<compile_context>
chip_gen: v6e
topology: v6e:2x2x1
jax: 0.10.0
libtpu: 0.0.40
codegen_flags: <defaults>
</compile_context>

<pallas_src>
import functools

import numpy as np
import jax
import jax.numpy as jnp
from jax.experimental import pallas as pl
from jax.experimental.pallas import tpu as pltpu

LANE_TILE = 128   # time-tile width (lane axis)
ROW_CHUNK = 16    # group-chunk height (sublane axis) -> conv state stays in vregs


def _hydra_kernel(a_ref, wb_ref, out_ref, apad_ref, *,
                  d, L, K, n_tiles, rc, P, Lp, divisor):
    """One example, one diff branch (homogeneous block of GB groups).

    a_ref:    (1, GB, L)          gathered + channel-summed input (unpadded)
    wb_ref:   (9, K, GB, 128)     conv taps pre-broadcast along lanes
    out_ref:  (1, GB, 2K)         [:, :, :K] = count_max, [:, :, K:] = count_min
    apad_ref: (GB, Lp)            VMEM scratch: zero-padded (+diffed) series,
                                  data starts at lane-aligned offset P.
    """
    GB = a_ref.shape[1]
    LT = LANE_TILE
    off0 = P - 4 * d          # conv output t reads apad[off0 + t + j*d], j=0..8

    # ---- stage the (optionally differenced) zero-padded series into VMEM ----
    # Prefix zeros [0, P), data at [P, P+L) (X) or [P, P+L-1) (diff), zeros to Lp.
    apad_ref[:, pl.ds(0, P)] = jnp.zeros((GB, P), jnp.float32)

    def _fill_x():
        apad_ref[:, pl.ds(P, L)] = a_ref[0]
        apad_ref[:, pl.ds(P + L, Lp - (P + L))] = jnp.zeros(
            (GB, Lp - (P + L)), jnp.float32)

    def _fill_diff():
        apad_ref[:, pl.ds(P, L - 1)] = (a_ref[0, :, pl.ds(1, L - 1)]
                                        - a_ref[0, :, pl.ds(0, L - 1)])
        apad_ref[:, pl.ds(P + L - 1, Lp - (P + L - 1))] = jnp.zeros(
            (GB, Lp - (P + L - 1)), jnp.float32)

    if divisor == 1:
        _fill_x()
        valid_len = L                       # static
    else:
        is_diff = pl.program_id(0) == 1
        pl.when(jnp.logical_not(is_diff))(_fill_x)
        pl.when(is_diff)(_fill_diff)
        valid_len = jnp.where(is_diff, L - 1, L)

    # Row chunks (static) -- GB is a multiple of 8, rc <= GB.
    chunks = []
    r0 = 0
    while r0 < GB:
        nr = min(rc, GB - r0)
        chunks.append((r0, nr))
        r0 += nr

    def tile_counts(r0, nr, t0, valid_f):
        """Conv + running arg-max/min over K + pooled per-k reduces for one
        (row chunk, time tile). valid_f is None for fully-valid interior tiles."""
        taps = [apad_ref[r0:r0 + nr, pl.ds(off0 + t0 + j * d, LT)]
                for j in range(9)]

        def conv(kk):
            z = wb_ref[0, kk, r0:r0 + nr, :] * taps[0]
            for j in range(1, 9):
                z = z + wb_ref[j, kk, r0:r0 + nr, :] * taps[j]
            return z

        z0 = conv(0)
        max_val = z0
        min_val = z0
        max_idx = jnp.zeros((nr, LT), jnp.int32)
        min_idx = jnp.zeros((nr, LT), jnp.int32)
        for kk in range(1, K):
            zk = conv(kk)
            gm = zk > max_val
            max_val = jnp.where(gm, zk, max_val)
            max_idx = jnp.where(gm, kk, max_idx)
            lm = zk < min_val
            min_val = jnp.where(lm, zk, min_val)
            min_idx = jnp.where(lm, kk, min_idx)

        mval = max_val if valid_f is None else max_val * valid_f

        # Per-k 2-D masked lane reduces (keeps live state at vreg granularity).
        cmax_cols, cmin_cols = [], []
        for kk in range(K):
            sel_max = max_idx == kk
            cmax_cols.append(jnp.sum(jnp.where(sel_max, mval, 0.0),
                                     axis=-1, keepdims=True))
            sel_min = min_idx == kk
            if valid_f is None:
                cmin_cols.append(jnp.sum(sel_min.astype(jnp.float32),
                                         axis=-1, keepdims=True))
            else:
                cmin_cols.append(jnp.sum(jnp.where(sel_min, valid_f, 0.0),
                                         axis=-1, keepdims=True))
        return (jnp.concatenate(cmax_cols, axis=-1),      # (nr, K)
                jnp.concatenate(cmin_cols, axis=-1))      # (nr, K)

    # ---- interior time tiles: fully valid, no masking work ----
    init = []
    for (_, nr) in chunks:
        init.append(jnp.zeros((nr, K), jnp.float32))
        init.append(jnp.zeros((nr, K), jnp.float32))
    init = tuple(init)

    n_interior = n_tiles - 1
    if n_interior > 0:
        def body(ti, carry):
            t0 = pl.multiple_of(ti * LT, LT)
            new = []
            for ci, (r0c, nr) in enumerate(chunks):
                cmax_c, cmin_c = tile_counts(r0c, nr, t0, None)
                new.append(carry[2 * ci] + cmax_c)
                new.append(carry[2 * ci + 1] + cmin_c)
            return tuple(new)
        acc = jax.lax.fori_loop(0, n_interior, body, init)
    else:
        acc = init

    # ---- last (ragged) time tile: mask t >= valid_len, then write output ----
    t_last = (n_tiles - 1) * LT
    for ci, (r0c, nr) in enumerate(chunks):
        t_idx = t_last + jax.lax.broadcasted_iota(jnp.int32, (nr, LT), 1)
        valid_f = (t_idx < valid_len).astype(jnp.float32)
        cmax_c, cmin_c = tile_counts(r0c, nr, t_last, valid_f)
        out_ref[0, r0c:r0c + nr, 0:K] = acc[2 * ci] + cmax_c
        out_ref[0, r0c:r0c + nr, K:2 * K] = acc[2 * ci + 1] + cmin_c


def hydra_branch(a, wb, *, dilation, divisor):
    """a: (N, Gtot, L) f32, wb: (9, K, Gtot, 128) f32 -> (N, Gtot, 2K) f32."""
    n, gtot, l_in = a.shape
    k = wb.shape[1]
    gb = gtot // divisor
    lt = LANE_TILE
    n_tiles = -(-l_in // lt)
    pad = 4 * dilation
    p_al = -(-pad // lt) * lt                 # pad base rounded up to 128 lanes
    lp = n_tiles * lt + 2 * p_al
    rc = min(ROW_CHUNK, gb)

    kernel = functools.partial(_hydra_kernel, d=dilation, L=l_in, K=k,
                               n_tiles=n_tiles, rc=rc, P=p_al, Lp=lp,
                               divisor=divisor)

    # VMEM budget: apad scratch + double-buffered input + double-buffered
    # weights + output, plus headroom; clamp to 48 MiB (fits v7x's 64 MiB).
    vmem_bytes = (gb * lp * 4
                  + 2 * gb * l_in * 4
                  + 2 * 9 * k * gb * lt * 4
                  + 4 * gb * 2 * k * 4)
    vmem_limit = int(min(max(vmem_bytes * 3 // 2 + (2 << 20), 32 << 20), 48 << 20))

    return pl.pallas_call(
        kernel,
        out_shape=jax.ShapeDtypeStruct((n, gtot, 2 * k), jnp.float32),
        grid_spec=pltpu.PrefetchScalarGridSpec(
            num_scalar_prefetch=0,
            grid=(divisor, n),                # j = diff branch, i = example
            in_specs=[pl.BlockSpec((1, gb, l_in), lambda j, i: (i, j, 0)),
                      pl.BlockSpec((9, k, gb, lt), lambda j, i: (0, 0, j, 0))],
            out_specs=pl.BlockSpec((1, gb, 2 * k), lambda j, i: (i, j, 0)),
            scratch_shapes=[pltpu.VMEM((gb, lp), jnp.float32)]),
        compiler_params=pltpu.CompilerParams(
            dimension_semantics=("parallel", "parallel"),
            vmem_limit_bytes=vmem_limit),
    )(a, wb)


class HydraMultivariateJax:
    """JAX/Pallas port of the PyTorch HydraMultivariate module (forward)."""

    def __init__(self, input_length, num_channels, k=8, g=64,
                 max_num_channels=8, seed=0):
        self.k = k
        self.g = g
        max_exponent = np.log2((input_length - 1) / (9 - 1))
        self.dilations = [int(2 ** e) for e in range(int(max_exponent) + 1)]
        self.num_dilations = len(self.dilations)
        divisor = 2 if g > 1 else 1
        self.divisor = divisor
        self._g = g // divisor
        self.gtot = divisor * self._g
        assert divisor == 1 or self._g % 8 == 0, (
            "g/2 must be a multiple of 8 for the branch-blocked TPU kernel")
        num_channels_per = int(np.clip(num_channels // 2, 2, max_num_channels))
        self.num_channels = num_channels

        key = jax.random.PRNGKey(seed)
        self.WB = []   # per dilation: (9, K, Gtot, 128) lane-broadcast weights
        self.M = []    # per dilation: (Gtot, C) channel count matrix (gather+sum)
        for _ in range(self.num_dilations):
            key, kw, ki = jax.random.split(key, 3)
            w = jax.random.normal(kw, (divisor, k * self._g, 1, 9),
                                  dtype=jnp.float32)
            w = w - jnp.mean(w, axis=-1, keepdims=True)
            w = w / jnp.sum(jnp.abs(w), axis=-1, keepdims=True)
            w4 = w.reshape(divisor, self._g, k, 9)                 # (div,_g,k,9)
            w_t = jnp.transpose(w4, (3, 2, 0, 1)).reshape(9, k, self.gtot)
            self.WB.append(jnp.broadcast_to(
                w_t[..., None], (9, k, self.gtot, LANE_TILE)).astype(jnp.float32))

            idx = jax.random.randint(ki, (divisor, self._g, num_channels_per),
                                     0, num_channels, dtype=jnp.int32)
            idx_np = np.asarray(idx).reshape(self.gtot, num_channels_per)
            m = np.zeros((self.gtot, num_channels), np.float32)
            np.add.at(m, (np.repeat(np.arange(self.gtot), num_channels_per),
                          idx_np.ravel()), 1.0)
            self.M.append(jnp.asarray(m))

    def __call__(self, X):
        # X: (N, C, L) float32
        n = X.shape[0]
        gx = self._g
        k = self.k
        feats = []
        for di, d in enumerate(self.dilations):
            # Channel gather + sum as a count-matrix contraction (MXU, no
            # (N, Gtot, ncp, L) intermediate). The diff branch is derived
            # in-kernel (diff commutes with the channel sum).
            a = jnp.einsum('gc,ncl->ngl', self.M[di], X)          # (N,Gtot,L)
            out = hydra_branch(a, self.WB[di], dilation=d, divisor=self.divisor)
            feats.append(out[:, :gx, :k])       # diff0 count_max
            feats.append(out[:, :gx, k:])       # diff0 count_min
            if self.divisor == 2:
                feats.append(out[:, gx:, :k])   # diff1 count_max
                feats.append(out[:, gx:, k:])   # diff1 count_min
        return jnp.concatenate(feats, axis=1).reshape(n, -1)


def hydra_reference(model, X):
    """Pure-JAX reference of the forward pass (same weights / gather matrix)."""
    N = X.shape[0]
    k, g_ = model.k, model._g
    feats = []
    for di, d in enumerate(model.dilations):
        p = 4 * d
        a = jnp.einsum('gc,ncl->ngl', model.M[di], X)             # (N,Gtot,L)
        for br in range(model.divisor):
            s = a[:, br * g_:(br + 1) * g_]
            if br == 1:
                s = s[:, :, 1:] - s[:, :, :-1]
            sp = jnp.pad(s, ((0, 0), (0, 0), (p, p)))
            lout = sp.shape[-1] - 8 * d
            w = model.WB[di][:, :, br * g_:(br + 1) * g_, 0]      # (9,K,_g)
            z = jnp.zeros((N, g_, k, lout), jnp.float32)
            for j in range(9):
                z = z + (jnp.transpose(w[j])[None, :, :, None]
                         * sp[:, :, None, j * d:j * d + lout])
            mv = z.max(axis=2)
            mi = jnp.argmax(z, axis=2)
            ni = jnp.argmin(z, axis=2)
            oh_max = jax.nn.one_hot(mi, k, dtype=jnp.float32)     # (N,_g,L,K)
            oh_min = jax.nn.one_hot(ni, k, dtype=jnp.float32)
            feats.append(jnp.einsum('nglk,ngl->ngk', oh_max, mv))
            feats.append(oh_min.sum(axis=2))
    return jnp.concatenate(feats, axis=1).reshape(N, -1)


if __name__ == "__main__":
    # Small deterministic example: batch=2, channels=4, input_length=32.
    N, C, L = 2, 4, 32
    key = jax.random.PRNGKey(0)
    X = jax.random.normal(key, (N, C, L), dtype=jnp.float32)

    model = HydraMultivariateJax(input_length=L, num_channels=C,
                                 k=8, g=64, max_num_channels=8, seed=0)
    fwd = jax.jit(lambda x: model(x))
    Z = jax.block_until_ready(fwd(X))

    expected_feats = (model.num_dilations * min(2, model.g) * 2
                      * model._g * model.k)
    assert Z.shape == (N, expected_feats), Z.shape
    assert bool(jnp.all(jnp.isfinite(Z)))

    # Correctness check vs. pure-JAX reference. A tolerance on the mismatch
    # fraction (rather than allclose) makes the check robust to a rare
    # argmax/argmin flip on float-rounding-level near-ties.
    Zref = np.asarray(hydra_reference(model, X))
    mismatch = float(np.mean(np.abs(np.asarray(Z) - Zref) > 1e-2))
    assert mismatch < 0.005, f"mismatch fraction too high: {mismatch}"

    print("KERNEL_OK")
</pallas_src>

<mosaic_0001>
module attributes {stable_mosaic.version = 11 : i64} {
  func.func @_hydra_kernel(%arg0: i32, %arg1: i32, %arg2: memref<1x32x32xf32, #tpu.memory_space<vmem>>, %arg3: memref<9x8x32x128xf32, #tpu.memory_space<vmem>>, %arg4: memref<1x32x16xf32, #tpu.memory_space<vmem>>, %arg5: memref<32x384xf32, #tpu.memory_space<vmem>>) attributes {dimension_semantics = [#tpu.dimension_semantics<parallel>, #tpu.dimension_semantics<parallel>], iteration_bounds = array<i64: 2, 2>, scalar_prefetch = 0 : i64, scratch_operands = 1 : i64, tpu.core_type = #tpu.core_type<tc>, window_params = [{transform_indices = @transform_0, window_bounds = array<i64: 1, 32, 32>}, {transform_indices = @transform_1, window_bounds = array<i64: 9, 8, 32, 128>}, {transform_indices = @transform_2, window_bounds = array<i64: 1, 32, 16>}]} {
    %cst = arith.constant 0.000000e+00 : f32
    %0 = vector.broadcast %cst : f32 to vector<32x128xf32>
    %c0 = arith.constant 0 : index
    %c0_0 = arith.constant 0 : index
    %1 = vector.load %arg5[%c0, %c0_0] : memref<32x384xf32, #tpu.memory_space<vmem>>, vector<32x128xf32>
    tpu.vector_store %arg5[%c0, %c0_0], %0 {strides = array<i32>} : memref<32x384xf32, #tpu.memory_space<vmem>>, vector<32x128xf32>,
    %c1_i32 = arith.constant 1 : i32
    %2 = arith.cmpi eq, %arg0, %c1_i32 : i32
    %true = arith.constant true
    %3 = arith.xori %2, %true : i1
    %4 = arith.extui %3 : i1 to i32
    %c0_i32 = arith.constant 0 : i32
    %5 = arith.cmpi ne, %4, %c0_i32 : i32
    scf.if %5 {
      %c0_736 = arith.constant 0 : index
      %c0_737 = arith.constant 0 : index
      %c0_738 = arith.constant 0 : index
      %933 = vector.load %arg2[%c0_736, %c0_737, %c0_738] : memref<1x32x32xf32, #tpu.memory_space<vmem>>, vector<1x32x32xf32>
      %934 = vector.shape_cast %933 : vector<1x32x32xf32> to vector<32x32xf32>
      %c0_739 = arith.constant 0 : index
      %c128_740 = arith.constant 128 : index
      %935 = vector.load %arg5[%c0_739, %c128_740] : memref<32x384xf32, #tpu.memory_space<vmem>>, vector<32x32xf32>
      tpu.vector_store %arg5[%c0_739, %c128_740], %934 {strides = array<i32>} : memref<32x384xf32, #tpu.memory_space<vmem>>, vector<32x32xf32>,
      %cst_741 = arith.constant 0.000000e+00 : f32
      %936 = vector.broadcast %cst_741 : f32 to vector<32x224xf32>
      %c0_742 = arith.constant 0 : index
      %c160 = arith.constant 160 : index
      %937 = vector.load %arg5[%c0_742, %c160] : memref<32x384xf32, #tpu.memory_space<vmem>>, vector<32x224xf32>
      tpu.vector_store %arg5[%c0_742, %c160], %936 {strides = array<i32>} : memref<32x384xf32, #tpu.memory_space<vmem>>, vector<32x224xf32>,
    } else {
    }
    %6 = arith.extui %2 : i1 to i32
    %c0_i32_1 = arith.constant 0 : i32
    %7 = arith.cmpi ne, %6, %c0_i32_1 : i32
    scf.if %7 {
      %c0_736 = arith.constant 0 : index
      %c0_737 = arith.constant 0 : index
      %c1_738 = arith.constant 1 : index
      %933 = vector.load %arg2[%c0_736, %c0_737, %c1_738] : memref<1x32x32xf32, #tpu.memory_space<vmem>>, vector<1x32x31xf32>
      %934 = vector.shape_cast %933 : vector<1x32x31xf32> to vector<32x31xf32>
      %c0_739 = arith.constant 0 : index
      %c0_740 = arith.constant 0 : index
      %c0_741 = arith.constant 0 : index
      %935 = vector.load %arg2[%c0_739, %c0_740, %c0_741] : memref<1x32x32xf32, #tpu.memory_space<vmem>>, vector<1x32x31xf32>
      %936 = vector.shape_cast %935 : vector<1x32x31xf32> to vector<32x31xf32>
      %937 = arith.subf %934, %936 : vector<32x31xf32>
      %c0_742 = arith.constant 0 : index
      %c128_743 = arith.constant 128 : index
      %938 = vector.load %arg5[%c0_742, %c128_743] : memref<32x384xf32, #tpu.memory_space<vmem>>, vector<32x31xf32>
      tpu.vector_store %arg5[%c0_742, %c128_743], %937 {strides = array<i32>} : memref<32x384xf32, #tpu.memory_space<vmem>>, vector<32x31xf32>,
      %cst_744 = arith.constant 0.000000e+00 : f32
      %939 = vector.broadcast %cst_744 : f32 to vector<32x225xf32>
      %c0_745 = arith.constant 0 : index
      %c159 = arith.constant 159 : index
      %940 = vector.load %arg5[%c0_745, %c159] : memref<32x384xf32, #tpu.memory_space<vmem>>, vector<32x225xf32>
      tpu.vector_store %arg5[%c0_745, %c159], %939 {strides = array<i32>} : memref<32x384xf32, #tpu.memory_space<vmem>>, vector<32x225xf32>,
    } else {
    }
    %c31_i32 = arith.constant 31 : i32
    %c32_i32 = arith.constant 32 : i32
    %8 = arith.select %2, %c31_i32, %c32_i32 : i32
    %cst_2 = arith.constant 0.000000e+00 : f32
    %9 = vector.broadcast %cst_2 : f32 to vector<16x8xf32>
    %cst_3 = arith.constant 0.000000e+00 : f32
    %10 = vector.broadcast %cst_3 : f32 to vector<16x8xf32>
    %cst_4 = arith.constant 0.000000e+00 : f32
    %11 = vector.broadcast %cst_4 : f32 to vector<16x8xf32>
    %cst_5 = arith.constant 0.000000e+00 : f32
    %12 = vector.broadcast %cst_5 : f32 to vector<16x8xf32>
    %13 = tpu.iota {dimensions = array<i32: 1>} : vector<16x128xi32>
    %c0_i32_6 = arith.constant 0 : i32
    %14 = vector.broadcast %c0_i32_6 : i32 to vector<16x128xi32>
    %15 = arith.addi %14, %13 : vector<16x128xi32>
    %16 = vector.broadcast %8 : i32 to vector<16x128xi32>
    %17 = arith.cmpi slt, %15, %16 : vector<16x128xi32>
    %18 = arith.extui %17 : vector<16x128xi1> to vector<16x128xi32>
    %19 = arith.sitofp %18 : vector<16x128xi32> to vector<16x128xf32>
    %c0_7 = arith.constant 0 : index
    %c124 = arith.constant 124 : index
    %20 = vector.load %arg5[%c0_7, %c124] : memref<32x384xf32, #tpu.memory_space<vmem>>, vector<16x128xf32>
    %c0_8 = arith.constant 0 : index
    %c125 = arith.constant 125 : index
    %21 = vector.load %arg5[%c0_8, %c125] : memref<32x384xf32, #tpu.memory_space<vmem>>, vector<16x128xf32>
    %c0_9 = arith.constant 0 : index
    %c126 = arith.constant 126 : index
    %22 = vector.load %arg5[%c0_9, %c126] : memref<32x384xf32, #tpu.memory_space<vmem>>, vector<16x128xf32>
    %c0_10 = arith.constant 0 : index
    %c127 = arith.constant 127 : index
    %23 = vector.load %arg5[%c0_10, %c127] : memref<32x384xf32, #tpu.memory_space<vmem>>, vector<16x128xf32>
    %c0_11 = arith.constant 0 : index
    %c128 = arith.constant 128 : index
    %24 = vector.load %arg5[%c0_11, %c128] : memref<32x384xf32, #tpu.memory_space<vmem>>, vector<16x128xf32>
    %c0_12 = arith.constant 0 : index
    %c129 = arith.constant 129 : index
    %25 = vector.load %arg5[%c0_12, %c129] : memref<32x384xf32, #tpu.memory_space<vmem>>, vector<16x128xf32>
    %c0_13 = arith.constant 0 : index
    %c130 = arith.constant 130 : index
    %26 = vector.load %arg5[%c0_13, %c130] : memref<32x384xf32, #tpu.memory_space<vmem>>, vector<16x128xf32>
    %c0_14 = arith.constant 0 : index
    %c131 = arith.constant 131 : index
    %27 = vector.load %arg5[%c0_14, %c131] : memref<32x384xf32, #tpu.memory_space<vmem>>, vector<16x128xf32>
    %c0_15 = arith.constant 0 : index
    %c132 = arith.constant 132 : index
    %28 = vector.load %arg5[%c0_15, %c132] : memref<32x384xf32, #tpu.memory_space<vmem>>, vector<16x128xf32>
    %c0_16 = arith.constant 0 : index
    %c0_17 = arith.constant 0 : index
    %c0_18 = arith.constant 0 : index
    %c0_19 = arith.constant 0 : index
    %29 = vector.load %arg3[%c0_16, %c0_17, %c0_18, %c0_19] : memref<9x8x32x128xf32, #tpu.memory_space<vmem>>, vector<1x1x16x128xf32>
    %30 = vector.shape_cast %29 : vector<1x1x16x128xf32> to vector<16x128xf32>
    %31 = arith.mulf %30, %20 : vector<16x128xf32>
    %c1 = arith.constant 1 : index
    %c0_20 = arith.constant 0 : index
    %c0_21 = arith.constant 0 : index
    %c0_22 = arith.constant 0 : index
    %32 = vector.load %arg3[%c1, %c0_20, %c0_21, %c0_22] : memref<9x8x32x128xf32, #tpu.memory_space<vmem>>, vector<1x1x16x128xf32>
    %33 = vector.shape_cast %32 : vector<1x1x16x128xf32> to vector<16x128xf32>
    %34 = arith.mulf %33, %21 : vector<16x128xf32>
    %35 = arith.addf %31, %34 : vector<16x128xf32>
    %c2 = arith.constant 2 : index
    %c0_23 = arith.constant 0 : index
    %c0_24 = arith.constant 0 : index
    %c0_25 = arith.constant 0 : index
    %36 = vector.load %arg3[%c2, %c0_23, %c0_24, %c0_25] : memref<9x8x32x128xf32, #tpu.memory_space<vmem>>, vector<1x1x16x128xf32>
    %37 = vector.shape_cast %36 : vector<1x1x16x128xf32> to vector<16x128xf32>
    %38 = arith.mulf %37, %22 : vector<16x128xf32>
    %39 = arith.addf %35, %38 : vector<16x128xf32>
    %c3 = arith.constant 3 : index
    %c0_26 = arith.constant 0 : index
    %c0_27 = arith.constant 0 : index
    %c0_28 = arith.constant 0 : index
    %40 = vector.load %arg3[%c3, %c0_26, %c0_27, %c0_28] : memref<9x8x32x128xf32, #tpu.memory_space<vmem>>, vector<1x1x16x128xf32>
    %41 = vector.shape_cast %40 : vector<1x1x16x128xf32> to vector<16x128xf32>
    %42 = arith.mulf %41, %23 : vector<16x128xf32>
    %43 = arith.addf %39, %42 : vector<16x128xf32>
    %c4 = arith.constant 4 : index
    %c0_29 = arith.constant 0 : index
    %c0_30 = arith.constant 0 : index
    %c0_31 = arith.constant 0 : index
    %44 = vector.load %arg3[%c4, %c0_29, %c0_30, %c0_31] : memref<9x8x32x128xf32, #tpu.memory_space<vmem>>, vector<1x1x16x128xf32>
    %45 = vector.shape_cast %44 : vector<1x1x16x128xf32> to vector<16x128xf32>
    %46 = arith.mulf %45, %24 : vector<16x128xf32>
    %47 = arith.addf %43, %46 : vector<16x128xf32>
    %c5 = arith.constant 5 : index
    %c0_32 = arith.constant 0 : index
    %c0_33 = arith.constant 0 : index
    %c0_34 = arith.constant 0 : index
    %48 = vector.load %arg3[%c5, %c0_32, %c0_33, %c0_34] : memref<9x8x32x128xf32, #tpu.memory_space<vmem>>, vector<1x1x16x128xf32>
    %49 = vector.shape_cast %48 : vector<1x1x16x128xf32> to vector<16x128xf32>
    %50 = arith.mulf %49, %25 : vector<16x128xf32>
    %51 = arith.addf %47, %50 : vector<16x128xf32>
    %c6 = arith.constant 6 : index
    %c0_35 = arith.constant 0 : index
    %c0_36 = arith.constant 0 : index
    %c0_37 = arith.constant 0 : index
    %52 = vector.load %arg3[%c6, %c0_35, %c0_36, %c0_37] : memref<9x8x32x128xf32, #tpu.memory_space<vmem>>, vector<1x1x16x128xf32>
    %53 = vector.shape_cast %52 : vector<1x1x16x128xf32> to vector<16x128xf32>
    %54 = arith.mulf %53, %26 : vector<16x128xf32>
    %55 = arith.addf %51, %54 : vector<16x128xf32>
    %c7 = arith.constant 7 : index
    %c0_38 = arith.constant 0 : index
    %c0_39 = arith.constant 0 : index
    %c0_40 = arith.constant 0 : index
    %56 = vector.load %arg3[%c7, %c0_38, %c0_39, %c0_40] : memref<9x8x32x128xf32, #tpu.memory_space<vmem>>, vector<1x1x16x128xf32>
    %57 = vector.shape_cast %56 : vector<1x1x16x128xf32> to vector<16x128xf32>
    %58 = arith.mulf %57, %27 : vector<16x128xf32>
    %59 = arith.addf %55, %58 : vector<16x128xf32>
    %c8 = arith.constant 8 : index
    %c0_41 = arith.constant 0 : index
    %c0_42 = arith.constant 0 : index
    %c0_43 = arith.constant 0 : index
    %60 = vector.load %arg3[%c8, %c0_41, %c0_42, %c0_43] : memref<9x8x32x128xf32, #tpu.memory_space<vmem>>, vector<1x1x16x128xf32>
    %61 = vector.shape_cast %60 : vector<1x1x16x128xf32> to vector<16x128xf32>
    %62 = arith.mulf %61, %28 : vector<16x128xf32>
    %63 = arith.addf %59, %62 : vector<16x128xf32>
    %c0_i32_44 = arith.constant 0 : i32
    %64 = vector.broadcast %c0_i32_44 : i32 to vector<16x128xi32>
    %c0_i32_45 = arith.constant 0 : i32
    %65 = vector.broadcast %c0_i32_45 : i32 to vector<16x128xi32>
    %c0_46 = arith.constant 0 : index
    %c1_47 = arith.constant 1 : index
    %c0_48 = arith.constant 0 : index
    %c0_49 = arith.constant 0 : index
    %66 = vector.load %arg3[%c0_46, %c1_47, %c0_48, %c0_49] : memref<9x8x32x128xf32, #tpu.memory_space<vmem>>, vector<1x1x16x128xf32>
    %67 = vector.shape_cast %66 : vector<1x1x16x128xf32> to vector<16x128xf32>
    %68 = arith.mulf %67, %20 : vector<16x128xf32>
    %c1_50 = arith.constant 1 : index
    %c1_51 = arith.constant 1 : index
    %c0_52 = arith.constant 0 : index
    %c0_53 = arith.constant 0 : index
    %69 = vector.load %arg3[%c1_50, %c1_51, %c0_52, %c0_53] : memref<9x8x32x128xf32, #tpu.memory_space<vmem>>, vector<1x1x16x128xf32>
    %70 = vector.shape_cast %69 : vector<1x1x16x128xf32> to vector<16x128xf32>
    %71 = arith.mulf %70, %21 : vector<16x128xf32>
    %72 = arith.addf %68, %71 : vector<16x128xf32>
    %c2_54 = arith.constant 2 : index
    %c1_55 = arith.constant 1 : index
    %c0_56 = arith.constant 0 : index
    %c0_57 = arith.constant 0 : index
    %73 = vector.load %arg3[%c2_54, %c1_55, %c0_56, %c0_57] : memref<9x8x32x128xf32, #tpu.memory_space<vmem>>, vector<1x1x16x128xf32>
    %74 = vector.shape_cast %73 : vector<1x1x16x128xf32> to vector<16x128xf32>
    %75 = arith.mulf %74, %22 : vector<16x128xf32>
    %76 = arith.addf %72, %75 : vector<16x128xf32>
    %c3_58 = arith.constant 3 : index
    %c1_59 = arith.constant 1 : index
    %c0_60 = arith.constant 0 : index
    %c0_61 = arith.constant 0 : index
    %77 = vector.load %arg3[%c3_58, %c1_59, %c0_60, %c0_61] : memref<9x8x32x128xf32, #tpu.memory_space<vmem>>, vector<1x1x16x128xf32>
    %78 = vector.shape_cast %77 : vector<1x1x16x128xf32> to vector<16x128xf32>
    %79 = arith.mulf %78, %23 : vector<16x128xf32>
    %80 = arith.addf %76, %79 : vector<16x128xf32>
    %c4_62 = arith.constant 4 : index
    %c1_63 = arith.constant 1 : index
    %c0_64 = arith.constant 0 : index
    %c0_65 = arith.constant 0 : index
    %81 = vector.load %arg3[%c4_62, %c1_63, %c0_64, %c0_65] : memref<9x8x32x128xf32, #tpu.memory_space<vmem>>, vector<1x1x16x128xf32>
    %82 = vector.shape_cast %81 : vector<1x1x16x128xf32> to vector<16x128xf32>
    %83 = arith.mulf %82, %24 : vector<16x128xf32>
    %84 = arith.addf %80, %83 : vector<16x128xf32>
    %c5_66 = arith.constant 5 : index
    %c1_67 = arith.constant 1 : index
    %c0_68 = arith.constant 0 : index
    %c0_69 = arith.constant 0 : index
    %85 = vector.load %arg3[%c5_66, %c1_67, %c0_68, %c0_69] : memref<9x8x32x128xf32, #tpu.memory_space<vmem>>, vector<1x1x16x128xf32>
    %86 = vector.shape_cast %85 : vector<1x1x16x128xf32> to vector<16x128xf32>
    %87 = arith.mulf %86, %25 : vector<16x128xf32>
    %88 = arith.addf %84, %87 : vector<16x128xf32>
    %c6_70 = arith.constant 6 : index
    %c1_71 = arith.constant 1 : index
    %c0_72 = arith.constant 0 : index
    %c0_73 = arith.constant 0 : index
    %89 = vector.load %arg3[%c6_70, %c1_71, %c0_72, %c0_73] : memref<9x8x32x128xf32, #tpu.memory_space<vmem>>, vector<1x1x16x128xf32>
    %90 = vector.shape_cast %89 : vector<1x1x16x128xf32> to vector<16x128xf32>
    %91 = arith.mulf %90, %26 : vector<16x128xf32>
    %92 = arith.addf %88, %91 : vector<16x128xf32>
    %c7_74 = arith.constant 7 : index
    %c1_75 = arith.constant 1 : index
    %c0_76 = arith.constant 0 : index
    %c0_77 = arith.constant 0 : index
    %93 = vector.load %arg3[%c7_74, %c1_75, %c0_76, %c0_77] : memref<9x8x32x128xf32, #tpu.memory_space<vmem>>, vector<1x1x16x128xf32>
    %94 = vector.shape_cast %93 : vector<1x1x16x128xf32> to vector<16x128xf32>
    %95 = arith.mulf %94, %27 : vector<16x128xf32>
    %96 = arith.addf %92, %95 : vector<16x128xf32>
    %c8_78 = arith.constant 8 : index
    %c1_79 = arith.constant 1 : index
    %c0_80 = arith.constant 0 : index
    %c0_81 = arith.constant 0 : index
    %97 = vector.load %arg3[%c8_78, %c1_79, %c0_80, %c0_81] : memref<9x8x32x128xf32, #tpu.memory_space<vmem>>, vector<1x1x16x128xf32>
    %98 = vector.shape_cast %97 : vector<1x1x16x128xf32> to vector<16x128xf32>
    %99 = arith.mulf %98, %28 : vector<16x128xf32>
    %100 = arith.addf %96, %99 : vector<16x128xf32>
    %101 = arith.cmpf ogt, %100, %63 : vector<16x128xf32>
    %102 = arith.select %101, %100, %63 : vector<16x128xi1>, vector<16x128xf32>
    %c1_i32_82 = arith.constant 1 : i32
    %103 = vector.broadcast %c1_i32_82 : i32 to vector<16x128xi32>
    %104 = arith.select %101, %103, %64 : vector<16x128xi1>, vector<16x128xi32>
    %105 = arith.cmpf olt, %100, %63 : vector<16x128xf32>
    %106 = arith.select %105, %100, %63 : vector<16x128xi1>, vector<16x128xf32>
    %c1_i32_83 = arith.constant 1 : i32
    %107 = vector.broadcast %c1_i32_83 : i32 to vector<16x128xi32>
    %108 = arith.select %105, %107, %65 : vector<16x128xi1>, vector<16x128xi32>
    %c0_84 = arith.constant 0 : index
    %c2_85 = arith.constant 2 : index
    %c0_86 = arith.constant 0 : index
    %c0_87 = arith.constant 0 : index
    %109 = vector.load %arg3[%c0_84, %c2_85, %c0_86, %c0_87] : memref<9x8x32x128xf32, #tpu.memory_space<vmem>>, vector<1x1x16x128xf32>
    %110 = vector.shape_cast %109 : vector<1x1x16x128xf32> to vector<16x128xf32>
    %111 = arith.mulf %110, %20 : vector<16x128xf32>
    %c1_88 = arith.constant 1 : index
    %c2_89 = arith.constant 2 : index
    %c0_90 = arith.constant 0 : index
    %c0_91 = arith.constant 0 : index
    %112 = vector.load %arg3[%c1_88, %c2_89, %c0_90, %c0_91] : memref<9x8x32x128xf32, #tpu.memory_space<vmem>>, vector<1x1x16x128xf32>
    %113 = vector.shape_cast %112 : vector<1x1x16x128xf32> to vector<16x128xf32>
    %114 = arith.mulf %113, %21 : vector<16x128xf32>
    %115 = arith.addf %111, %114 : vector<16x128xf32>
    %c2_92 = arith.constant 2 : index
    %c2_93 = arith.constant 2 : index
    %c0_94 = arith.constant 0 : index
    %c0_95 = arith.constant 0 : index
    %116 = vector.load %arg3[%c2_92, %c2_93, %c0_94, %c0_95] : memref<9x8x32x128xf32, #tpu.memory_space<vmem>>, vector<1x1x16x128xf32>
    %117 = vector.shape_cast %116 : vector<1x1x16x128xf32> to vector<16x128xf32>
    %118 = arith.mulf %117, %22 : vector<16x128xf32>
    %119 = arith.addf %115, %118 : vector<16x128xf32>
    %c3_96 = arith.constant 3 : index
    %c2_97 = arith.constant 2 : index
    %c0_98 = arith.constant 0 : index
    %c0_99 = arith.constant 0 : index
    %120 = vector.load %arg3[%c3_96, %c2_97, %c0_98, %c0_99] : memref<9x8x32x128xf32, #tpu.memory_space<vmem>>, vector<1x1x16x128xf32>
    %121 = vector.shape_cast %120 : vector<1x1x16x128xf32> to vector<16x128xf32>
    %122 = arith.mulf %121, %23 : vector<16x128xf32>
    %123 = arith.addf %119, %122 : vector<16x128xf32>
    %c4_100 = arith.constant 4 : index
    %c2_101 = arith.constant 2 : index
    %c0_102 = arith.constant 0 : index
    %c0_103 = arith.constant 0 : index
    %124 = vector.load %arg3[%c4_100, %c2_101, %c0_102, %c0_103] : memref<9x8x32x128xf32, #tpu.memory_space<vmem>>, vector<1x1x16x128xf32>
    %125 = vector.shape_cast %124 : vector<1x1x16x128xf32> to vector<16x128xf32>
    %126 = arith.mulf %125, %24 : vector<16x128xf32>
    %127 = arith.addf %123, %126 : vector<16x128xf32>
    %c5_104 = arith.constant 5 : index
    %c2_105 = arith.constant 2 : index
    %c0_106 = arith.constant 0 : index
    %c0_107 = arith.constant 0 : index
    %128 = vector.load %arg3[%c5_104, %c2_105, %c0_106, %c0_107] : memref<9x8x32x128xf32, #tpu.memory_space<vmem>>, vector<1x1x16x128xf32>
    %129 = vector.shape_cast %128 : vector<1x1x16x128xf32> to vector<16x128xf32>
    %130 = arith.mulf %129, %25 : vector<16x128xf32>
    %131 = arith.addf %127, %130 : vector<16x128xf32>
    %c6_108 = arith.constant 6 : index
    %c2_109 = arith.constant 2 : index
    %c0_110 = arith.constant 0 : index
    %c0_111 = arith.constant 0 : index
    %132 = vector.load %arg3[%c6_108, %c2_109, %c0_110, %c0_111] : memref<9x8x32x128xf32, #tpu.memory_space<vmem>>, vector<1x1x16x128xf32>
    %133 = vector.shape_cast %132 : vector<1x1x16x128xf32> to vector<16x128xf32>
    %134 = arith.mulf %133, %26 : vector<16x128xf32>
    %135 = arith.addf %131, %134 : vector<16x128xf32>
    %c7_112 = arith.constant 7 : index
    %c2_113 = arith.constant 2 : index
    %c0_114 = arith.constant 0 : index
    %c0_115 = arith.constant 0 : index
    %136 = vector.load %arg3[%c7_112, %c2_113, %c0_114, %c0_115] : memref<9x8x32x128xf32, #tpu.memory_space<vmem>>, vector<1x1x16x128xf32>
    %137 = vector.shape_cast %136 : vector<1x1x16x128xf32> to vector<16x128xf32>
    %138 = arith.mulf %137, %27 : vector<16x128xf32>
    %139 = arith.addf %135, %138 : vector<16x128xf32>
    %c8_116 = arith.constant 8 : index
    %c2_117 = arith.constant 2 : index
    %c0_118 = arith.constant 0 : index
    %c0_119 = arith.constant 0 : index
    %140 = vector.load %arg3[%c8_116, %c2_117, %c0_118, %c0_119] : memref<9x8x32x128xf32, #tpu.memory_space<vmem>>, vector<1x1x16x128xf32>
    %141 = vector.shape_cast %140 : vector<1x1x16x128xf32> to vector<16x128xf32>
    %142 = arith.mulf %141, %28 : vector<16x128xf32>
    %143 = arith.addf %139, %142 : vector<16x128xf32>
    %144 = arith.cmpf ogt, %143, %102 : vector<16x128xf32>
    %145 = arith.select %144, %143, %102 : vector<16x128xi1>, vector<16x128xf32>
    %c2_i32 = arith.constant 2 : i32
    %146 = vector.broadcast %c2_i32 : i32 to vector<16x128xi32>
    %147 = arith.select %144, %146, %104 : vector<16x128xi1>, vector<16x128xi32>
    %148 = arith.cmpf olt, %143, %106 : vector<16x128xf32>
    %149 = arith.select %148, %143, %106 : vector<16x128xi1>, vector<16x128xf32>
    %c2_i32_120 = arith.constant 2 : i32
    %150 = vector.broadcast %c2_i32_120 : i32 to vector<16x128xi32>
    %151 = arith.select %148, %150, %108 : vector<16x128xi1>, vector<16x128xi32>
    %c0_121 = arith.constant 0 : index
    %c3_122 = arith.constant 3 : index
    %c0_123 = arith.constant 0 : index
    %c0_124 = arith.constant 0 : index
    %152 = vector.load %arg3[%c0_121, %c3_122, %c0_123, %c0_124] : memref<9x8x32x128xf32, #tpu.memory_space<vmem>>, vector<1x1x16x128xf32>
    %153 = vector.shape_cast %152 : vector<1x1x16x128xf32> to vector<16x128xf32>
    %154 = arith.mulf %153, %20 : vector<16x128xf32>
    %c1_125 = arith.constant 1 : index
    %c3_126 = arith.constant 3 : index
    %c0_127 = arith.constant 0 : index
    %c0_128 = arith.constant 0 : index
    %155 = vector.load %arg3[%c1_125, %c3_126, %c0_127, %c0_128] : memref<9x8x32x128xf32, #tpu.memory_space<vmem>>, vector<1x1x16x128xf32>
    %156 = vector.shape_cast %155 : vector<1x1x16x128xf32> to vector<16x128xf32>
    %157 = arith.mulf %156, %21 : vector<16x128xf32>
    %158 = arith.addf %154, %157 : vector<16x128xf32>
    %c2_129 = arith.constant 2 : index
    %c3_130 = arith.constant 3 : index
    %c0_131 = arith.constant 0 : index
    %c0_132 = arith.constant 0 : index
    %159 = vector.load %arg3[%c2_129, %c3_130, %c0_131, %c0_132] : memref<9x8x32x128xf32, #tpu.memory_space<vmem>>, vector<1x1x16x128xf32>
    %160 = vector.shape_cast %159 : vector<1x1x16x128xf32> to vector<16x128xf32>
    %161 = arith.mulf %160, %22 : vector<16x128xf32>
    %162 = arith.addf %158, %161 : vector<16x128xf32>
    %c3_133 = arith.constant 3 : index
    %c3_134 = arith.constant 3 : index
    %c0_135 = arith.constant 0 : index
    %c0_136 = arith.constant 0 : index
    %163 = vector.load %arg3[%c3_133, %c3_134, %c0_135, %c0_136] : memref<9x8x32x128xf32, #tpu.memory_space<vmem>>, vector<1x1x16x128xf32>
    %164 = vector.shape_cast %163 : vector<1x1x16x128xf32> to vector<16x128xf32>
    %165 = arith.mulf %164, %23 : vector<16x128xf32>
    %166 = arith.addf %162, %165 : vector<16x128xf32>
    %c4_137 = arith.constant 4 : index
    %c3_138 = arith.constant 3 : index
    %c0_139 = arith.constant 0 : index
    %c0_140 = arith.constant 0 : index
    %167 = vector.load %arg3[%c4_137, %c3_138, %c0_139, %c0_140] : memref<9x8x32x128xf32, #tpu.memory_space<vmem>>, vector<1x1x16x128xf32>
    %168 = vector.shape_cast %167 : vector<1x1x16x128xf32> to vector<16x128xf32>
    %169 = arith.mulf %168, %24 : vector<16x128xf32>
    %170 = arith.addf %166, %169 : vector<16x128xf32>
    %c5_141 = arith.constant 5 : index
    %c3_142 = arith.constant 3 : index
    %c0_143 = arith.constant 0 : index
    %c0_144 = arith.constant 0 : index
    %171 = vector.load %arg3[%c5_141, %c3_142, %c0_143, %c0_144] : memref<9x8x32x128xf32, #tpu.memory_space<vmem>>, vector<1x1x16x128xf32>
    %172 = vector.shape_cast %171 : vector<1x1x16x128xf32> to vector<16x128xf32>
    %173 = arith.mulf %172, %25 : vector<16x128xf32>
    %174 = arith.addf %170, %173 : vector<16x128xf32>
    %c6_145 = arith.constant 6 : index
    %c3_146 = arith.constant 3 : index
    %c0_147 = arith.constant 0 : index
    %c0_148 = arith.constant 0 : index
    %175 = vector.load %arg3[%c6_145, %c3_146, %c0_147, %c0_148] : memref<9x8x32x128xf32, #tpu.memory_space<vmem>>, vector<1x1x16x128xf32>
    %176 = vector.shape_cast %175 : vector<1x1x16x128xf32> to vector<16x128xf32>
    %177 = arith.mulf %176, %26 : vector<16x128xf32>
    %178 = arith.addf %174, %177 : vector<16x128xf32>
    %c7_149 = arith.constant 7 : index
    %c3_150 = arith.constant 3 : index
    %c0_151 = arith.constant 0 : index
    %c0_152 = arith.constant 0 : index
    %179 = vector.load %arg3[%c7_149, %c3_150, %c0_151, %c0_152] : memref<9x8x32x128xf32, #tpu.memory_space<vmem>>, vector<1x1x16x128xf32>
    %180 = vector.shape_cast %179 : vector<1x1x16x128xf32> to vector<16x128xf32>
    %181 = arith.mulf %180, %27 : vector<16x128xf32>
    %182 = arith.addf %178, %181 : vector<16x128xf32>
    %c8_153 = arith.constant 8 : index
    %c3_154 = arith.constant 3 : index
    %c0_155 = arith.constant 0 : index
    %c0_156 = arith.constant 0 : index
    %183 = vector.load %arg3[%c8_153, %c3_154, %c0_155, %c0_156] : memref<9x8x32x128xf32, #tpu.memory_space<vmem>>, vector<1x1x16x128xf32>
    %184 = vector.shape_cast %183 : vector<1x1x16x128xf32> to vector<16x128xf32>
    %185 = arith.mulf %184, %28 : vector<16x128xf32>
    %186 = arith.addf %182, %185 : vector<16x128xf32>
    %187 = arith.cmpf ogt, %186, %145 : vector<16x128xf32>
    %188 = arith.select %187, %186, %145 : vector<16x128xi1>, vector<16x128xf32>
    %c3_i32 = arith.constant 3 : i32
    %189 = vector.broadcast %c3_i32 : i32 to vector<16x128xi32>
    %190 = arith.select %187, %189, %147 : vector<16x128xi1>, vector<16x128xi32>
    %191 = arith.cmpf olt, %186, %149 : vector<16x128xf32>
    %192 = arith.select %191, %186, %149 : vector<16x128xi1>, vector<16x128xf32>
    %c3_i32_157 = arith.constant 3 : i32
    %193 = vector.broadcast %c3_i32_157 : i32 to vector<16x128xi32>
    %194 = arith.select %191, %193, %151 : vector<16x128xi1>, vector<16x128xi32>
    %c0_158 = arith.constant 0 : index
    %c4_159 = arith.constant 4 : index
    %c0_160 = arith.constant 0 : index
    %c0_161 = arith.constant 0 : index
    %195 = vector.load %arg3[%c0_158, %c4_159, %c0_160, %c0_161] : memref<9x8x32x128xf32, #tpu.memory_space<vmem>>, vector<1x1x16x128xf32>
    %196 = vector.shape_cast %195 : vector<1x1x16x128xf32> to vector<16x128xf32>
    %197 = arith.mulf %196, %20 : vector<16x128xf32>
    %c1_162 = arith.constant 1 : index
    %c4_163 = arith.constant 4 : index
    %c0_164 = arith.constant 0 : index
    %c0_165 = arith.constant 0 : index
    %198 = vector.load %arg3[%c1_162, %c4_163, %c0_164, %c0_165] : memref<9x8x32x128xf32, #tpu.memory_space<vmem>>, vector<1x1x16x128xf32>
    %199 = vector.shape_cast %198 : vector<1x1x16x128xf32> to vector<16x128xf32>
    %200 = arith.mulf %199, %21 : vector<16x128xf32>
    %201 = arith.addf %197, %200 : vector<16x128xf32>
    %c2_166 = arith.constant 2 : index
    %c4_167 = arith.constant 4 : index
    %c0_168 = arith.constant 0 : index
    %c0_169 = arith.constant 0 : index
    %202 = vector.load %arg3[%c2_166, %c4_167, %c0_168, %c0_169] : memref<9x8x32x128xf32, #tpu.memory_space<vmem>>, vector<1x1x16x128xf32>
    %203 = vector.shape_cast %202 : vector<1x1x16x128xf32> to vector<16x128xf32>
    %204 = arith.mulf %203, %22 : vector<16x128xf32>
    %205 = arith.addf %201, %204 : vector<16x128xf32>
    %c3_170 = arith.constant 3 : index
    %c4_171 = arith.constant 4 : index
    %c0_172 = arith.constant 0 : index
    %c0_173 = arith.constant 0 : index
    %206 = vector.load %arg3[%c3_170, %c4_171, %c0_172, %c0_173] : memref<9x8x32x128xf32, #tpu.memory_space<vmem>>, vector<1x1x16x128xf32>
    %207 = vector.shape_cast %206 : vector<1x1x16x128xf32> to vector<16x128xf32>
    %208 = arith.mulf %207, %23 : vector<16x128xf32>
    %209 = arith.addf %205, %208 : vector<16x128xf32>
    %c4_174 = arith.constant 4 : index
    %c4_175 = arith.constant 4 : index
    %c0_176 = arith.constant 0 : index
    %c0_177 = arith.constant 0 : index
    %210 = vector.load %arg3[%c4_174, %c4_175, %c0_176, %c0_177] : memref<9x8x32x128xf32, #tpu.memory_space<vmem>>, vector<1x1x16x128xf32>
    %211 = vector.shape_cast %210 : vector<1x1x16x128xf32> to vector<16x128xf32>
    %212 = arith.mulf %211, %24 : vector<16x128xf32>
    %213 = arith.addf %209, %212 : vector<16x128xf32>
    %c5_178 = arith.constant 5 : index
    %c4_179 = arith.constant 4 : index
    %c0_180 = arith.constant 0 : index
    %c0_181 = arith.constant 0 : index
    %214 = vector.load %arg3[%c5_178, %c4_179, %c0_180, %c0_181] : memref<9x8x32x128xf32, #tpu.memory_space<vmem>>, vector<1x1x16x128xf32>
    %215 = vector.shape_cast %214 : vector<1x1x16x128xf32> to vector<16x128xf32>
    %216 = arith.mulf %215, %25 : vector<16x128xf32>
    %217 = arith.addf %213, %216 : vector<16x128xf32>
    %c6_182 = arith.constant 6 : index
    %c4_183 = arith.constant 4 : index
    %c0_184 = arith.constant 0 : index
    %c0_185 = arith.constant 0 : index
    %218 = vector.load %arg3[%c6_182, %c4_183, %c0_184, %c0_185] : memref<9x8x32x128xf32, #tpu.memory_space<vmem>>, vector<1x1x16x128xf32>
    %219 = vector.shape_cast %218 : vector<1x1x16x128xf32> to vector<16x128xf32>
    %220 = arith.mulf %219, %26 : vector<16x128xf32>
    %221 = arith.addf %217, %220 : vector<16x128xf32>
    %c7_186 = arith.constant 7 : index
    %c4_187 = arith.constant 4 : index
    %c0_188 = arith.constant 0 : index
    %c0_189 = arith.constant 0 : index
    %222 = vector.load %arg3[%c7_186, %c4_187, %c0_188, %c0_189] : memref<9x8x32x128xf32, #tpu.memory_space<vmem>>, vector<1x1x16x128xf32>
    %223 = vector.shape_cast %222 : vector<1x1x16x128xf32> to vector<16x128xf32>
    %224 = arith.mulf %223, %27 : vector<16x128xf32>
    %225 = arith.addf %221, %224 : vector<16x128xf32>
    %c8_190 = arith.constant 8 : index
    %c4_191 = arith.constant 4 : index
    %c0_192 = arith.constant 0 : index
    %c0_193 = arith.constant 0 : index
    %226 = vector.load %arg3[%c8_190, %c4_191, %c0_192, %c0_193] : memref<9x8x32x128xf32, #tpu.memory_space<vmem>>, vector<1x1x16x128xf32>
    %227 = vector.shape_cast %226 : vector<1x1x16x128xf32> to vector<16x128xf32>
    %228 = arith.mulf %227, %28 : vector<16x128xf32>
    %229 = arith.addf %225, %228 : vector<16x128xf32>
    %230 = arith.cmpf ogt, %229, %188 : vector<16x128xf32>
    %231 = arith.select %230, %229, %188 : vector<16x128xi1>, vector<16x128xf32>
    %c4_i32 = arith.constant 4 : i32
    %232 = vector.broadcast %c4_i32 : i32 to vector<16x128xi32>
    %233 = arith.select %230, %232, %190 : vector<16x128xi1>, vector<16x128xi32>
    %234 = arith.cmpf olt, %229, %192 : vector<16x128xf32>
    %235 = arith.select %234, %229, %192 : vector<16x128xi1>, vector<16x128xf32>
    %c4_i32_194 = arith.constant 4 : i32
    %236 = vector.broadcast %c4_i32_194 : i32 to vector<16x128xi32>
    %237 = arith.select %234, %236, %194 : vector<16x128xi1>, vector<16x128xi32>
    %c0_195 = arith.constant 0 : index
    %c5_196 = arith.constant 5 : index
    %c0_197 = arith.constant 0 : index
    %c0_198 = arith.constant 0 : index
    %238 = vector.load %arg3[%c0_195, %c5_196, %c0_197, %c0_198] : memref<9x8x32x128xf32, #tpu.memory_space<vmem>>, vector<1x1x16x128xf32>
    %239 = vector.shape_cast %238 : vector<1x1x16x128xf32> to vector<16x128xf32>
    %240 = arith.mulf %239, %20 : vector<16x128xf32>
    %c1_199 = arith.constant 1 : index
    %c5_200 = arith.constant 5 : index
    %c0_201 = arith.constant 0 : index
    %c0_202 = arith.constant 0 : index
    %241 = vector.load %arg3[%c1_199, %c5_200, %c0_201, %c0_202] : memref<9x8x32x128xf32, #tpu.memory_space<vmem>>, vector<1x1x16x128xf32>
    %242 = vector.shape_cast %241 : vector<1x1x16x128xf32> to vector<16x128xf32>
    %243 = arith.mulf %242, %21 : vector<16x128xf32>
    %244 = arith.addf %240, %243 : vector<16x128xf32>
    %c2_203 = arith.constant 2 : index
    %c5_204 = arith.constant 5 : index
    %c0_205 = arith.constant 0 : index
    %c0_206 = arith.constant 0 : index
    %245 = vector.load %arg3[%c2_203, %c5_204, %c0_205, %c0_206] : memref<9x8x32x128xf32, #tpu.memory_space<vmem>>, vector<1x1x16x128xf32>
    %246 = vector.shape_cast %245 : vector<1x1x16x128xf32> to vector<16x128xf32>
    %247 = arith.mulf %246, %22 : vector<16x128xf32>
    %248 = arith.addf %244, %247 : vector<16x128xf32>
    %c3_207 = arith.constant 3 : index
    %c5_208 = arith.constant 5 : index
    %c0_209 = arith.constant 0 : index
    %c0_210 = arith.constant 0 : index
    %249 = vector.load %arg3[%c3_207, %c5_208, %c0_209, %c0_210] : memref<9x8x32x128xf32, #tpu.memory_space<vmem>>, vector<1x1x16x128xf32>
    %250 = vector.shape_cast %249 : vector<1x1x16x128xf32> to vector<16x128xf32>
    %251 = arith.mulf %250, %23 : vector<16x128xf32>
    %252 = arith.addf %248, %251 : vector<16x128xf32>
    %c4_211 = arith.constant 4 : index
    %c5_212 = arith.constant 5 : index
    %c0_213 = arith.constant 0 : index
    %c0_214 = arith.constant 0 : index
    %253 = vector.load %arg3[%c4_211, %c5_212, %c0_213, %c0_214] : memref<9x8x32x128xf32, #tpu.memory_space<vmem>>, vector<1x1x16x128xf32>
    %254 = vector.shape_cast %253 : vector<1x1x16x128xf32> to vector<16x128xf32>
    %255 = arith.mulf %254, %24 : vector<16x128xf32>
    %256 = arith.addf %252, %255 : vector<16x128xf32>
    %c5_215 = arith.constant 5 : index
    %c5_216 = arith.constant 5 : index
    %c0_217 = arith.constant 0 : index
    %c0_218 = arith.constant 0 : index
    %257 = vector.load %arg3[%c5_215, %c5_216, %c0_217, %c0_218] : memref<9x8x32x128xf32, #tpu.memory_space<vmem>>, vector<1x1x16x128xf32>
    %258 = vector.shape_cast %257 : vector<1x1x16x128xf32> to vector<16x128xf32>
    %259 = arith.mulf %258, %25 : vector<16x128xf32>
    %260 = arith.addf %256, %259 : vector<16x128xf32>
    %c6_219 = arith.constant 6 : index
    %c5_220 = arith.constant 5 : index
    %c0_221 = arith.constant 0 : index
    %c0_222 = arith.constant 0 : index
    %261 = vector.load %arg3[%c6_219, %c5_220, %c0_221, %c0_222] : memref<9x8x32x128xf32, #tpu.memory_space<vmem>>, vector<1x1x16x128xf32>
    %262 = vector.shape_cast %261 : vector<1x1x16x128xf32> to vector<16x128xf32>
    %263 = arith.mulf %262, %26 : vector<16x128xf32>
    %264 = arith.addf %260, %263 : vector<16x128xf32>
    %c7_223 = arith.constant 7 : index
    %c5_224 = arith.constant 5 : index
    %c0_225 = arith.constant 0 : index
    %c0_226 = arith.constant 0 : index
    %265 = vector.load %arg3[%c7_223, %c5_224, %c0_225, %c0_226] : memref<9x8x32x128xf32, #tpu.memory_space<vmem>>, vector<1x1x16x128xf32>
    %266 = vector.shape_cast %265 : vector<1x1x16x128xf32> to vector<16x128xf32>
    %267 = arith.mulf %266, %27 : vector<16x128xf32>
    %268 = arith.addf %264, %267 : vector<16x128xf32>
    %c8_227 = arith.constant 8 : index
    %c5_228 = arith.constant 5 : index
    %c0_229 = arith.constant 0 : index
    %c0_230 = arith.constant 0 : index
    %269 = vector.load %arg3[%c8_227, %c5_228, %c0_229, %c0_230] : memref<9x8x32x128xf32, #tpu.memory_space<vmem>>, vector<1x1x16x128xf32>
    %270 = vector.shape_cast %269 : vector<1x1x16x128xf32> to vector<16x128xf32>
    %271 = arith.mulf %270, %28 : vector<16x128xf32>
    %272 = arith.addf %268, %271 : vector<16x128xf32>
    %273 = arith.cmpf ogt, %272, %231 : vector<16x128xf32>
    %274 = arith.select %273, %272, %231 : vector<16x128xi1>, vector<16x128xf32>
    %c5_i32 = arith.constant 5 : i32
    %275 = vector.broadcast %c5_i32 : i32 to vector<16x128xi32>
    %276 = arith.select %273, %275, %233 : vector<16x128xi1>, vector<16x128xi32>
    %277 = arith.cmpf olt, %272, %235 : vector<16x128xf32>
    %278 = arith.select %277, %272, %235 : vector<16x128xi1>, vector<16x128xf32>
    %c5_i32_231 = arith.constant 5 : i32
    %279 = vector.broadcast %c5_i32_231 : i32 to vector<16x128xi32>
    %280 = arith.select %277, %279, %237 : vector<16x128xi1>, vector<16x128xi32>
    %c0_232 = arith.constant 0 : index
    %c6_233 = arith.constant 6 : index
    %c0_234 = arith.constant 0 : index
    %c0_235 = arith.constant 0 : index
    %281 = vector.load %arg3[%c0_232, %c6_233, %c0_234, %c0_235] : memref<9x8x32x128xf32, #tpu.memory_space<vmem>>, vector<1x1x16x128xf32>
    %282 = vector.shape_cast %281 : vector<1x1x16x128xf32> to vector<16x128xf32>
    %283 = arith.mulf %282, %20 : vector<16x128xf32>
    %c1_236 = arith.constant 1 : index
    %c6_237 = arith.constant 6 : index
    %c0_238 = arith.constant 0 : index
    %c0_239 = arith.constant 0 : index
    %284 = vector.load %arg3[%c1_236, %c6_237, %c0_238, %c0_239] : memref<9x8x32x128xf32, #tpu.memory_space<vmem>>, vector<1x1x16x128xf32>
    %285 = vector.shape_cast %284 : vector<1x1x16x128xf32> to vector<16x128xf32>
    %286 = arith.mulf %285, %21 : vector<16x128xf32>
    %287 = arith.addf %283, %286 : vector<16x128xf32>
    %c2_240 = arith.constant 2 : index
    %c6_241 = arith.constant 6 : index
    %c0_242 = arith.constant 0 : index
    %c0_243 = arith.constant 0 : index
    %288 = vector.load %arg3[%c2_240, %c6_241, %c0_242, %c0_243] : memref<9x8x32x128xf32, #tpu.memory_space<vmem>>, vector<1x1x16x128xf32>
    %289 = vector.shape_cast %288 : vector<1x1x16x128xf32> to vector<16x128xf32>
    %290 = arith.mulf %289, %22 : vector<16x128xf32>
    %291 = arith.addf %287, %290 : vector<16x128xf32>
    %c3_244 = arith.constant 3 : index
    %c6_245 = arith.constant 6 : index
    %c0_246 = arith.constant 0 : index
    %c0_247 = arith.constant 0 : index
    %292 = vector.load %arg3[%c3_244, %c6_245, %c0_246, %c0_247] : memref<9x8x32x128xf32, #tpu.memory_space<vmem>>, vector<1x1x16x128xf32>
    %293 = vector.shape_cast %292 : vector<1x1x16x128xf32> to vector<16x128xf32>
    %294 = arith.mulf %293, %23 : vector<16x128xf32>
    %295 = arith.addf %291, %294 : vector<16x128xf32>
    %c4_248 = arith.constant 4 : index
    %c6_249 = arith.constant 6 : index
    %c0_250 = arith.constant 0 : index
    %c0_251 = arith.constant 0 : index
    %296 = vector.load %arg3[%c4_248, %c6_249, %c0_250, %c0_251] : memref<9x8x32x128xf32, #tpu.memory_space<vmem>>, vector<1x1x16x128xf32>
    %297 = vector.shape_cast %296 : vector<1x1x16x128xf32> to vector<16x128xf32>
    %298 = arith.mulf %297, %24 : vector<16x128xf32>
    %299 = arith.addf %295, %298 : vector<16x128xf32>
    %c5_252 = arith.constant 5 : index
    %c6_253 = arith.constant 6 : index
    %c0_254 = arith.constant 0 : index
    %c0_255 = arith.constant 0 : index
    %300 = vector.load %arg3[%c5_252, %c6_253, %c0_254, %c0_255] : memref<9x8x32x128xf32, #tpu.memory_space<vmem>>, vector<1x1x16x128xf32>
    %301 = vector.shape_cast %300 : vector<1x1x16x128xf32> to vector<16x128xf32>
    %302 = arith.mulf %301, %25 : vector<16x128xf32>
    %303 = arith.addf %299, %302 : vector<16x128xf32>
    %c6_256 = arith.constant 6 : index
    %c6_257 = arith.constant 6 : index
    %c0_258 = arith.constant 0 : index
    %c0_259 = arith.constant 0 : index
    %304 = vector.load %arg3[%c6_256, %c6_257, %c0_258, %c0_259] : memref<9x8x32x128xf32, #tpu.memory_space<vmem>>, vector<1x1x16x128xf32>
    %305 = vector.shape_cast %304 : vector<1x1x16x128xf32> to vector<16x128xf32>
    %306 = arith.mulf %305, %26 : vector<16x128xf32>
    %307 = arith.addf %303, %306 : vector<16x128xf32>
    %c7_260 = arith.constant 7 : index
    %c6_261 = arith.constant 6 : index
    %c0_262 = arith.constant 0 : index
    %c0_263 = arith.constant 0 : index
    %308 = vector.load %arg3[%c7_260, %c6_261, %c0_262, %c0_263] : memref<9x8x32x128xf32, #tpu.memory_space<vmem>>, vector<1x1x16x128xf32>
    %309 = vector.shape_cast %308 : vector<1x1x16x128xf32> to vector<16x128xf32>
    %310 = arith.mulf %309, %27 : vector<16x128xf32>
    %311 = arith.addf %307, %310 : vector<16x128xf32>
    %c8_264 = arith.constant 8 : index
    %c6_265 = arith.constant 6 : index
    %c0_266 = arith.constant 0 : index
    %c0_267 = arith.constant 0 : index
    %312 = vector.load %arg3[%c8_264, %c6_265, %c0_266, %c0_267] : memref<9x8x32x128xf32, #tpu.memory_space<vmem>>, vector<1x1x16x128xf32>
    %313 = vector.shape_cast %312 : vector<1x1x16x128xf32> to vector<16x128xf32>
    %314 = arith.mulf %313, %28 : vector<16x128xf32>
    %315 = arith.addf %311, %314 : vector<16x128xf32>
    %316 = arith.cmpf ogt, %315, %274 : vector<16x128xf32>
    %317 = arith.select %316, %315, %274 : vector<16x128xi1>, vector<16x128xf32>
    %c6_i32 = arith.constant 6 : i32
    %318 = vector.broadcast %c6_i32 : i32 to vector<16x128xi32>
    %319 = arith.select %316, %318, %276 : vector<16x128xi1>, vector<16x128xi32>
    %320 = arith.cmpf olt, %315, %278 : vector<16x128xf32>
    %321 = arith.select %320, %315, %278 : vector<16x128xi1>, vector<16x128xf32>
    %c6_i32_268 = arith.constant 6 : i32
    %322 = vector.broadcast %c6_i32_268 : i32 to vector<16x128xi32>
    %323 = arith.select %320, %322, %280 : vector<16x128xi1>, vector<16x128xi32>
    %c0_269 = arith.constant 0 : index
    %c7_270 = arith.constant 7 : index
    %c0_271 = arith.constant 0 : index
    %c0_272 = arith.constant 0 : index
    %324 = vector.load %arg3[%c0_269, %c7_270, %c0_271, %c0_272] : memref<9x8x32x128xf32, #tpu.memory_space<vmem>>, vector<1x1x16x128xf32>
    %325 = vector.shape_cast %324 : vector<1x1x16x128xf32> to vector<16x128xf32>
    %326 = arith.mulf %325, %20 : vector<16x128xf32>
    %c1_273 = arith.constant 1 : index
    %c7_274 = arith.constant 7 : index
    %c0_275 = arith.constant 0 : index
    %c0_276 = arith.constant 0 : index
    %327 = vector.load %arg3[%c1_273, %c7_274, %c0_275, %c0_276] : memref<9x8x32x128xf32, #tpu.memory_space<vmem>>, vector<1x1x16x128xf32>
    %328 = vector.shape_cast %327 : vector<1x1x16x128xf32> to vector<16x128xf32>
    %329 = arith.mulf %328, %21 : vector<16x128xf32>
    %330 = arith.addf %326, %329 : vector<16x128xf32>
    %c2_277 = arith.constant 2 : index
    %c7_278 = arith.constant 7 : index
    %c0_279 = arith.constant 0 : index
    %c0_280 = arith.constant 0 : index
    %331 = vector.load %arg3[%c2_277, %c7_278, %c0_279, %c0_280] : memref<9x8x32x128xf32, #tpu.memory_space<vmem>>, vector<1x1x16x128xf32>
    %332 = vector.shape_cast %331 : vector<1x1x16x128xf32> to vector<16x128xf32>
    %333 = arith.mulf %332, %22 : vector<16x128xf32>
    %334 = arith.addf %330, %333 : vector<16x128xf32>
    %c3_281 = arith.constant 3 : index
    %c7_282 = arith.constant 7 : index
    %c0_283 = arith.constant 0 : index
    %c0_284 = arith.constant 0 : index
    %335 = vector.load %arg3[%c3_281, %c7_282, %c0_283, %c0_284] : memref<9x8x32x128xf32, #tpu.memory_space<vmem>>, vector<1x1x16x128xf32>
    %336 = vector.shape_cast %335 : vector<1x1x16x128xf32> to vector<16x128xf32>
    %337 = arith.mulf %336, %23 : vector<16x128xf32>
    %338 = arith.addf %334, %337 : vector<16x128xf32>
    %c4_285 = arith.constant 4 : index
    %c7_286 = arith.constant 7 : index
    %c0_287 = arith.constant 0 : index
    %c0_288 = arith.constant 0 : index
    %339 = vector.load %arg3[%c4_285, %c7_286, %c0_287, %c0_288] : memref<9x8x32x128xf32, #tpu.memory_space<vmem>>, vector<1x1x16x128xf32>
    %340 = vector.shape_cast %339 : vector<1x1x16x128xf32> to vector<16x128xf32>
    %341 = arith.mulf %340, %24 : vector<16x128xf32>
    %342 = arith.addf %338, %341 : vector<16x128xf32>
    %c5_289 = arith.constant 5 : index
    %c7_290 = arith.constant 7 : index
    %c0_291 = arith.constant 0 : index
    %c0_292 = arith.constant 0 : index
    %343 = vector.load %arg3[%c5_289, %c7_290, %c0_291, %c0_292] : memref<9x8x32x128xf32, #tpu.memory_space<vmem>>, vector<1x1x16x128xf32>
    %344 = vector.shape_cast %343 : vector<1x1x16x128xf32> to vector<16x128xf32>
    %345 = arith.mulf %344, %25 : vector<16x128xf32>
    %346 = arith.addf %342, %345 : vector<16x128xf32>
    %c6_293 = arith.constant 6 : index
    %c7_294 = arith.constant 7 : index
    %c0_295 = arith.constant 0 : index
    %c0_296 = arith.constant 0 : index
    %347 = vector.load %arg3[%c6_293, %c7_294, %c0_295, %c0_296] : memref<9x8x32x128xf32, #tpu.memory_space<vmem>>, vector<1x1x16x128xf32>
    %348 = vector.shape_cast %347 : vector<1x1x16x128xf32> to vector<16x128xf32>
    %349 = arith.mulf %348, %26 : vector<16x128xf32>
    %350 = arith.addf %346, %349 : vector<16x128xf32>
    %c7_297 = arith.constant 7 : index
    %c7_298 = arith.constant 7 : index
    %c0_299 = arith.constant 0 : index
    %c0_300 = arith.constant 0 : index
    %351 = vector.load %arg3[%c7_297, %c7_298, %c0_299, %c0_300] : memref<9x8x32x128xf32, #tpu.memory_space<vmem>>, vector<1x1x16x128xf32>
    %352 = vector.shape_cast %351 : vector<1x1x16x128xf32> to vector<16x128xf32>
    %353 = arith.mulf %352, %27 : vector<16x128xf32>
    %354 = arith.addf %350, %353 : vector<16x128xf32>
    %c8_301 = arith.constant 8 : index
    %c7_302 = arith.constant 7 : index
    %c0_303 = arith.constant 0 : index
    %c0_304 = arith.constant 0 : index
    %355 = vector.load %arg3[%c8_301, %c7_302, %c0_303, %c0_304] : memref<9x8x32x128xf32, #tpu.memory_space<vmem>>, vector<1x1x16x128xf32>
    %356 = vector.shape_cast %355 : vector<1x1x16x128xf32> to vector<16x128xf32>
    %357 = arith.mulf %356, %28 : vector<16x128xf32>
    %358 = arith.addf %354, %357 : vector<16x128xf32>
    %359 = arith.cmpf ogt, %358, %317 : vector<16x128xf32>
    %360 = arith.select %359, %358, %317 : vector<16x128xi1>, vector<16x128xf32>
    %c7_i32 = arith.constant 7 : i32
    %361 = vector.broadcast %c7_i32 : i32 to vector<16x128xi32>
    %362 = arith.select %359, %361, %319 : vector<16x128xi1>, vector<16x128xi32>
    %363 = arith.cmpf olt, %358, %321 : vector<16x128xf32>
    %c7_i32_305 = arith.constant 7 : i32
    %364 = vector.broadcast %c7_i32_305 : i32 to vector<16x128xi32>
    %365 = arith.select %363, %364, %323 : vector<16x128xi1>, vector<16x128xi32>
    %366 = arith.mulf %360, %19 : vector<16x128xf32>
    %c0_i32_306 = arith.constant 0 : i32
    %367 = vector.broadcast %c0_i32_306 : i32 to vector<16x128xi32>
    %368 = arith.cmpi eq, %362, %367 : vector<16x128xi32>
    %cst_307 = arith.constant 0.000000e+00 : f32
    %369 = vector.broadcast %cst_307 : f32 to vector<16x128xf32>
    %370 = arith.select %368, %366, %369 : vector<16x128xi1>, vector<16x128xf32>
    %cst_308 = arith.constant dense<0.000000e+00> : vector<16xf32>
    %371 = vector.multi_reduction <add>, %370, %cst_308 [1] : vector<16x128xf32> to vector<16xf32>
    %372 = vector.shape_cast %371 : vector<16xf32> to vector<16x1xf32>
    %c0_i32_309 = arith.constant 0 : i32
    %373 = vector.broadcast %c0_i32_309 : i32 to vector<16x128xi32>
    %374 = arith.cmpi eq, %365, %373 : vector<16x128xi32>
    %cst_310 = arith.constant 0.000000e+00 : f32
    %375 = vector.broadcast %cst_310 : f32 to vector<16x128xf32>
    %376 = arith.select %374, %19, %375 : vector<16x128xi1>, vector<16x128xf32>
    %cst_311 = arith.constant dense<0.000000e+00> : vector<16xf32>
    %377 = vector.multi_reduction <add>, %376, %cst_311 [1] : vector<16x128xf32> to vector<16xf32>
    %378 = vector.shape_cast %377 : vector<16xf32> to vector<16x1xf32>
    %c1_i32_312 = arith.constant 1 : i32
    %379 = vector.broadcast %c1_i32_312 : i32 to vector<16x128xi32>
    %380 = arith.cmpi eq, %362, %379 : vector<16x128xi32>
    %cst_313 = arith.constant 0.000000e+00 : f32
    %381 = vector.broadcast %cst_313 : f32 to vector<16x128xf32>
    %382 = arith.select %380, %366, %381 : vector<16x128xi1>, vector<16x128xf32>
    %cst_314 = arith.constant dense<0.000000e+00> : vector<16xf32>
    %383 = vector.multi_reduction <add>, %382, %cst_314 [1] : vector<16x128xf32> to vector<16xf32>
    %384 = vector.shape_cast %383 : vector<16xf32> to vector<16x1xf32>
    %c1_i32_315 = arith.constant 1 : i32
    %385 = vector.broadcast %c1_i32_315 : i32 to vector<16x128xi32>
    %386 = arith.cmpi eq, %365, %385 : vector<16x128xi32>
    %cst_316 = arith.constant 0.000000e+00 : f32
    %387 = vector.broadcast %cst_316 : f32 to vector<16x128xf32>
    %388 = arith.select %386, %19, %387 : vector<16x128xi1>, vector<16x128xf32>
    %cst_317 = arith.constant dense<0.000000e+00> : vector<16xf32>
    %389 = vector.multi_reduction <add>, %388, %cst_317 [1] : vector<16x128xf32> to vector<16xf32>
    %390 = vector.shape_cast %389 : vector<16xf32> to vector<16x1xf32>
    %c2_i32_318 = arith.constant 2 : i32
    %391 = vector.broadcast %c2_i32_318 : i32 to vector<16x128xi32>
    %392 = arith.cmpi eq, %362, %391 : vector<16x128xi32>
    %cst_319 = arith.constant 0.000000e+00 : f32
    %393 = vector.broadcast %cst_319 : f32 to vector<16x128xf32>
    %394 = arith.select %392, %366, %393 : vector<16x128xi1>, vector<16x128xf32>
    %cst_320 = arith.constant dense<0.000000e+00> : vector<16xf32>
    %395 = vector.multi_reduction <add>, %394, %cst_320 [1] : vector<16x128xf32> to vector<16xf32>
    %396 = vector.shape_cast %395 : vector<16xf32> to vector<16x1xf32>
    %c2_i32_321 = arith.constant 2 : i32
    %397 = vector.broadcast %c2_i32_321 : i32 to vector<16x128xi32>
    %398 = arith.cmpi eq, %365, %397 : vector<16x128xi32>
    %cst_322 = arith.constant 0.000000e+00 : f32
    %399 = vector.broadcast %cst_322 : f32 to vector<16x128xf32>
    %400 = arith.select %398, %19, %399 : vector<16x128xi1>, vector<16x128xf32>
    %cst_323 = arith.constant dense<0.000000e+00> : vector<16xf32>
    %401 = vector.multi_reduction <add>, %400, %cst_323 [1] : vector<16x128xf32> to vector<16xf32>
    %402 = vector.shape_cast %401 : vector<16xf32> to vector<16x1xf32>
    %c3_i32_324 = arith.constant 3 : i32
    %403 = vector.broadcast %c3_i32_324 : i32 to vector<16x128xi32>
    %404 = arith.cmpi eq, %362, %403 : vector<16x128xi32>
    %cst_325 = arith.constant 0.000000e+00 : f32
    %405 = vector.broadcast %cst_325 : f32 to vector<16x128xf32>
    %406 = arith.select %404, %366, %405 : vector<16x128xi1>, vector<16x128xf32>
    %cst_326 = arith.constant dense<0.000000e+00> : vector<16xf32>
    %407 = vector.multi_reduction <add>, %406, %cst_326 [1] : vector<16x128xf32> to vector<16xf32>
    %408 = vector.shape_cast %407 : vector<16xf32> to vector<16x1xf32>
    %c3_i32_327 = arith.constant 3 : i32
    %409 = vector.broadcast %c3_i32_327 : i32 to vector<16x128xi32>
    %410 = arith.cmpi eq, %365, %409 : vector<16x128xi32>
    %cst_328 = arith.constant 0.000000e+00 : f32
    %411 = vector.broadcast %cst_328 : f32 to vector<16x128xf32>
    %412 = arith.select %410, %19, %411 : vector<16x128xi1>, vector<16x128xf32>
    %cst_329 = arith.constant dense<0.000000e+00> : vector<16xf32>
    %413 = vector.multi_reduction <add>, %412, %cst_329 [1] : vector<16x128xf32> to vector<16xf32>
    %414 = vector.shape_cast %413 : vector<16xf32> to vector<16x1xf32>
    %c4_i32_330 = arith.constant 4 : i32
    %415 = vector.broadcast %c4_i32_330 : i32 to vector<16x128xi32>
    %416 = arith.cmpi eq, %362, %415 : vector<16x128xi32>
    %cst_331 = arith.constant 0.000000e+00 : f32
    %417 = vector.broadcast %cst_331 : f32 to vector<16x128xf32>
    %418 = arith.select %416, %366, %417 : vector<16x128xi1>, vector<16x128xf32>
    %cst_332 = arith.constant dense<0.000000e+00> : vector<16xf32>
    %419 = vector.multi_reduction <add>, %418, %cst_332 [1] : vector<16x128xf32> to vector<16xf32>
    %420 = vector.shape_cast %419 : vector<16xf32> to vector<16x1xf32>
    %c4_i32_333 = arith.constant 4 : i32
    %421 = vector.broadcast %c4_i32_333 : i32 to vector<16x128xi32>
    %422 = arith.cmpi eq, %365, %421 : vector<16x128xi32>
    %cst_334 = arith.constant 0.000000e+00 : f32
    %423 = vector.broadcast %cst_334 : f32 to vector<16x128xf32>
    %424 = arith.select %422, %19, %423 : vector<16x128xi1>, vector<16x128xf32>
    %cst_335 = arith.constant dense<0.000000e+00> : vector<16xf32>
    %425 = vector.multi_reduction <add>, %424, %cst_335 [1] : vector<16x128xf32> to vector<16xf32>
    %426 = vector.shape_cast %425 : vector<16xf32> to vector<16x1xf32>
    %c5_i32_336 = arith.constant 5 : i32
    %427 = vector.broadcast %c5_i32_336 : i32 to vector<16x128xi32>
    %428 = arith.cmpi eq, %362, %427 : vector<16x128xi32>
    %cst_337 = arith.constant 0.000000e+00 : f32
    %429 = vector.broadcast %cst_337 : f32 to vector<16x128xf32>
    %430 = arith.select %428, %366, %429 : vector<16x128xi1>, vector<16x128xf32>
    %cst_338 = arith.constant dense<0.000000e+00> : vector<16xf32>
    %431 = vector.multi_reduction <add>, %430, %cst_338 [1] : vector<16x128xf32> to vector<16xf32>
    %432 = vector.shape_cast %431 : vector<16xf32> to vector<16x1xf32>
    %c5_i32_339 = arith.constant 5 : i32
    %433 = vector.broadcast %c5_i32_339 : i32 to vector<16x128xi32>
    %434 = arith.cmpi eq, %365, %433 : vector<16x128xi32>
    %cst_340 = arith.constant 0.000000e+00 : f32
    %435 = vector.broadcast %cst_340 : f32 to vector<16x128xf32>
    %436 = arith.select %434, %19, %435 : vector<16x128xi1>, vector<16x128xf32>
    %cst_341 = arith.constant dense<0.000000e+00> : vector<16xf32>
    %437 = vector.multi_reduction <add>, %436, %cst_341 [1] : vector<16x128xf32> to vector<16xf32>
    %438 = vector.shape_cast %437 : vector<16xf32> to vector<16x1xf32>
    %c6_i32_342 = arith.constant 6 : i32
    %439 = vector.broadcast %c6_i32_342 : i32 to vector<16x128xi32>
    %440 = arith.cmpi eq, %362, %439 : vector<16x128xi32>
    %cst_343 = arith.constant 0.000000e+00 : f32
    %441 = vector.broadcast %cst_343 : f32 to vector<16x128xf32>
    %442 = arith.select %440, %366, %441 : vector<16x128xi1>, vector<16x128xf32>
    %cst_344 = arith.constant dense<0.000000e+00> : vector<16xf32>
    %443 = vector.multi_reduction <add>, %442, %cst_344 [1] : vector<16x128xf32> to vector<16xf32>
    %444 = vector.shape_cast %443 : vector<16xf32> to vector<16x1xf32>
    %c6_i32_345 = arith.constant 6 : i32
    %445 = vector.broadcast %c6_i32_345 : i32 to vector<16x128xi32>
    %446 = arith.cmpi eq, %365, %445 : vector<16x128xi32>
    %cst_346 = arith.constant 0.000000e+00 : f32
    %447 = vector.broadcast %cst_346 : f32 to vector<16x128xf32>
    %448 = arith.select %446, %19, %447 : vector<16x128xi1>, vector<16x128xf32>
    %cst_347 = arith.constant dense<0.000000e+00> : vector<16xf32>
    %449 = vector.multi_reduction <add>, %448, %cst_347 [1] : vector<16x128xf32> to vector<16xf32>
    %450 = vector.shape_cast %449 : vector<16xf32> to vector<16x1xf32>
    %c7_i32_348 = arith.constant 7 : i32
    %451 = vector.broadcast %c7_i32_348 : i32 to vector<16x128xi32>
    %452 = arith.cmpi eq, %362, %451 : vector<16x128xi32>
    %cst_349 = arith.constant 0.000000e+00 : f32
    %453 = vector.broadcast %cst_349 : f32 to vector<16x128xf32>
    %454 = arith.select %452, %366, %453 : vector<16x128xi1>, vector<16x128xf32>
    %cst_350 = arith.constant dense<0.000000e+00> : vector<16xf32>
    %455 = vector.multi_reduction <add>, %454, %cst_350 [1] : vector<16x128xf32> to vector<16xf32>
    %456 = vector.shape_cast %455 : vector<16xf32> to vector<16x1xf32>
    %c7_i32_351 = arith.constant 7 : i32
    %457 = vector.broadcast %c7_i32_351 : i32 to vector<16x128xi32>
    %458 = arith.cmpi eq, %365, %457 : vector<16x128xi32>
    %cst_352 = arith.constant 0.000000e+00 : f32
    %459 = vector.broadcast %cst_352 : f32 to vector<16x128xf32>
    %460 = arith.select %458, %19, %459 : vector<16x128xi1>, vector<16x128xf32>
    %cst_353 = arith.constant dense<0.000000e+00> : vector<16xf32>
    %461 = vector.multi_reduction <add>, %460, %cst_353 [1] : vector<16x128xf32> to vector<16xf32>
    %462 = vector.shape_cast %461 : vector<16xf32> to vector<16x1xf32>
    %463 = tpu.concatenate %372, %384, %396, %408, %420, %432, %444, %456 in 1 : vector<16x1xf32>, vector<16x1xf32>, vector<16x1xf32>, vector<16x1xf32>, vector<16x1xf32>, vector<16x1xf32>, vector<16x1xf32>, vector<16x1xf32> -> vector<16x8xf32>
    %464 = tpu.concatenate %378, %390, %402, %414, %426, %438, %450, %462 in 1 : vector<16x1xf32>, vector<16x1xf32>, vector<16x1xf32>, vector<16x1xf32>, vector<16x1xf32>, vector<16x1xf32>, vector<16x1xf32>, vector<16x1xf32> -> vector<16x8xf32>
    %465 = arith.addf %9, %463 : vector<16x8xf32>
    %c0_354 = arith.constant 0 : index
    %c0_355 = arith.constant 0 : index
    %c0_356 = arith.constant 0 : index
    %466 = vector.load %arg4[%c0_354, %c0_355, %c0_356] : memref<1x32x16xf32, #tpu.memory_space<vmem>>, vector<1x16x8xf32>
    %467 = vector.shape_cast %466 : vector<1x16x8xf32> to vector<16x8xf32>
    %468 = vector.shape_cast %465 : vector<16x8xf32> to vector<1x16x8xf32>
    tpu.vector_store %arg4[%c0_354, %c0_355, %c0_356], %468 {strides = array<i32>} : memref<1x32x16xf32, #tpu.memory_space<vmem>>, vector<1x16x8xf32>,
    %469 = arith.addf %10, %464 : vector<16x8xf32>
    %c0_357 = arith.constant 0 : index
    %c0_358 = arith.constant 0 : index
    %c8_359 = arith.constant 8 : index
    %470 = vector.load %arg4[%c0_357, %c0_358, %c8_359] : memref<1x32x16xf32, #tpu.memory_space<vmem>>, vector<1x16x8xf32>
    %471 = vector.shape_cast %470 : vector<1x16x8xf32> to vector<16x8xf32>
    %472 = vector.shape_cast %469 : vector<16x8xf32> to vector<1x16x8xf32>
    tpu.vector_store %arg4[%c0_357, %c0_358, %c8_359], %472 {strides = array<i32>} : memref<1x32x16xf32, #tpu.memory_space<vmem>>, vector<1x16x8xf32>,
    %473 = tpu.iota {dimensions = array<i32: 1>} : vector<16x128xi32>
    %c0_i32_360 = arith.constant 0 : i32
    %474 = vector.broadcast %c0_i32_360 : i32 to vector<16x128xi32>
    %475 = arith.addi %474, %473 : vector<16x128xi32>
    %476 = vector.broadcast %8 : i32 to vector<16x128xi32>
    %477 = arith.cmpi slt, %475, %476 : vector<16x128xi32>
    %478 = arith.extui %477 : vector<16x128xi1> to vector<16x128xi32>
    %479 = arith.sitofp %478 : vector<16x128xi32> to vector<16x128xf32>
    %c16 = arith.constant 16 : index
    %c124_361 = arith.constant 124 : index
    %480 = vector.load %arg5[%c16, %c124_361] : memref<32x384xf32, #tpu.memory_space<vmem>>, vector<16x128xf32>
    %c16_362 = arith.constant 16 : index
    %c125_363 = arith.constant 125 : index
    %481 = vector.load %arg5[%c16_362, %c125_363] : memref<32x384xf32, #tpu.memory_space<vmem>>, vector<16x128xf32>
    %c16_364 = arith.constant 16 : index
    %c126_365 = arith.constant 126 : index
    %482 = vector.load %arg5[%c16_364, %c126_365] : memref<32x384xf32, #tpu.memory_space<vmem>>, vector<16x128xf32>
    %c16_366 = arith.constant 16 : index
    %c127_367 = arith.constant 127 : index
    %483 = vector.load %arg5[%c16_366, %c127_367] : memref<32x384xf32, #tpu.memory_space<vmem>>, vector<16x128xf32>
    %c16_368 = arith.constant 16 : index
    %c128_369 = arith.constant 128 : index
    %484 = vector.load %arg5[%c16_368, %c128_369] : memref<32x384xf32, #tpu.memory_space<vmem>>, vector<16x128xf32>
    %c16_370 = arith.constant 16 : index
    %c129_371 = arith.constant 129 : index
    %485 = vector.load %arg5[%c16_370, %c129_371] : memref<32x384xf32, #tpu.memory_space<vmem>>, vector<16x128xf32>
    %c16_372 = arith.constant 16 : index
    %c130_373 = arith.constant 130 : index
    %486 = vector.load %arg5[%c16_372, %c130_373] : memref<32x384xf32, #tpu.memory_space<vmem>>, vector<16x128xf32>
    %c16_374 = arith.constant 16 : index
    %c131_375 = arith.constant 131 : index
    %487 = vector.load %arg5[%c16_374, %c131_375] : memref<32x384xf32, #tpu.memory_space<vmem>>, vector<16x128xf32>
    %c16_376 = arith.constant 16 : index
    %c132_377 = arith.constant 132 : index
    %488 = vector.load %arg5[%c16_376, %c132_377] : memref<32x384xf32, #tpu.memory_space<vmem>>, vector<16x128xf32>
    %c0_378 = arith.constant 0 : index
    %c0_379 = arith.constant 0 : index
    %c16_380 = arith.constant 16 : index
    %c0_381 = arith.constant 0 : index
    %489 = vector.load %arg3[%c0_378, %c0_379, %c16_380, %c0_381] : memref<9x8x32x128xf32, #tpu.memory_space<vmem>>, vector<1x1x16x128xf32>
    %490 = vector.shape_cast %489 : vector<1x1x16x128xf32> to vector<16x128xf32>
    %491 = arith.mulf %490, %480 : vector<16x128xf32>
    %c1_382 = arith.constant 1 : index
    %c0_383 = arith.constant 0 : index
    %c16_384 = arith.constant 16 : index
    %c0_385 = arith.constant 0 : index
    %492 = vector.load %arg3[%c1_382, %c0_383, %c16_384, %c0_385] : memref<9x8x32x128xf32, #tpu.memory_space<vmem>>, vector<1x1x16x128xf32>
    %493 = vector.shape_cast %492 : vector<1x1x16x128xf32> to vector<16x128xf32>
    %494 = arith.mulf %493, %481 : vector<16x128xf32>
    %495 = arith.addf %491, %494 : vector<16x128xf32>
    %c2_386 = arith.constant 2 : index
    %c0_387 = arith.constant 0 : index
    %c16_388 = arith.constant 16 : index
    %c0_389 = arith.constant 0 : index
    %496 = vector.load %arg3[%c2_386, %c0_387, %c16_388, %c0_389] : memref<9x8x32x128xf32, #tpu.memory_space<vmem>>, vector<1x1x16x128xf32>
    %497 = vector.shape_cast %496 : vector<1x1x16x128xf32> to vector<16x128xf32>
    %498 = arith.mulf %497, %482 : vector<16x128xf32>
    %499 = arith.addf %495, %498 : vector<16x128xf32>
    %c3_390 = arith.constant 3 : index
    %c0_391 = arith.constant 0 : index
    %c16_392 = arith.constant 16 : index
    %c0_393 = arith.constant 0 : index
    %500 = vector.load %arg3[%c3_390, %c0_391, %c16_392, %c0_393] : memref<9x8x32x128xf32, #tpu.memory_space<vmem>>, vector<1x1x16x128xf32>
    %501 = vector.shape_cast %500 : vector<1x1x16x128xf32> to vector<16x128xf32>
    %502 = arith.mulf %501, %483 : vector<16x128xf32>
    %503 = arith.addf %499, %502 : vector<16x128xf32>
    %c4_394 = arith.constant 4 : index
    %c0_395 = arith.constant 0 : index
    %c16_396 = arith.constant 16 : index
    %c0_397 = arith.constant 0 : index
    %504 = vector.load %arg3[%c4_394, %c0_395, %c16_396, %c0_397] : memref<9x8x32x128xf32, #tpu.memory_space<vmem>>, vector<1x1x16x128xf32>
    %505 = vector.shape_cast %504 : vector<1x1x16x128xf32> to vector<16x128xf32>
    %506 = arith.mulf %505, %484 : vector<16x128xf32>
    %507 = arith.addf %503, %506 : vector<16x128xf32>
    %c5_398 = arith.constant 5 : index
    %c0_399 = arith.constant 0 : index
    %c16_400 = arith.constant 16 : index
    %c0_401 = arith.constant 0 : index
    %508 = vector.load %arg3[%c5_398, %c0_399, %c16_400, %c0_401] : memref<9x8x32x128xf32, #tpu.memory_space<vmem>>, vector<1x1x16x128xf32>
    %509 = vector.shape_cast %508 : vector<1x1x16x128xf32> to vector<16x128xf32>
    %510 = arith.mulf %509, %485 : vector<16x128xf32>
    %511 = arith.addf %507, %510 : vector<16x128xf32>
    %c6_402 = arith.constant 6 : index
    %c0_403 = arith.constant 0 : index
    %c16_404 = arith.constant 16 : index
    %c0_405 = arith.constant 0 : index
    %512 = vector.load %arg3[%c6_402, %c0_403, %c16_404, %c0_405] : memref<9x8x32x128xf32, #tpu.memory_space<vmem>>, vector<1x1x16x128xf32>
    %513 = vector.shape_cast %512 : vector<1x1x16x128xf32> to vector<16x128xf32>
    %514 = arith.mulf %513, %486 : vector<16x128xf32>
    %515 = arith.addf %511, %514 : vector<16x128xf32>
    %c7_406 = arith.constant 7 : index
    %c0_407 = arith.constant 0 : index
    %c16_408 = arith.constant 16 : index
    %c0_409 = arith.constant 0 : index
    %516 = vector.load %arg3[%c7_406, %c0_407, %c16_408, %c0_409] : memref<9x8x32x128xf32, #tpu.memory_space<vmem>>, vector<1x1x16x128xf32>
    %517 = vector.shape_cast %516 : vector<1x1x16x128xf32> to vector<16x128xf32>
    %518 = arith.mulf %517, %487 : vector<16x128xf32>
    %519 = arith.addf %515, %518 : vector<16x128xf32>
    %c8_410 = arith.constant 8 : index
    %c0_411 = arith.constant 0 : index
    %c16_412 = arith.constant 16 : index
    %c0_413 = arith.constant 0 : index
    %520 = vector.load %arg3[%c8_410, %c0_411, %c16_412, %c0_413] : memref<9x8x32x128xf32, #tpu.memory_space<vmem>>, vector<1x1x16x128xf32>
    %521 = vector.shape_cast %520 : vector<1x1x16x128xf32> to vector<16x128xf32>
    %522 = arith.mulf %521, %488 : vector<16x128xf32>
    %523 = arith.addf %519, %522 : vector<16x128xf32>
    %c0_i32_414 = arith.constant 0 : i32
    %524 = vector.broadcast %c0_i32_414 : i32 to vector<16x128xi32>
    %c0_i32_415 = arith.constant 0 : i32
    %525 = vector.broadcast %c0_i32_415 : i32 to vector<16x128xi32>
    %c0_416 = arith.constant 0 : index
    %c1_417 = arith.constant 1 : index
    %c16_418 = arith.constant 16 : index
    %c0_419 = arith.constant 0 : index
    %526 = vector.load %arg3[%c0_416, %c1_417, %c16_418, %c0_419] : memref<9x8x32x128xf32, #tpu.memory_space<vmem>>, vector<1x1x16x128xf32>
    %527 = vector.shape_cast %526 : vector<1x1x16x128xf32> to vector<16x128xf32>
    %528 = arith.mulf %527, %480 : vector<16x128xf32>
    %c1_420 = arith.constant 1 : index
    %c1_421 = arith.constant 1 : index
    %c16_422 = arith.constant 16 : index
    %c0_423 = arith.constant 0 : index
    %529 = vector.load %arg3[%c1_420, %c1_421, %c16_422, %c0_423] : memref<9x8x32x128xf32, #tpu.memory_space<vmem>>, vector<1x1x16x128xf32>
    %530 = vector.shape_cast %529 : vector<1x1x16x128xf32> to vector<16x128xf32>
    %531 = arith.mulf %530, %481 : vector<16x128xf32>
    %532 = arith.addf %528, %531 : vector<16x128xf32>
    %c2_424 = arith.constant 2 : index
    %c1_425 = arith.constant 1 : index
    %c16_426 = arith.constant 16 : index
    %c0_427 = arith.constant 0 : index
    %533 = vector.load %arg3[%c2_424, %c1_425, %c16_426, %c0_427] : memref<9x8x32x128xf32, #tpu.memory_space<vmem>>, vector<1x1x16x128xf32>
    %534 = vector.shape_cast %533 : vector<1x1x16x128xf32> to vector<16x128xf32>
    %535 = arith.mulf %534, %482 : vector<16x128xf32>
    %536 = arith.addf %532, %535 : vector<16x128xf32>
    %c3_428 = arith.constant 3 : index
    %c1_429 = arith.constant 1 : index
    %c16_430 = arith.constant 16 : index
    %c0_431 = arith.constant 0 : index
    %537 = vector.load %arg3[%c3_428, %c1_429, %c16_430, %c0_431] : memref<9x8x32x128xf32, #tpu.memory_space<vmem>>, vector<1x1x16x128xf32>
    %538 = vector.shape_cast %537 : vector<1x1x16x128xf32> to vector<16x128xf32>
    %539 = arith.mulf %538, %483 : vector<16x128xf32>
    %540 = arith.addf %536, %539 : vector<16x128xf32>
    %c4_432 = arith.constant 4 : index
    %c1_433 = arith.constant 1 : index
    %c16_434 = arith.constant 16 : index
    %c0_435 = arith.constant 0 : index
    %541 = vector.load %arg3[%c4_432, %c1_433, %c16_434, %c0_435] : memref<9x8x32x128xf32, #tpu.memory_space<vmem>>, vector<1x1x16x128xf32>
    %542 = vector.shape_cast %541 : vector<1x1x16x128xf32> to vector<16x128xf32>
    %543 = arith.mulf %542, %484 : vector<16x128xf32>
    %544 = arith.addf %540, %543 : vector<16x128xf32>
    %c5_436 = arith.constant 5 : index
    %c1_437 = arith.constant 1 : index
    %c16_438 = arith.constant 16 : index
    %c0_439 = arith.constant 0 : index
    %545 = vector.load %arg3[%c5_436, %c1_437, %c16_438, %c0_439] : memref<9x8x32x128xf32, #tpu.memory_space<vmem>>, vector<1x1x16x128xf32>
    %546 = vector.shape_cast %545 : vector<1x1x16x128xf32> to vector<16x128xf32>
    %547 = arith.mulf %546, %485 : vector<16x128xf32>
    %548 = arith.addf %544, %547 : vector<16x128xf32>
    %c6_440 = arith.constant 6 : index
    %c1_441 = arith.constant 1 : index
    %c16_442 = arith.constant 16 : index
    %c0_443 = arith.constant 0 : index
    %549 = vector.load %arg3[%c6_440, %c1_441, %c16_442, %c0_443] : memref<9x8x32x128xf32, #tpu.memory_space<vmem>>, vector<1x1x16x128xf32>
    %550 = vector.shape_cast %549 : vector<1x1x16x128xf32> to vector<16x128xf32>
    %551 = arith.mulf %550, %486 : vector<16x128xf32>
    %552 = arith.addf %548, %551 : vector<16x128xf32>
    %c7_444 = arith.constant 7 : index
    %c1_445 = arith.constant 1 : index
    %c16_446 = arith.constant 16 : index
    %c0_447 = arith.constant 0 : index
    %553 = vector.load %arg3[%c7_444, %c1_445, %c16_446, %c0_447] : memref<9x8x32x128xf32, #tpu.memory_space<vmem>>, vector<1x1x16x128xf32>
    %554 = vector.shape_cast %553 : vector<1x1x16x128xf32> to vector<16x128xf32>
    %555 = arith.mulf %554, %487 : vector<16x128xf32>
    %556 = arith.addf %552, %555 : vector<16x128xf32>
    %c8_448 = arith.constant 8 : index
    %c1_449 = arith.constant 1 : index
    %c16_450 = arith.constant 16 : index
    %c0_451 = arith.constant 0 : index
    %557 = vector.load %arg3[%c8_448, %c1_449, %c16_450, %c0_451] : memref<9x8x32x128xf32, #tpu.memory_space<vmem>>, vector<1x1x16x128xf32>
    %558 = vector.shape_cast %557 : vector<1x1x16x128xf32> to vector<16x128xf32>
    %559 = arith.mulf %558, %488 : vector<16x128xf32>
    %560 = arith.addf %556, %559 : vector<16x128xf32>
    %561 = arith.cmpf ogt, %560, %523 : vector<16x128xf32>
    %562 = arith.select %561, %560, %523 : vector<16x128xi1>, vector<16x128xf32>
    %c1_i32_452 = arith.constant 1 : i32
    %563 = vector.broadcast %c1_i32_452 : i32 to vector<16x128xi32>
    %564 = arith.select %561, %563, %524 : vector<16x128xi1>, vector<16x128xi32>
    %565 = arith.cmpf olt, %560, %523 : vector<16x128xf32>
    %566 = arith.select %565, %560, %523 : vector<16x128xi1>, vector<16x128xf32>
    %c1_i32_453 = arith.constant 1 : i32
    %567 = vector.broadcast %c1_i32_453 : i32 to vector<16x128xi32>
    %568 = arith.select %565, %567, %525 : vector<16x128xi1>, vector<16x128xi32>
    %c0_454 = arith.constant 0 : index
    %c2_455 = arith.constant 2 : index
    %c16_456 = arith.constant 16 : index
    %c0_457 = arith.constant 0 : index
    %569 = vector.load %arg3[%c0_454, %c2_455, %c16_456, %c0_457] : memref<9x8x32x128xf32, #tpu.memory_space<vmem>>, vector<1x1x16x128xf32>
    %570 = vector.shape_cast %569 : vector<1x1x16x128xf32> to vector<16x128xf32>
    %571 = arith.mulf %570, %480 : vector<16x128xf32>
    %c1_458 = arith.constant 1 : index
    %c2_459 = arith.constant 2 : index
    %c16_460 = arith.constant 16 : index
    %c0_461 = arith.constant 0 : index
    %572 = vector.load %arg3[%c1_458, %c2_459, %c16_460, %c0_461] : memref<9x8x32x128xf32, #tpu.memory_space<vmem>>, vector<1x1x16x128xf32>
    %573 = vector.shape_cast %572 : vector<1x1x16x128xf32> to vector<16x128xf32>
    %574 = arith.mulf %573, %481 : vector<16x128xf32>
    %575 = arith.addf %571, %574 : vector<16x128xf32>
    %c2_462 = arith.constant 2 : index
    %c2_463 = arith.constant 2 : index
    %c16_464 = arith.constant 16 : index
    %c0_465 = arith.constant 0 : index
    %576 = vector.load %arg3[%c2_462, %c2_463, %c16_464, %c0_465] : memref<9x8x32x128xf32, #tpu.memory_space<vmem>>, vector<1x1x16x128xf32>
    %577 = vector.shape_cast %576 : vector<1x1x16x128xf32> to vector<16x128xf32>
    %578 = arith.mulf %577, %482 : vector<16x128xf32>
    %579 = arith.addf %575, %578 : vector<16x128xf32>
    %c3_466 = arith.constant 3 : index
    %c2_467 = arith.constant 2 : index
    %c16_468 = arith.constant 16 : index
    %c0_469 = arith.constant 0 : index
    %580 = vector.load %arg3[%c3_466, %c2_467, %c16_468, %c0_469] : memref<9x8x32x128xf32, #tpu.memory_space<vmem>>, vector<1x1x16x128xf32>
    %581 = vector.shape_cast %580 : vector<1x1x16x128xf32> to vector<16x128xf32>
    %582 = arith.mulf %581, %483 : vector<16x128xf32>
    %583 = arith.addf %579, %582 : vector<16x128xf32>
    %c4_470 = arith.constant 4 : index
    %c2_471 = arith.constant 2 : index
    %c16_472 = arith.constant 16 : index
    %c0_473 = arith.constant 0 : index
    %584 = vector.load %arg3[%c4_470, %c2_471, %c16_472, %c0_473] : memref<9x8x32x128xf32, #tpu.memory_space<vmem>>, vector<1x1x16x128xf32>
    %585 = vector.shape_cast %584 : vector<1x1x16x128xf32> to vector<16x128xf32>
    %586 = arith.mulf %585, %484 : vector<16x128xf32>
    %587 = arith.addf %583, %586 : vector<16x128xf32>
    %c5_474 = arith.constant 5 : index
    %c2_475 = arith.constant 2 : index
    %c16_476 = arith.constant 16 : index
    %c0_477 = arith.constant 0 : index
    %588 = vector.load %arg3[%c5_474, %c2_475, %c16_476, %c0_477] : memref<9x8x32x128xf32, #tpu.memory_space<vmem>>, vector<1x1x16x128xf32>
    %589 = vector.shape_cast %588 : vector<1x1x16x128xf32> to vector<16x128xf32>
    %590 = arith.mulf %589, %485 : vector<16x128xf32>
    %591 = arith.addf %587, %590 : vector<16x128xf32>
    %c6_478 = arith.constant 6 : index
    %c2_479 = arith.constant 2 : index
    %c16_480 = arith.constant 16 : index
    %c0_481 = arith.constant 0 : index
    %592 = vector.load %arg3[%c6_478, %c2_479, %c16_480, %c0_481] : memref<9x8x32x128xf32, #tpu.memory_space<vmem>>, vector<1x1x16x128xf32>
    %593 = vector.shape_cast %592 : vector<1x1x16x128xf32> to vector<16x128xf32>
    %594 = arith.mulf %593, %486 : vector<16x128xf32>
    %595 = arith.addf %591, %594 : vector<16x128xf32>
    %c7_482 = arith.constant 7 : index
    %c2_483 = arith.constant 2 : index
    %c16_484 = arith.constant 16 : index
    %c0_485 = arith.constant 0 : index
    %596 = vector.load %arg3[%c7_482, %c2_483, %c16_484, %c0_485] : memref<9x8x32x128xf32, #tpu.memory_space<vmem>>, vector<1x1x16x128xf32>
    %597 = vector.shape_cast %596 : vector<1x1x16x128xf32> to vector<16x128xf32>
    %598 = arith.mulf %597, %487 : vector<16x128xf32>
    %599 = arith.addf %595, %598 : vector<16x128xf32>
    %c8_486 = arith.constant 8 : index
    %c2_487 = arith.constant 2 : index
    %c16_488 = arith.constant 16 : index
    %c0_489 = arith.constant 0 : index
    %600 = vector.load %arg3[%c8_486, %c2_487, %c16_488, %c0_489] : memref<9x8x32x128xf32, #tpu.memory_space<vmem>>, vector<1x1x16x128xf32>
    %601 = vector.shape_cast %600 : vector<1x1x16x128xf32> to vector<16x128xf32>
    %602 = arith.mulf %601, %488 : vector<16x128xf32>
    %603 = arith.addf %599, %602 : vector<16x128xf32>
    %604 = arith.cmpf ogt, %603, %562 : vector<16x128xf32>
    %605 = arith.select %604, %603, %562 : vector<16x128xi1>, vector<16x128xf32>
    %c2_i32_490 = arith.constant 2 : i32
    %606 = vector.broadcast %c2_i32_490 : i32 to vector<16x128xi32>
    %607 = arith.select %604, %606, %564 : vector<16x128xi1>, vector<16x128xi32>
    %608 = arith.cmpf olt, %603, %566 : vector<16x128xf32>
    %609 = arith.select %608, %603, %566 : vector<16x128xi1>, vector<16x128xf32>
    %c2_i32_491 = arith.constant 2 : i32
    %610 = vector.broadcast %c2_i32_491 : i32 to vector<16x128xi32>
    %611 = arith.select %608, %610, %568 : vector<16x128xi1>, vector<16x128xi32>
    %c0_492 = arith.constant 0 : index
    %c3_493 = arith.constant 3 : index
    %c16_494 = arith.constant 16 : index
    %c0_495 = arith.constant 0 : index
    %612 = vector.load %arg3[%c0_492, %c3_493, %c16_494, %c0_495] : memref<9x8x32x128xf32, #tpu.memory_space<vmem>>, vector<1x1x16x128xf32>
    %613 = vector.shape_cast %612 : vector<1x1x16x128xf32> to vector<16x128xf32>
    %614 = arith.mulf %613, %480 : vector<16x128xf32>
    %c1_496 = arith.constant 1 : index
    %c3_497 = arith.constant 3 : index
    %c16_498 = arith.constant 16 : index
    %c0_499 = arith.constant 0 : index
    %615 = vector.load %arg3[%c1_496, %c3_497, %c16_498, %c0_499] : memref<9x8x32x128xf32, #tpu.memory_space<vmem>>, vector<1x1x16x128xf32>
    %616 = vector.shape_cast %615 : vector<1x1x16x128xf32> to vector<16x128xf32>
    %617 = arith.mulf %616, %481 : vector<16x128xf32>
    %618 = arith.addf %614, %617 : vector<16x128xf32>
    %c2_500 = arith.constant 2 : index
    %c3_501 = arith.constant 3 : index
    %c16_502 = arith.constant 16 : index
    %c0_503 = arith.constant 0 : index
    %619 = vector.load %arg3[%c2_500, %c3_501, %c16_502, %c0_503] : memref<9x8x32x128xf32, #tpu.memory_space<vmem>>, vector<1x1x16x128xf32>
    %620 = vector.shape_cast %619 : vector<1x1x16x128xf32> to vector<16x128xf32>
    %621 = arith.mulf %620, %482 : vector<16x128xf32>
    %622 = arith.addf %618, %621 : vector<16x128xf32>
    %c3_504 = arith.constant 3 : index
    %c3_505 = arith.constant 3 : index
    %c16_506 = arith.constant 16 : index
    %c0_507 = arith.constant 0 : index
    %623 = vector.load %arg3[%c3_504, %c3_505, %c16_506, %c0_507] : memref<9x8x32x128xf32, #tpu.memory_space<vmem>>, vector<1x1x16x128xf32>
    %624 = vector.shape_cast %623 : vector<1x1x16x128xf32> to vector<16x128xf32>
    %625 = arith.mulf %624, %483 : vector<16x128xf32>
    %626 = arith.addf %622, %625 : vector<16x128xf32>
    %c4_508 = arith.constant 4 : index
    %c3_509 = arith.constant 3 : index
    %c16_510 = arith.constant 16 : index
    %c0_511 = arith.constant 0 : index
    %627 = vector.load %arg3[%c4_508, %c3_509, %c16_510, %c0_511] : memref<9x8x32x128xf32, #tpu.memory_space<vmem>>, vector<1x1x16x128xf32>
    %628 = vector.shape_cast %627 : vector<1x1x16x128xf32> to vector<16x128xf32>
    %629 = arith.mulf %628, %484 : vector<16x128xf32>
    %630 = arith.addf %626, %629 : vector<16x128xf32>
    %c5_512 = arith.constant 5 : index
    %c3_513 = arith.constant 3 : index
    %c16_514 = arith.constant 16 : index
    %c0_515 = arith.constant 0 : index
    %631 = vector.load %arg3[%c5_512, %c3_513, %c16_514, %c0_515] : memref<9x8x32x128xf32, #tpu.memory_space<vmem>>, vector<1x1x16x128xf32>
    %632 = vector.shape_cast %631 : vector<1x1x16x128xf32> to vector<16x128xf32>
    %633 = arith.mulf %632, %485 : vector<16x128xf32>
    %634 = arith.addf %630, %633 : vector<16x128xf32>
    %c6_516 = arith.constant 6 : index
    %c3_517 = arith.constant 3 : index
    %c16_518 = arith.constant 16 : index
    %c0_519 = arith.constant 0 : index
    %635 = vector.load %arg3[%c6_516, %c3_517, %c16_518, %c0_519] : memref<9x8x32x128xf32, #tpu.memory_space<vmem>>, vector<1x1x16x128xf32>
    %636 = vector.shape_cast %635 : vector<1x1x16x128xf32> to vector<16x128xf32>
    %637 = arith.mulf %636, %486 : vector<16x128xf32>
    %638 = arith.addf %634, %637 : vector<16x128xf32>
    %c7_520 = arith.constant 7 : index
    %c3_521 = arith.constant 3 : index
    %c16_522 = arith.constant 16 : index
    %c0_523 = arith.constant 0 : index
    %639 = vector.load %arg3[%c7_520, %c3_521, %c16_522, %c0_523] : memref<9x8x32x128xf32, #tpu.memory_space<vmem>>, vector<1x1x16x128xf32>
    %640 = vector.shape_cast %639 : vector<1x1x16x128xf32> to vector<16x128xf32>
    %641 = arith.mulf %640, %487 : vector<16x128xf32>
    %642 = arith.addf %638, %641 : vector<16x128xf32>
    %c8_524 = arith.constant 8 : index
    %c3_525 = arith.constant 3 : index
    %c16_526 = arith.constant 16 : index
    %c0_527 = arith.constant 0 : index
    %643 = vector.load %arg3[%c8_524, %c3_525, %c16_526, %c0_527] : memref<9x8x32x128xf32, #tpu.memory_space<vmem>>, vector<1x1x16x128xf32>
    %644 = vector.shape_cast %643 : vector<1x1x16x128xf32> to vector<16x128xf32>
    %645 = arith.mulf %644, %488 : vector<16x128xf32>
    %646 = arith.addf %642, %645 : vector<16x128xf32>
    %647 = arith.cmpf ogt, %646, %605 : vector<16x128xf32>
    %648 = arith.select %647, %646, %605 : vector<16x128xi1>, vector<16x128xf32>
    %c3_i32_528 = arith.constant 3 : i32
    %649 = vector.broadcast %c3_i32_528 : i32 to vector<16x128xi32>
    %650 = arith.select %647, %649, %607 : vector<16x128xi1>, vector<16x128xi32>
    %651 = arith.cmpf olt, %646, %609 : vector<16x128xf32>
    %652 = arith.select %651, %646, %609 : vector<16x128xi1>, vector<16x128xf32>
    %c3_i32_529 = arith.constant 3 : i32
    %653 = vector.broadcast %c3_i32_529 : i32 to vector<16x128xi32>
    %654 = arith.select %651, %653, %611 : vector<16x128xi1>, vector<16x128xi32>
    %c0_530 = arith.constant 0 : index
    %c4_531 = arith.constant 4 : index
    %c16_532 = arith.constant 16 : index
    %c0_533 = arith.constant 0 : index
    %655 = vector.load %arg3[%c0_530, %c4_531, %c16_532, %c0_533] : memref<9x8x32x128xf32, #tpu.memory_space<vmem>>, vector<1x1x16x128xf32>
    %656 = vector.shape_cast %655 : vector<1x1x16x128xf32> to vector<16x128xf32>
    %657 = arith.mulf %656, %480 : vector<16x128xf32>
    %c1_534 = arith.constant 1 : index
    %c4_535 = arith.constant 4 : index
    %c16_536 = arith.constant 16 : index
    %c0_537 = arith.constant 0 : index
    %658 = vector.load %arg3[%c1_534, %c4_535, %c16_536, %c0_537] : memref<9x8x32x128xf32, #tpu.memory_space<vmem>>, vector<1x1x16x128xf32>
    %659 = vector.shape_cast %658 : vector<1x1x16x128xf32> to vector<16x128xf32>
    %660 = arith.mulf %659, %481 : vector<16x128xf32>
    %661 = arith.addf %657, %660 : vector<16x128xf32>
    %c2_538 = arith.constant 2 : index
    %c4_539 = arith.constant 4 : index
    %c16_540 = arith.constant 16 : index
    %c0_541 = arith.constant 0 : index
    %662 = vector.load %arg3[%c2_538, %c4_539, %c16_540, %c0_541] : memref<9x8x32x128xf32, #tpu.memory_space<vmem>>, vector<1x1x16x128xf32>
    %663 = vector.shape_cast %662 : vector<1x1x16x128xf32> to vector<16x128xf32>
    %664 = arith.mulf %663, %482 : vector<16x128xf32>
    %665 = arith.addf %661, %664 : vector<16x128xf32>
    %c3_542 = arith.constant 3 : index
    %c4_543 = arith.constant 4 : index
    %c16_544 = arith.constant 16 : index
    %c0_545 = arith.constant 0 : index
    %666 = vector.load %arg3[%c3_542, %c4_543, %c16_544, %c0_545] : memref<9x8x32x128xf32, #tpu.memory_space<vmem>>, vector<1x1x16x128xf32>
    %667 = vector.shape_cast %666 : vector<1x1x16x128xf32> to vector<16x128xf32>
    %668 = arith.mulf %667, %483 : vector<16x128xf32>
    %669 = arith.addf %665, %668 : vector<16x128xf32>
    %c4_546 = arith.constant 4 : index
    %c4_547 = arith.constant 4 : index
    %c16_548 = arith.constant 16 : index
    %c0_549 = arith.constant 0 : index
    %670 = vector.load %arg3[%c4_546, %c4_547, %c16_548, %c0_549] : memref<9x8x32x128xf32, #tpu.memory_space<vmem>>, vector<1x1x16x128xf32>
    %671 = vector.shape_cast %670 : vector<1x1x16x128xf32> to vector<16x128xf32>
    %672 = arith.mulf %671, %484 : vector<16x128xf32>
    %673 = arith.addf %669, %672 : vector<16x128xf32>
    %c5_550 = arith.constant 5 : index
    %c4_551 = arith.constant 4 : index
    %c16_552 = arith.constant 16 : index
    %c0_553 = arith.constant 0 : index
    %674 = vector.load %arg3[%c5_550, %c4_551, %c16_552, %c0_553] : memref<9x8x32x128xf32, #tpu.memory_space<vmem>>, vector<1x1x16x128xf32>
    %675 = vector.shape_cast %674 : vector<1x1x16x128xf32> to vector<16x128xf32>
    %676 = arith.mulf %675, %485 : vector<16x128xf32>
    %677 = arith.addf %673, %676 : vector<16x128xf32>
    %c6_554 = arith.constant 6 : index
    %c4_555 = arith.constant 4 : index
    %c16_556 = arith.constant 16 : index
    %c0_557 = arith.constant 0 : index
    %678 = vector.load %arg3[%c6_554, %c4_555, %c16_556, %c0_557] : memref<9x8x32x128xf32, #tpu.memory_space<vmem>>, vector<1x1x16x128xf32>
    %679 = vector.shape_cast %678 : vector<1x1x16x128xf32> to vector<16x128xf32>
    %680 = arith.mulf %679, %486 : vector<16x128xf32>
    %681 = arith.addf %677, %680 : vector<16x128xf32>
    %c7_558 = arith.constant 7 : index
    %c4_559 = arith.constant 4 : index
    %c16_560 = arith.constant 16 : index
    %c0_561 = arith.constant 0 : index
    %682 = vector.load %arg3[%c7_558, %c4_559, %c16_560, %c0_561] : memref<9x8x32x128xf32, #tpu.memory_space<vmem>>, vector<1x1x16x128xf32>
    %683 = vector.shape_cast %682 : vector<1x1x16x128xf32> to vector<16x128xf32>
    %684 = arith.mulf %683, %487 : vector<16x128xf32>
    %685 = arith.addf %681, %684 : vector<16x128xf32>
    %c8_562 = arith.constant 8 : index
    %c4_563 = arith.constant 4 : index
    %c16_564 = arith.constant 16 : index
    %c0_565 = arith.constant 0 : index
    %686 = vector.load %arg3[%c8_562, %c4_563, %c16_564, %c0_565] : memref<9x8x32x128xf32, #tpu.memory_space<vmem>>, vector<1x1x16x128xf32>
    %687 = vector.shape_cast %686 : vector<1x1x16x128xf32> to vector<16x128xf32>
    %688 = arith.mulf %687, %488 : vector<16x128xf32>
    %689 = arith.addf %685, %688 : vector<16x128xf32>
    %690 = arith.cmpf ogt, %689, %648 : vector<16x128xf32>
    %691 = arith.select %690, %689, %648 : vector<16x128xi1>, vector<16x128xf32>
    %c4_i32_566 = arith.constant 4 : i32
    %692 = vector.broadcast %c4_i32_566 : i32 to vector<16x128xi32>
    %693 = arith.select %690, %692, %650 : vector<16x128xi1>, vector<16x128xi32>
    %694 = arith.cmpf olt, %689, %652 : vector<16x128xf32>
    %695 = arith.select %694, %689, %652 : vector<16x128xi1>, vector<16x128xf32>
    %c4_i32_567 = arith.constant 4 : i32
    %696 = vector.broadcast %c4_i32_567 : i32 to vector<16x128xi32>
    %697 = arith.select %694, %696, %654 : vector<16x128xi1>, vector<16x128xi32>
    %c0_568 = arith.constant 0 : index
    %c5_569 = arith.constant 5 : index
    %c16_570 = arith.constant 16 : index
    %c0_571 = arith.constant 0 : index
    %698 = vector.load %arg3[%c0_568, %c5_569, %c16_570, %c0_571] : memref<9x8x32x128xf32, #tpu.memory_space<vmem>>, vector<1x1x16x128xf32>
    %699 = vector.shape_cast %698 : vector<1x1x16x128xf32> to vector<16x128xf32>
    %700 = arith.mulf %699, %480 : vector<16x128xf32>
    %c1_572 = arith.constant 1 : index
    %c5_573 = arith.constant 5 : index
    %c16_574 = arith.constant 16 : index
    %c0_575 = arith.constant 0 : index
    %701 = vector.load %arg3[%c1_572, %c5_573, %c16_574, %c0_575] : memref<9x8x32x128xf32, #tpu.memory_space<vmem>>, vector<1x1x16x128xf32>
    %702 = vector.shape_cast %701 : vector<1x1x16x128xf32> to vector<16x128xf32>
    %703 = arith.mulf %702, %481 : vector<16x128xf32>
    %704 = arith.addf %700, %703 : vector<16x128xf32>
    %c2_576 = arith.constant 2 : index
    %c5_577 = arith.constant 5 : index
    %c16_578 = arith.constant 16 : index
    %c0_579 = arith.constant 0 : index
    %705 = vector.load %arg3[%c2_576, %c5_577, %c16_578, %c0_579] : memref<9x8x32x128xf32, #tpu.memory_space<vmem>>, vector<1x1x16x128xf32>
    %706 = vector.shape_cast %705 : vector<1x1x16x128xf32> to vector<16x128xf32>
    %707 = arith.mulf %706, %482 : vector<16x128xf32>
    %708 = arith.addf %704, %707 : vector<16x128xf32>
    %c3_580 = arith.constant 3 : index
    %c5_581 = arith.constant 5 : index
    %c16_582 = arith.constant 16 : index
    %c0_583 = arith.constant 0 : index
    %709 = vector.load %arg3[%c3_580, %c5_581, %c16_582, %c0_583] : memref<9x8x32x128xf32, #tpu.memory_space<vmem>>, vector<1x1x16x128xf32>
    %710 = vector.shape_cast %709 : vector<1x1x16x128xf32> to vector<16x128xf32>
    %711 = arith.mulf %710, %483 : vector<16x128xf32>
    %712 = arith.addf %708, %711 : vector<16x128xf32>
    %c4_584 = arith.constant 4 : index
    %c5_585 = arith.constant 5 : index
    %c16_586 = arith.constant 16 : index
    %c0_587 = arith.constant 0 : index
    %713 = vector.load %arg3[%c4_584, %c5_585, %c16_586, %c0_587] : memref<9x8x32x128xf32, #tpu.memory_space<vmem>>, vector<1x1x16x128xf32>
    %714 = vector.shape_cast %713 : vector<1x1x16x128xf32> to vector<16x128xf32>
    %715 = arith.mulf %714, %484 : vector<16x128xf32>
    %716 = arith.addf %712, %715 : vector<16x128xf32>
    %c5_588 = arith.constant 5 : index
    %c5_589 = arith.constant 5 : index
    %c16_590 = arith.constant 16 : index
    %c0_591 = arith.constant 0 : index
    %717 = vector.load %arg3[%c5_588, %c5_589, %c16_590, %c0_591] : memref<9x8x32x128xf32, #tpu.memory_space<vmem>>, vector<1x1x16x128xf32>
    %718 = vector.shape_cast %717 : vector<1x1x16x128xf32> to vector<16x128xf32>
    %719 = arith.mulf %718, %485 : vector<16x128xf32>
    %720 = arith.addf %716, %719 : vector<16x128xf32>
    %c6_592 = arith.constant 6 : index
    %c5_593 = arith.constant 5 : index
    %c16_594 = arith.constant 16 : index
    %c0_595 = arith.constant 0 : index
    %721 = vector.load %arg3[%c6_592, %c5_593, %c16_594, %c0_595] : memref<9x8x32x128xf32, #tpu.memory_space<vmem>>, vector<1x1x16x128xf32>
    %722 = vector.shape_cast %721 : vector<1x1x16x128xf32> to vector<16x128xf32>
    %723 = arith.mulf %722, %486 : vector<16x128xf32>
    %724 = arith.addf %720, %723 : vector<16x128xf32>
    %c7_596 = arith.constant 7 : index
    %c5_597 = arith.constant 5 : index
    %c16_598 = arith.constant 16 : index
    %c0_599 = arith.constant 0 : index
    %725 = vector.load %arg3[%c7_596, %c5_597, %c16_598, %c0_599] : memref<9x8x32x128xf32, #tpu.memory_space<vmem>>, vector<1x1x16x128xf32>
    %726 = vector.shape_cast %725 : vector<1x1x16x128xf32> to vector<16x128xf32>
    %727 = arith.mulf %726, %487 : vector<16x128xf32>
    %728 = arith.addf %724, %727 : vector<16x128xf32>
    %c8_600 = arith.constant 8 : index
    %c5_601 = arith.constant 5 : index
    %c16_602 = arith.constant 16 : index
    %c0_603 = arith.constant 0 : index
    %729 = vector.load %arg3[%c8_600, %c5_601, %c16_602, %c0_603] : memref<9x8x32x128xf32, #tpu.memory_space<vmem>>, vector<1x1x16x128xf32>
    %730 = vector.shape_cast %729 : vector<1x1x16x128xf32> to vector<16x128xf32>
    %731 = arith.mulf %730, %488 : vector<16x128xf32>
    %732 = arith.addf %728, %731 : vector<16x128xf32>
    %733 = arith.cmpf ogt, %732, %691 : vector<16x128xf32>
    %734 = arith.select %733, %732, %691 : vector<16x128xi1>, vector<16x128xf32>
    %c5_i32_604 = arith.constant 5 : i32
    %735 = vector.broadcast %c5_i32_604 : i32 to vector<16x128xi32>
    %736 = arith.select %733, %735, %693 : vector<16x128xi1>, vector<16x128xi32>
    %737 = arith.cmpf olt, %732, %695 : vector<16x128xf32>
    %738 = arith.select %737, %732, %695 : vector<16x128xi1>, vector<16x128xf32>
    %c5_i32_605 = arith.constant 5 : i32
    %739 = vector.broadcast %c5_i32_605 : i32 to vector<16x128xi32>
    %740 = arith.select %737, %739, %697 : vector<16x128xi1>, vector<16x128xi32>
    %c0_606 = arith.constant 0 : index
    %c6_607 = arith.constant 6 : index
    %c16_608 = arith.constant 16 : index
    %c0_609 = arith.constant 0 : index
    %741 = vector.load %arg3[%c0_606, %c6_607, %c16_608, %c0_609] : memref<9x8x32x128xf32, #tpu.memory_space<vmem>>, vector<1x1x16x128xf32>
    %742 = vector.shape_cast %741 : vector<1x1x16x128xf32> to vector<16x128xf32>
    %743 = arith.mulf %742, %480 : vector<16x128xf32>
    %c1_610 = arith.constant 1 : index
    %c6_611 = arith.constant 6 : index
    %c16_612 = arith.constant 16 : index
    %c0_613 = arith.constant 0 : index
    %744 = vector.load %arg3[%c1_610, %c6_611, %c16_612, %c0_613] : memref<9x8x32x128xf32, #tpu.memory_space<vmem>>, vector<1x1x16x128xf32>
    %745 = vector.shape_cast %744 : vector<1x1x16x128xf32> to vector<16x128xf32>
    %746 = arith.mulf %745, %481 : vector<16x128xf32>
    %747 = arith.addf %743, %746 : vector<16x128xf32>
    %c2_614 = arith.constant 2 : index
    %c6_615 = arith.constant 6 : index
    %c16_616 = arith.constant 16 : index
    %c0_617 = arith.constant 0 : index
    %748 = vector.load %arg3[%c2_614, %c6_615, %c16_616, %c0_617] : memref<9x8x32x128xf32, #tpu.memory_space<vmem>>, vector<1x1x16x128xf32>
    %749 = vector.shape_cast %748 : vector<1x1x16x128xf32> to vector<16x128xf32>
    %750 = arith.mulf %749, %482 : vector<16x128xf32>
    %751 = arith.addf %747, %750 : vector<16x128xf32>
    %c3_618 = arith.constant 3 : index
    %c6_619 = arith.constant 6 : index
    %c16_620 = arith.constant 16 : index
    %c0_621 = arith.constant 0 : index
    %752 = vector.load %arg3[%c3_618, %c6_619, %c16_620, %c0_621] : memref<9x8x32x128xf32, #tpu.memory_space<vmem>>, vector<1x1x16x128xf32>
    %753 = vector.shape_cast %752 : vector<1x1x16x128xf32> to vector<16x128xf32>
    %754 = arith.mulf %753, %483 : vector<16x128xf32>
    %755 = arith.addf %751, %754 : vector<16x128xf32>
    %c4_622 = arith.constant 4 : index
    %c6_623 = arith.constant 6 : index
    %c16_624 = arith.constant 16 : index
    %c0_625 = arith.constant 0 : index
    %756 = vector.load %arg3[%c4_622, %c6_623, %c16_624, %c0_625] : memref<9x8x32x128xf32, #tpu.memory_space<vmem>>, vector<1x1x16x128xf32>
    %757 = vector.shape_cast %756 : vector<1x1x16x128xf32> to vector<16x128xf32>
    %758 = arith.mulf %757, %484 : vector<16x128xf32>
    %759 = arith.addf %755, %758 : vector<16x128xf32>
    %c5_626 = arith.constant 5 : index
    %c6_627 = arith.constant 6 : index
    %c16_628 = arith.constant 16 : index
    %c0_629 = arith.constant 0 : index
    %760 = vector.load %arg3[%c5_626, %c6_627, %c16_628, %c0_629] : memref<9x8x32x128xf32, #tpu.memory_space<vmem>>, vector<1x1x16x128xf32>
    %761 = vector.shape_cast %760 : vector<1x1x16x128xf32> to vector<16x128xf32>
    %762 = arith.mulf %761, %485 : vector<16x128xf32>
    %763 = arith.addf %759, %762 : vector<16x128xf32>
    %c6_630 = arith.constant 6 : index
    %c6_631 = arith.constant 6 : index
    %c16_632 = arith.constant 16 : index
    %c0_633 = arith.constant 0 : index
    %764 = vector.load %arg3[%c6_630, %c6_631, %c16_632, %c0_633] : memref<9x8x32x128xf32, #tpu.memory_space<vmem>>, vector<1x1x16x128xf32>
    %765 = vector.shape_cast %764 : vector<1x1x16x128xf32> to vector<16x128xf32>
    %766 = arith.mulf %765, %486 : vector<16x128xf32>
    %767 = arith.addf %763, %766 : vector<16x128xf32>
    %c7_634 = arith.constant 7 : index
    %c6_635 = arith.constant 6 : index
    %c16_636 = arith.constant 16 : index
    %c0_637 = arith.constant 0 : index
    %768 = vector.load %arg3[%c7_634, %c6_635, %c16_636, %c0_637] : memref<9x8x32x128xf32, #tpu.memory_space<vmem>>, vector<1x1x16x128xf32>
    %769 = vector.shape_cast %768 : vector<1x1x16x128xf32> to vector<16x128xf32>
    %770 = arith.mulf %769, %487 : vector<16x128xf32>
    %771 = arith.addf %767, %770 : vector<16x128xf32>
    %c8_638 = arith.constant 8 : index
    %c6_639 = arith.constant 6 : index
    %c16_640 = arith.constant 16 : index
    %c0_641 = arith.constant 0 : index
    %772 = vector.load %arg3[%c8_638, %c6_639, %c16_640, %c0_641] : memref<9x8x32x128xf32, #tpu.memory_space<vmem>>, vector<1x1x16x128xf32>
    %773 = vector.shape_cast %772 : vector<1x1x16x128xf32> to vector<16x128xf32>
    %774 = arith.mulf %773, %488 : vector<16x128xf32>
    %775 = arith.addf %771, %774 : vector<16x128xf32>
    %776 = arith.cmpf ogt, %775, %734 : vector<16x128xf32>
    %777 = arith.select %776, %775, %734 : vector<16x128xi1>, vector<16x128xf32>
    %c6_i32_642 = arith.constant 6 : i32
    %778 = vector.broadcast %c6_i32_642 : i32 to vector<16x128xi32>
    %779 = arith.select %776, %778, %736 : vector<16x128xi1>, vector<16x128xi32>
    %780 = arith.cmpf olt, %775, %738 : vector<16x128xf32>
    %781 = arith.select %780, %775, %738 : vector<16x128xi1>, vector<16x128xf32>
    %c6_i32_643 = arith.constant 6 : i32
    %782 = vector.broadcast %c6_i32_643 : i32 to vector<16x128xi32>
    %783 = arith.select %780, %782, %740 : vector<16x128xi1>, vector<16x128xi32>
    %c0_644 = arith.constant 0 : index
    %c7_645 = arith.constant 7 : index
    %c16_646 = arith.constant 16 : index
    %c0_647 = arith.constant 0 : index
    %784 = vector.load %arg3[%c0_644, %c7_645, %c16_646, %c0_647] : memref<9x8x32x128xf32, #tpu.memory_space<vmem>>, vector<1x1x16x128xf32>
    %785 = vector.shape_cast %784 : vector<1x1x16x128xf32> to vector<16x128xf32>
    %786 = arith.mulf %785, %480 : vector<16x128xf32>
    %c1_648 = arith.constant 1 : index
    %c7_649 = arith.constant 7 : index
    %c16_650 = arith.constant 16 : index
    %c0_651 = arith.constant 0 : index
    %787 = vector.load %arg3[%c1_648, %c7_649, %c16_650, %c0_651] : memref<9x8x32x128xf32, #tpu.memory_space<vmem>>, vector<1x1x16x128xf32>
    %788 = vector.shape_cast %787 : vector<1x1x16x128xf32> to vector<16x128xf32>
    %789 = arith.mulf %788, %481 : vector<16x128xf32>
    %790 = arith.addf %786, %789 : vector<16x128xf32>
    %c2_652 = arith.constant 2 : index
    %c7_653 = arith.constant 7 : index
    %c16_654 = arith.constant 16 : index
    %c0_655 = arith.constant 0 : index
    %791 = vector.load %arg3[%c2_652, %c7_653, %c16_654, %c0_655] : memref<9x8x32x128xf32, #tpu.memory_space<vmem>>, vector<1x1x16x128xf32>
    %792 = vector.shape_cast %791 : vector<1x1x16x128xf32> to vector<16x128xf32>
    %793 = arith.mulf %792, %482 : vector<16x128xf32>
    %794 = arith.addf %790, %793 : vector<16x128xf32>
    %c3_656 = arith.constant 3 : index
    %c7_657 = arith.constant 7 : index
    %c16_658 = arith.constant 16 : index
    %c0_659 = arith.constant 0 : index
    %795 = vector.load %arg3[%c3_656, %c7_657, %c16_658, %c0_659] : memref<9x8x32x128xf32, #tpu.memory_space<vmem>>, vector<1x1x16x128xf32>
    %796 = vector.shape_cast %795 : vector<1x1x16x128xf32> to vector<16x128xf32>
    %797 = arith.mulf %796, %483 : vector<16x128xf32>
    %798 = arith.addf %794, %797 : vector<16x128xf32>
    %c4_660 = arith.constant 4 : index
    %c7_661 = arith.constant 7 : index
    %c16_662 = arith.constant 16 : index
    %c0_663 = arith.constant 0 : index
    %799 = vector.load %arg3[%c4_660, %c7_661, %c16_662, %c0_663] : memref<9x8x32x128xf32, #tpu.memory_space<vmem>>, vector<1x1x16x128xf32>
    %800 = vector.shape_cast %799 : vector<1x1x16x128xf32> to vector<16x128xf32>
    %801 = arith.mulf %800, %484 : vector<16x128xf32>
    %802 = arith.addf %798, %801 : vector<16x128xf32>
    %c5_664 = arith.constant 5 : index
    %c7_665 = arith.constant 7 : index
    %c16_666 = arith.constant 16 : index
    %c0_667 = arith.constant 0 : index
    %803 = vector.load %arg3[%c5_664, %c7_665, %c16_666, %c0_667] : memref<9x8x32x128xf32, #tpu.memory_space<vmem>>, vector<1x1x16x128xf32>
    %804 = vector.shape_cast %803 : vector<1x1x16x128xf32> to vector<16x128xf32>
    %805 = arith.mulf %804, %485 : vector<16x128xf32>
    %806 = arith.addf %802, %805 : vector<16x128xf32>
    %c6_668 = arith.constant 6 : index
    %c7_669 = arith.constant 7 : index
    %c16_670 = arith.constant 16 : index
    %c0_671 = arith.constant 0 : index
    %807 = vector.load %arg3[%c6_668, %c7_669, %c16_670, %c0_671] : memref<9x8x32x128xf32, #tpu.memory_space<vmem>>, vector<1x1x16x128xf32>
    %808 = vector.shape_cast %807 : vector<1x1x16x128xf32> to vector<16x128xf32>
    %809 = arith.mulf %808, %486 : vector<16x128xf32>
    %810 = arith.addf %806, %809 : vector<16x128xf32>
    %c7_672 = arith.constant 7 : index
    %c7_673 = arith.constant 7 : index
    %c16_674 = arith.constant 16 : index
    %c0_675 = arith.constant 0 : index
    %811 = vector.load %arg3[%c7_672, %c7_673, %c16_674, %c0_675] : memref<9x8x32x128xf32, #tpu.memory_space<vmem>>, vector<1x1x16x128xf32>
    %812 = vector.shape_cast %811 : vector<1x1x16x128xf32> to vector<16x128xf32>
    %813 = arith.mulf %812, %487 : vector<16x128xf32>
    %814 = arith.addf %810, %813 : vector<16x128xf32>
    %c8_676 = arith.constant 8 : index
    %c7_677 = arith.constant 7 : index
    %c16_678 = arith.constant 16 : index
    %c0_679 = arith.constant 0 : index
    %815 = vector.load %arg3[%c8_676, %c7_677, %c16_678, %c0_679] : memref<9x8x32x128xf32, #tpu.memory_space<vmem>>, vector<1x1x16x128xf32>
    %816 = vector.shape_cast %815 : vector<1x1x16x128xf32> to vector<16x128xf32>
    %817 = arith.mulf %816, %488 : vector<16x128xf32>
    %818 = arith.addf %814, %817 : vector<16x128xf32>
    %819 = arith.cmpf ogt, %818, %777 : vector<16x128xf32>
    %820 = arith.select %819, %818, %777 : vector<16x128xi1>, vector<16x128xf32>
    %c7_i32_680 = arith.constant 7 : i32
    %821 = vector.broadcast %c7_i32_680 : i32 to vector<16x128xi32>
    %822 = arith.select %819, %821, %779 : vector<16x128xi1>, vector<16x128xi32>
    %823 = arith.cmpf olt, %818, %781 : vector<16x128xf32>
    %c7_i32_681 = arith.constant 7 : i32
    %824 = vector.broadcast %c7_i32_681 : i32 to vector<16x128xi32>
    %825 = arith.select %823, %824, %783 : vector<16x128xi1>, vector<16x128xi32>
    %826 = arith.mulf %820, %479 : vector<16x128xf32>
    %c0_i32_682 = arith.constant 0 : i32
    %827 = vector.broadcast %c0_i32_682 : i32 to vector<16x128xi32>
    %828 = arith.cmpi eq, %822, %827 : vector<16x128xi32>
    %cst_683 = arith.constant 0.000000e+00 : f32
    %829 = vector.broadcast %cst_683 : f32 to vector<16x128xf32>
    %830 = arith.select %828, %826, %829 : vector<16x128xi1>, vector<16x128xf32>
    %cst_684 = arith.constant dense<0.000000e+00> : vector<16xf32>
    %831 = vector.multi_reduction <add>, %830, %cst_684 [1] : vector<16x128xf32> to vector<16xf32>
    %832 = vector.shape_cast %831 : vector<16xf32> to vector<16x1xf32>
    %c0_i32_685 = arith.constant 0 : i32
    %833 = vector.broadcast %c0_i32_685 : i32 to vector<16x128xi32>
    %834 = arith.cmpi eq, %825, %833 : vector<16x128xi32>
    %cst_686 = arith.constant 0.000000e+00 : f32
    %835 = vector.broadcast %cst_686 : f32 to vector<16x128xf32>
    %836 = arith.select %834, %479, %835 : vector<16x128xi1>, vector<16x128xf32>
    %cst_687 = arith.constant dense<0.000000e+00> : vector<16xf32>
    %837 = vector.multi_reduction <add>, %836, %cst_687 [1] : vector<16x128xf32> to vector<16xf32>
    %838 = vector.shape_cast %837 : vector<16xf32> to vector<16x1xf32>
    %c1_i32_688 = arith.constant 1 : i32
    %839 = vector.broadcast %c1_i32_688 : i32 to vector<16x128xi32>
    %840 = arith.cmpi eq, %822, %839 : vector<16x128xi32>
    %cst_689 = arith.constant 0.000000e+00 : f32
    %841 = vector.broadcast %cst_689 : f32 to vector<16x128xf32>
    %842 = arith.select %840, %826, %841 : vector<16x128xi1>, vector<16x128xf32>
    %cst_690 = arith.constant dense<0.000000e+00> : vector<16xf32>
    %843 = vector.multi_reduction <add>, %842, %cst_690 [1] : vector<16x128xf32> to vector<16xf32>
    %844 = vector.shape_cast %843 : vector<16xf32> to vector<16x1xf32>
    %c1_i32_691 = arith.constant 1 : i32
    %845 = vector.broadcast %c1_i32_691 : i32 to vector<16x128xi32>
    %846 = arith.cmpi eq, %825, %845 : vector<16x128xi32>
    %cst_692 = arith.constant 0.000000e+00 : f32
    %847 = vector.broadcast %cst_692 : f32 to vector<16x128xf32>
    %848 = arith.select %846, %479, %847 : vector<16x128xi1>, vector<16x128xf32>
    %cst_693 = arith.constant dense<0.000000e+00> : vector<16xf32>
    %849 = vector.multi_reduction <add>, %848, %cst_693 [1] : vector<16x128xf32> to vector<16xf32>
    %850 = vector.shape_cast %849 : vector<16xf32> to vector<16x1xf32>
    %c2_i32_694 = arith.constant 2 : i32
    %851 = vector.broadcast %c2_i32_694 : i32 to vector<16x128xi32>
    %852 = arith.cmpi eq, %822, %851 : vector<16x128xi32>
    %cst_695 = arith.constant 0.000000e+00 : f32
    %853 = vector.broadcast %cst_695 : f32 to vector<16x128xf32>
    %854 = arith.select %852, %826, %853 : vector<16x128xi1>, vector<16x128xf32>
    %cst_696 = arith.constant dense<0.000000e+00> : vector<16xf32>
    %855 = vector.multi_reduction <add>, %854, %cst_696 [1] : vector<16x128xf32> to vector<16xf32>
    %856 = vector.shape_cast %855 : vector<16xf32> to vector<16x1xf32>
    %c2_i32_697 = arith.constant 2 : i32
    %857 = vector.broadcast %c2_i32_697 : i32 to vector<16x128xi32>
    %858 = arith.cmpi eq, %825, %857 : vector<16x128xi32>
    %cst_698 = arith.constant 0.000000e+00 : f32
    %859 = vector.broadcast %cst_698 : f32 to vector<16x128xf32>
    %860 = arith.select %858, %479, %859 : vector<16x128xi1>, vector<16x128xf32>
    %cst_699 = arith.constant dense<0.000000e+00> : vector<16xf32>
    %861 = vector.multi_reduction <add>, %860, %cst_699 [1] : vector<16x128xf32> to vector<16xf32>
    %862 = vector.shape_cast %861 : vector<16xf32> to vector<16x1xf32>
    %c3_i32_700 = arith.constant 3 : i32
    %863 = vector.broadcast %c3_i32_700 : i32 to vector<16x128xi32>
    %864 = arith.cmpi eq, %822, %863 : vector<16x128xi32>
    %cst_701 = arith.constant 0.000000e+00 : f32
    %865 = vector.broadcast %cst_701 : f32 to vector<16x128xf32>
    %866 = arith.select %864, %826, %865 : vector<16x128xi1>, vector<16x128xf32>
    %cst_702 = arith.constant dense<0.000000e+00> : vector<16xf32>
    %867 = vector.multi_reduction <add>, %866, %cst_702 [1] : vector<16x128xf32> to vector<16xf32>
    %868 = vector.shape_cast %867 : vector<16xf32> to vector<16x1xf32>
    %c3_i32_703 = arith.constant 3 : i32
    %869 = vector.broadcast %c3_i32_703 : i32 to vector<16x128xi32>
    %870 = arith.cmpi eq, %825, %869 : vector<16x128xi32>
    %cst_704 = arith.constant 0.000000e+00 : f32
    %871 = vector.broadcast %cst_704 : f32 to vector<16x128xf32>
    %872 = arith.select %870, %479, %871 : vector<16x128xi1>, vector<16x128xf32>
    %cst_705 = arith.constant dense<0.000000e+00> : vector<16xf32>
    %873 = vector.multi_reduction <add>, %872, %cst_705 [1] : vector<16x128xf32> to vector<16xf32>
    %874 = vector.shape_cast %873 : vector<16xf32> to vector<16x1xf32>
    %c4_i32_706 = arith.constant 4 : i32
    %875 = vector.broadcast %c4_i32_706 : i32 to vector<16x128xi32>
    %876 = arith.cmpi eq, %822, %875 : vector<16x128xi32>
    %cst_707 = arith.constant 0.000000e+00 : f32
    %877 = vector.broadcast %cst_707 : f32 to vector<16x128xf32>
    %878 = arith.select %876, %826, %877 : vector<16x128xi1>, vector<16x128xf32>
    %cst_708 = arith.constant dense<0.000000e+00> : vector<16xf32>
    %879 = vector.multi_reduction <add>, %878, %cst_708 [1] : vector<16x128xf32> to vector<16xf32>
    %880 = vector.shape_cast %879 : vector<16xf32> to vector<16x1xf32>
    %c4_i32_709 = arith.constant 4 : i32
    %881 = vector.broadcast %c4_i32_709 : i32 to vector<16x128xi32>
    %882 = arith.cmpi eq, %825, %881 : vector<16x128xi32>
    %cst_710 = arith.constant 0.000000e+00 : f32
    %883 = vector.broadcast %cst_710 : f32 to vector<16x128xf32>
    %884 = arith.select %882, %479, %883 : vector<16x128xi1>, vector<16x128xf32>
    %cst_711 = arith.constant dense<0.000000e+00> : vector<16xf32>
    %885 = vector.multi_reduction <add>, %884, %cst_711 [1] : vector<16x128xf32> to vector<16xf32>
    %886 = vector.shape_cast %885 : vector<16xf32> to vector<16x1xf32>
    %c5_i32_712 = arith.constant 5 : i32
    %887 = vector.broadcast %c5_i32_712 : i32 to vector<16x128xi32>
    %888 = arith.cmpi eq, %822, %887 : vector<16x128xi32>
    %cst_713 = arith.constant 0.000000e+00 : f32
    %889 = vector.broadcast %cst_713 : f32 to vector<16x128xf32>
    %890 = arith.select %888, %826, %889 : vector<16x128xi1>, vector<16x128xf32>
    %cst_714 = arith.constant dense<0.000000e+00> : vector<16xf32>
    %891 = vector.multi_reduction <add>, %890, %cst_714 [1] : vector<16x128xf32> to vector<16xf32>
    %892 = vector.shape_cast %891 : vector<16xf32> to vector<16x1xf32>
    %c5_i32_715 = arith.constant 5 : i32
    %893 = vector.broadcast %c5_i32_715 : i32 to vector<16x128xi32>
    %894 = arith.cmpi eq, %825, %893 : vector<16x128xi32>
    %cst_716 = arith.constant 0.000000e+00 : f32
    %895 = vector.broadcast %cst_716 : f32 to vector<16x128xf32>
    %896 = arith.select %894, %479, %895 : vector<16x128xi1>, vector<16x128xf32>
    %cst_717 = arith.constant dense<0.000000e+00> : vector<16xf32>
    %897 = vector.multi_reduction <add>, %896, %cst_717 [1] : vector<16x128xf32> to vector<16xf32>
    %898 = vector.shape_cast %897 : vector<16xf32> to vector<16x1xf32>
    %c6_i32_718 = arith.constant 6 : i32
    %899 = vector.broadcast %c6_i32_718 : i32 to vector<16x128xi32>
    %900 = arith.cmpi eq, %822, %899 : vector<16x128xi32>
    %cst_719 = arith.constant 0.000000e+00 : f32
    %901 = vector.broadcast %cst_719 : f32 to vector<16x128xf32>
    %902 = arith.select %900, %826, %901 : vector<16x128xi1>, vector<16x128xf32>
    %cst_720 = arith.constant dense<0.000000e+00> : vector<16xf32>
    %903 = vector.multi_reduction <add>, %902, %cst_720 [1] : vector<16x128xf32> to vector<16xf32>
    %904 = vector.shape_cast %903 : vector<16xf32> to vector<16x1xf32>
    %c6_i32_721 = arith.constant 6 : i32
    %905 = vector.broadcast %c6_i32_721 : i32 to vector<16x128xi32>
    %906 = arith.cmpi eq, %825, %905 : vector<16x128xi32>
    %cst_722 = arith.constant 0.000000e+00 : f32
    %907 = vector.broadcast %cst_722 : f32 to vector<16x128xf32>
    %908 = arith.select %906, %479, %907 : vector<16x128xi1>, vector<16x128xf32>
    %cst_723 = arith.constant dense<0.000000e+00> : vector<16xf32>
    %909 = vector.multi_reduction <add>, %908, %cst_723 [1] : vector<16x128xf32> to vector<16xf32>
    %910 = vector.shape_cast %909 : vector<16xf32> to vector<16x1xf32>
    %c7_i32_724 = arith.constant 7 : i32
    %911 = vector.broadcast %c7_i32_724 : i32 to vector<16x128xi32>
    %912 = arith.cmpi eq, %822, %911 : vector<16x128xi32>
    %cst_725 = arith.constant 0.000000e+00 : f32
    %913 = vector.broadcast %cst_725 : f32 to vector<16x128xf32>
    %914 = arith.select %912, %826, %913 : vector<16x128xi1>, vector<16x128xf32>
    %cst_726 = arith.constant dense<0.000000e+00> : vector<16xf32>
    %915 = vector.multi_reduction <add>, %914, %cst_726 [1] : vector<16x128xf32> to vector<16xf32>
    %916 = vector.shape_cast %915 : vector<16xf32> to vector<16x1xf32>
    %c7_i32_727 = arith.constant 7 : i32
    %917 = vector.broadcast %c7_i32_727 : i32 to vector<16x128xi32>
    %918 = arith.cmpi eq, %825, %917 : vector<16x128xi32>
    %cst_728 = arith.constant 0.000000e+00 : f32
    %919 = vector.broadcast %cst_728 : f32 to vector<16x128xf32>
    %920 = arith.select %918, %479, %919 : vector<16x128xi1>, vector<16x128xf32>
    %cst_729 = arith.constant dense<0.000000e+00> : vector<16xf32>
    %921 = vector.multi_reduction <add>, %920, %cst_729 [1] : vector<16x128xf32> to vector<16xf32>
    %922 = vector.shape_cast %921 : vector<16xf32> to vector<16x1xf32>
    %923 = tpu.concatenate %832, %844, %856, %868, %880, %892, %904, %916 in 1 : vector<16x1xf32>, vector<16x1xf32>, vector<16x1xf32>, vector<16x1xf32>, vector<16x1xf32>, vector<16x1xf32>, vector<16x1xf32>, vector<16x1xf32> -> vector<16x8xf32>
    %924 = tpu.concatenate %838, %850, %862, %874, %886, %898, %910, %922 in 1 : vector<16x1xf32>, vector<16x1xf32>, vector<16x1xf32>, vector<16x1xf32>, vector<16x1xf32>, vector<16x1xf32>, vector<16x1xf32>, vector<16x1xf32> -> vector<16x8xf32>
    %925 = arith.addf %11, %923 : vector<16x8xf32>
    %c0_730 = arith.constant 0 : index
    %c16_731 = arith.constant 16 : index
    %c0_732 = arith.constant 0 : index
    %926 = vector.load %arg4[%c0_730, %c16_731, %c0_732] : memref<1x32x16xf32, #tpu.memory_space<vmem>>, vector<1x16x8xf32>
    %927 = vector.shape_cast %926 : vector<1x16x8xf32> to vector<16x8xf32>
    %928 = vector.shape_cast %925 : vector<16x8xf32> to vector<1x16x8xf32>
    tpu.vector_store %arg4[%c0_730, %c16_731, %c0_732], %928 {strides = array<i32>} : memref<1x32x16xf32, #tpu.memory_space<vmem>>, vector<1x16x8xf32>,
    %929 = arith.addf %12, %924 : vector<16x8xf32>
    %c0_733 = arith.constant 0 : index
    %c16_734 = arith.constant 16 : index
    %c8_735 = arith.constant 8 : index
    %930 = vector.load %arg4[%c0_733, %c16_734, %c8_735] : memref<1x32x16xf32, #tpu.memory_space<vmem>>, vector<1x16x8xf32>
    %931 = vector.shape_cast %930 : vector<1x16x8xf32> to vector<16x8xf32>
    %932 = vector.shape_cast %929 : vector<16x8xf32> to vector<1x16x8xf32>
    tpu.vector_store %arg4[%c0_733, %c16_734, %c8_735], %932 {strides = array<i32>} : memref<1x32x16xf32, #tpu.memory_space<vmem>>, vector<1x16x8xf32>,
    return
  }
  func.func @transform_0(%arg0: i32, %arg1: i32) -> (i32, i32, i32) {
    %c0_i32 = arith.constant 0 : i32
    %c0_i32_0 = arith.constant 0 : i32
    return %arg1, %arg0, %c0_i32 : i32, i32, i32
  }
  func.func @transform_1(%arg0: i32, %arg1: i32) -> (i32, i32, i32, i32) {
    %c0_i32 = arith.constant 0 : i32
    %c0_i32_0 = arith.constant 0 : i32
    %c0_i32_1 = arith.constant 0 : i32
    %c0_i32_2 = arith.constant 0 : i32
    return %c0_i32, %c0_i32_0, %arg0, %c0_i32_1 : i32, i32, i32, i32
  }
  func.func @transform_2(%arg0: i32, %arg1: i32) -> (i32, i32, i32) {
    %c0_i32 = arith.constant 0 : i32
    %c0_i32_0 = arith.constant 0 : i32
    return %arg1, %arg0, %c0_i32 : i32, i32, i32
  }
}

module attributes {stable_mosaic.version = 11 : i64} {
  func.func @_hydra_kernel(%arg0: i32, %arg1: i32, %arg2: memref<1x32x32xf32, #tpu.memory_space<vmem>>, %arg3: memref<9x8x32x128xf32, #tpu.memory_space<vmem>>, %arg4: memref<1x32x16xf32, #tpu.memory_space<vmem>>, %arg5: memref<32x384xf32, #tpu.memory_space<vmem>>) attributes {dimension_semantics = [#tpu.dimension_semantics<parallel>, #tpu.dimension_semantics<parallel>], iteration_bounds = array<i64: 2, 2>, scalar_prefetch = 0 : i64, scratch_operands = 1 : i64, tpu.core_type = #tpu.core_type<tc>, window_params = [{transform_indices = @transform_0, window_bounds = array<i64: 1, 32, 32>}, {transform_indices = @transform_1, window_bounds = array<i64: 9, 8, 32, 128>}, {transform_indices = @transform_2, window_bounds = array<i64: 1, 32, 16>}]} {
    %cst = arith.constant 0.000000e+00 : f32
    %0 = vector.broadcast %cst : f32 to vector<32x128xf32>
    %c0 = arith.constant 0 : index
    %c0_0 = arith.constant 0 : index
    %1 = vector.load %arg5[%c0, %c0_0] : memref<32x384xf32, #tpu.memory_space<vmem>>, vector<32x128xf32>
    tpu.vector_store %arg5[%c0, %c0_0], %0 {strides = array<i32>} : memref<32x384xf32, #tpu.memory_space<vmem>>, vector<32x128xf32>,
    %c1_i32 = arith.constant 1 : i32
    %2 = arith.cmpi eq, %arg0, %c1_i32 : i32
    %true = arith.constant true
    %3 = arith.xori %2, %true : i1
    %4 = arith.extui %3 : i1 to i32
    %c0_i32 = arith.constant 0 : i32
    %5 = arith.cmpi ne, %4, %c0_i32 : i32
    scf.if %5 {
      %c0_736 = arith.constant 0 : index
      %c0_737 = arith.constant 0 : index
      %c0_738 = arith.constant 0 : index
      %933 = vector.load %arg2[%c0_736, %c0_737, %c0_738] : memref<1x32x32xf32, #tpu.memory_space<vmem>>, vector<1x32x32xf32>
      %934 = vector.shape_cast %933 : vector<1x32x32xf32> to vector<32x32xf32>
      %c0_739 = arith.constant 0 : index
      %c128_740 = arith.constant 128 : index
      %935 = vector.load %arg5[%c0_739, %c128_740] : memref<32x384xf32, #tpu.memory_space<vmem>>, vector<32x32xf32>
      tpu.vector_store %arg5[%c0_739, %c128_740], %934 {strides = array<i32>} : memref<32x384xf32, #tpu.memory_space<vmem>>, vector<32x32xf32>,
      %cst_741 = arith.constant 0.000000e+00 : f32
      %936 = vector.broadcast %cst_741 : f32 to vector<32x224xf32>
      %c0_742 = arith.constant 0 : index
      %c160 = arith.constant 160 : index
      %937 = vector.load %arg5[%c0_742, %c160] : memref<32x384xf32, #tpu.memory_space<vmem>>, vector<32x224xf32>
      tpu.vector_store %arg5[%c0_742, %c160], %936 {strides = array<i32>} : memref<32x384xf32, #tpu.memory_space<vmem>>, vector<32x224xf32>,
    } else {
    }
    %6 = arith.extui %2 : i1 to i32
    %c0_i32_1 = arith.constant 0 : i32
    %7 = arith.cmpi ne, %6, %c0_i32_1 : i32
    scf.if %7 {
      %c0_736 = arith.constant 0 : index
      %c0_737 = arith.constant 0 : index
      %c1_738 = arith.constant 1 : index
      %933 = vector.load %arg2[%c0_736, %c0_737, %c1_738] : memref<1x32x32xf32, #tpu.memory_space<vmem>>, vector<1x32x31xf32>
      %934 = vector.shape_cast %933 : vector<1x32x31xf32> to vector<32x31xf32>
      %c0_739 = arith.constant 0 : index
      %c0_740 = arith.constant 0 : index
      %c0_741 = arith.constant 0 : index
      %935 = vector.load %arg2[%c0_739, %c0_740, %c0_741] : memref<1x32x32xf32, #tpu.memory_space<vmem>>, vector<1x32x31xf32>
      %936 = vector.shape_cast %935 : vector<1x32x31xf32> to vector<32x31xf32>
      %937 = arith.subf %934, %936 : vector<32x31xf32>
      %c0_742 = arith.constant 0 : index
      %c128_743 = arith.constant 128 : index
      %938 = vector.load %arg5[%c0_742, %c128_743] : memref<32x384xf32, #tpu.memory_space<vmem>>, vector<32x31xf32>
      tpu.vector_store %arg5[%c0_742, %c128_743], %937 {strides = array<i32>} : memref<32x384xf32, #tpu.memory_space<vmem>>, vector<32x31xf32>,
      %cst_744 = arith.constant 0.000000e+00 : f32
      %939 = vector.broadcast %cst_744 : f32 to vector<32x225xf32>
      %c0_745 = arith.constant 0 : index
      %c159 = arith.constant 159 : index
      %940 = vector.load %arg5[%c0_745, %c159] : memref<32x384xf32, #tpu.memory_space<vmem>>, vector<32x225xf32>
      tpu.vector_store %arg5[%c0_745, %c159], %939 {strides = array<i32>} : memref<32x384xf32, #tpu.memory_space<vmem>>, vector<32x225xf32>,
    } else {
    }
    %c31_i32 = arith.constant 31 : i32
    %c32_i32 = arith.constant 32 : i32
    %8 = arith.select %2, %c31_i32, %c32_i32 : i32
    %cst_2 = arith.constant 0.000000e+00 : f32
    %9 = vector.broadcast %cst_2 : f32 to vector<16x8xf32>
    %cst_3 = arith.constant 0.000000e+00 : f32
    %10 = vector.broadcast %cst_3 : f32 to vector<16x8xf32>
    %cst_4 = arith.constant 0.000000e+00 : f32
    %11 = vector.broadcast %cst_4 : f32 to vector<16x8xf32>
    %cst_5 = arith.constant 0.000000e+00 : f32
    %12 = vector.broadcast %cst_5 : f32 to vector<16x8xf32>
    %13 = tpu.iota {dimensions = array<i32: 1>} : vector<16x128xi32>
    %c0_i32_6 = arith.constant 0 : i32
    %14 = vector.broadcast %c0_i32_6 : i32 to vector<16x128xi32>
    %15 = arith.addi %14, %13 : vector<16x128xi32>
    %16 = vector.broadcast %8 : i32 to vector<16x128xi32>
    %17 = arith.cmpi slt, %15, %16 : vector<16x128xi32>
    %18 = arith.extui %17 : vector<16x128xi1> to vector<16x128xi32>
    %19 = arith.sitofp %18 : vector<16x128xi32> to vector<16x128xf32>
    %c0_7 = arith.constant 0 : index
    %c120 = arith.constant 120 : index
    %20 = vector.load %arg5[%c0_7, %c120] : memref<32x384xf32, #tpu.memory_space<vmem>>, vector<16x128xf32>
    %c0_8 = arith.constant 0 : index
    %c122 = arith.constant 122 : index
    %21 = vector.load %arg5[%c0_8, %c122] : memref<32x384xf32, #tpu.memory_space<vmem>>, vector<16x128xf32>
    %c0_9 = arith.constant 0 : index
    %c124 = arith.constant 124 : index
    %22 = vector.load %arg5[%c0_9, %c124] : memref<32x384xf32, #tpu.memory_space<vmem>>, vector<16x128xf32>
    %c0_10 = arith.constant 0 : index
    %c126 = arith.constant 126 : index
    %23 = vector.load %arg5[%c0_10, %c126] : memref<32x384xf32, #tpu.memory_space<vmem>>, vector<16x128xf32>
    %c0_11 = arith.constant 0 : index
    %c128 = arith.constant 128 : index
    %24 = vector.load %arg5[%c0_11, %c128] : memref<32x384xf32, #tpu.memory_space<vmem>>, vector<16x128xf32>
    %c0_12 = arith.constant 0 : index
    %c130 = arith.constant 130 : index
    %25 = vector.load %arg5[%c0_12, %c130] : memref<32x384xf32, #tpu.memory_space<vmem>>, vector<16x128xf32>
    %c0_13 = arith.constant 0 : index
    %c132 = arith.constant 132 : index
    %26 = vector.load %arg5[%c0_13, %c132] : memref<32x384xf32, #tpu.memory_space<vmem>>, vector<16x128xf32>
    %c0_14 = arith.constant 0 : index
    %c134 = arith.constant 134 : index
    %27 = vector.load %arg5[%c0_14, %c134] : memref<32x384xf32, #tpu.memory_space<vmem>>, vector<16x128xf32>
    %c0_15 = arith.constant 0 : index
    %c136 = arith.constant 136 : index
    %28 = vector.load %arg5[%c0_15, %c136] : memref<32x384xf32, #tpu.memory_space<vmem>>, vector<16x128xf32>
    %c0_16 = arith.constant 0 : index
    %c0_17 = arith.constant 0 : index
    %c0_18 = arith.constant 0 : index
    %c0_19 = arith.constant 0 : index
    %29 = vector.load %arg3[%c0_16, %c0_17, %c0_18, %c0_19] : memref<9x8x32x128xf32, #tpu.memory_space<vmem>>, vector<1x1x16x128xf32>
    %30 = vector.shape_cast %29 : vector<1x1x16x128xf32> to vector<16x128xf32>
    %31 = arith.mulf %30, %20 : vector<16x128xf32>
    %c1 = arith.constant 1 : index
    %c0_20 = arith.constant 0 : index
    %c0_21 = arith.constant 0 : index
    %c0_22 = arith.constant 0 : index
    %32 = vector.load %arg3[%c1, %c0_20, %c0_21, %c0_22] : memref<9x8x32x128xf32, #tpu.memory_space<vmem>>, vector<1x1x16x128xf32>
    %33 = vector.shape_cast %32 : vector<1x1x16x128xf32> to vector<16x128xf32>
    %34 = arith.mulf %33, %21 : vector<16x128xf32>
    %35 = arith.addf %31, %34 : vector<16x128xf32>
    %c2 = arith.constant 2 : index
    %c0_23 = arith.constant 0 : index
    %c0_24 = arith.constant 0 : index
    %c0_25 = arith.constant 0 : index
    %36 = vector.load %arg3[%c2, %c0_23, %c0_24, %c0_25] : memref<9x8x32x128xf32, #tpu.memory_space<vmem>>, vector<1x1x16x128xf32>
    %37 = vector.shape_cast %36 : vector<1x1x16x128xf32> to vector<16x128xf32>
    %38 = arith.mulf %37, %22 : vector<16x128xf32>
    %39 = arith.addf %35, %38 : vector<16x128xf32>
    %c3 = arith.constant 3 : index
    %c0_26 = arith.constant 0 : index
    %c0_27 = arith.constant 0 : index
    %c0_28 = arith.constant 0 : index
    %40 = vector.load %arg3[%c3, %c0_26, %c0_27, %c0_28] : memref<9x8x32x128xf32, #tpu.memory_space<vmem>>, vector<1x1x16x128xf32>
    %41 = vector.shape_cast %40 : vector<1x1x16x128xf32> to vector<16x128xf32>
    %42 = arith.mulf %41, %23 : vector<16x128xf32>
    %43 = arith.addf %39, %42 : vector<16x128xf32>
    %c4 = arith.constant 4 : index
    %c0_29 = arith.constant 0 : index
    %c0_30 = arith.constant 0 : index
    %c0_31 = arith.constant 0 : index
    %44 = vector.load %arg3[%c4, %c0_29, %c0_30, %c0_31] : memref<9x8x32x128xf32, #tpu.memory_space<vmem>>, vector<1x1x16x128xf32>
    %45 = vector.shape_cast %44 : vector<1x1x16x128xf32> to vector<16x128xf32>
    %46 = arith.mulf %45, %24 : vector<16x128xf32>
    %47 = arith.addf %43, %46 : vector<16x128xf32>
    %c5 = arith.constant 5 : index
    %c0_32 = arith.constant 0 : index
    %c0_33 = arith.constant 0 : index
    %c0_34 = arith.constant 0 : index
    %48 = vector.load %arg3[%c5, %c0_32, %c0_33, %c0_34] : memref<9x8x32x128xf32, #tpu.memory_space<vmem>>, vector<1x1x16x128xf32>
    %49 = vector.shape_cast %48 : vector<1x1x16x128xf32> to vector<16x128xf32>
    %50 = arith.mulf %49, %25 : vector<16x128xf32>
    %51 = arith.addf %47, %50 : vector<16x128xf32>
    %c6 = arith.constant 6 : index
    %c0_35 = arith.constant 0 : index
    %c0_36 = arith.constant 0 : index
    %c0_37 = arith.constant 0 : index
    %52 = vector.load %arg3[%c6, %c0_35, %c0_36, %c0_37] : memref<9x8x32x128xf32, #tpu.memory_space<vmem>>, vector<1x1x16x128xf32>
    %53 = vector.shape_cast %52 : vector<1x1x16x128xf32> to vector<16x128xf32>
    %54 = arith.mulf %53, %26 : vector<16x128xf32>
    %55 = arith.addf %51, %54 : vector<16x128xf32>
    %c7 = arith.constant 7 : index
    %c0_38 = arith.constant 0 : index
    %c0_39 = arith.constant 0 : index
    %c0_40 = arith.constant 0 : index
    %56 = vector.load %arg3[%c7, %c0_38, %c0_39, %c0_40] : memref<9x8x32x128xf32, #tpu.memory_space<vmem>>, vector<1x1x16x128xf32>
    %57 = vector.shape_cast %56 : vector<1x1x16x128xf32> to vector<16x128xf32>
    %58 = arith.mulf %57, %27 : vector<16x128xf32>
    %59 = arith.addf %55, %58 : vector<16x128xf32>
    %c8 = arith.constant 8 : index
    %c0_41 = arith.constant 0 : index
    %c0_42 = arith.constant 0 : index
    %c0_43 = arith.constant 0 : index
    %60 = vector.load %arg3[%c8, %c0_41, %c0_42, %c0_43] : memref<9x8x32x128xf32, #tpu.memory_space<vmem>>, vector<1x1x16x128xf32>
    %61 = vector.shape_cast %60 : vector<1x1x16x128xf32> to vector<16x128xf32>
    %62 = arith.mulf %61, %28 : vector<16x128xf32>
    %63 = arith.addf %59, %62 : vector<16x128xf32>
    %c0_i32_44 = arith.constant 0 : i32
    %64 = vector.broadcast %c0_i32_44 : i32 to vector<16x128xi32>
    %c0_i32_45 = arith.constant 0 : i32
    %65 = vector.broadcast %c0_i32_45 : i32 to vector<16x128xi32>
    %c0_46 = arith.constant 0 : index
    %c1_47 = arith.constant 1 : index
    %c0_48 = arith.constant 0 : index
    %c0_49 = arith.constant 0 : index
    %66 = vector.load %arg3[%c0_46, %c1_47, %c0_48, %c0_49] : memref<9x8x32x128xf32, #tpu.memory_space<vmem>>, vector<1x1x16x128xf32>
    %67 = vector.shape_cast %66 : vector<1x1x16x128xf32> to vector<16x128xf32>
    %68 = arith.mulf %67, %20 : vector<16x128xf32>
    %c1_50 = arith.constant 1 : index
    %c1_51 = arith.constant 1 : index
    %c0_52 = arith.constant 0 : index
    %c0_53 = arith.constant 0 : index
    %69 = vector.load %arg3[%c1_50, %c1_51, %c0_52, %c0_53] : memref<9x8x32x128xf32, #tpu.memory_space<vmem>>, vector<1x1x16x128xf32>
    %70 = vector.shape_cast %69 : vector<1x1x16x128xf32> to vector<16x128xf32>
    %71 = arith.mulf %70, %21 : vector<16x128xf32>
    %72 = arith.addf %68, %71 : vector<16x128xf32>
    %c2_54 = arith.constant 2 : index
    %c1_55 = arith.constant 1 : index
    %c0_56 = arith.constant 0 : index
    %c0_57 = arith.constant 0 : index
    %73 = vector.load %arg3[%c2_54, %c1_55, %c0_56, %c0_57] : memref<9x8x32x128xf32, #tpu.memory_space<vmem>>, vector<1x1x16x128xf32>
    %74 = vector.shape_cast %73 : vector<1x1x16x128xf32> to vector<16x128xf32>
    %75 = arith.mulf %74, %22 : vector<16x128xf32>
    %76 = arith.addf %72, %75 : vector<16x128xf32>
    %c3_58 = arith.constant 3 : index
    %c1_59 = arith.constant 1 : index
    %c0_60 = arith.constant 0 : index
    %c0_61 = arith.constant 0 : index
    %77 = vector.load %arg3[%c3_58, %c1_59, %c0_60, %c0_61] : memref<9x8x32x128xf32, #tpu.memory_space<vmem>>, vector<1x1x16x128xf32>
    %78 = vector.shape_cast %77 : vector<1x1x16x128xf32> to vector<16x128xf32>
    %79 = arith.mulf %78, %23 : vector<16x128xf32>
    %80 = arith.addf %76, %79 : vector<16x128xf32>
    %c4_62 = arith.constant 4 : index
    %c1_63 = arith.constant 1 : index
    %c0_64 = arith.constant 0 : index
    %c0_65 = arith.constant 0 : index
    %81 = vector.load %arg3[%c4_62, %c1_63, %c0_64, %c0_65] : memref<9x8x32x128xf32, #tpu.memory_space<vmem>>, vector<1x1x16x128xf32>
    %82 = vector.shape_cast %81 : vector<1x1x16x128xf32> to vector<16x128xf32>
    %83 = arith.mulf %82, %24 : vector<16x128xf32>
    %84 = arith.addf %80, %83 : vector<16x128xf32>
    %c5_66 = arith.constant 5 : index
    %c1_67 = arith.constant 1 : index
    %c0_68 = arith.constant 0 : index
    %c0_69 = arith.constant 0 : index
    %85 = vector.load %arg3[%c5_66, %c1_67, %c0_68, %c0_69] : memref<9x8x32x128xf32, #tpu.memory_space<vmem>>, vector<1x1x16x128xf32>
    %86 = vector.shape_cast %85 : vector<1x1x16x128xf32> to vector<16x128xf32>
    %87 = arith.mulf %86, %25 : vector<16x128xf32>
    %88 = arith.addf %84, %87 : vector<16x128xf32>
    %c6_70 = arith.constant 6 : index
    %c1_71 = arith.constant 1 : index
    %c0_72 = arith.constant 0 : index
    %c0_73 = arith.constant 0 : index
    %89 = vector.load %arg3[%c6_70, %c1_71, %c0_72, %c0_73] : memref<9x8x32x128xf32, #tpu.memory_space<vmem>>, vector<1x1x16x128xf32>
    %90 = vector.shape_cast %89 : vector<1x1x16x128xf32> to vector<16x128xf32>
    %91 = arith.mulf %90, %26 : vector<16x128xf32>
    %92 = arith.addf %88, %91 : vector<16x128xf32>
    %c7_74 = arith.constant 7 : index
    %c1_75 = arith.constant 1 : index
    %c0_76 = arith.constant 0 : index
    %c0_77 = arith.constant 0 : index
    %93 = vector.load %arg3[%c7_74, %c1_75, %c0_76, %c0_77] : memref<9x8x32x128xf32, #tpu.memory_space<vmem>>, vector<1x1x16x128xf32>
    %94 = vector.shape_cast %93 : vector<1x1x16x128xf32> to vector<16x128xf32>
    %95 = arith.mulf %94, %27 : vector<16x128xf32>
    %96 = arith.addf %92, %95 : vector<16x128xf32>
    %c8_78 = arith.constant 8 : index
    %c1_79 = arith.constant 1 : index
    %c0_80 = arith.constant 0 : index
    %c0_81 = arith.constant 0 : index
    %97 = vector.load %arg3[%c8_78, %c1_79, %c0_80, %c0_81] : memref<9x8x32x128xf32, #tpu.memory_space<vmem>>, vector<1x1x16x128xf32>
    %98 = vector.shape_cast %97 : vector<1x1x16x128xf32> to vector<16x128xf32>
    %99 = arith.mulf %98, %28 : vector<16x128xf32>
    %100 = arith.addf %96, %99 : vector<16x128xf32>
    %101 = arith.cmpf ogt, %100, %63 : vector<16x128xf32>
    %102 = arith.select %101, %100, %63 : vector<16x128xi1>, vector<16x128xf32>
    %c1_i32_82 = arith.constant 1 : i32
    %103 = vector.broadcast %c1_i32_82 : i32 to vector<16x128xi32>
    %104 = arith.select %101, %103, %64 : vector<16x128xi1>, vector<16x128xi32>
    %105 = arith.cmpf olt, %100, %63 : vector<16x128xf32>
    %106 = arith.select %105, %100, %63 : vector<16x128xi1>, vector<16x128xf32>
    %c1_i32_83 = arith.constant 1 : i32
    %107 = vector.broadcast %c1_i32_83 : i32 to vector<16x128xi32>
    %108 = arith.select %105, %107, %65 : vector<16x128xi1>, vector<16x128xi32>
    %c0_84 = arith.constant 0 : index
    %c2_85 = arith.constant 2 : index
    %c0_86 = arith.constant 0 : index
    %c0_87 = arith.constant 0 : index
    %109 = vector.load %arg3[%c0_84, %c2_85, %c0_86, %c0_87] : memref<9x8x32x128xf32, #tpu.memory_space<vmem>>, vector<1x1x16x128xf32>
    %110 = vector.shape_cast %109 : vector<1x1x16x128xf32> to vector<16x128xf32>
    %111 = arith.mulf %110, %20 : vector<16x128xf32>
    %c1_88 = arith.constant 1 : index
    %c2_89 = arith.constant 2 : index
    %c0_90 = arith.constant 0 : index
    %c0_91 = arith.constant 0 : index
    %112 = vector.load %arg3[%c1_88, %c2_89, %c0_90, %c0_91] : memref<9x8x32x128xf32, #tpu.memory_space<vmem>>, vector<1x1x16x128xf32>
    %113 = vector.shape_cast %112 : vector<1x1x16x128xf32> to vector<16x128xf32>
    %114 = arith.mulf %113, %21 : vector<16x128xf32>
    %115 = arith.addf %111, %114 : vector<16x128xf32>
    %c2_92 = arith.constant 2 : index
    %c2_93 = arith.constant 2 : index
    %c0_94 = arith.constant 0 : index
    %c0_95 = arith.constant 0 : index
    %116 = vector.load %arg3[%c2_92, %c2_93, %c0_94, %c0_95] : memref<9x8x32x128xf32, #tpu.memory_space<vmem>>, vector<1x1x16x128xf32>
    %117 = vector.shape_cast %116 : vector<1x1x16x128xf32> to vector<16x128xf32>
    %118 = arith.mulf %117, %22 : vector<16x128xf32>
    %119 = arith.addf %115, %118 : vector<16x128xf32>
    %c3_96 = arith.constant 3 : index
    %c2_97 = arith.constant 2 : index
    %c0_98 = arith.constant 0 : index
    %c0_99 = arith.constant 0 : index
    %120 = vector.load %arg3[%c3_96, %c2_97, %c0_98, %c0_99] : memref<9x8x32x128xf32, #tpu.memory_space<vmem>>, vector<1x1x16x128xf32>
    %121 = vector.shape_cast %120 : vector<1x1x16x128xf32> to vector<16x128xf32>
    %122 = arith.mulf %121, %23 : vector<16x128xf32>
    %123 = arith.addf %119, %122 : vector<16x128xf32>
    %c4_100 = arith.constant 4 : index
    %c2_101 = arith.constant 2 : index
    %c0_102 = arith.constant 0 : index
    %c0_103 = arith.constant 0 : index
    %124 = vector.load %arg3[%c4_100, %c2_101, %c0_102, %c0_103] : memref<9x8x32x128xf32, #tpu.memory_space<vmem>>, vector<1x1x16x128xf32>
    %125 = vector.shape_cast %124 : vector<1x1x16x128xf32> to vector<16x128xf32>
    %126 = arith.mulf %125, %24 : vector<16x128xf32>
    %127 = arith.addf %123, %126 : vector<16x128xf32>
    %c5_104 = arith.constant 5 : index
    %c2_105 = arith.constant 2 : index
    %c0_106 = arith.constant 0 : index
    %c0_107 = arith.constant 0 : index
    %128 = vector.load %arg3[%c5_104, %c2_105, %c0_106, %c0_107] : memref<9x8x32x128xf32, #tpu.memory_space<vmem>>, vector<1x1x16x128xf32>
    %129 = vector.shape_cast %128 : vector<1x1x16x128xf32> to vector<16x128xf32>
    %130 = arith.mulf %129, %25 : vector<16x128xf32>
    %131 = arith.addf %127, %130 : vector<16x128xf32>
    %c6_108 = arith.constant 6 : index
    %c2_109 = arith.constant 2 : index
    %c0_110 = arith.constant 0 : index
    %c0_111 = arith.constant 0 : index
    %132 = vector.load %arg3[%c6_108, %c2_109, %c0_110, %c0_111] : memref<9x8x32x128xf32, #tpu.memory_space<vmem>>, vector<1x1x16x128xf32>
    %133 = vector.shape_cast %132 : vector<1x1x16x128xf32> to vector<16x128xf32>
    %134 = arith.mulf %133, %26 : vector<16x128xf32>
    %135 = arith.addf %131, %134 : vector<16x128xf32>
    %c7_112 = arith.constant 7 : index
    %c2_113 = arith.constant 2 : index
    %c0_114 = arith.constant 0 : index
    %c0_115 = arith.constant 0 : index
    %136 = vector.load %arg3[%c7_112, %c2_113, %c0_114, %c0_115] : memref<9x8x32x128xf32, #tpu.memory_space<vmem>>, vector<1x1x16x128xf32>
    %137 = vector.shape_cast %136 : vector<1x1x16x128xf32> to vector<16x128xf32>
    %138 = arith.mulf %137, %27 : vector<16x128xf32>
    %139 = arith.addf %135, %138 : vector<16x128xf32>
    %c8_116 = arith.constant 8 : index
    %c2_117 = arith.constant 2 : index
    %c0_118 = arith.constant 0 : index
    %c0_119 = arith.constant 0 : index
    %140 = vector.load %arg3[%c8_116, %c2_117, %c0_118, %c0_119] : memref<9x8x32x128xf32, #tpu.memory_space<vmem>>, vector<1x1x16x128xf32>
    %141 = vector.shape_cast %140 : vector<1x1x16x128xf32> to vector<16x128xf32>
    %142 = arith.mulf %141, %28 : vector<16x128xf32>
    %143 = arith.addf %139, %142 : vector<16x128xf32>
    %144 = arith.cmpf ogt, %143, %102 : vector<16x128xf32>
    %145 = arith.select %144, %143, %102 : vector<16x128xi1>, vector<16x128xf32>
    %c2_i32 = arith.constant 2 : i32
    %146 = vector.broadcast %c2_i32 : i32 to vector<16x128xi32>
    %147 = arith.select %144, %146, %104 : vector<16x128xi1>, vector<16x128xi32>
    %148 = arith.cmpf olt, %143, %106 : vector<16x128xf32>
    %149 = arith.select %148, %143, %106 : vector<16x128xi1>, vector<16x128xf32>
    %c2_i32_120 = arith.constant 2 : i32
    %150 = vector.broadcast %c2_i32_120 : i32 to vector<16x128xi32>
    %151 = arith.select %148, %150, %108 : vector<16x128xi1>, vector<16x128xi32>
    %c0_121 = arith.constant 0 : index
    %c3_122 = arith.constant 3 : index
    %c0_123 = arith.constant 0 : index
    %c0_124 = arith.constant 0 : index
    %152 = vector.load %arg3[%c0_121, %c3_122, %c0_123, %c0_124] : memref<9x8x32x128xf32, #tpu.memory_space<vmem>>, vector<1x1x16x128xf32>
    %153 = vector.shape_cast %152 : vector<1x1x16x128xf32> to vector<16x128xf32>
    %154 = arith.mulf %153, %20 : vector<16x128xf32>
    %c1_125 = arith.constant 1 : index
    %c3_126 = arith.constant 3 : index
    %c0_127 = arith.constant 0 : index
    %c0_128 = arith.constant 0 : index
    %155 = vector.load %arg3[%c1_125, %c3_126, %c0_127, %c0_128] : memref<9x8x32x128xf32, #tpu.memory_space<vmem>>, vector<1x1x16x128xf32>
    %156 = vector.shape_cast %155 : vector<1x1x16x128xf32> to vector<16x128xf32>
    %157 = arith.mulf %156, %21 : vector<16x128xf32>
    %158 = arith.addf %154, %157 : vector<16x128xf32>
    %c2_129 = arith.constant 2 : index
    %c3_130 = arith.constant 3 : index
    %c0_131 = arith.constant 0 : index
    %c0_132 = arith.constant 0 : index
    %159 = vector.load %arg3[%c2_129, %c3_130, %c0_131, %c0_132] : memref<9x8x32x128xf32, #tpu.memory_space<vmem>>, vector<1x1x16x128xf32>
    %160 = vector.shape_cast %159 : vector<1x1x16x128xf32> to vector<16x128xf32>
    %161 = arith.mulf %160, %22 : vector<16x128xf32>
    %162 = arith.addf %158, %161 : vector<16x128xf32>
    %c3_133 = arith.constant 3 : index
    %c3_134 = arith.constant 3 : index
    %c0_135 = arith.constant 0 : index
    %c0_136 = arith.constant 0 : index
    %163 = vector.load %arg3[%c3_133, %c3_134, %c0_135, %c0_136] : memref<9x8x32x128xf32, #tpu.memory_space<vmem>>, vector<1x1x16x128xf32>
    %164 = vector.shape_cast %163 : vector<1x1x16x128xf32> to vector<16x128xf32>
    %165 = arith.mulf %164, %23 : vector<16x128xf32>
    %166 = arith.addf %162, %165 : vector<16x128xf32>
    %c4_137 = arith.constant 4 : index
    %c3_138 = arith.constant 3 : index
    %c0_139 = arith.constant 0 : index
    %c0_140 = arith.constant 0 : index
    %167 = vector.load %arg3[%c4_137, %c3_138, %c0_139, %c0_140] : memref<9x8x32x128xf32, #tpu.memory_space<vmem>>, vector<1x1x16x128xf32>
    %168 = vector.shape_cast %167 : vector<1x1x16x128xf32> to vector<16x128xf32>
    %169 = arith.mulf %168, %24 : vector<16x128xf32>
    %170 = arith.addf %166, %169 : vector<16x128xf32>
    %c5_141 = arith.constant 5 : index
    %c3_142 = arith.constant 3 : index
    %c0_143 = arith.constant 0 : index
    %c0_144 = arith.constant 0 : index
    %171 = vector.load %arg3[%c5_141, %c3_142, %c0_143, %c0_144] : memref<9x8x32x128xf32, #tpu.memory_space<vmem>>, vector<1x1x16x128xf32>
    %172 = vector.shape_cast %171 : vector<1x1x16x128xf32> to vector<16x128xf32>
    %173 = arith.mulf %172, %25 : vector<16x128xf32>
    %174 = arith.addf %170, %173 : vector<16x128xf32>
    %c6_145 = arith.constant 6 : index
    %c3_146 = arith.constant 3 : index
    %c0_147 = arith.constant 0 : index
    %c0_148 = arith.constant 0 : index
    %175 = vector.load %arg3[%c6_145, %c3_146, %c0_147, %c0_148] : memref<9x8x32x128xf32, #tpu.memory_space<vmem>>, vector<1x1x16x128xf32>
    %176 = vector.shape_cast %175 : vector<1x1x16x128xf32> to vector<16x128xf32>
    %177 = arith.mulf %176, %26 : vector<16x128xf32>
    %178 = arith.addf %174, %177 : vector<16x128xf32>
    %c7_149 = arith.constant 7 : index
    %c3_150 = arith.constant 3 : index
    %c0_151 = arith.constant 0 : index
    %c0_152 = arith.constant 0 : index
    %179 = vector.load %arg3[%c7_149, %c3_150, %c0_151, %c0_152] : memref<9x8x32x128xf32, #tpu.memory_space<vmem>>, vector<1x1x16x128xf32>
    %180 = vector.shape_cast %179 : vector<1x1x16x128xf32> to vector<16x128xf32>
    %181 = arith.mulf %180, %27 : vector<16x128xf32>
    %182 = arith.addf %178, %181 : vector<16x128xf32>
    %c8_153 = arith.constant 8 : index
    %c3_154 = arith.constant 3 : index
    %c0_155 = arith.constant 0 : index
    %c0_156 = arith.constant 0 : index
    %183 = vector.load %arg3[%c8_153, %c3_154, %c0_155, %c0_156] : memref<9x8x32x128xf32, #tpu.memory_space<vmem>>, vector<1x1x16x128xf32>
    %184 = vector.shape_cast %183 : vector<1x1x16x128xf32> to vector<16x128xf32>
    %185 = arith.mulf %184, %28 : vector<16x128xf32>
    %186 = arith.addf %182, %185 : vector<16x128xf32>
    %187 = arith.cmpf ogt, %186, %145 : vector<16x128xf32>
    %188 = arith.select %187, %186, %145 : vector<16x128xi1>, vector<16x128xf32>
    %c3_i32 = arith.constant 3 : i32
    %189 = vector.broadcast %c3_i32 : i32 to vector<16x128xi32>
    %190 = arith.select %187, %189, %147 : vector<16x128xi1>, vector<16x128xi32>
    %191 = arith.cmpf olt, %186, %149 : vector<16x128xf32>
    %192 = arith.select %191, %186, %149 : vector<16x128xi1>, vector<16x128xf32>
    %c3_i32_157 = arith.constant 3 : i32
    %193 = vector.broadcast %c3_i32_157 : i32 to vector<16x128xi32>
    %194 = arith.select %191, %193, %151 : vector<16x128xi1>, vector<16x128xi32>
    %c0_158 = arith.constant 0 : index
    %c4_159 = arith.constant 4 : index
    %c0_160 = arith.constant 0 : index
    %c0_161 = arith.constant 0 : index
    %195 = vector.load %arg3[%c0_158, %c4_159, %c0_160, %c0_161] : memref<9x8x32x128xf32, #tpu.memory_space<vmem>>, vector<1x1x16x128xf32>
    %196 = vector.shape_cast %195 : vector<1x1x16x128xf32> to vector<16x128xf32>
    %197 = arith.mulf %196, %20 : vector<16x128xf32>
    %c1_162 = arith.constant 1 : index
    %c4_163 = arith.constant 4 : index
    %c0_164 = arith.constant 0 : index
    %c0_165 = arith.constant 0 : index
    %198 = vector.load %arg3[%c1_162, %c4_163, %c0_164, %c0_165] : memref<9x8x32x128xf32, #tpu.memory_space<vmem>>, vector<1x1x16x128xf32>
    %199 = vector.shape_cast %198 : vector<1x1x16x128xf32> to vector<16x128xf32>
    %200 = arith.mulf %199, %21 : vector<16x128xf32>
    %201 = arith.addf %197, %200 : vector<16x128xf32>
    %c2_166 = arith.constant 2 : index
    %c4_167 = arith.constant 4 : index
    %c0_168 = arith.constant 0 : index
    %c0_169 = arith.constant 0 : index
    %202 = vector.load %arg3[%c2_166, %c4_167, %c0_168, %c0_169] : memref<9x8x32x128xf32, #tpu.memory_space<vmem>>, vector<1x1x16x128xf32>
    %203 = vector.shape_cast %202 : vector<1x1x16x128xf32> to vector<16x128xf32>
    %204 = arith.mulf %203, %22 : vector<16x128xf32>
    %205 = arith.addf %201, %204 : vector<16x128xf32>
    %c3_170 = arith.constant 3 : index
    %c4_171 = arith.constant 4 : index
    %c0_172 = arith.constant 0 : index
    %c0_173 = arith.constant 0 : index
    %206 = vector.load %arg3[%c3_170, %c4_171, %c0_172, %c0_173] : memref<9x8x32x128xf32, #tpu.memory_space<vmem>>, vector<1x1x16x128xf32>
    %207 = vector.shape_cast %206 : vector<1x1x16x128xf32> to vector<16x128xf32>
    %208 = arith.mulf %207, %23 : vector<16x128xf32>
    %209 = arith.addf %205, %208 : vector<16x128xf32>
    %c4_174 = arith.constant 4 : index
    %c4_175 = arith.constant 4 : index
    %c0_176 = arith.constant 0 : index
    %c0_177 = arith.constant 0 : index
    %210 = vector.load %arg3[%c4_174, %c4_175, %c0_176, %c0_177] : memref<9x8x32x128xf32, #tpu.memory_space<vmem>>, vector<1x1x16x128xf32>
    %211 = vector.shape_cast %210 : vector<1x1x16x128xf32> to vector<16x128xf32>
    %212 = arith.mulf %211, %24 : vector<16x128xf32>
    %213 = arith.addf %209, %212 : vector<16x128xf32>
    %c5_178 = arith.constant 5 : index
    %c4_179 = arith.constant 4 : index
    %c0_180 = arith.constant 0 : index
    %c0_181 = arith.constant 0 : index
    %214 = vector.load %arg3[%c5_178, %c4_179, %c0_180, %c0_181] : memref<9x8x32x128xf32, #tpu.memory_space<vmem>>, vector<1x1x16x128xf32>
    %215 = vector.shape_cast %214 : vector<1x1x16x128xf32> to vector<16x128xf32>
    %216 = arith.mulf %215, %25 : vector<16x128xf32>
    %217 = arith.addf %213, %216 : vector<16x128xf32>
    %c6_182 = arith.constant 6 : index
    %c4_183 = arith.constant 4 : index
    %c0_184 = arith.constant 0 : index
    %c0_185 = arith.constant 0 : index
    %218 = vector.load %arg3[%c6_182, %c4_183, %c0_184, %c0_185] : memref<9x8x32x128xf32, #tpu.memory_space<vmem>>, vector<1x1x16x128xf32>
    %219 = vector.shape_cast %218 : vector<1x1x16x128xf32> to vector<16x128xf32>
    %220 = arith.mulf %219, %26 : vector<16x128xf32>
    %221 = arith.addf %217, %220 : vector<16x128xf32>
    %c7_186 = arith.constant 7 : index
    %c4_187 = arith.constant 4 : index
    %c0_188 = arith.constant 0 : index
    %c0_189 = arith.constant 0 : index
    %222 = vector.load %arg3[%c7_186, %c4_187, %c0_188, %c0_189] : memref<9x8x32x128xf32, #tpu.memory_space<vmem>>, vector<1x1x16x128xf32>
    %223 = vector.shape_cast %222 : vector<1x1x16x128xf32> to vector<16x128xf32>
    %224 = arith.mulf %223, %27 : vector<16x128xf32>
    %225 = arith.addf %221, %224 : vector<16x128xf32>
    %c8_190 = arith.constant 8 : index
    %c4_191 = arith.constant 4 : index
    %c0_192 = arith.constant 0 : index
    %c0_193 = arith.constant 0 : index
    %226 = vector.load %arg3[%c8_190, %c4_191, %c0_192, %c0_193] : memref<9x8x32x128xf32, #tpu.memory_space<vmem>>, vector<1x1x16x128xf32>
    %227 = vector.shape_cast %226 : vector<1x1x16x128xf32> to vector<16x128xf32>
    %228 = arith.mulf %227, %28 : vector<16x128xf32>
    %229 = arith.addf %225, %228 : vector<16x128xf32>
    %230 = arith.cmpf ogt, %229, %188 : vector<16x128xf32>
    %231 = arith.select %230, %229, %188 : vector<16x128xi1>, vector<16x128xf32>
    %c4_i32 = arith.constant 4 : i32
    %232 = vector.broadcast %c4_i32 : i32 to vector<16x128xi32>
    %233 = arith.select %230, %232, %190 : vector<16x128xi1>, vector<16x128xi32>
    %234 = arith.cmpf olt, %229, %192 : vector<16x128xf32>
    %235 = arith.select %234, %229, %192 : vector<16x128xi1>, vector<16x128xf32>
    %c4_i32_194 = arith.constant 4 : i32
    %236 = vector.broadcast %c4_i32_194 : i32 to vector<16x128xi32>
    %237 = arith.select %234, %236, %194 : vector<16x128xi1>, vector<16x128xi32>
    %c0_195 = arith.constant 0 : index
    %c5_196 = arith.constant 5 : index
    %c0_197 = arith.constant 0 : index
    %c0_198 = arith.constant 0 : index
    %238 = vector.load %arg3[%c0_195, %c5_196, %c0_197, %c0_198] : memref<9x8x32x128xf32, #tpu.memory_space<vmem>>, vector<1x1x16x128xf32>
    %239 = vector.shape_cast %238 : vector<1x1x16x128xf32> to vector<16x128xf32>
    %240 = arith.mulf %239, %20 : vector<16x128xf32>
    %c1_199 = arith.constant 1 : index
    %c5_200 = arith.constant 5 : index
    %c0_201 = arith.constant 0 : index
    %c0_202 = arith.constant 0 : index
    %241 = vector.load %arg3[%c1_199, %c5_200, %c0_201, %c0_202] : memref<9x8x32x128xf32, #tpu.memory_space<vmem>>, vector<1x1x16x128xf32>
    %242 = vector.shape_cast %241 : vector<1x1x16x128xf32> to vector<16x128xf32>
    %243 = arith.mulf %242, %21 : vector<16x128xf32>
    %244 = arith.addf %240, %243 : vector<16x128xf32>
    %c2_203 = arith.constant 2 : index
    %c5_204 = arith.constant 5 : index
    %c0_205 = arith.constant 0 : index
    %c0_206 = arith.constant 0 : index
    %245 = vector.load %arg3[%c2_203, %c5_204, %c0_205, %c0_206] : memref<9x8x32x128xf32, #tpu.memory_space<vmem>>, vector<1x1x16x128xf32>
    %246 = vector.shape_cast %245 : vector<1x1x16x128xf32> to vector<16x128xf32>
    %247 = arith.mulf %246, %22 : vector<16x128xf32>
    %248 = arith.addf %244, %247 : vector<16x128xf32>
    %c3_207 = arith.constant 3 : index
    %c5_208 = arith.constant 5 : index
    %c0_209 = arith.constant 0 : index
    %c0_210 = arith.constant 0 : index
    %249 = vector.load %arg3[%c3_207, %c5_208, %c0_209, %c0_210] : memref<9x8x32x128xf32, #tpu.memory_space<vmem>>, vector<1x1x16x128xf32>
    %250 = vector.shape_cast %249 : vector<1x1x16x128xf32> to vector<16x128xf32>
    %251 = arith.mulf %250, %23 : vector<16x128xf32>
    %252 = arith.addf %248, %251 : vector<16x128xf32>
    %c4_211 = arith.constant 4 : index
    %c5_212 = arith.constant 5 : index
    %c0_213 = arith.constant 0 : index
    %c0_214 = arith.constant 0 : index
    %253 = vector.load %arg3[%c4_211, %c5_212, %c0_213, %c0_214] : memref<9x8x32x128xf32, #tpu.memory_space<vmem>>, vector<1x1x16x128xf32>
    %254 = vector.shape_cast %253 : vector<1x1x16x128xf32> to vector<16x128xf32>
    %255 = arith.mulf %254, %24 : vector<16x128xf32>
    %256 = arith.addf %252, %255 : vector<16x128xf32>
    %c5_215 = arith.constant 5 : index
    %c5_216 = arith.constant 5 : index
    %c0_217 = arith.constant 0 : index
    %c0_218 = arith.constant 0 : index
    %257 = vector.load %arg3[%c5_215, %c5_216, %c0_217, %c0_218] : memref<9x8x32x128xf32, #tpu.memory_space<vmem>>, vector<1x1x16x128xf32>
    %258 = vector.shape_cast %257 : vector<1x1x16x128xf32> to vector<16x128xf32>
    %259 = arith.mulf %258, %25 : vector<16x128xf32>
    %260 = arith.addf %256, %259 : vector<16x128xf32>
    %c6_219 = arith.constant 6 : index
    %c5_220 = arith.constant 5 : index
    %c0_221 = arith.constant 0 : index
    %c0_222 = arith.constant 0 : index
    %261 = vector.load %arg3[%c6_219, %c5_220, %c0_221, %c0_222] : memref<9x8x32x128xf32, #tpu.memory_space<vmem>>, vector<1x1x16x128xf32>
    %262 = vector.shape_cast %261 : vector<1x1x16x128xf32> to vector<16x128xf32>
    %263 = arith.mulf %262, %26 : vector<16x128xf32>
    %264 = arith.addf %260, %263 : vector<16x128xf32>
    %c7_223 = arith.constant 7 : index
    %c5_224 = arith.constant 5 : index
    %c0_225 = arith.constant 0 : index
    %c0_226 = arith.constant 0 : index
    %265 = vector.load %arg3[%c7_223, %c5_224, %c0_225, %c0_226] : memref<9x8x32x128xf32, #tpu.memory_space<vmem>>, vector<1x1x16x128xf32>
    %266 = vector.shape_cast %265 : vector<1x1x16x128xf32> to vector<16x128xf32>
    %267 = arith.mulf %266, %27 : vector<16x128xf32>
    %268 = arith.addf %264, %267 : vector<16x128xf32>
    %c8_227 = arith.constant 8 : index
    %c5_228 = arith.constant 5 : index
    %c0_229 = arith.constant 0 : index
    %c0_230 = arith.constant 0 : index
    %269 = vector.load %arg3[%c8_227, %c5_228, %c0_229, %c0_230] : memref<9x8x32x128xf32, #tpu.memory_space<vmem>>, vector<1x1x16x128xf32>
    %270 = vector.shape_cast %269 : vector<1x1x16x128xf32> to vector<16x128xf32>
    %271 = arith.mulf %270, %28 : vector<16x128xf32>
    %272 = arith.addf %268, %271 : vector<16x128xf32>
    %273 = arith.cmpf ogt, %272, %231 : vector<16x128xf32>
    %274 = arith.select %273, %272, %231 : vector<16x128xi1>, vector<16x128xf32>
    %c5_i32 = arith.constant 5 : i32
    %275 = vector.broadcast %c5_i32 : i32 to vector<16x128xi32>
    %276 = arith.select %273, %275, %233 : vector<16x128xi1>, vector<16x128xi32>
    %277 = arith.cmpf olt, %272, %235 : vector<16x128xf32>
    %278 = arith.select %277, %272, %235 : vector<16x128xi1>, vector<16x128xf32>
    %c5_i32_231 = arith.constant 5 : i32
    %279 = vector.broadcast %c5_i32_231 : i32 to vector<16x128xi32>
    %280 = arith.select %277, %279, %237 : vector<16x128xi1>, vector<16x128xi32>
    %c0_232 = arith.constant 0 : index
    %c6_233 = arith.constant 6 : index
    %c0_234 = arith.constant 0 : index
    %c0_235 = arith.constant 0 : index
    %281 = vector.load %arg3[%c0_232, %c6_233, %c0_234, %c0_235] : memref<9x8x32x128xf32, #tpu.memory_space<vmem>>, vector<1x1x16x128xf32>
    %282 = vector.shape_cast %281 : vector<1x1x16x128xf32> to vector<16x128xf32>
    %283 = arith.mulf %282, %20 : vector<16x128xf32>
    %c1_236 = arith.constant 1 : index
    %c6_237 = arith.constant 6 : index
    %c0_238 = arith.constant 0 : index
    %c0_239 = arith.constant 0 : index
    %284 = vector.load %arg3[%c1_236, %c6_237, %c0_238, %c0_239] : memref<9x8x32x128xf32, #tpu.memory_space<vmem>>, vector<1x1x16x128xf32>
    %285 = vector.shape_cast %284 : vector<1x1x16x128xf32> to vector<16x128xf32>
    %286 = arith.mulf %285, %21 : vector<16x128xf32>
    %287 = arith.addf %283, %286 : vector<16x128xf32>
    %c2_240 = arith.constant 2 : index
    %c6_241 = arith.constant 6 : index
    %c0_242 = arith.constant 0 : index
    %c0_243 = arith.constant 0 : index
    %288 = vector.load %arg3[%c2_240, %c6_241, %c0_242, %c0_243] : memref<9x8x32x128xf32, #tpu.memory_space<vmem>>, vector<1x1x16x128xf32>
    %289 = vector.shape_cast %288 : vector<1x1x16x128xf32> to vector<16x128xf32>
    %290 = arith.mulf %289, %22 : vector<16x128xf32>
    %291 = arith.addf %287, %290 : vector<16x128xf32>
    %c3_244 = arith.constant 3 : index
    %c6_245 = arith.constant 6 : index
    %c0_246 = arith.constant 0 : index
    %c0_247 = arith.constant 0 : index
    %292 = vector.load %arg3[%c3_244, %c6_245, %c0_246, %c0_247] : memref<9x8x32x128xf32, #tpu.memory_space<vmem>>, vector<1x1x16x128xf32>
    %293 = vector.shape_cast %292 : vector<1x1x16x128xf32> to vector<16x128xf32>
    %294 = arith.mulf %293, %23 : vector<16x128xf32>
    %295 = arith.addf %291, %294 : vector<16x128xf32>
    %c4_248 = arith.constant 4 : index
    %c6_249 = arith.constant 6 : index
    %c0_250 = arith.constant 0 : index
    %c0_251 = arith.constant 0 : index
    %296 = vector.load %arg3[%c4_248, %c6_249, %c0_250, %c0_251] : memref<9x8x32x128xf32, #tpu.memory_space<vmem>>, vector<1x1x16x128xf32>
    %297 = vector.shape_cast %296 : vector<1x1x16x128xf32> to vector<16x128xf32>
    %298 = arith.mulf %297, %24 : vector<16x128xf32>
    %299 = arith.addf %295, %298 : vector<16x128xf32>
    %c5_252 = arith.constant 5 : index
    %c6_253 = arith.constant 6 : index
    %c0_254 = arith.constant 0 : index
    %c0_255 = arith.constant 0 : index
    %300 = vector.load %arg3[%c5_252, %c6_253, %c0_254, %c0_255] : memref<9x8x32x128xf32, #tpu.memory_space<vmem>>, vector<1x1x16x128xf32>
    %301 = vector.shape_cast %300 : vector<1x1x16x128xf32> to vector<16x128xf32>
    %302 = arith.mulf %301, %25 : vector<16x128xf32>
    %303 = arith.addf %299, %302 : vector<16x128xf32>
    %c6_256 = arith.constant 6 : index
    %c6_257 = arith.constant 6 : index
    %c0_258 = arith.constant 0 : index
    %c0_259 = arith.constant 0 : index
    %304 = vector.load %arg3[%c6_256, %c6_257, %c0_258, %c0_259] : memref<9x8x32x128xf32, #tpu.memory_space<vmem>>, vector<1x1x16x128xf32>
    %305 = vector.shape_cast %304 : vector<1x1x16x128xf32> to vector<16x128xf32>
    %306 = arith.mulf %305, %26 : vector<16x128xf32>
    %307 = arith.addf %303, %306 : vector<16x128xf32>
    %c7_260 = arith.constant 7 : index
    %c6_261 = arith.constant 6 : index
    %c0_262 = arith.constant 0 : index
    %c0_263 = arith.constant 0 : index
    %308 = vector.load %arg3[%c7_260, %c6_261, %c0_262, %c0_263] : memref<9x8x32x128xf32, #tpu.memory_space<vmem>>, vector<1x1x16x128xf32>
    %309 = vector.shape_cast %308 : vector<1x1x16x128xf32> to vector<16x128xf32>
    %310 = arith.mulf %309, %27 : vector<16x128xf32>
    %311 = arith.addf %307, %310 : vector<16x128xf32>
    %c8_264 = arith.constant 8 : index
    %c6_265 = arith.constant 6 : index
    %c0_266 = arith.constant 0 : index
    %c0_267 = arith.constant 0 : index
    %312 = vector.load %arg3[%c8_264, %c6_265, %c0_266, %c0_267] : memref<9x8x32x128xf32, #tpu.memory_space<vmem>>, vector<1x1x16x128xf32>
    %313 = vector.shape_cast %312 : vector<1x1x16x128xf32> to vector<16x128xf32>
    %314 = arith.mulf %313, %28 : vector<16x128xf32>
    %315 = arith.addf %311, %314 : vector<16x128xf32>
    %316 = arith.cmpf ogt, %315, %274 : vector<16x128xf32>
    %317 = arith.select %316, %315, %274 : vector<16x128xi1>, vector<16x128xf32>
    %c6_i32 = arith.constant 6 : i32
    %318 = vector.broadcast %c6_i32 : i32 to vector<16x128xi32>
    %319 = arith.select %316, %318, %276 : vector<16x128xi1>, vector<16x128xi32>
    %320 = arith.cmpf olt, %315, %278 : vector<16x128xf32>
    %321 = arith.select %320, %315, %278 : vector<16x128xi1>, vector<16x128xf32>
    %c6_i32_268 = arith.constant 6 : i32
    %322 = vector.broadcast %c6_i32_268 : i32 to vector<16x128xi32>
    %323 = arith.select %320, %322, %280 : vector<16x128xi1>, vector<16x128xi32>
    %c0_269 = arith.constant 0 : index
    %c7_270 = arith.constant 7 : index
    %c0_271 = arith.constant 0 : index
    %c0_272 = arith.constant 0 : index
    %324 = vector.load %arg3[%c0_269, %c7_270, %c0_271, %c0_272] : memref<9x8x32x128xf32, #tpu.memory_space<vmem>>, vector<1x1x16x128xf32>
    %325 = vector.shape_cast %324 : vector<1x1x16x128xf32> to vector<16x128xf32>
    %326 = arith.mulf %325, %20 : vector<16x128xf32>
    %c1_273 = arith.constant 1 : index
    %c7_274 = arith.constant 7 : index
    %c0_275 = arith.constant 0 : index
    %c0_276 = arith.constant 0 : index
    %327 = vector.load %arg3[%c1_273, %c7_274, %c0_275, %c0_276] : memref<9x8x32x128xf32, #tpu.memory_space<vmem>>, vector<1x1x16x128xf32>
    %328 = vector.shape_cast %327 : vector<1x1x16x128xf32> to vector<16x128xf32>
    %329 = arith.mulf %328, %21 : vector<16x128xf32>
    %330 = arith.addf %326, %329 : vector<16x128xf32>
    %c2_277 = arith.constant 2 : index
    %c7_278 = arith.constant 7 : index
    %c0_279 = arith.constant 0 : index
    %c0_280 = arith.constant 0 : index
    %331 = vector.load %arg3[%c2_277, %c7_278, %c0_279, %c0_280] : memref<9x8x32x128xf32, #tpu.memory_space<vmem>>, vector<1x1x16x128xf32>
    %332 = vector.shape_cast %331 : vector<1x1x16x128xf32> to vector<16x128xf32>
    %333 = arith.mulf %332, %22 : vector<16x128xf32>
    %334 = arith.addf %330, %333 : vector<16x128xf32>
    %c3_281 = arith.constant 3 : index
    %c7_282 = arith.constant 7 : index
    %c0_283 = arith.constant 0 : index
    %c0_284 = arith.constant 0 : index
    %335 = vector.load %arg3[%c3_281, %c7_282, %c0_283, %c0_284] : memref<9x8x32x128xf32, #tpu.memory_space<vmem>>, vector<1x1x16x128xf32>
    %336 = vector.shape_cast %335 : vector<1x1x16x128xf32> to vector<16x128xf32>
    %337 = arith.mulf %336, %23 : vector<16x128xf32>
    %338 = arith.addf %334, %337 : vector<16x128xf32>
    %c4_285 = arith.constant 4 : index
    %c7_286 = arith.constant 7 : index
    %c0_287 = arith.constant 0 : index
    %c0_288 = arith.constant 0 : index
    %339 = vector.load %arg3[%c4_285, %c7_286, %c0_287, %c0_288] : memref<9x8x32x128xf32, #tpu.memory_space<vmem>>, vector<1x1x16x128xf32>
    %340 = vector.shape_cast %339 : vector<1x1x16x128xf32> to vector<16x128xf32>
    %341 = arith.mulf %340, %24 : vector<16x128xf32>
    %342 = arith.addf %338, %341 : vector<16x128xf32>
    %c5_289 = arith.constant 5 : index
    %c7_290 = arith.constant 7 : index
    %c0_291 = arith.constant 0 : index
    %c0_292 = arith.constant 0 : index
    %343 = vector.load %arg3[%c5_289, %c7_290, %c0_291, %c0_292] : memref<9x8x32x128xf32, #tpu.memory_space<vmem>>, vector<1x1x16x128xf32>
    %344 = vector.shape_cast %343 : vector<1x1x16x128xf32> to vector<16x128xf32>
    %345 = arith.mulf %344, %25 : vector<16x128xf32>
    %346 = arith.addf %342, %345 : vector<16x128xf32>
    %c6_293 = arith.constant 6 : index
    %c7_294 = arith.constant 7 : index
    %c0_295 = arith.constant 0 : index
    %c0_296 = arith.constant 0 : index
    %347 = vector.load %arg3[%c6_293, %c7_294, %c0_295, %c0_296] : memref<9x8x32x128xf32, #tpu.memory_space<vmem>>, vector<1x1x16x128xf32>
    %348 = vector.shape_cast %347 : vector<1x1x16x128xf32> to vector<16x128xf32>
    %349 = arith.mulf %348, %26 : vector<16x128xf32>
    %350 = arith.addf %346, %349 : vector<16x128xf32>
    %c7_297 = arith.constant 7 : index
    %c7_298 = arith.constant 7 : index
    %c0_299 = arith.constant 0 : index
    %c0_300 = arith.constant 0 : index
    %351 = vector.load %arg3[%c7_297, %c7_298, %c0_299, %c0_300] : memref<9x8x32x128xf32, #tpu.memory_space<vmem>>, vector<1x1x16x128xf32>
    %352 = vector.shape_cast %351 : vector<1x1x16x128xf32> to vector<16x128xf32>
    %353 = arith.mulf %352, %27 : vector<16x128xf32>
    %354 = arith.addf %350, %353 : vector<16x128xf32>
    %c8_301 = arith.constant 8 : index
    %c7_302 = arith.constant 7 : index
    %c0_303 = arith.constant 0 : index
    %c0_304 = arith.constant 0 : index
    %355 = vector.load %arg3[%c8_301, %c7_302, %c0_303, %c0_304] : memref<9x8x32x128xf32, #tpu.memory_space<vmem>>, vector<1x1x16x128xf32>
    %356 = vector.shape_cast %355 : vector<1x1x16x128xf32> to vector<16x128xf32>
    %357 = arith.mulf %356, %28 : vector<16x128xf32>
    %358 = arith.addf %354, %357 : vector<16x128xf32>
    %359 = arith.cmpf ogt, %358, %317 : vector<16x128xf32>
    %360 = arith.select %359, %358, %317 : vector<16x128xi1>, vector<16x128xf32>
    %c7_i32 = arith.constant 7 : i32
    %361 = vector.broadcast %c7_i32 : i32 to vector<16x128xi32>
    %362 = arith.select %359, %361, %319 : vector<16x128xi1>, vector<16x128xi32>
    %363 = arith.cmpf olt, %358, %321 : vector<16x128xf32>
    %c7_i32_305 = arith.constant 7 : i32
    %364 = vector.broadcast %c7_i32_305 : i32 to vector<16x128xi32>
    %365 = arith.select %363, %364, %323 : vector<16x128xi1>, vector<16x128xi32>
    %366 = arith.mulf %360, %19 : vector<16x128xf32>
    %c0_i32_306 = arith.constant 0 : i32
    %367 = vector.broadcast %c0_i32_306 : i32 to vector<16x128xi32>
    %368 = arith.cmpi eq, %362, %367 : vector<16x128xi32>
    %cst_307 = arith.constant 0.000000e+00 : f32
    %369 = vector.broadcast %cst_307 : f32 to vector<16x128xf32>
    %370 = arith.select %368, %366, %369 : vector<16x128xi1>, vector<16x128xf32>
    %cst_308 = arith.constant dense<0.000000e+00> : vector<16xf32>
    %371 = vector.multi_reduction <add>, %370, %cst_308 [1] : vector<16x128xf32> to vector<16xf32>
    %372 = vector.shape_cast %371 : vector<16xf32> to vector<16x1xf32>
    %c0_i32_309 = arith.constant 0 : i32
    %373 = vector.broadcast %c0_i32_309 : i32 to vector<16x128xi32>
    %374 = arith.cmpi eq, %365, %373 : vector<16x128xi32>
    %cst_310 = arith.constant 0.000000e+00 : f32
    %375 = vector.broadcast %cst_310 : f32 to vector<16x128xf32>
    %376 = arith.select %374, %19, %375 : vector<16x128xi1>, vector<16x128xf32>
    %cst_311 = arith.constant dense<0.000000e+00> : vector<16xf32>
    %377 = vector.multi_reduction <add>, %376, %cst_311 [1] : vector<16x128xf32> to vector<16xf32>
    %378 = vector.shape_cast %377 : vector<16xf32> to vector<16x1xf32>
    %c1_i32_312 = arith.constant 1 : i32
    %379 = vector.broadcast %c1_i32_312 : i32 to vector<16x128xi32>
    %380 = arith.cmpi eq, %362, %379 : vector<16x128xi32>
    %cst_313 = arith.constant 0.000000e+00 : f32
    %381 = vector.broadcast %cst_313 : f32 to vector<16x128xf32>
    %382 = arith.select %380, %366, %381 : vector<16x128xi1>, vector<16x128xf32>
    %cst_314 = arith.constant dense<0.000000e+00> : vector<16xf32>
    %383 = vector.multi_reduction <add>, %382, %cst_314 [1] : vector<16x128xf32> to vector<16xf32>
    %384 = vector.shape_cast %383 : vector<16xf32> to vector<16x1xf32>
    %c1_i32_315 = arith.constant 1 : i32
    %385 = vector.broadcast %c1_i32_315 : i32 to vector<16x128xi32>
    %386 = arith.cmpi eq, %365, %385 : vector<16x128xi32>
    %cst_316 = arith.constant 0.000000e+00 : f32
    %387 = vector.broadcast %cst_316 : f32 to vector<16x128xf32>
    %388 = arith.select %386, %19, %387 : vector<16x128xi1>, vector<16x128xf32>
    %cst_317 = arith.constant dense<0.000000e+00> : vector<16xf32>
    %389 = vector.multi_reduction <add>, %388, %cst_317 [1] : vector<16x128xf32> to vector<16xf32>
    %390 = vector.shape_cast %389 : vector<16xf32> to vector<16x1xf32>
    %c2_i32_318 = arith.constant 2 : i32
    %391 = vector.broadcast %c2_i32_318 : i32 to vector<16x128xi32>
    %392 = arith.cmpi eq, %362, %391 : vector<16x128xi32>
    %cst_319 = arith.constant 0.000000e+00 : f32
    %393 = vector.broadcast %cst_319 : f32 to vector<16x128xf32>
    %394 = arith.select %392, %366, %393 : vector<16x128xi1>, vector<16x128xf32>
    %cst_320 = arith.constant dense<0.000000e+00> : vector<16xf32>
    %395 = vector.multi_reduction <add>, %394, %cst_320 [1] : vector<16x128xf32> to vector<16xf32>
    %396 = vector.shape_cast %395 : vector<16xf32> to vector<16x1xf32>
    %c2_i32_321 = arith.constant 2 : i32
    %397 = vector.broadcast %c2_i32_321 : i32 to vector<16x128xi32>
    %398 = arith.cmpi eq, %365, %397 : vector<16x128xi32>
    %cst_322 = arith.constant 0.000000e+00 : f32
    %399 = vector.broadcast %cst_322 : f32 to vector<16x128xf32>
    %400 = arith.select %398, %19, %399 : vector<16x128xi1>, vector<16x128xf32>
    %cst_323 = arith.constant dense<0.000000e+00> : vector<16xf32>
    %401 = vector.multi_reduction <add>, %400, %cst_323 [1] : vector<16x128xf32> to vector<16xf32>
    %402 = vector.shape_cast %401 : vector<16xf32> to vector<16x1xf32>
    %c3_i32_324 = arith.constant 3 : i32
    %403 = vector.broadcast %c3_i32_324 : i32 to vector<16x128xi32>
    %404 = arith.cmpi eq, %362, %403 : vector<16x128xi32>
    %cst_325 = arith.constant 0.000000e+00 : f32
    %405 = vector.broadcast %cst_325 : f32 to vector<16x128xf32>
    %406 = arith.select %404, %366, %405 : vector<16x128xi1>, vector<16x128xf32>
    %cst_326 = arith.constant dense<0.000000e+00> : vector<16xf32>
    %407 = vector.multi_reduction <add>, %406, %cst_326 [1] : vector<16x128xf32> to vector<16xf32>
    %408 = vector.shape_cast %407 : vector<16xf32> to vector<16x1xf32>
    %c3_i32_327 = arith.constant 3 : i32
    %409 = vector.broadcast %c3_i32_327 : i32 to vector<16x128xi32>
    %410 = arith.cmpi eq, %365, %409 : vector<16x128xi32>
    %cst_328 = arith.constant 0.000000e+00 : f32
    %411 = vector.broadcast %cst_328 : f32 to vector<16x128xf32>
    %412 = arith.select %410, %19, %411 : vector<16x128xi1>, vector<16x128xf32>
    %cst_329 = arith.constant dense<0.000000e+00> : vector<16xf32>
    %413 = vector.multi_reduction <add>, %412, %cst_329 [1] : vector<16x128xf32> to vector<16xf32>
    %414 = vector.shape_cast %413 : vector<16xf32> to vector<16x1xf32>
    %c4_i32_330 = arith.constant 4 : i32
    %415 = vector.broadcast %c4_i32_330 : i32 to vector<16x128xi32>
    %416 = arith.cmpi eq, %362, %415 : vector<16x128xi32>
    %cst_331 = arith.constant 0.000000e+00 : f32
    %417 = vector.broadcast %cst_331 : f32 to vector<16x128xf32>
    %418 = arith.select %416, %366, %417 : vector<16x128xi1>, vector<16x128xf32>
    %cst_332 = arith.constant dense<0.000000e+00> : vector<16xf32>
    %419 = vector.multi_reduction <add>, %418, %cst_332 [1] : vector<16x128xf32> to vector<16xf32>
    %420 = vector.shape_cast %419 : vector<16xf32> to vector<16x1xf32>
    %c4_i32_333 = arith.constant 4 : i32
    %421 = vector.broadcast %c4_i32_333 : i32 to vector<16x128xi32>
    %422 = arith.cmpi eq, %365, %421 : vector<16x128xi32>
    %cst_334 = arith.constant 0.000000e+00 : f32
    %423 = vector.broadcast %cst_334 : f32 to vector<16x128xf32>
    %424 = arith.select %422, %19, %423 : vector<16x128xi1>, vector<16x128xf32>
    %cst_335 = arith.constant dense<0.000000e+00> : vector<16xf32>
    %425 = vector.multi_reduction <add>, %424, %cst_335 [1] : vector<16x128xf32> to vector<16xf32>
    %426 = vector.shape_cast %425 : vector<16xf32> to vector<16x1xf32>
    %c5_i32_336 = arith.constant 5 : i32
    %427 = vector.broadcast %c5_i32_336 : i32 to vector<16x128xi32>
    %428 = arith.cmpi eq, %362, %427 : vector<16x128xi32>
    %cst_337 = arith.constant 0.000000e+00 : f32
    %429 = vector.broadcast %cst_337 : f32 to vector<16x128xf32>
    %430 = arith.select %428, %366, %429 : vector<16x128xi1>, vector<16x128xf32>
    %cst_338 = arith.constant dense<0.000000e+00> : vector<16xf32>
    %431 = vector.multi_reduction <add>, %430, %cst_338 [1] : vector<16x128xf32> to vector<16xf32>
    %432 = vector.shape_cast %431 : vector<16xf32> to vector<16x1xf32>
    %c5_i32_339 = arith.constant 5 : i32
    %433 = vector.broadcast %c5_i32_339 : i32 to vector<16x128xi32>
    %434 = arith.cmpi eq, %365, %433 : vector<16x128xi32>
    %cst_340 = arith.constant 0.000000e+00 : f32
    %435 = vector.broadcast %cst_340 : f32 to vector<16x128xf32>
    %436 = arith.select %434, %19, %435 : vector<16x128xi1>, vector<16x128xf32>
    %cst_341 = arith.constant dense<0.000000e+00> : vector<16xf32>
    %437 = vector.multi_reduction <add>, %436, %cst_341 [1] : vector<16x128xf32> to vector<16xf32>
    %438 = vector.shape_cast %437 : vector<16xf32> to vector<16x1xf32>
    %c6_i32_342 = arith.constant 6 : i32
    %439 = vector.broadcast %c6_i32_342 : i32 to vector<16x128xi32>
    %440 = arith.cmpi eq, %362, %439 : vector<16x128xi32>
    %cst_343 = arith.constant 0.000000e+00 : f32
    %441 = vector.broadcast %cst_343 : f32 to vector<16x128xf32>
    %442 = arith.select %440, %366, %441 : vector<16x128xi1>, vector<16x128xf32>
    %cst_344 = arith.constant dense<0.000000e+00> : vector<16xf32>
    %443 = vector.multi_reduction <add>, %442, %cst_344 [1] : vector<16x128xf32> to vector<16xf32>
    %444 = vector.shape_cast %443 : vector<16xf32> to vector<16x1xf32>
    %c6_i32_345 = arith.constant 6 : i32
    %445 = vector.broadcast %c6_i32_345 : i32 to vector<16x128xi32>
    %446 = arith.cmpi eq, %365, %445 : vector<16x128xi32>
    %cst_346 = arith.constant 0.000000e+00 : f32
    %447 = vector.broadcast %cst_346 : f32 to vector<16x128xf32>
    %448 = arith.select %446, %19, %447 : vector<16x128xi1>, vector<16x128xf32>
    %cst_347 = arith.constant dense<0.000000e+00> : vector<16xf32>
    %449 = vector.multi_reduction <add>, %448, %cst_347 [1] : vector<16x128xf32> to vector<16xf32>
    %450 = vector.shape_cast %449 : vector<16xf32> to vector<16x1xf32>
    %c7_i32_348 = arith.constant 7 : i32
    %451 = vector.broadcast %c7_i32_348 : i32 to vector<16x128xi32>
    %452 = arith.cmpi eq, %362, %451 : vector<16x128xi32>
    %cst_349 = arith.constant 0.000000e+00 : f32
    %453 = vector.broadcast %cst_349 : f32 to vector<16x128xf32>
    %454 = arith.select %452, %366, %453 : vector<16x128xi1>, vector<16x128xf32>
    %cst_350 = arith.constant dense<0.000000e+00> : vector<16xf32>
    %455 = vector.multi_reduction <add>, %454, %cst_350 [1] : vector<16x128xf32> to vector<16xf32>
    %456 = vector.shape_cast %455 : vector<16xf32> to vector<16x1xf32>
    %c7_i32_351 = arith.constant 7 : i32
    %457 = vector.broadcast %c7_i32_351 : i32 to vector<16x128xi32>
    %458 = arith.cmpi eq, %365, %457 : vector<16x128xi32>
    %cst_352 = arith.constant 0.000000e+00 : f32
    %459 = vector.broadcast %cst_352 : f32 to vector<16x128xf32>
    %460 = arith.select %458, %19, %459 : vector<16x128xi1>, vector<16x128xf32>
    %cst_353 = arith.constant dense<0.000000e+00> : vector<16xf32>
    %461 = vector.multi_reduction <add>, %460, %cst_353 [1] : vector<16x128xf32> to vector<16xf32>
    %462 = vector.shape_cast %461 : vector<16xf32> to vector<16x1xf32>
    %463 = tpu.concatenate %372, %384, %396, %408, %420, %432, %444, %456 in 1 : vector<16x1xf32>, vector<16x1xf32>, vector<16x1xf32>, vector<16x1xf32>, vector<16x1xf32>, vector<16x1xf32>, vector<16x1xf32>, vector<16x1xf32> -> vector<16x8xf32>
    %464 = tpu.concatenate %378, %390, %402, %414, %426, %438, %450, %462 in 1 : vector<16x1xf32>, vector<16x1xf32>, vector<16x1xf32>, vector<16x1xf32>, vector<16x1xf32>, vector<16x1xf32>, vector<16x1xf32>, vector<16x1xf32> -> vector<16x8xf32>
    %465 = arith.addf %9, %463 : vector<16x8xf32>
    %c0_354 = arith.constant 0 : index
    %c0_355 = arith.constant 0 : index
    %c0_356 = arith.constant 0 : index
    %466 = vector.load %arg4[%c0_354, %c0_355, %c0_356] : memref<1x32x16xf32, #tpu.memory_space<vmem>>, vector<1x16x8xf32>
    %467 = vector.shape_cast %466 : vector<1x16x8xf32> to vector<16x8xf32>
    %468 = vector.shape_cast %465 : vector<16x8xf32> to vector<1x16x8xf32>
    tpu.vector_store %arg4[%c0_354, %c0_355, %c0_356], %468 {strides = array<i32>} : memref<1x32x16xf32, #tpu.memory_space<vmem>>, vector<1x16x8xf32>,
    %469 = arith.addf %10, %464 : vector<16x8xf32>
    %c0_357 = arith.constant 0 : index
    %c0_358 = arith.constant 0 : index
    %c8_359 = arith.constant 8 : index
    %470 = vector.load %arg4[%c0_357, %c0_358, %c8_359] : memref<1x32x16xf32, #tpu.memory_space<vmem>>, vector<1x16x8xf32>
    %471 = vector.shape_cast %470 : vector<1x16x8xf32> to vector<16x8xf32>
    %472 = vector.shape_cast %469 : vector<16x8xf32> to vector<1x16x8xf32>
    tpu.vector_store %arg4[%c0_357, %c0_358, %c8_359], %472 {strides = array<i32>} : memref<1x32x16xf32, #tpu.memory_space<vmem>>, vector<1x16x8xf32>,
    %473 = tpu.iota {dimensions = array<i32: 1>} : vector<16x128xi32>
    %c0_i32_360 = arith.constant 0 : i32
    %474 = vector.broadcast %c0_i32_360 : i32 to vector<16x128xi32>
    %475 = arith.addi %474, %473 : vector<16x128xi32>
    %476 = vector.broadcast %8 : i32 to vector<16x128xi32>
    %477 = arith.cmpi slt, %475, %476 : vector<16x128xi32>
    %478 = arith.extui %477 : vector<16x128xi1> to vector<16x128xi32>
    %479 = arith.sitofp %478 : vector<16x128xi32> to vector<16x128xf32>
    %c16 = arith.constant 16 : index
    %c120_361 = arith.constant 120 : index
    %480 = vector.load %arg5[%c16, %c120_361] : memref<32x384xf32, #tpu.memory_space<vmem>>, vector<16x128xf32>
    %c16_362 = arith.constant 16 : index
    %c122_363 = arith.constant 122 : index
    %481 = vector.load %arg5[%c16_362, %c122_363] : memref<32x384xf32, #tpu.memory_space<vmem>>, vector<16x128xf32>
    %c16_364 = arith.constant 16 : index
    %c124_365 = arith.constant 124 : index
    %482 = vector.load %arg5[%c16_364, %c124_365] : memref<32x384xf32, #tpu.memory_space<vmem>>, vector<16x128xf32>
    %c16_366 = arith.constant 16 : index
    %c126_367 = arith.constant 126 : index
    %483 = vector.load %arg5[%c16_366, %c126_367] : memref<32x384xf32, #tpu.memory_space<vmem>>, vector<16x128xf32>
    %c16_368 = arith.constant 16 : index
    %c128_369 = arith.constant 128 : index
    %484 = vector.load %arg5[%c16_368, %c128_369] : memref<32x384xf32, #tpu.memory_space<vmem>>, vector<16x128xf32>
    %c16_370 = arith.constant 16 : index
    %c130_371 = arith.constant 130 : index
    %485 = vector.load %arg5[%c16_370, %c130_371] : memref<32x384xf32, #tpu.memory_space<vmem>>, vector<16x128xf32>
    %c16_372 = arith.constant 16 : index
    %c132_373 = arith.constant 132 : index
    %486 = vector.load %arg5[%c16_372, %c132_373] : memref<32x384xf32, #tpu.memory_space<vmem>>, vector<16x128xf32>
    %c16_374 = arith.constant 16 : index
    %c134_375 = arith.constant 134 : index
    %487 = vector.load %arg5[%c16_374, %c134_375] : memref<32x384xf32, #tpu.memory_space<vmem>>, vector<16x128xf32>
    %c16_376 = arith.constant 16 : index
    %c136_377 = arith.constant 136 : index
    %488 = vector.load %arg5[%c16_376, %c136_377] : memref<32x384xf32, #tpu.memory_space<vmem>>, vector<16x128xf32>
    %c0_378 = arith.constant 0 : index
    %c0_379 = arith.constant 0 : index
    %c16_380 = arith.constant 16 : index
    %c0_381 = arith.constant 0 : index
    %489 = vector.load %arg3[%c0_378, %c0_379, %c16_380, %c0_381] : memref<9x8x32x128xf32, #tpu.memory_space<vmem>>, vector<1x1x16x128xf32>
    %490 = vector.shape_cast %489 : vector<1x1x16x128xf32> to vector<16x128xf32>
    %491 = arith.mulf %490, %480 : vector<16x128xf32>
    %c1_382 = arith.constant 1 : index
    %c0_383 = arith.constant 0 : index
    %c16_384 = arith.constant 16 : index
    %c0_385 = arith.constant 0 : index
    %492 = vector.load %arg3[%c1_382, %c0_383, %c16_384, %c0_385] : memref<9x8x32x128xf32, #tpu.memory_space<vmem>>, vector<1x1x16x128xf32>
    %493 = vector.shape_cast %492 : vector<1x1x16x128xf32> to vector<16x128xf32>
    %494 = arith.mulf %493, %481 : vector<16x128xf32>
    %495 = arith.addf %491, %494 : vector<16x128xf32>
    %c2_386 = arith.constant 2 : index
    %c0_387 = arith.constant 0 : index
    %c16_388 = arith.constant 16 : index
    %c0_389 = arith.constant 0 : index
    %496 = vector.load %arg3[%c2_386, %c0_387, %c16_388, %c0_389] : memref<9x8x32x128xf32, #tpu.memory_space<vmem>>, vector<1x1x16x128xf32>
    %497 = vector.shape_cast %496 : vector<1x1x16x128xf32> to vector<16x128xf32>
    %498 = arith.mulf %497, %482 : vector<16x128xf32>
    %499 = arith.addf %495, %498 : vector<16x128xf32>
    %c3_390 = arith.constant 3 : index
    %c0_391 = arith.constant 0 : index
    %c16_392 = arith.constant 16 : index
    %c0_393 = arith.constant 0 : index
    %500 = vector.load %arg3[%c3_390, %c0_391, %c16_392, %c0_393] : memref<9x8x32x128xf32, #tpu.memory_space<vmem>>, vector<1x1x16x128xf32>
    %501 = vector.shape_cast %500 : vector<1x1x16x128xf32> to vector<16x128xf32>
    %502 = arith.mulf %501, %483 : vector<16x128xf32>
    %503 = arith.addf %499, %502 : vector<16x128xf32>
    %c4_394 = arith.constant 4 : index
    %c0_395 = arith.constant 0 : index
    %c16_396 = arith.constant 16 : index
    %c0_397 = arith.constant 0 : index
    %504 = vector.load %arg3[%c4_394, %c0_395, %c16_396, %c0_397] : memref<9x8x32x128xf32, #tpu.memory_space<vmem>>, vector<1x1x16x128xf32>
    %505 = vector.shape_cast %504 : vector<1x1x16x128xf32> to vector<16x128xf32>
    %506 = arith.mulf %505, %484 : vector<16x128xf32>
    %507 = arith.addf %503, %506 : vector<16x128xf32>
    %c5_398 = arith.constant 5 : index
    %c0_399 = arith.constant 0 : index
    %c16_400 = arith.constant 16 : index
    %c0_401 = arith.constant 0 : index
    %508 = vector.load %arg3[%c5_398, %c0_399, %c16_400, %c0_401] : memref<9x8x32x128xf32, #tpu.memory_space<vmem>>, vector<1x1x16x128xf32>
    %509 = vector.shape_cast %508 : vector<1x1x16x128xf32> to vector<16x128xf32>
    %510 = arith.mulf %509, %485 : vector<16x128xf32>
    %511 = arith.addf %507, %510 : vector<16x128xf32>
    %c6_402 = arith.constant 6 : index
    %c0_403 = arith.constant 0 : index
    %c16_404 = arith.constant 16 : index
    %c0_405 = arith.constant 0 : index
    %512 = vector.load %arg3[%c6_402, %c0_403, %c16_404, %c0_405] : memref<9x8x32x128xf32, #tpu.memory_space<vmem>>, vector<1x1x16x128xf32>
    %513 = vector.shape_cast %512 : vector<1x1x16x128xf32> to vector<16x128xf32>
    %514 = arith.mulf %513, %486 : vector<16x128xf32>
    %515 = arith.addf %511, %514 : vector<16x128xf32>
    %c7_406 = arith.constant 7 : index
    %c0_407 = arith.constant 0 : index
    %c16_408 = arith.constant 16 : index
    %c0_409 = arith.constant 0 : index
    %516 = vector.load %arg3[%c7_406, %c0_407, %c16_408, %c0_409] : memref<9x8x32x128xf32, #tpu.memory_space<vmem>>, vector<1x1x16x128xf32>
    %517 = vector.shape_cast %516 : vector<1x1x16x128xf32> to vector<16x128xf32>
    %518 = arith.mulf %517, %487 : vector<16x128xf32>
    %519 = arith.addf %515, %518 : vector<16x128xf32>
    %c8_410 = arith.constant 8 : index
    %c0_411 = arith.constant 0 : index
    %c16_412 = arith.constant 16 : index
    %c0_413 = arith.constant 0 : index
    %520 = vector.load %arg3[%c8_410, %c0_411, %c16_412, %c0_413] : memref<9x8x32x128xf32, #tpu.memory_space<vmem>>, vector<1x1x16x128xf32>
    %521 = vector.shape_cast %520 : vector<1x1x16x128xf32> to vector<16x128xf32>
    %522 = arith.mulf %521, %488 : vector<16x128xf32>
    %523 = arith.addf %519, %522 : vector<16x128xf32>
    %c0_i32_414 = arith.constant 0 : i32
    %524 = vector.broadcast %c0_i32_414 : i32 to vector<16x128xi32>
    %c0_i32_415 = arith.constant 0 : i32
    %525 = vector.broadcast %c0_i32_415 : i32 to vector<16x128xi32>
    %c0_416 = arith.constant 0 : index
    %c1_417 = arith.constant 1 : index
    %c16_418 = arith.constant 16 : index
    %c0_419 = arith.constant 0 : index
    %526 = vector.load %arg3[%c0_416, %c1_417, %c16_418, %c0_419] : memref<9x8x32x128xf32, #tpu.memory_space<vmem>>, vector<1x1x16x128xf32>
    %527 = vector.shape_cast %526 : vector<1x1x16x128xf32> to vector<16x128xf32>
    %528 = arith.mulf %527, %480 : vector<16x128xf32>
    %c1_420 = arith.constant 1 : index
    %c1_421 = arith.constant 1 : index
    %c16_422 = arith.constant 16 : index
    %c0_423 = arith.constant 0 : index
    %529 = vector.load %arg3[%c1_420, %c1_421, %c16_422, %c0_423] : memref<9x8x32x128xf32, #tpu.memory_space<vmem>>, vector<1x1x16x128xf32>
    %530 = vector.shape_cast %529 : vector<1x1x16x128xf32> to vector<16x128xf32>
    %531 = arith.mulf %530, %481 : vector<16x128xf32>
    %532 = arith.addf %528, %531 : vector<16x128xf32>
    %c2_424 = arith.constant 2 : index
    %c1_425 = arith.constant 1 : index
    %c16_426 = arith.constant 16 : index
    %c0_427 = arith.constant 0 : index
    %533 = vector.load %arg3[%c2_424, %c1_425, %c16_426, %c0_427] : memref<9x8x32x128xf32, #tpu.memory_space<vmem>>, vector<1x1x16x128xf32>
    %534 = vector.shape_cast %533 : vector<1x1x16x128xf32> to vector<16x128xf32>
    %535 = arith.mulf %534, %482 : vector<16x128xf32>
    %536 = arith.addf %532, %535 : vector<16x128xf32>
    %c3_428 = arith.constant 3 : index
    %c1_429 = arith.constant 1 : index
    %c16_430 = arith.constant 16 : index
    %c0_431 = arith.constant 0 : index
    %537 = vector.load %arg3[%c3_428, %c1_429, %c16_430, %c0_431] : memref<9x8x32x128xf32, #tpu.memory_space<vmem>>, vector<1x1x16x128xf32>
    %538 = vector.shape_cast %537 : vector<1x1x16x128xf32> to vector<16x128xf32>
    %539 = arith.mulf %538, %483 : vector<16x128xf32>
    %540 = arith.addf %536, %539 : vector<16x128xf32>
    %c4_432 = arith.constant 4 : index
    %c1_433 = arith.constant 1 : index
    %c16_434 = arith.constant 16 : index
    %c0_435 = arith.constant 0 : index
    %541 = vector.load %arg3[%c4_432, %c1_433, %c16_434, %c0_435] : memref<9x8x32x128xf32, #tpu.memory_space<vmem>>, vector<1x1x16x128xf32>
    %542 = vector.shape_cast %541 : vector<1x1x16x128xf32> to vector<16x128xf32>
    %543 = arith.mulf %542, %484 : vector<16x128xf32>
    %544 = arith.addf %540, %543 : vector<16x128xf32>
    %c5_436 = arith.constant 5 : index
    %c1_437 = arith.constant 1 : index
    %c16_438 = arith.constant 16 : index
    %c0_439 = arith.constant 0 : index
    %545 = vector.load %arg3[%c5_436, %c1_437, %c16_438, %c0_439] : memref<9x8x32x128xf32, #tpu.memory_space<vmem>>, vector<1x1x16x128xf32>
    %546 = vector.shape_cast %545 : vector<1x1x16x128xf32> to vector<16x128xf32>
    %547 = arith.mulf %546, %485 : vector<16x128xf32>
    %548 = arith.addf %544, %547 : vector<16x128xf32>
    %c6_440 = arith.constant 6 : index
    %c1_441 = arith.constant 1 : index
    %c16_442 = arith.constant 16 : index
    %c0_443 = arith.constant 0 : index
    %549 = vector.load %arg3[%c6_440, %c1_441, %c16_442, %c0_443] : memref<9x8x32x128xf32, #tpu.memory_space<vmem>>, vector<1x1x16x128xf32>
    %550 = vector.shape_cast %549 : vector<1x1x16x128xf32> to vector<16x128xf32>
    %551 = arith.mulf %550, %486 : vector<16x128xf32>
    %552 = arith.addf %548, %551 : vector<16x128xf32>
    %c7_444 = arith.constant 7 : index
    %c1_445 = arith.constant 1 : index
    %c16_446 = arith.constant 16 : index
    %c0_447 = arith.constant 0 : index
    %553 = vector.load %arg3[%c7_444, %c1_445, %c16_446, %c0_447] : memref<9x8x32x128xf32, #tpu.memory_space<vmem>>, vector<1x1x16x128xf32>
    %554 = vector.shape_cast %553 : vector<1x1x16x128xf32> to vector<16x128xf32>
    %555 = arith.mulf %554, %487 : vector<16x128xf32>
    %556 = arith.addf %552, %555 : vector<16x128xf32>
    %c8_448 = arith.constant 8 : index
    %c1_449 = arith.constant 1 : index
    %c16_450 = arith.constant 16 : index
    %c0_451 = arith.constant 0 : index
    %557 = vector.load %arg3[%c8_448, %c1_449, %c16_450, %c0_451] : memref<9x8x32x128xf32, #tpu.memory_space<vmem>>, vector<1x1x16x128xf32>
    %558 = vector.shape_cast %557 : vector<1x1x16x128xf32> to vector<16x128xf32>
    %559 = arith.mulf %558, %488 : vector<16x128xf32>
    %560 = arith.addf %556, %559 : vector<16x128xf32>
    %561 = arith.cmpf ogt, %560, %523 : vector<16x128xf32>
    %562 = arith.select %561, %560, %523 : vector<16x128xi1>, vector<16x128xf32>
    %c1_i32_452 = arith.constant 1 : i32
    %563 = vector.broadcast %c1_i32_452 : i32 to vector<16x128xi32>
    %564 = arith.select %561, %563, %524 : vector<16x128xi1>, vector<16x128xi32>
    %565 = arith.cmpf olt, %560, %523 : vector<16x128xf32>
    %566 = arith.select %565, %560, %523 : vector<16x128xi1>, vector<16x128xf32>
    %c1_i32_453 = arith.constant 1 : i32
    %567 = vector.broadcast %c1_i32_453 : i32 to vector<16x128xi32>
    %568 = arith.select %565, %567, %525 : vector<16x128xi1>, vector<16x128xi32>
    %c0_454 = arith.constant 0 : index
    %c2_455 = arith.constant 2 : index
    %c16_456 = arith.constant 16 : index
    %c0_457 = arith.constant 0 : index
    %569 = vector.load %arg3[%c0_454, %c2_455, %c16_456, %c0_457] : memref<9x8x32x128xf32, #tpu.memory_space<vmem>>, vector<1x1x16x128xf32>
    %570 = vector.shape_cast %569 : vector<1x1x16x128xf32> to vector<16x128xf32>
    %571 = arith.mulf %570, %480 : vector<16x128xf32>
    %c1_458 = arith.constant 1 : index
    %c2_459 = arith.constant 2 : index
    %c16_460 = arith.constant 16 : index
    %c0_461 = arith.constant 0 : index
    %572 = vector.load %arg3[%c1_458, %c2_459, %c16_460, %c0_461] : memref<9x8x32x128xf32, #tpu.memory_space<vmem>>, vector<1x1x16x128xf32>
    %573 = vector.shape_cast %572 : vector<1x1x16x128xf32> to vector<16x128xf32>
    %574 = arith.mulf %573, %481 : vector<16x128xf32>
    %575 = arith.addf %571, %574 : vector<16x128xf32>
    %c2_462 = arith.constant 2 : index
    %c2_463 = arith.constant 2 : index
    %c16_464 = arith.constant 16 : index
    %c0_465 = arith.constant 0 : index
    %576 = vector.load %arg3[%c2_462, %c2_463, %c16_464, %c0_465] : memref<9x8x32x128xf32, #tpu.memory_space<vmem>>, vector<1x1x16x128xf32>
    %577 = vector.shape_cast %576 : vector<1x1x16x128xf32> to vector<16x128xf32>
    %578 = arith.mulf %577, %482 : vector<16x128xf32>
    %579 = arith.addf %575, %578 : vector<16x128xf32>
    %c3_466 = arith.constant 3 : index
    %c2_467 = arith.constant 2 : index
    %c16_468 = arith.constant 16 : index
    %c0_469 = arith.constant 0 : index
    %580 = vector.load %arg3[%c3_466, %c2_467, %c16_468, %c0_469] : memref<9x8x32x128xf32, #tpu.memory_space<vmem>>, vector<1x1x16x128xf32>
    %581 = vector.shape_cast %580 : vector<1x1x16x128xf32> to vector<16x128xf32>
    %582 = arith.mulf %581, %483 : vector<16x128xf32>
    %583 = arith.addf %579, %582 : vector<16x128xf32>
    %c4_470 = arith.constant 4 : index
    %c2_471 = arith.constant 2 : index
    %c16_472 = arith.constant 16 : index
    %c0_473 = arith.constant 0 : index
    %584 = vector.load %arg3[%c4_470, %c2_471, %c16_472, %c0_473] : memref<9x8x32x128xf32, #tpu.memory_space<vmem>>, vector<1x1x16x128xf32>
    %585 = vector.shape_cast %584 : vector<1x1x16x128xf32> to vector<16x128xf32>
    %586 = arith.mulf %585, %484 : vector<16x128xf32>
    %587 = arith.addf %583, %586 : vector<16x128xf32>
    %c5_474 = arith.constant 5 : index
    %c2_475 = arith.constant 2 : index
    %c16_476 = arith.constant 16 : index
    %c0_477 = arith.constant 0 : index
    %588 = vector.load %arg3[%c5_474, %c2_475, %c16_476, %c0_477] : memref<9x8x32x128xf32, #tpu.memory_space<vmem>>, vector<1x1x16x128xf32>
    %589 = vector.shape_cast %588 : vector<1x1x16x128xf32> to vector<16x128xf32>
    %590 = arith.mulf %589, %485 : vector<16x128xf32>
    %591 = arith.addf %587, %590 : vector<16x128xf32>
    %c6_478 = arith.constant 6 : index
    %c2_479 = arith.constant 2 : index
    %c16_480 = arith.constant 16 : index
    %c0_481 = arith.constant 0 : index
    %592 = vector.load %arg3[%c6_478, %c2_479, %c16_480, %c0_481] : memref<9x8x32x128xf32, #tpu.memory_space<vmem>>, vector<1x1x16x128xf32>
    %593 = vector.shape_cast %592 : vector<1x1x16x128xf32> to vector<16x128xf32>
    %594 = arith.mulf %593, %486 : vector<16x128xf32>
    %595 = arith.addf %591, %594 : vector<16x128xf32>
    %c7_482 = arith.constant 7 : index
    %c2_483 = arith.constant 2 : index
    %c16_484 = arith.constant 16 : index
    %c0_485 = arith.constant 0 : index
    %596 = vector.load %arg3[%c7_482, %c2_483, %c16_484, %c0_485] : memref<9x8x32x128xf32, #tpu.memory_space<vmem>>, vector<1x1x16x128xf32>
    %597 = vector.shape_cast %596 : vector<1x1x16x128xf32> to vector<16x128xf32>
    %598 = arith.mulf %597, %487 : vector<16x128xf32>
    %599 = arith.addf %595, %598 : vector<16x128xf32>
    %c8_486 = arith.constant 8 : index
    %c2_487 = arith.constant 2 : index
    %c16_488 = arith.constant 16 : index
    %c0_489 = arith.constant 0 : index
    %600 = vector.load %arg3[%c8_486, %c2_487, %c16_488, %c0_489] : memref<9x8x32x128xf32, #tpu.memory_space<vmem>>, vector<1x1x16x128xf32>
    %601 = vector.shape_cast %600 : vector<1x1x16x128xf32> to vector<16x128xf32>
    %602 = arith.mulf %601, %488 : vector<16x128xf32>
    %603 = arith.addf %599, %602 : vector<16x128xf32>
    %604 = arith.cmpf ogt, %603, %562 : vector<16x128xf32>
    %605 = arith.select %604, %603, %562 : vector<16x128xi1>, vector<16x128xf32>
    %c2_i32_490 = arith.constant 2 : i32
    %606 = vector.broadcast %c2_i32_490 : i32 to vector<16x128xi32>
    %607 = arith.select %604, %606, %564 : vector<16x128xi1>, vector<16x128xi32>
    %608 = arith.cmpf olt, %603, %566 : vector<16x128xf32>
    %609 = arith.select %608, %603, %566 : vector<16x128xi1>, vector<16x128xf32>
    %c2_i32_491 = arith.constant 2 : i32
    %610 = vector.broadcast %c2_i32_491 : i32 to vector<16x128xi32>
    %611 = arith.select %608, %610, %568 : vector<16x128xi1>, vector<16x128xi32>
    %c0_492 = arith.constant 0 : index
    %c3_493 = arith.constant 3 : index
    %c16_494 = arith.constant 16 : index
    %c0_495 = arith.constant 0 : index
    %612 = vector.load %arg3[%c0_492, %c3_493, %c16_494, %c0_495] : memref<9x8x32x128xf32, #tpu.memory_space<vmem>>, vector<1x1x16x128xf32>
    %613 = vector.shape_cast %612 : vector<1x1x16x128xf32> to vector<16x128xf32>
    %614 = arith.mulf %613, %480 : vector<16x128xf32>
    %c1_496 = arith.constant 1 : index
    %c3_497 = arith.constant 3 : index
    %c16_498 = arith.constant 16 : index
    %c0_499 = arith.constant 0 : index
    %615 = vector.load %arg3[%c1_496, %c3_497, %c16_498, %c0_499] : memref<9x8x32x128xf32, #tpu.memory_space<vmem>>, vector<1x1x16x128xf32>
    %616 = vector.shape_cast %615 : vector<1x1x16x128xf32> to vector<16x128xf32>
    %617 = arith.mulf %616, %481 : vector<16x128xf32>
    %618 = arith.addf %614, %617 : vector<16x128xf32>
    %c2_500 = arith.constant 2 : index
    %c3_501 = arith.constant 3 : index
    %c16_502 = arith.constant 16 : index
    %c0_503 = arith.constant 0 : index
    %619 = vector.load %arg3[%c2_500, %c3_501, %c16_502, %c0_503] : memref<9x8x32x128xf32, #tpu.memory_space<vmem>>, vector<1x1x16x128xf32>
    %620 = vector.shape_cast %619 : vector<1x1x16x128xf32> to vector<16x128xf32>
    %621 = arith.mulf %620, %482 : vector<16x128xf32>
    %622 = arith.addf %618, %621 : vector<16x128xf32>
    %c3_504 = arith.constant 3 : index
    %c3_505 = arith.constant 3 : index
    %c16_506 = arith.constant 16 : index
    %c0_507 = arith.constant 0 : index
    %623 = vector.load %arg3[%c3_504, %c3_505, %c16_506, %c0_507] : memref<9x8x32x128xf32, #tpu.memory_space<vmem>>, vector<1x1x16x128xf32>
    %624 = vector.shape_cast %623 : vector<1x1x16x128xf32> to vector<16x128xf32>
    %625 = arith.mulf %624, %483 : vector<16x128xf32>
    %626 = arith.addf %622, %625 : vector<16x128xf32>
    %c4_508 = arith.constant 4 : index
    %c3_509 = arith.constant 3 : index
    %c16_510 = arith.constant 16 : index
    %c0_511 = arith.constant 0 : index
    %627 = vector.load %arg3[%c4_508, %c3_509, %c16_510, %c0_511] : memref<9x8x32x128xf32, #tpu.memory_space<vmem>>, vector<1x1x16x128xf32>
    %628 = vector.shape_cast %627 : vector<1x1x16x128xf32> to vector<16x128xf32>
    %629 = arith.mulf %628, %484 : vector<16x128xf32>
    %630 = arith.addf %626, %629 : vector<16x128xf32>
    %c5_512 = arith.constant 5 : index
    %c3_513 = arith.constant 3 : index
    %c16_514 = arith.constant 16 : index
    %c0_515 = arith.constant 0 : index
    %631 = vector.load %arg3[%c5_512, %c3_513, %c16_514, %c0_515] : memref<9x8x32x128xf32, #tpu.memory_space<vmem>>, vector<1x1x16x128xf32>
    %632 = vector.shape_cast %631 : vector<1x1x16x128xf32> to vector<16x128xf32>
    %633 = arith.mulf %632, %485 : vector<16x128xf32>
    %634 = arith.addf %630, %633 : vector<16x128xf32>
    %c6_516 = arith.constant 6 : index
    %c3_517 = arith.constant 3 : index
    %c16_518 = arith.constant 16 : index
    %c0_519 = arith.constant 0 : index
    %635 = vector.load %arg3[%c6_516, %c3_517, %c16_518, %c0_519] : memref<9x8x32x128xf32, #tpu.memory_space<vmem>>, vector<1x1x16x128xf32>
    %636 = vector.shape_cast %635 : vector<1x1x16x128xf32> to vector<16x128xf32>
    %637 = arith.mulf %636, %486 : vector<16x128xf32>
    %638 = arith.addf %634, %637 : vector<16x128xf32>
    %c7_520 = arith.constant 7 : index
    %c3_521 = arith.constant 3 : index
    %c16_522 = arith.constant 16 : index
    %c0_523 = arith.constant 0 : index
    %639 = vector.load %arg3[%c7_520, %c3_521, %c16_522, %c0_523] : memref<9x8x32x128xf32, #tpu.memory_space<vmem>>, vector<1x1x16x128xf32>
    %640 = vector.shape_cast %639 : vector<1x1x16x128xf32> to vector<16x128xf32>
    %641 = arith.mulf %640, %487 : vector<16x128xf32>
    %642 = arith.addf %638, %641 : vector<16x128xf32>
    %c8_524 = arith.constant 8 : index
    %c3_525 = arith.constant 3 : index
    %c16_526 = arith.constant 16 : index
    %c0_527 = arith.constant 0 : index
    %643 = vector.load %arg3[%c8_524, %c3_525, %c16_526, %c0_527] : memref<9x8x32x128xf32, #tpu.memory_space<vmem>>, vector<1x1x16x128xf32>
    %644 = vector.shape_cast %643 : vector<1x1x16x128xf32> to vector<16x128xf32>
    %645 = arith.mulf %644, %488 : vector<16x128xf32>
    %646 = arith.addf %642, %645 : vector<16x128xf32>
    %647 = arith.cmpf ogt, %646, %605 : vector<16x128xf32>
    %648 = arith.select %647, %646, %605 : vector<16x128xi1>, vector<16x128xf32>
    %c3_i32_528 = arith.constant 3 : i32
    %649 = vector.broadcast %c3_i32_528 : i32 to vector<16x128xi32>
    %650 = arith.select %647, %649, %607 : vector<16x128xi1>, vector<16x128xi32>
    %651 = arith.cmpf olt, %646, %609 : vector<16x128xf32>
    %652 = arith.select %651, %646, %609 : vector<16x128xi1>, vector<16x128xf32>
    %c3_i32_529 = arith.constant 3 : i32
    %653 = vector.broadcast %c3_i32_529 : i32 to vector<16x128xi32>
    %654 = arith.select %651, %653, %611 : vector<16x128xi1>, vector<16x128xi32>
    %c0_530 = arith.constant 0 : index
    %c4_531 = arith.constant 4 : index
    %c16_532 = arith.constant 16 : index
    %c0_533 = arith.constant 0 : index
    %655 = vector.load %arg3[%c0_530, %c4_531, %c16_532, %c0_533] : memref<9x8x32x128xf32, #tpu.memory_space<vmem>>, vector<1x1x16x128xf32>
    %656 = vector.shape_cast %655 : vector<1x1x16x128xf32> to vector<16x128xf32>
    %657 = arith.mulf %656, %480 : vector<16x128xf32>
    %c1_534 = arith.constant 1 : index
    %c4_535 = arith.constant 4 : index
    %c16_536 = arith.constant 16 : index
    %c0_537 = arith.constant 0 : index
    %658 = vector.load %arg3[%c1_534, %c4_535, %c16_536, %c0_537] : memref<9x8x32x128xf32, #tpu.memory_space<vmem>>, vector<1x1x16x128xf32>
    %659 = vector.shape_cast %658 : vector<1x1x16x128xf32> to vector<16x128xf32>
    %660 = arith.mulf %659, %481 : vector<16x128xf32>
    %661 = arith.addf %657, %660 : vector<16x128xf32>
    %c2_538 = arith.constant 2 : index
    %c4_539 = arith.constant 4 : index
    %c16_540 = arith.constant 16 : index
    %c0_541 = arith.constant 0 : index
    %662 = vector.load %arg3[%c2_538, %c4_539, %c16_540, %c0_541] : memref<9x8x32x128xf32, #tpu.memory_space<vmem>>, vector<1x1x16x128xf32>
    %663 = vector.shape_cast %662 : vector<1x1x16x128xf32> to vector<16x128xf32>
    %664 = arith.mulf %663, %482 : vector<16x128xf32>
    %665 = arith.addf %661, %664 : vector<16x128xf32>
    %c3_542 = arith.constant 3 : index
    %c4_543 = arith.constant 4 : index
    %c16_544 = arith.constant 16 : index
    %c0_545 = arith.constant 0 : index
    %666 = vector.load %arg3[%c3_542, %c4_543, %c16_544, %c0_545] : memref<9x8x32x128xf32, #tpu.memory_space<vmem>>, vector<1x1x16x128xf32>
    %667 = vector.shape_cast %666 : vector<1x1x16x128xf32> to vector<16x128xf32>
    %668 = arith.mulf %667, %483 : vector<16x128xf32>
    %669 = arith.addf %665, %668 : vector<16x128xf32>
    %c4_546 = arith.constant 4 : index
    %c4_547 = arith.constant 4 : index
    %c16_548 = arith.constant 16 : index
    %c0_549 = arith.constant 0 : index
    %670 = vector.load %arg3[%c4_546, %c4_547, %c16_548, %c0_549] : memref<9x8x32x128xf32, #tpu.memory_space<vmem>>, vector<1x1x16x128xf32>
    %671 = vector.shape_cast %670 : vector<1x1x16x128xf32> to vector<16x128xf32>
    %672 = arith.mulf %671, %484 : vector<16x128xf32>
    %673 = arith.addf %669, %672 : vector<16x128xf32>
    %c5_550 = arith.constant 5 : index
    %c4_551 = arith.constant 4 : index
    %c16_552 = arith.constant 16 : index
    %c0_553 = arith.constant 0 : index
    %674 = vector.load %arg3[%c5_550, %c4_551, %c16_552, %c0_553] : memref<9x8x32x128xf32, #tpu.memory_space<vmem>>, vector<1x1x16x128xf32>
    %675 = vector.shape_cast %674 : vector<1x1x16x128xf32> to vector<16x128xf32>
    %676 = arith.mulf %675, %485 : vector<16x128xf32>
    %677 = arith.addf %673, %676 : vector<16x128xf32>
    %c6_554 = arith.constant 6 : index
    %c4_555 = arith.constant 4 : index
    %c16_556 = arith.constant 16 : index
    %c0_557 = arith.constant 0 : index
    %678 = vector.load %arg3[%c6_554, %c4_555, %c16_556, %c0_557] : memref<9x8x32x128xf32, #tpu.memory_space<vmem>>, vector<1x1x16x128xf32>
    %679 = vector.shape_cast %678 : vector<1x1x16x128xf32> to vector<16x128xf32>
    %680 = arith.mulf %679, %486 : vector<16x128xf32>
    %681 = arith.addf %677, %680 : vector<16x128xf32>
    %c7_558 = arith.constant 7 : index
    %c4_559 = arith.constant 4 : index
    %c16_560 = arith.constant 16 : index
    %c0_561 = arith.constant 0 : index
    %682 = vector.load %arg3[%c7_558, %c4_559, %c16_560, %c0_561] : memref<9x8x32x128xf32, #tpu.memory_space<vmem>>, vector<1x1x16x128xf32>
    %683 = vector.shape_cast %682 : vector<1x1x16x128xf32> to vector<16x128xf32>
    %684 = arith.mulf %683, %487 : vector<16x128xf32>
    %685 = arith.addf %681, %684 : vector<16x128xf32>
    %c8_562 = arith.constant 8 : index
    %c4_563 = arith.constant 4 : index
    %c16_564 = arith.constant 16 : index
    %c0_565 = arith.constant 0 : index
    %686 = vector.load %arg3[%c8_562, %c4_563, %c16_564, %c0_565] : memref<9x8x32x128xf32, #tpu.memory_space<vmem>>, vector<1x1x16x128xf32>
    %687 = vector.shape_cast %686 : vector<1x1x16x128xf32> to vector<16x128xf32>
    %688 = arith.mulf %687, %488 : vector<16x128xf32>
    %689 = arith.addf %685, %688 : vector<16x128xf32>
    %690 = arith.cmpf ogt, %689, %648 : vector<16x128xf32>
    %691 = arith.select %690, %689, %648 : vector<16x128xi1>, vector<16x128xf32>
    %c4_i32_566 = arith.constant 4 : i32
    %692 = vector.broadcast %c4_i32_566 : i32 to vector<16x128xi32>
    %693 = arith.select %690, %692, %650 : vector<16x128xi1>, vector<16x128xi32>
    %694 = arith.cmpf olt, %689, %652 : vector<16x128xf32>
    %695 = arith.select %694, %689, %652 : vector<16x128xi1>, vector<16x128xf32>
    %c4_i32_567 = arith.constant 4 : i32
    %696 = vector.broadcast %c4_i32_567 : i32 to vector<16x128xi32>
    %697 = arith.select %694, %696, %654 : vector<16x128xi1>, vector<16x128xi32>
    %c0_568 = arith.constant 0 : index
    %c5_569 = arith.constant 5 : index
    %c16_570 = arith.constant 16 : index
    %c0_571 = arith.constant 0 : index
    %698 = vector.load %arg3[%c0_568, %c5_569, %c16_570, %c0_571] : memref<9x8x32x128xf32, #tpu.memory_space<vmem>>, vector<1x1x16x128xf32>
    %699 = vector.shape_cast %698 : vector<1x1x16x128xf32> to vector<16x128xf32>
    %700 = arith.mulf %699, %480 : vector<16x128xf32>
    %c1_572 = arith.constant 1 : index
    %c5_573 = arith.constant 5 : index
    %c16_574 = arith.constant 16 : index
    %c0_575 = arith.constant 0 : index
    %701 = vector.load %arg3[%c1_572, %c5_573, %c16_574, %c0_575] : memref<9x8x32x128xf32, #tpu.memory_space<vmem>>, vector<1x1x16x128xf32>
    %702 = vector.shape_cast %701 : vector<1x1x16x128xf32> to vector<16x128xf32>
    %703 = arith.mulf %702, %481 : vector<16x128xf32>
    %704 = arith.addf %700, %703 : vector<16x128xf32>
    %c2_576 = arith.constant 2 : index
    %c5_577 = arith.constant 5 : index
    %c16_578 = arith.constant 16 : index
    %c0_579 = arith.constant 0 : index
    %705 = vector.load %arg3[%c2_576, %c5_577, %c16_578, %c0_579] : memref<9x8x32x128xf32, #tpu.memory_space<vmem>>, vector<1x1x16x128xf32>
    %706 = vector.shape_cast %705 : vector<1x1x16x128xf32> to vector<16x128xf32>
    %707 = arith.mulf %706, %482 : vector<16x128xf32>
    %708 = arith.addf %704, %707 : vector<16x128xf32>
    %c3_580 = arith.constant 3 : index
    %c5_581 = arith.constant 5 : index
    %c16_582 = arith.constant 16 : index
    %c0_583 = arith.constant 0 : index
    %709 = vector.load %arg3[%c3_580, %c5_581, %c16_582, %c0_583] : memref<9x8x32x128xf32, #tpu.memory_space<vmem>>, vector<1x1x16x128xf32>
    %710 = vector.shape_cast %709 : vector<1x1x16x128xf32> to vector<16x128xf32>
    %711 = arith.mulf %710, %483 : vector<16x128xf32>
    %712 = arith.addf %708, %711 : vector<16x128xf32>
    %c4_584 = arith.constant 4 : index
    %c5_585 = arith.constant 5 : index
    %c16_586 = arith.constant 16 : index
    %c0_587 = arith.constant 0 : index
    %713 = vector.load %arg3[%c4_584, %c5_585, %c16_586, %c0_587] : memref<9x8x32x128xf32, #tpu.memory_space<vmem>>, vector<1x1x16x128xf32>
    %714 = vector.shape_cast %713 : vector<1x1x16x128xf32> to vector<16x128xf32>
    %715 = arith.mulf %714, %484 : vector<16x128xf32>
    %716 = arith.addf %712, %715 : vector<16x128xf32>
    %c5_588 = arith.constant 5 : index
    %c5_589 = arith.constant 5 : index
    %c16_590 = arith.constant 16 : index
    %c0_591 = arith.constant 0 : index
    %717 = vector.load %arg3[%c5_588, %c5_589, %c16_590, %c0_591] : memref<9x8x32x128xf32, #tpu.memory_space<vmem>>, vector<1x1x16x128xf32>
    %718 = vector.shape_cast %717 : vector<1x1x16x128xf32> to vector<16x128xf32>
    %719 = arith.mulf %718, %485 : vector<16x128xf32>
    %720 = arith.addf %716, %719 : vector<16x128xf32>
    %c6_592 = arith.constant 6 : index
    %c5_593 = arith.constant 5 : index
    %c16_594 = arith.constant 16 : index
    %c0_595 = arith.constant 0 : index
    %721 = vector.load %arg3[%c6_592, %c5_593, %c16_594, %c0_595] : memref<9x8x32x128xf32, #tpu.memory_space<vmem>>, vector<1x1x16x128xf32>
    %722 = vector.shape_cast %721 : vector<1x1x16x128xf32> to vector<16x128xf32>
    %723 = arith.mulf %722, %486 : vector<16x128xf32>
    %724 = arith.addf %720, %723 : vector<16x128xf32>
    %c7_596 = arith.constant 7 : index
    %c5_597 = arith.constant 5 : index
    %c16_598 = arith.constant 16 : index
    %c0_599 = arith.constant 0 : index
    %725 = vector.load %arg3[%c7_596, %c5_597, %c16_598, %c0_599] : memref<9x8x32x128xf32, #tpu.memory_space<vmem>>, vector<1x1x16x128xf32>
    %726 = vector.shape_cast %725 : vector<1x1x16x128xf32> to vector<16x128xf32>
    %727 = arith.mulf %726, %487 : vector<16x128xf32>
    %728 = arith.addf %724, %727 : vector<16x128xf32>
    %c8_600 = arith.constant 8 : index
    %c5_601 = arith.constant 5 : index
    %c16_602 = arith.constant 16 : index
    %c0_603 = arith.constant 0 : index
    %729 = vector.load %arg3[%c8_600, %c5_601, %c16_602, %c0_603] : memref<9x8x32x128xf32, #tpu.memory_space<vmem>>, vector<1x1x16x128xf32>
    %730 = vector.shape_cast %729 : vector<1x1x16x128xf32> to vector<16x128xf32>
    %731 = arith.mulf %730, %488 : vector<16x128xf32>
    %732 = arith.addf %728, %731 : vector<16x128xf32>
    %733 = arith.cmpf ogt, %732, %691 : vector<16x128xf32>
    %734 = arith.select %733, %732, %691 : vector<16x128xi1>, vector<16x128xf32>
    %c5_i32_604 = arith.constant 5 : i32
    %735 = vector.broadcast %c5_i32_604 : i32 to vector<16x128xi32>
    %736 = arith.select %733, %735, %693 : vector<16x128xi1>, vector<16x128xi32>
    %737 = arith.cmpf olt, %732, %695 : vector<16x128xf32>
    %738 = arith.select %737, %732, %695 : vector<16x128xi1>, vector<16x128xf32>
    %c5_i32_605 = arith.constant 5 : i32
    %739 = vector.broadcast %c5_i32_605 : i32 to vector<16x128xi32>
    %740 = arith.select %737, %739, %697 : vector<16x128xi1>, vector<16x128xi32>
    %c0_606 = arith.constant 0 : index
    %c6_607 = arith.constant 6 : index
    %c16_608 = arith.constant 16 : index
    %c0_609 = arith.constant 0 : index
    %741 = vector.load %arg3[%c0_606, %c6_607, %c16_608, %c0_609] : memref<9x8x32x128xf32, #tpu.memory_space<vmem>>, vector<1x1x16x128xf32>
    %742 = vector.shape_cast %741 : vector<1x1x16x128xf32> to vector<16x128xf32>
    %743 = arith.mulf %742, %480 : vector<16x128xf32>
    %c1_610 = arith.constant 1 : index
    %c6_611 = arith.constant 6 : index
    %c16_612 = arith.constant 16 : index
    %c0_613 = arith.constant 0 : index
    %744 = vector.load %arg3[%c1_610, %c6_611, %c16_612, %c0_613] : memref<9x8x32x128xf32, #tpu.memory_space<vmem>>, vector<1x1x16x128xf32>
    %745 = vector.shape_cast %744 : vector<1x1x16x128xf32> to vector<16x128xf32>
    %746 = arith.mulf %745, %481 : vector<16x128xf32>
    %747 = arith.addf %743, %746 : vector<16x128xf32>
    %c2_614 = arith.constant 2 : index
    %c6_615 = arith.constant 6 : index
    %c16_616 = arith.constant 16 : index
    %c0_617 = arith.constant 0 : index
    %748 = vector.load %arg3[%c2_614, %c6_615, %c16_616, %c0_617] : memref<9x8x32x128xf32, #tpu.memory_space<vmem>>, vector<1x1x16x128xf32>
    %749 = vector.shape_cast %748 : vector<1x1x16x128xf32> to vector<16x128xf32>
    %750 = arith.mulf %749, %482 : vector<16x128xf32>
    %751 = arith.addf %747, %750 : vector<16x128xf32>
    %c3_618 = arith.constant 3 : index
    %c6_619 = arith.constant 6 : index
    %c16_620 = arith.constant 16 : index
    %c0_621 = arith.constant 0 : index
    %752 = vector.load %arg3[%c3_618, %c6_619, %c16_620, %c0_621] : memref<9x8x32x128xf32, #tpu.memory_space<vmem>>, vector<1x1x16x128xf32>
    %753 = vector.shape_cast %752 : vector<1x1x16x128xf32> to vector<16x128xf32>
    %754 = arith.mulf %753, %483 : vector<16x128xf32>
    %755 = arith.addf %751, %754 : vector<16x128xf32>
    %c4_622 = arith.constant 4 : index
    %c6_623 = arith.constant 6 : index
    %c16_624 = arith.constant 16 : index
    %c0_625 = arith.constant 0 : index
    %756 = vector.load %arg3[%c4_622, %c6_623, %c16_624, %c0_625] : memref<9x8x32x128xf32, #tpu.memory_space<vmem>>, vector<1x1x16x128xf32>
    %757 = vector.shape_cast %756 : vector<1x1x16x128xf32> to vector<16x128xf32>
    %758 = arith.mulf %757, %484 : vector<16x128xf32>
    %759 = arith.addf %755, %758 : vector<16x128xf32>
    %c5_626 = arith.constant 5 : index
    %c6_627 = arith.constant 6 : index
    %c16_628 = arith.constant 16 : index
    %c0_629 = arith.constant 0 : index
    %760 = vector.load %arg3[%c5_626, %c6_627, %c16_628, %c0_629] : memref<9x8x32x128xf32, #tpu.memory_space<vmem>>, vector<1x1x16x128xf32>
    %761 = vector.shape_cast %760 : vector<1x1x16x128xf32> to vector<16x128xf32>
    %762 = arith.mulf %761, %485 : vector<16x128xf32>
    %763 = arith.addf %759, %762 : vector<16x128xf32>
    %c6_630 = arith.constant 6 : index
    %c6_631 = arith.constant 6 : index
    %c16_632 = arith.constant 16 : index
    %c0_633 = arith.constant 0 : index
    %764 = vector.load %arg3[%c6_630, %c6_631, %c16_632, %c0_633] : memref<9x8x32x128xf32, #tpu.memory_space<vmem>>, vector<1x1x16x128xf32>
    %765 = vector.shape_cast %764 : vector<1x1x16x128xf32> to vector<16x128xf32>
    %766 = arith.mulf %765, %486 : vector<16x128xf32>
    %767 = arith.addf %763, %766 : vector<16x128xf32>
    %c7_634 = arith.constant 7 : index
    %c6_635 = arith.constant 6 : index
    %c16_636 = arith.constant 16 : index
    %c0_637 = arith.constant 0 : index
    %768 = vector.load %arg3[%c7_634, %c6_635, %c16_636, %c0_637] : memref<9x8x32x128xf32, #tpu.memory_space<vmem>>, vector<1x1x16x128xf32>
    %769 = vector.shape_cast %768 : vector<1x1x16x128xf32> to vector<16x128xf32>
    %770 = arith.mulf %769, %487 : vector<16x128xf32>
    %771 = arith.addf %767, %770 : vector<16x128xf32>
    %c8_638 = arith.constant 8 : index
    %c6_639 = arith.constant 6 : index
    %c16_640 = arith.constant 16 : index
    %c0_641 = arith.constant 0 : index
    %772 = vector.load %arg3[%c8_638, %c6_639, %c16_640, %c0_641] : memref<9x8x32x128xf32, #tpu.memory_space<vmem>>, vector<1x1x16x128xf32>
    %773 = vector.shape_cast %772 : vector<1x1x16x128xf32> to vector<16x128xf32>
    %774 = arith.mulf %773, %488 : vector<16x128xf32>
    %775 = arith.addf %771, %774 : vector<16x128xf32>
    %776 = arith.cmpf ogt, %775, %734 : vector<16x128xf32>
    %777 = arith.select %776, %775, %734 : vector<16x128xi1>, vector<16x128xf32>
    %c6_i32_642 = arith.constant 6 : i32
    %778 = vector.broadcast %c6_i32_642 : i32 to vector<16x128xi32>
    %779 = arith.select %776, %778, %736 : vector<16x128xi1>, vector<16x128xi32>
    %780 = arith.cmpf olt, %775, %738 : vector<16x128xf32>
    %781 = arith.select %780, %775, %738 : vector<16x128xi1>, vector<16x128xf32>
    %c6_i32_643 = arith.constant 6 : i32
    %782 = vector.broadcast %c6_i32_643 : i32 to vector<16x128xi32>
    %783 = arith.select %780, %782, %740 : vector<16x128xi1>, vector<16x128xi32>
    %c0_644 = arith.constant 0 : index
    %c7_645 = arith.constant 7 : index
    %c16_646 = arith.constant 16 : index
    %c0_647 = arith.constant 0 : index
    %784 = vector.load %arg3[%c0_644, %c7_645, %c16_646, %c0_647] : memref<9x8x32x128xf32, #tpu.memory_space<vmem>>, vector<1x1x16x128xf32>
    %785 = vector.shape_cast %784 : vector<1x1x16x128xf32> to vector<16x128xf32>
    %786 = arith.mulf %785, %480 : vector<16x128xf32>
    %c1_648 = arith.constant 1 : index
    %c7_649 = arith.constant 7 : index
    %c16_650 = arith.constant 16 : index
    %c0_651 = arith.constant 0 : index
    %787 = vector.load %arg3[%c1_648, %c7_649, %c16_650, %c0_651] : memref<9x8x32x128xf32, #tpu.memory_space<vmem>>, vector<1x1x16x128xf32>
    %788 = vector.shape_cast %787 : vector<1x1x16x128xf32> to vector<16x128xf32>
    %789 = arith.mulf %788, %481 : vector<16x128xf32>
    %790 = arith.addf %786, %789 : vector<16x128xf32>
    %c2_652 = arith.constant 2 : index
    %c7_653 = arith.constant 7 : index
    %c16_654 = arith.constant 16 : index
    %c0_655 = arith.constant 0 : index
    %791 = vector.load %arg3[%c2_652, %c7_653, %c16_654, %c0_655] : memref<9x8x32x128xf32, #tpu.memory_space<vmem>>, vector<1x1x16x128xf32>
    %792 = vector.shape_cast %791 : vector<1x1x16x128xf32> to vector<16x128xf32>
    %793 = arith.mulf %792, %482 : vector<16x128xf32>
    %794 = arith.addf %790, %793 : vector<16x128xf32>
    %c3_656 = arith.constant 3 : index
    %c7_657 = arith.constant 7 : index
    %c16_658 = arith.constant 16 : index
    %c0_659 = arith.constant 0 : index
    %795 = vector.load %arg3[%c3_656, %c7_657, %c16_658, %c0_659] : memref<9x8x32x128xf32, #tpu.memory_space<vmem>>, vector<1x1x16x128xf32>
    %796 = vector.shape_cast %795 : vector<1x1x16x128xf32> to vector<16x128xf32>
    %797 = arith.mulf %796, %483 : vector<16x128xf32>
    %798 = arith.addf %794, %797 : vector<16x128xf32>
    %c4_660 = arith.constant 4 : index
    %c7_661 = arith.constant 7 : index
    %c16_662 = arith.constant 16 : index
    %c0_663 = arith.constant 0 : index
    %799 = vector.load %arg3[%c4_660, %c7_661, %c16_662, %c0_663] : memref<9x8x32x128xf32, #tpu.memory_space<vmem>>, vector<1x1x16x128xf32>
    %800 = vector.shape_cast %799 : vector<1x1x16x128xf32> to vector<16x128xf32>
    %801 = arith.mulf %800, %484 : vector<16x128xf32>
    %802 = arith.addf %798, %801 : vector<16x128xf32>
    %c5_664 = arith.constant 5 : index
    %c7_665 = arith.constant 7 : index
    %c16_666 = arith.constant 16 : index
    %c0_667 = arith.constant 0 : index
    %803 = vector.load %arg3[%c5_664, %c7_665, %c16_666, %c0_667] : memref<9x8x32x128xf32, #tpu.memory_space<vmem>>, vector<1x1x16x128xf32>
    %804 = vector.shape_cast %803 : vector<1x1x16x128xf32> to vector<16x128xf32>
    %805 = arith.mulf %804, %485 : vector<16x128xf32>
    %806 = arith.addf %802, %805 : vector<16x128xf32>
    %c6_668 = arith.constant 6 : index
    %c7_669 = arith.constant 7 : index
    %c16_670 = arith.constant 16 : index
    %c0_671 = arith.constant 0 : index
    %807 = vector.load %arg3[%c6_668, %c7_669, %c16_670, %c0_671] : memref<9x8x32x128xf32, #tpu.memory_space<vmem>>, vector<1x1x16x128xf32>
    %808 = vector.shape_cast %807 : vector<1x1x16x128xf32> to vector<16x128xf32>
    %809 = arith.mulf %808, %486 : vector<16x128xf32>
    %810 = arith.addf %806, %809 : vector<16x128xf32>
    %c7_672 = arith.constant 7 : index
    %c7_673 = arith.constant 7 : index
    %c16_674 = arith.constant 16 : index
    %c0_675 = arith.constant 0 : index
    %811 = vector.load %arg3[%c7_672, %c7_673, %c16_674, %c0_675] : memref<9x8x32x128xf32, #tpu.memory_space<vmem>>, vector<1x1x16x128xf32>
    %812 = vector.shape_cast %811 : vector<1x1x16x128xf32> to vector<16x128xf32>
    %813 = arith.mulf %812, %487 : vector<16x128xf32>
    %814 = arith.addf %810, %813 : vector<16x128xf32>
    %c8_676 = arith.constant 8 : index
    %c7_677 = arith.constant 7 : index
    %c16_678 = arith.constant 16 : index
    %c0_679 = arith.constant 0 : index
    %815 = vector.load %arg3[%c8_676, %c7_677, %c16_678, %c0_679] : memref<9x8x32x128xf32, #tpu.memory_space<vmem>>, vector<1x1x16x128xf32>
    %816 = vector.shape_cast %815 : vector<1x1x16x128xf32> to vector<16x128xf32>
    %817 = arith.mulf %816, %488 : vector<16x128xf32>
    %818 = arith.addf %814, %817 : vector<16x128xf32>
    %819 = arith.cmpf ogt, %818, %777 : vector<16x128xf32>
    %820 = arith.select %819, %818, %777 : vector<16x128xi1>, vector<16x128xf32>
    %c7_i32_680 = arith.constant 7 : i32
    %821 = vector.broadcast %c7_i32_680 : i32 to vector<16x128xi32>
    %822 = arith.select %819, %821, %779 : vector<16x128xi1>, vector<16x128xi32>
    %823 = arith.cmpf olt, %818, %781 : vector<16x128xf32>
    %c7_i32_681 = arith.constant 7 : i32
    %824 = vector.broadcast %c7_i32_681 : i32 to vector<16x128xi32>
    %825 = arith.select %823, %824, %783 : vector<16x128xi1>, vector<16x128xi32>
    %826 = arith.mulf %820, %479 : vector<16x128xf32>
    %c0_i32_682 = arith.constant 0 : i32
    %827 = vector.broadcast %c0_i32_682 : i32 to vector<16x128xi32>
    %828 = arith.cmpi eq, %822, %827 : vector<16x128xi32>
    %cst_683 = arith.constant 0.000000e+00 : f32
    %829 = vector.broadcast %cst_683 : f32 to vector<16x128xf32>
    %830 = arith.select %828, %826, %829 : vector<16x128xi1>, vector<16x128xf32>
    %cst_684 = arith.constant dense<0.000000e+00> : vector<16xf32>
    %831 = vector.multi_reduction <add>, %830, %cst_684 [1] : vector<16x128xf32> to vector<16xf32>
    %832 = vector.shape_cast %831 : vector<16xf32> to vector<16x1xf32>
    %c0_i32_685 = arith.constant 0 : i32
    %833 = vector.broadcast %c0_i32_685 : i32 to vector<16x128xi32>
    %834 = arith.cmpi eq, %825, %833 : vector<16x128xi32>
    %cst_686 = arith.constant 0.000000e+00 : f32
    %835 = vector.broadcast %cst_686 : f32 to vector<16x128xf32>
    %836 = arith.select %834, %479, %835 : vector<16x128xi1>, vector<16x128xf32>
    %cst_687 = arith.constant dense<0.000000e+00> : vector<16xf32>
    %837 = vector.multi_reduction <add>, %836, %cst_687 [1] : vector<16x128xf32> to vector<16xf32>
    %838 = vector.shape_cast %837 : vector<16xf32> to vector<16x1xf32>
    %c1_i32_688 = arith.constant 1 : i32
    %839 = vector.broadcast %c1_i32_688 : i32 to vector<16x128xi32>
    %840 = arith.cmpi eq, %822, %839 : vector<16x128xi32>
    %cst_689 = arith.constant 0.000000e+00 : f32
    %841 = vector.broadcast %cst_689 : f32 to vector<16x128xf32>
    %842 = arith.select %840, %826, %841 : vector<16x128xi1>, vector<16x128xf32>
    %cst_690 = arith.constant dense<0.000000e+00> : vector<16xf32>
    %843 = vector.multi_reduction <add>, %842, %cst_690 [1] : vector<16x128xf32> to vector<16xf32>
    %844 = vector.shape_cast %843 : vector<16xf32> to vector<16x1xf32>
    %c1_i32_691 = arith.constant 1 : i32
    %845 = vector.broadcast %c1_i32_691 : i32 to vector<16x128xi32>
    %846 = arith.cmpi eq, %825, %845 : vector<16x128xi32>
    %cst_692 = arith.constant 0.000000e+00 : f32
    %847 = vector.broadcast %cst_692 : f32 to vector<16x128xf32>
    %848 = arith.select %846, %479, %847 : vector<16x128xi1>, vector<16x128xf32>
    %cst_693 = arith.constant dense<0.000000e+00> : vector<16xf32>
    %849 = vector.multi_reduction <add>, %848, %cst_693 [1] : vector<16x128xf32> to vector<16xf32>
    %850 = vector.shape_cast %849 : vector<16xf32> to vector<16x1xf32>
    %c2_i32_694 = arith.constant 2 : i32
    %851 = vector.broadcast %c2_i32_694 : i32 to vector<16x128xi32>
    %852 = arith.cmpi eq, %822, %851 : vector<16x128xi32>
    %cst_695 = arith.constant 0.000000e+00 : f32
    %853 = vector.broadcast %cst_695 : f32 to vector<16x128xf32>
    %854 = arith.select %852, %826, %853 : vector<16x128xi1>, vector<16x128xf32>
    %cst_696 = arith.constant dense<0.000000e+00> : vector<16xf32>
    %855 = vector.multi_reduction <add>, %854, %cst_696 [1] : vector<16x128xf32> to vector<16xf32>
    %856 = vector.shape_cast %855 : vector<16xf32> to vector<16x1xf32>
    %c2_i32_697 = arith.constant 2 : i32
    %857 = vector.broadcast %c2_i32_697 : i32 to vector<16x128xi32>
    %858 = arith.cmpi eq, %825, %857 : vector<16x128xi32>
    %cst_698 = arith.constant 0.000000e+00 : f32
    %859 = vector.broadcast %cst_698 : f32 to vector<16x128xf32>
    %860 = arith.select %858, %479, %859 : vector<16x128xi1>, vector<16x128xf32>
    %cst_699 = arith.constant dense<0.000000e+00> : vector<16xf32>
    %861 = vector.multi_reduction <add>, %860, %cst_699 [1] : vector<16x128xf32> to vector<16xf32>
    %862 = vector.shape_cast %861 : vector<16xf32> to vector<16x1xf32>
    %c3_i32_700 = arith.constant 3 : i32
    %863 = vector.broadcast %c3_i32_700 : i32 to vector<16x128xi32>
    %864 = arith.cmpi eq, %822, %863 : vector<16x128xi32>
    %cst_701 = arith.constant 0.000000e+00 : f32
    %865 = vector.broadcast %cst_701 : f32 to vector<16x128xf32>
    %866 = arith.select %864, %826, %865 : vector<16x128xi1>, vector<16x128xf32>
    %cst_702 = arith.constant dense<0.000000e+00> : vector<16xf32>
    %867 = vector.multi_reduction <add>, %866, %cst_702 [1] : vector<16x128xf32> to vector<16xf32>
    %868 = vector.shape_cast %867 : vector<16xf32> to vector<16x1xf32>
    %c3_i32_703 = arith.constant 3 : i32
    %869 = vector.broadcast %c3_i32_703 : i32 to vector<16x128xi32>
    %870 = arith.cmpi eq, %825, %869 : vector<16x128xi32>
    %cst_704 = arith.constant 0.000000e+00 : f32
    %871 = vector.broadcast %cst_704 : f32 to vector<16x128xf32>
    %872 = arith.select %870, %479, %871 : vector<16x128xi1>, vector<16x128xf32>
    %cst_705 = arith.constant dense<0.000000e+00> : vector<16xf32>
    %873 = vector.multi_reduction <add>, %872, %cst_705 [1] : vector<16x128xf32> to vector<16xf32>
    %874 = vector.shape_cast %873 : vector<16xf32> to vector<16x1xf32>
    %c4_i32_706 = arith.constant 4 : i32
    %875 = vector.broadcast %c4_i32_706 : i32 to vector<16x128xi32>
    %876 = arith.cmpi eq, %822, %875 : vector<16x128xi32>
    %cst_707 = arith.constant 0.000000e+00 : f32
    %877 = vector.broadcast %cst_707 : f32 to vector<16x128xf32>
    %878 = arith.select %876, %826, %877 : vector<16x128xi1>, vector<16x128xf32>
    %cst_708 = arith.constant dense<0.000000e+00> : vector<16xf32>
    %879 = vector.multi_reduction <add>, %878, %cst_708 [1] : vector<16x128xf32> to vector<16xf32>
    %880 = vector.shape_cast %879 : vector<16xf32> to vector<16x1xf32>
    %c4_i32_709 = arith.constant 4 : i32
    %881 = vector.broadcast %c4_i32_709 : i32 to vector<16x128xi32>
    %882 = arith.cmpi eq, %825, %881 : vector<16x128xi32>
    %cst_710 = arith.constant 0.000000e+00 : f32
    %883 = vector.broadcast %cst_710 : f32 to vector<16x128xf32>
    %884 = arith.select %882, %479, %883 : vector<16x128xi1>, vector<16x128xf32>
    %cst_711 = arith.constant dense<0.000000e+00> : vector<16xf32>
    %885 = vector.multi_reduction <add>, %884, %cst_711 [1] : vector<16x128xf32> to vector<16xf32>
    %886 = vector.shape_cast %885 : vector<16xf32> to vector<16x1xf32>
    %c5_i32_712 = arith.constant 5 : i32
    %887 = vector.broadcast %c5_i32_712 : i32 to vector<16x128xi32>
    %888 = arith.cmpi eq, %822, %887 : vector<16x128xi32>
    %cst_713 = arith.constant 0.000000e+00 : f32
    %889 = vector.broadcast %cst_713 : f32 to vector<16x128xf32>
    %890 = arith.select %888, %826, %889 : vector<16x128xi1>, vector<16x128xf32>
    %cst_714 = arith.constant dense<0.000000e+00> : vector<16xf32>
    %891 = vector.multi_reduction <add>, %890, %cst_714 [1] : vector<16x128xf32> to vector<16xf32>
    %892 = vector.shape_cast %891 : vector<16xf32> to vector<16x1xf32>
    %c5_i32_715 = arith.constant 5 : i32
    %893 = vector.broadcast %c5_i32_715 : i32 to vector<16x128xi32>
    %894 = arith.cmpi eq, %825, %893 : vector<16x128xi32>
    %cst_716 = arith.constant 0.000000e+00 : f32
    %895 = vector.broadcast %cst_716 : f32 to vector<16x128xf32>
    %896 = arith.select %894, %479, %895 : vector<16x128xi1>, vector<16x128xf32>
    %cst_717 = arith.constant dense<0.000000e+00> : vector<16xf32>
    %897 = vector.multi_reduction <add>, %896, %cst_717 [1] : vector<16x128xf32> to vector<16xf32>
    %898 = vector.shape_cast %897 : vector<16xf32> to vector<16x1xf32>
    %c6_i32_718 = arith.constant 6 : i32
    %899 = vector.broadcast %c6_i32_718 : i32 to vector<16x128xi32>
    %900 = arith.cmpi eq, %822, %899 : vector<16x128xi32>
    %cst_719 = arith.constant 0.000000e+00 : f32
    %901 = vector.broadcast %cst_719 : f32 to vector<16x128xf32>
    %902 = arith.select %900, %826, %901 : vector<16x128xi1>, vector<16x128xf32>
    %cst_720 = arith.constant dense<0.000000e+00> : vector<16xf32>
    %903 = vector.multi_reduction <add>, %902, %cst_720 [1] : vector<16x128xf32> to vector<16xf32>
    %904 = vector.shape_cast %903 : vector<16xf32> to vector<16x1xf32>
    %c6_i32_721 = arith.constant 6 : i32
    %905 = vector.broadcast %c6_i32_721 : i32 to vector<16x128xi32>
    %906 = arith.cmpi eq, %825, %905 : vector<16x128xi32>
    %cst_722 = arith.constant 0.000000e+00 : f32
    %907 = vector.broadcast %cst_722 : f32 to vector<16x128xf32>
    %908 = arith.select %906, %479, %907 : vector<16x128xi1>, vector<16x128xf32>
    %cst_723 = arith.constant dense<0.000000e+00> : vector<16xf32>
    %909 = vector.multi_reduction <add>, %908, %cst_723 [1] : vector<16x128xf32> to vector<16xf32>
    %910 = vector.shape_cast %909 : vector<16xf32> to vector<16x1xf32>
    %c7_i32_724 = arith.constant 7 : i32
    %911 = vector.broadcast %c7_i32_724 : i32 to vector<16x128xi32>
    %912 = arith.cmpi eq, %822, %911 : vector<16x128xi32>
    %cst_725 = arith.constant 0.000000e+00 : f32
    %913 = vector.broadcast %cst_725 : f32 to vector<16x128xf32>
    %914 = arith.select %912, %826, %913 : vector<16x128xi1>, vector<16x128xf32>
    %cst_726 = arith.constant dense<0.000000e+00> : vector<16xf32>
    %915 = vector.multi_reduction <add>, %914, %cst_726 [1] : vector<16x128xf32> to vector<16xf32>
    %916 = vector.shape_cast %915 : vector<16xf32> to vector<16x1xf32>
    %c7_i32_727 = arith.constant 7 : i32
    %917 = vector.broadcast %c7_i32_727 : i32 to vector<16x128xi32>
    %918 = arith.cmpi eq, %825, %917 : vector<16x128xi32>
    %cst_728 = arith.constant 0.000000e+00 : f32
    %919 = vector.broadcast %cst_728 : f32 to vector<16x128xf32>
    %920 = arith.select %918, %479, %919 : vector<16x128xi1>, vector<16x128xf32>
    %cst_729 = arith.constant dense<0.000000e+00> : vector<16xf32>
    %921 = vector.multi_reduction <add>, %920, %cst_729 [1] : vector<16x128xf32> to vector<16xf32>
    %922 = vector.shape_cast %921 : vector<16xf32> to vector<16x1xf32>
    %923 = tpu.concatenate %832, %844, %856, %868, %880, %892, %904, %916 in 1 : vector<16x1xf32>, vector<16x1xf32>, vector<16x1xf32>, vector<16x1xf32>, vector<16x1xf32>, vector<16x1xf32>, vector<16x1xf32>, vector<16x1xf32> -> vector<16x8xf32>
    %924 = tpu.concatenate %838, %850, %862, %874, %886, %898, %910, %922 in 1 : vector<16x1xf32>, vector<16x1xf32>, vector<16x1xf32>, vector<16x1xf32>, vector<16x1xf32>, vector<16x1xf32>, vector<16x1xf32>, vector<16x1xf32> -> vector<16x8xf32>
    %925 = arith.addf %11, %923 : vector<16x8xf32>
    %c0_730 = arith.constant 0 : index
    %c16_731 = arith.constant 16 : index
    %c0_732 = arith.constant 0 : index
    %926 = vector.load %arg4[%c0_730, %c16_731, %c0_732] : memref<1x32x16xf32, #tpu.memory_space<vmem>>, vector<1x16x8xf32>
    %927 = vector.shape_cast %926 : vector<1x16x8xf32> to vector<16x8xf32>
    %928 = vector.shape_cast %925 : vector<16x8xf32> to vector<1x16x8xf32>
    tpu.vector_store %arg4[%c0_730, %c16_731, %c0_732], %928 {strides = array<i32>} : memref<1x32x16xf32, #tpu.memory_space<vmem>>, vector<1x16x8xf32>,
    %929 = arith.addf %12, %924 : vector<16x8xf32>
    %c0_733 = arith.constant 0 : index
    %c16_734 = arith.constant 16 : index
    %c8_735 = arith.constant 8 : index
    %930 = vector.load %arg4[%c0_733, %c16_734, %c8_735] : memref<1x32x16xf32, #tpu.memory_space<vmem>>, vector<1x16x8xf32>
    %931 = vector.shape_cast %930 : vector<1x16x8xf32> to vector<16x8xf32>
    %932 = vector.shape_cast %929 : vector<16x8xf32> to vector<1x16x8xf32>
    tpu.vector_store %arg4[%c0_733, %c16_734, %c8_735], %932 {strides = array<i32>} : memref<1x32x16xf32, #tpu.memory_space<vmem>>, vector<1x16x8xf32>,
    return
  }
  func.func @transform_0(%arg0: i32, %arg1: i32) -> (i32, i32, i32) {
    %c0_i32 = arith.constant 0 : i32
    %c0_i32_0 = arith.constant 0 : i32
    return %arg1, %arg0, %c0_i32 : i32, i32, i32
  }
  func.func @transform_1(%arg0: i32, %arg1: i32) -> (i32, i32, i32, i32) {
    %c0_i32 = arith.constant 0 : i32
    %c0_i32_0 = arith.constant 0 : i32
    %c0_i32_1 = arith.constant 0 : i32
    %c0_i32_2 = arith.constant 0 : i32
    return %c0_i32, %c0_i32_0, %arg0, %c0_i32_1 : i32, i32, i32, i32
  }
  func.func @transform_2(%arg0: i32, %arg1: i32) -> (i32, i32, i32) {
    %c0_i32 = arith.constant 0 : i32
    %c0_i32_0 = arith.constant 0 : i32
    return %arg1, %arg0, %c0_i32 : i32, i32, i32
  }
}

</mosaic_0001>

<llo_original>
// kernel: _lambda_.2
$region0: #{_lambda_.2}
  #allocation0 [shape = 'u32[]', space=smem, size = 0x4, offset = 0x4, fixed_abs, tag = 'smem constant byte address 0x4 - core index']
  #allocation1 [shape = 'u32[144,128]{1,0:T(1,128)}', space=vmem, size = 0x12000, scoped, tag = 'internal scratch']
  #allocation2 [shape = 'f32[32,384]{1,0:T(8,128)}', space=vmem, size = 0xc000, scoped, tag = 'scratch operand']
  #allocation5 [shape = 's32[]', space=sflag, size = 0x4, offset = 0, fixed_abs, tag = 'sflag constant byte address 0x0 - dummy sync flag']
  %s0 = inlined_call_operand.vmem [shape: f32[2,64,32], index: 0, kind: input, shape index: {}]
  %s1 = inlined_call_operand.hbm [shape: f32[9,8,64,128], index: 1, kind: input, shape index: {}]
  %s2 = inlined_call_operand.vmem [shape: f32[2,64,16], index: 2, kind: output, shape index: {}]
  %s3 = sld [smem:[#allocation0]]
  $region53: #{_lambda_.2} parent=0
    _
  %s5 = ssub.s32 1, %s3
  %s6 = scalar_select 0, %s5, %s3
  $region1: #{_lambda_.2} parent=0
    #allocation3 [shape = 'u8[2359296]{0}', space=vmem, size = 0x240000, scoped, tag = 'input window, operand 1']
    #allocation4 [shape = 's32[2]{0}', space=sflag, size = 0x8, scoped, tag = 'scoped memory for _lambda_.2']
    %7 = vsyncpa [#allocation4], 0
    %s8 = scalar_lea.sflag [#allocation4], 1
    %9 = vsyncpa %s8, 0
    loop: start=0, step=1, limit=6
    $region2: #{_lambda_.2} parent=1 // loop_pre_header
      _
    $region3: #{_lambda_.2} parent=1 // loop_header
      %s11 = sphi 0, %s15
      %p12 = scmp.ge.s32.totalorder %s11, 6
      %s18 = sphi 0, %s30
      %s19 = sphi 0, %s26
      %s20 = sphi 0, %s18
      %s21 = sphi 0, %s19
      %s22 = sphi 0, %s20
      %s23 = sphi 0, %s21
      %s35 = sphi 0, %s37
      %s38 = sphi 0, %s35
      %s39 = sphi 0, %s38
      %s55 = sphi 0, %s39
      %s61 = sphi 0, %s63
      %s64 = sphi 0, %s61
      %s65 = sphi 0, %s64
      %s81 = sphi 0, %s65
      %s89 = sphi 0, %s91
      %s92 = sphi 0, %s89
      %s93 = sphi 0, %s92
      %s109 = sphi 0, %s93
    $region4: #{_lambda_.2} parent=1 // loop_header_branch
      %14 = sbr.rel (%p12) target = $region8
    $region5: #{_lambda_.2} parent=1 // loop_body
      %s16 = ssub.s32 %s11, 1
      %s17 = ssub.s32 %s11, 2
      %s24 = sadd.s32 1, %s19
      %p25 = scmp.ge.s32.totalorder %s24, 2
      %s26 = scalar_select %p25, 0, %s24
      %s27 = sadd.s32 1, %s18
      %s28 = scalar_select %p25, %s27, %s18
      %p29 = scmp.ge.s32.totalorder %s28, 2
      %s30 = scalar_select %p29, 0, %s28
      %s31 = ssub.s32 %s19, %s26
      %s32 = ssub.s32 %s18, %s30
      %s33 = sor.u32 %s31, %s32
      %p34 = scmp.eq.s32.totalorder %s33, 0
      %s36 = sadd.s32 %s35, 1
      %s37 = scalar_select %p34, %s35, %s36
      %p40 = pneg %p34
      %p41 = scmp.eq.s32.totalorder %s11, 3
      %p42 = por %p40, %p41
      %p43 = scmp.ne.s32.totalorder %s35, %s38
      %p44 = scmp.eq.s32.totalorder %s11, 0
      %p45 = por %p43, %p44
      %p46 = scmp.ne.s32.totalorder %s35, %s38
      %p47 = scmp.eq.s32.totalorder %s16, 3
      %p48 = por %p46, %p47
      %p49 = scmp.ne.s32.totalorder %s38, %s39
      %p50 = scmp.eq.s32.totalorder %s16, 0
      %p51 = por %p49, %p50
      %p52 = scmp.ne.s32.totalorder %s38, %s39
      %p53 = scmp.eq.s32.totalorder %s17, 3
      %p54 = por %p52, %p53
      %p56 = scmp.ne.s32.totalorder %s39, %s55
      %p57 = scmp.eq.s32.totalorder %s17, 0
      %p58 = por %p56, %p57
      %s59 = ssub.s32 %s18, %s30
      %p60 = scmp.eq.s32.totalorder %s59, 0
      %s62 = sadd.s32 %s61, 1
      %s63 = scalar_select %p60, %s61, %s62
      %p66 = pneg %p60
      %p67 = scmp.eq.s32.totalorder %s11, 3
      %p68 = por %p66, %p67
      %p69 = scmp.ne.s32.totalorder %s61, %s64
      %p70 = scmp.eq.s32.totalorder %s11, 0
      %p71 = por %p69, %p70
      %p72 = scmp.ne.s32.totalorder %s61, %s64
      %p73 = scmp.eq.s32.totalorder %s16, 3
      %p74 = por %p72, %p73
      %p75 = scmp.ne.s32.totalorder %s64, %s65
      %p76 = scmp.eq.s32.totalorder %s16, 0
      %p77 = por %p75, %p76
      %p78 = scmp.ne.s32.totalorder %s64, %s65
      %p79 = scmp.eq.s32.totalorder %s17, 3
      %p80 = por %p78, %p79
      %p82 = scmp.ne.s32.totalorder %s65, %s81
      %p83 = scmp.eq.s32.totalorder %s17, 0
      %p84 = por %p82, %p83
      %s85 = ssub.s32 %s19, %s26
      %s86 = ssub.s32 %s18, %s30
      %s87 = sor.u32 %s85, %s86
      %p88 = scmp.eq.s32.totalorder %s87, 0
      %s90 = sadd.s32 %s89, 1
      %s91 = scalar_select %p88, %s89, %s90
      %p94 = pneg %p88
      %p95 = scmp.eq.s32.totalorder %s11, 3
      %p96 = por %p94, %p95
      %p97 = scmp.ne.s32.totalorder %s89, %s92
      %p98 = scmp.eq.s32.totalorder %s11, 0
      %p99 = por %p97, %p98
      %p100 = scmp.ne.s32.totalorder %s89, %s92
      %p101 = scmp.eq.s32.totalorder %s16, 3
      %p102 = por %p100, %p101
      %p103 = scmp.ne.s32.totalorder %s92, %s93
      %p104 = scmp.eq.s32.totalorder %s16, 0
      %p105 = por %p103, %p104
      %p106 = scmp.ne.s32.totalorder %s92, %s93
      %p107 = scmp.eq.s32.totalorder %s17, 3
      %p108 = por %p106, %p107
      %p110 = scmp.ne.s32.totalorder %s93, %s109
      %p111 = scmp.eq.s32.totalorder %s17, 0
      %p112 = por %p110, %p111
      %p113 = scmp.le.s32.totalorder 1, %s11
      %p114 = scmp.lt.s32.totalorder %s11, 5
      %p115 = pnand %p113, %p114
      %p116 = pneg %p115
      // Predicated region
      $region9: #{_lambda_.2} parent=5 // pred_check
        _
      $region10: #{_lambda_.2} parent=5 // pred_check_branch
        %118 = sbr.rel (%p115) target = $region12
      $region11: #{_lambda_.2} parent=5 // pred_region
        %s119 = ssub.s32 %s11, 1
      $region12: #{_lambda_.2} parent=5 // pred_fallthru
        _
      %p120 = scmp.lt.s32.totalorder %s11, 4
      // Predicated region
      $region13: #{_lambda_.2} parent=5 // pred_check
        %p121 = pneg %p120
      $region14: #{_lambda_.2} parent=5 // pred_check_branch
        %123 = sbr.rel (%p121) target = $region16
      $region15: #{_lambda_.2} parent=5 // pred_region
        // Predicated region
        $region17: #{_lambda_.2} parent=15 // pred_check
          %p124 = pneg %p45
        $region18: #{_lambda_.2} parent=15 // pred_check_branch
          %126 = sbr.rel (%p124) target = $region20
        $region19: #{_lambda_.2} parent=15 // pred_region
          %s127 = smul.u32 4, %s18
          %p128 = scmp.lt.s32.totalorder %s19, 1
          %s129 = scalar_select %p128, %s19, 1
          %p130 = scmp.lt.s32.totalorder %s127, 7
          %s131 = scalar_select %p130, %s127, 7
          %s132 = smul.addr %s129, 8
          %s133 = sadd.s32 %s131, %s132
          %s134 = smul.addr %s133, 8
          %s135 = scalar_lea.vmem %s0, %s134
          %s136 = smul.u32 4, %s18
        $region20: #{_lambda_.2} parent=15 // pred_fallthru
          _
        // Predicated region
        $region21: #{_lambda_.2} parent=15 // pred_check
          %p137 = pneg %p71
        $region22: #{_lambda_.2} parent=15 // pred_check_branch
          %139 = sbr.rel (%p137) target = $region24
        $region23: #{_lambda_.2} parent=15 // pred_region
          #allocation6 [shape = 'u32[6]{0}', space=smem, size = 0x18, scoped, tag = 'DMA stride descriptor']
          %s140 = sand.u32 %s61, 1
          %s141 = scalar_lea.sflag [#allocation4], %s140
          %s142 = sand.u32 %s61, 1
          %s143 = smul.addr %s142, 2304
          %s144 = scalar_lea.vmem [#allocation3], %s143
          %s145 = smul.u32 4, %s18
          %s147 = ssub.s32 36864, 36864
          %148 = vsyncadd %s141, %s147
          %s149 = smul.addr %s145, 128
          %s150 = scalar_lea.hbm %s1, %s149
          %s152 = sshll.u32 1, 14
          %s153 = sxor.u32 4294967295, %s152
          %s155 = sld [smem:[#allocation0]]
          %s156 = sadd.s32 2, %s155
          %s158 = sshll.u32 7, 26
          %s159 = sxor.u32 4294967295, %s158
          %s160 = sand.u32 0, %s159
          %s161 = sshll.u32 %s156, 26
          %s162 = sor.u32 %s160, %s161
          %s163 = sshll.u32 %s144, 4
          %s164 = int_to_ptr.vmem [resolvable:$true] %s163
          %170 = sst [smem:[#allocation6]] 1024
          %s171 = scalar_lea.smem [#allocation6], 1
          %172 = sst [smem:[%s171]] 512
          %s173 = scalar_lea.smem [#allocation6], 2
          %174 = sst [smem:[%s173]] 4
          %s175 = scalar_lea.smem [#allocation6], 3
          %176 = sst [smem:[%s175]] 128
          %s177 = scalar_lea.smem [#allocation6], 4
          %178 = sst [smem:[%s177]] 128
          %s179 = scalar_lea.smem [#allocation6], 5
          %180 = sst [smem:[%s179]] 8
          %182 = dma.general %s150, 36864, %s164, %s141, 131072, [#allocation6], %s162, 0
        $region24: #{_lambda_.2} parent=15 // pred_fallthru
          _
      $region16: #{_lambda_.2} parent=5 // pred_fallthru
        _
      %p183 = scmp.le.s32.totalorder 1, %s11
      %p184 = scmp.lt.s32.totalorder %s11, 5
      %p185 = pnand %p183, %p184
      %p186 = pneg %p185
      // Predicated region
      $region25: #{_lambda_.2} parent=5 // pred_check
        _
      $region26: #{_lambda_.2} parent=5 // pred_check_branch
        %188 = sbr.rel (%p185) target = $region28
      $region27: #{_lambda_.2} parent=5 // pred_region
        %s189 = ssub.s32 %s11, 1
        %s190 = sand.u32 %s64, 1
        %s191 = scalar_lea.sflag [#allocation4], %s190
        %s192 = sand.u32 %s64, 1
        %s193 = smul.addr %s192, 2304
        %s194 = scalar_lea.vmem [#allocation3], %s193
        // Predicated region
        $region29: #{_lambda_.2} parent=27 // pred_check
          %p195 = pneg %p77
        $region30: #{_lambda_.2} parent=27 // pred_check_branch
          %197 = sbr.rel (%p195) target = $region32
        $region31: #{_lambda_.2} parent=27 // pred_region
          %198 = dma.done %s191, 36864
        $region32: #{_lambda_.2} parent=27 // pred_fallthru
          _
        %s199 = smul.u32 4, %s20
        %p200 = scmp.lt.s32.totalorder %s21, 1
        %s201 = scalar_select %p200, %s21, 1
        %p202 = scmp.lt.s32.totalorder %s199, 7
        %s203 = scalar_select %p202, %s199, 7
        %s204 = smul.addr %s201, 8
        %s205 = sadd.s32 %s203, %s204
        %s206 = smul.addr %s205, 8
        %s207 = scalar_lea.vmem %s0, %s206
        %p208 = pneg %p51
        %p209 = pneg %p48
        %s210 = sand.u32 %s64, 1
        %s211 = scalar_lea.sflag [#allocation4], %s210
        %s212 = sand.u32 %s64, 1
        %s213 = smul.addr %s212, 2304
        %s214 = scalar_lea.vmem [#allocation3], %s213
        %p215 = pneg %p77
        %p216 = pneg %p74
        %p217 = pneg %p105
        %p218 = pneg %p102
        %s219 = smul.u32 4, %s20
        %p220 = scmp.lt.s32.totalorder %s21, 1
        %s221 = scalar_select %p220, %s21, 1
        %p222 = scmp.lt.s32.totalorder %s219, 7
        %s223 = scalar_select %p222, %s219, 7
        %s224 = smul.addr %s221, 8
        %s225 = sadd.s32 %s223, %s224
        %s226 = smul.addr %s225, 8
        %s227 = scalar_lea.vmem %s2, %s226
        %s228 = smul.u32 4, %s20
        %p229 = scmp.lt.s32.totalorder %s21, 1
        %s230 = scalar_select %p229, %s21, 1
        %p231 = scmp.lt.s32.totalorder %s228, 7
        %s232 = scalar_select %p231, %s228, 7
        %s233 = smul.addr %s230, 8
        %s234 = sadd.s32 %s232, %s233
        %s235 = smul.addr %s234, 8
        %s236 = scalar_lea.vmem %s0, %s235
        %s237 = smul.u32 4, %s20
        %s238 = smul.u32 4, %s20
        %s239 = smul.u32 4, %s20
        %p240 = scmp.lt.s32.totalorder %s21, 1
        %s241 = scalar_select %p240, %s21, 1
        %p242 = scmp.lt.s32.totalorder %s239, 7
        %s243 = scalar_select %p242, %s239, 7
        %s244 = smul.addr %s241, 8
        %s245 = sadd.s32 %s243, %s244
        %s246 = smul.addr %s245, 8
        %s247 = scalar_lea.vmem %s2, %s246
        %s248 = smul.u32 4, %s20
        %249 = vst [vmem:[#allocation2] sm:$0xff] 0.0
        %250 = vst [vmem:[#allocation2 + $0x18] sm:$0xff] 0.0
        %251 = vst [vmem:[#allocation2 + $0x30] sm:$0xff] 0.0
        %252 = vst [vmem:[#allocation2 + $0x48] sm:$0xff] 0.0
        %p253 = scmp.eq.s32.totalorder %s20, 1
        %p254 = scmp.ne.s32.totalorder %s20, 1
        // Predicated region
        $region33: #{_lambda_.2} parent=27 // pred_check
          %p255 = pneg %p254
        $region34: #{_lambda_.2} parent=27 // pred_check_branch
          %257 = sbr.rel (%p255) target = $region36
        $region35: #{_lambda_.2} parent=27 // pred_region
          %v258 = vld [vmem:[%s236] sm:$0xff]
          %v259 = vld [vmem:[%s236 + $0x8] sm:$0xff]
          %v260 = vld [vmem:[%s236 + $0x10] sm:$0xff]
          %v261 = vld [vmem:[%s236 + $0x18] sm:$0xff]
          %vm262 = vcmask 261120
          %263 = vst.msk [vmem:[#allocation2 + $0x8] sm:$0xff] %vm262, %v258
          %264 = vst.msk [vmem:[#allocation2 + $0x20] sm:$0xff] %vm262, %v259
          %265 = vst.msk [vmem:[#allocation2 + $0x38] sm:$0xff] %vm262, %v260
          %266 = vst.msk [vmem:[#allocation2 + $0x50] sm:$0xff] %vm262, %v261
          %vm267 = vcmask 1047808
          %268 = vst.msk [vmem:[#allocation2 + $0x8] sm:$0xff] %vm267, 0.0
          %269 = vst [vmem:[#allocation2 + $0x10] sm:$0xff] 0.0
          %270 = vst.msk [vmem:[#allocation2 + $0x20] sm:$0xff] %vm267, 0.0
          %271 = vst [vmem:[#allocation2 + $0x28] sm:$0xff] 0.0
          %272 = vst.msk [vmem:[#allocation2 + $0x38] sm:$0xff] %vm267, 0.0
          %273 = vst [vmem:[#allocation2 + $0x40] sm:$0xff] 0.0
          %274 = vst.msk [vmem:[#allocation2 + $0x50] sm:$0xff] %vm267, 0.0
          %275 = vst [vmem:[#allocation2 + $0x58] sm:$0xff] 0.0
        $region36: #{_lambda_.2} parent=27 // pred_fallthru
          _
        // Predicated region
        $region37: #{_lambda_.2} parent=27 // pred_check
          %p276 = pneg %p253
        $region38: #{_lambda_.2} parent=27 // pred_check_branch
          %278 = sbr.rel (%p276) target = $region40
        $region39: #{_lambda_.2} parent=27 // pred_region
          %v279 = vld [vmem:[%s236] sm:$0xff]
          %v280 = vld [vmem:[%s236 + $0x8] sm:$0xff]
          %v281 = vld [vmem:[%s236 + $0x10] sm:$0xff]
          %v282 = vld [vmem:[%s236 + $0x18] sm:$0xff]
          %287 = vrot.lane.b32.xlu0 %v279, 1
          %v288 = vpop.permute.xlu0 %287
          %289 = vrot.lane.b32.xlu0 %v280, 1
          %v290 = vpop.permute.xlu0 %289
          %291 = vrot.lane.b32.xlu0 %v281, 1
          %v292 = vpop.permute.xlu0 %291
          %293 = vrot.lane.b32.xlu0 %v282, 1
          %v294 = vpop.permute.xlu0 %293
          %v299 = vsub.f32 %v279, %v288
          %v300 = vsub.f32 %v280, %v290
          %v301 = vsub.f32 %v281, %v292
          %v302 = vsub.f32 %v282, %v294
          %307 = vrot.lane.b32.xlu0 %v299, 127
          %v308 = vpop.permute.xlu0 %307
          %309 = vrot.lane.b32.xlu0 %v300, 127
          %v310 = vpop.permute.xlu0 %309
          %311 = vrot.lane.b32.xlu0 %v301, 127
          %v312 = vpop.permute.xlu0 %311
          %313 = vrot.lane.b32.xlu0 %v302, 127
          %v314 = vpop.permute.xlu0 %313
          %vm319 = vcmask 252928
          %320 = vst.msk [vmem:[#allocation2 + $0x8] sm:$0xff] %vm319, %v308
          %321 = vst.msk [vmem:[#allocation2 + $0x20] sm:$0xff] %vm319, %v310
          %322 = vst.msk [vmem:[#allocation2 + $0x38] sm:$0xff] %vm319, %v312
          %323 = vst.msk [vmem:[#allocation2 + $0x50] sm:$0xff] %vm319, %v314
          %vm324 = vcmask 1047800
          %325 = vst.msk [vmem:[#allocation2 + $0x8] sm:$0xff] %vm324, 0.0
          %326 = vst [vmem:[#allocation2 + $0x10] sm:$0xff] 0.0
          %327 = vst.msk [vmem:[#allocation2 + $0x20] sm:$0xff] %vm324, 0.0
          %328 = vst [vmem:[#allocation2 + $0x28] sm:$0xff] 0.0
          %329 = vst.msk [vmem:[#allocation2 + $0x38] sm:$0xff] %vm324, 0.0
          %330 = vst [vmem:[#allocation2 + $0x40] sm:$0xff] 0.0
          %331 = vst.msk [vmem:[#allocation2 + $0x50] sm:$0xff] %vm324, 0.0
          %332 = vst [vmem:[#allocation2 + $0x58] sm:$0xff] 0.0
        $region40: #{_lambda_.2} parent=27 // pred_fallthru
          _
        %s333 = scalar_select %p253, 31, 32
        %v334 = vlaneseq
        %v335 = vand.u32 %v334, 127
        %v336 = vstv %s333
        %vm337 = vcmp.lt.s32.totalorder %v335, %v336
        %v338 = vsel %vm337, 1, 0
        %v339 = vcvt.s32.f32 %v338
        %v340 = vld [vmem:[#allocation2] sm:$0xff]
        %v341 = vld [vmem:[#allocation2 + $0x8] sm:$0xff]
        %v342 = vld [vmem:[#allocation2 + $0x18] sm:$0xff]
        %v343 = vld [vmem:[#allocation2 + $0x20] sm:$0xff]
        %v344 = vld [vmem:[#allocation2 + $0x10] sm:$0xff]
        %v345 = vld [vmem:[#allocation2 + $0x28] sm:$0xff]
        %v346 = vld [vmem:[%s194] sm:$0xff]
        %v347 = vld [vmem:[%s194 + $0x8] sm:$0xff]
        %352 = vrot.lane.b32.xlu0 %v340, 4
        %v353 = vpop.permute.xlu0 %352
        %354 = vrot.lane.b32.xlu0 %v341, 4
        %v355 = vpop.permute.xlu0 %354
        %356 = vrot.lane.b32.xlu0 %v342, 4
        %v357 = vpop.permute.xlu0 %356
        %358 = vrot.lane.b32.xlu0 %v343, 4
        %v359 = vpop.permute.xlu0 %358
        %vm360 = vcmask 31744
        %v361 = vsel %vm360, %v353, %v355
        %v362 = vsel %vm360, %v357, %v359
        %v365 = vmul.f32 %v346, %v361
        %v366 = vmul.f32 %v347, %v362
        %s367 = scalar_lea.vmem %s194, 256 [#allocation3]
        %v368 = vld [vmem:[%s367] sm:$0xff]
        %v369 = vld [vmem:[%s367 + $0x8] sm:$0xff]
        %370 = vrot.lane.b32.xlu0 %v340, 3
        %v371 = vpop.permute.xlu0 %370
        %372 = vrot.lane.b32.xlu0 %v341, 3
        %v373 = vpop.permute.xlu0 %372
        %374 = vrot.lane.b32.xlu0 %v342, 3
        %v375 = vpop.permute.xlu0 %374
        %376 = vrot.lane.b32.xlu0 %v343, 3
        %v377 = vpop.permute.xlu0 %376
        %vm378 = vcmask 23552
        %v379 = vsel %vm378, %v371, %v373
        %v380 = vsel %vm378, %v375, %v377
        %v383 = vmul.f32 %v368, %v379
        %v384 = vmul.f32 %v369, %v380
        %v385 = vadd.f32 %v365, %v383
        %v386 = vadd.f32 %v366, %v384
        %s387 = scalar_lea.vmem %s194, 512 [#allocation3]
        %v388 = vld [vmem:[%s387] sm:$0xff]
        %v389 = vld [vmem:[%s387 + $0x8] sm:$0xff]
        %390 = vrot.lane.b32.xlu0 %v340, 2
        %v391 = vpop.permute.xlu0 %390
        %392 = vrot.lane.b32.xlu0 %v341, 2
        %v393 = vpop.permute.xlu0 %392
        %394 = vrot.lane.b32.xlu0 %v342, 2
        %v395 = vpop.permute.xlu0 %394
        %396 = vrot.lane.b32.xlu0 %v343, 2
        %v397 = vpop.permute.xlu0 %396
        %vm398 = vcmask 15360
        %v399 = vsel %vm398, %v391, %v393
        %v400 = vsel %vm398, %v395, %v397
        %v403 = vmul.f32 %v388, %v399
        %v404 = vmul.f32 %v389, %v400
        %v405 = vadd.f32 %v385, %v403
        %v406 = vadd.f32 %v386, %v404
        %s407 = scalar_lea.vmem %s194, 768 [#allocation3]
        %v408 = vld [vmem:[%s407] sm:$0xff]
        %v409 = vld [vmem:[%s407 + $0x8] sm:$0xff]
        %410 = vrot.lane.b32.xlu0 %v340, 1
        %v411 = vpop.permute.xlu0 %410
        %412 = vrot.lane.b32.xlu0 %v341, 1
        %v413 = vpop.permute.xlu0 %412
        %414 = vrot.lane.b32.xlu0 %v342, 1
        %v415 = vpop.permute.xlu0 %414
        %416 = vrot.lane.b32.xlu0 %v343, 1
        %v417 = vpop.permute.xlu0 %416
        %vm418 = vcmask 7168
        %v419 = vsel %vm418, %v411, %v413
        %v420 = vsel %vm418, %v415, %v417
        %v423 = vmul.f32 %v408, %v419
        %v424 = vmul.f32 %v409, %v420
        %v425 = vadd.f32 %v405, %v423
        %v426 = vadd.f32 %v406, %v424
        %s427 = scalar_lea.vmem %s194, 1024 [#allocation3]
        %v428 = vld [vmem:[%s427] sm:$0xff]
        %v429 = vld [vmem:[%s427 + $0x8] sm:$0xff]
        %v430 = vmul.f32 %v428, %v341
        %v431 = vmul.f32 %v429, %v343
        %v432 = vadd.f32 %v425, %v430
        %v433 = vadd.f32 %v426, %v431
        %s434 = scalar_lea.vmem %s194, 1280 [#allocation3]
        %v435 = vld [vmem:[%s434] sm:$0xff]
        %v436 = vld [vmem:[%s434 + $0x8] sm:$0xff]
        %439 = vrot.lane.b32.xlu0 %v341, 127
        %v440 = vpop.permute.xlu0 %439
        %441 = vrot.lane.b32.xlu0 %v344, 127
        %v442 = vpop.permute.xlu0 %441
        %443 = vrot.lane.b32.xlu0 %v343, 127
        %v444 = vpop.permute.xlu0 %443
        %445 = vrot.lane.b32.xlu0 %v345, 127
        %v446 = vpop.permute.xlu0 %445
        %vm447 = vcmask 1039360
        %v448 = vsel %vm447, %v440, %v442
        %v449 = vsel %vm447, %v444, %v446
        %v452 = vmul.f32 %v435, %v448
        %v453 = vmul.f32 %v436, %v449
        %v454 = vadd.f32 %v432, %v452
        %v455 = vadd.f32 %v433, %v453
        %s456 = scalar_lea.vmem %s194, 1536 [#allocation3]
        %v457 = vld [vmem:[%s456] sm:$0xff]
        %v458 = vld [vmem:[%s456 + $0x8] sm:$0xff]
        %459 = vrot.lane.b32.xlu0 %v341, 126
        %v460 = vpop.permute.xlu0 %459
        %461 = vrot.lane.b32.xlu0 %v344, 126
        %v462 = vpop.permute.xlu0 %461
        %463 = vrot.lane.b32.xlu0 %v343, 126
        %v464 = vpop.permute.xlu0 %463
        %465 = vrot.lane.b32.xlu0 %v345, 126
        %v466 = vpop.permute.xlu0 %465
        %vm467 = vcmask 1031168
        %v468 = vsel %vm467, %v460, %v462
        %v469 = vsel %vm467, %v464, %v466
        %v472 = vmul.f32 %v457, %v468
        %v473 = vmul.f32 %v458, %v469
        %v474 = vadd.f32 %v454, %v472
        %v475 = vadd.f32 %v455, %v473
        %s476 = scalar_lea.vmem %s194, 1792 [#allocation3]
        %v477 = vld [vmem:[%s476] sm:$0xff]
        %v478 = vld [vmem:[%s476 + $0x8] sm:$0xff]
        %479 = vrot.lane.b32.xlu0 %v341, 125
        %v480 = vpop.permute.xlu0 %479
        %481 = vrot.lane.b32.xlu0 %v344, 125
        %v482 = vpop.permute.xlu0 %481
        %483 = vrot.lane.b32.xlu0 %v343, 125
        %v484 = vpop.permute.xlu0 %483
        %485 = vrot.lane.b32.xlu0 %v345, 125
        %v486 = vpop.permute.xlu0 %485
        %vm487 = vcmask 1022976
        %v488 = vsel %vm487, %v480, %v482
        %v489 = vsel %vm487, %v484, %v486
        %v492 = vmul.f32 %v477, %v488
        %v493 = vmul.f32 %v478, %v489
        %v494 = vadd.f32 %v474, %v492
        %v495 = vadd.f32 %v475, %v493
        %s496 = scalar_lea.vmem %s194, 2048 [#allocation3]
        %v497 = vld [vmem:[%s496] sm:$0xff]
        %v498 = vld [vmem:[%s496 + $0x8] sm:$0xff]
        %499 = vrot.lane.b32.xlu0 %v341, 124
        %v500 = vpop.permute.xlu0 %499
        %501 = vrot.lane.b32.xlu0 %v344, 124
        %v502 = vpop.permute.xlu0 %501
        %503 = vrot.lane.b32.xlu0 %v343, 124
        %v504 = vpop.permute.xlu0 %503
        %505 = vrot.lane.b32.xlu0 %v345, 124
        %v506 = vpop.permute.xlu0 %505
        %vm507 = vcmask 1014784
        %v508 = vsel %vm507, %v500, %v502
        %v509 = vsel %vm507, %v504, %v506
        %v512 = vmul.f32 %v497, %v508
        %v513 = vmul.f32 %v498, %v509
        %v514 = vadd.f32 %v494, %v512
        %v515 = vadd.f32 %v495, %v513
        %s516 = scalar_lea.vmem %s194, 32 [#allocation3]
        %v517 = vld [vmem:[%s516] sm:$0xff]
        %v518 = vld [vmem:[%s516 + $0x8] sm:$0xff]
        %v519 = vmul.f32 %v517, %v361
        %v520 = vmul.f32 %v518, %v362
        %s521 = scalar_lea.vmem %s194, 288 [#allocation3]
        %v522 = vld [vmem:[%s521] sm:$0xff]
        %v523 = vld [vmem:[%s521 + $0x8] sm:$0xff]
        %v524 = vmul.f32 %v522, %v379
        %v525 = vmul.f32 %v523, %v380
        %v526 = vadd.f32 %v519, %v524
        %v527 = vadd.f32 %v520, %v525
        %s528 = scalar_lea.vmem %s194, 544 [#allocation3]
        %v529 = vld [vmem:[%s528] sm:$0xff]
        %v530 = vld [vmem:[%s528 + $0x8] sm:$0xff]
        %v531 = vmul.f32 %v529, %v399
        %v532 = vmul.f32 %v530, %v400
        %v533 = vadd.f32 %v526, %v531
        %v534 = vadd.f32 %v527, %v532
        %s535 = scalar_lea.vmem %s194, 800 [#allocation3]
        %v536 = vld [vmem:[%s535] sm:$0xff]
        %v537 = vld [vmem:[%s535 + $0x8] sm:$0xff]
        %v538 = vmul.f32 %v536, %v419
        %v539 = vmul.f32 %v537, %v420
        %v540 = vadd.f32 %v533, %v538
        %v541 = vadd.f32 %v534, %v539
        %s542 = scalar_lea.vmem %s194, 1056 [#allocation3]
        %v543 = vld [vmem:[%s542] sm:$0xff]
        %v544 = vld [vmem:[%s542 + $0x8] sm:$0xff]
        %v545 = vmul.f32 %v543, %v341
        %v546 = vmul.f32 %v544, %v343
        %v547 = vadd.f32 %v540, %v545
        %v548 = vadd.f32 %v541, %v546
        %s549 = scalar_lea.vmem %s194, 1312 [#allocation3]
        %v550 = vld [vmem:[%s549] sm:$0xff]
        %v551 = vld [vmem:[%s549 + $0x8] sm:$0xff]
        %v552 = vmul.f32 %v550, %v448
        %v553 = vmul.f32 %v551, %v449
        %v554 = vadd.f32 %v547, %v552
        %v555 = vadd.f32 %v548, %v553
        %s556 = scalar_lea.vmem %s194, 1568 [#allocation3]
        %v557 = vld [vmem:[%s556] sm:$0xff]
        %v558 = vld [vmem:[%s556 + $0x8] sm:$0xff]
        %v559 = vmul.f32 %v557, %v468
        %v560 = vmul.f32 %v558, %v469
        %v561 = vadd.f32 %v554, %v559
        %v562 = vadd.f32 %v555, %v560
        %s563 = scalar_lea.vmem %s194, 1824 [#allocation3]
        %v564 = vld [vmem:[%s563] sm:$0xff]
        %v565 = vld [vmem:[%s563 + $0x8] sm:$0xff]
        %v566 = vmul.f32 %v564, %v488
        %v567 = vmul.f32 %v565, %v489
        %v568 = vadd.f32 %v561, %v566
        %v569 = vadd.f32 %v562, %v567
        %s570 = scalar_lea.vmem %s194, 2080 [#allocation3]
        %v571 = vld [vmem:[%s570] sm:$0xff]
        %v572 = vld [vmem:[%s570 + $0x8] sm:$0xff]
        %v573 = vmul.f32 %v571, %v508
        %v574 = vmul.f32 %v572, %v509
        %v575 = vadd.f32 %v568, %v573
        %v576 = vadd.f32 %v569, %v574
        %vm577 = vcmp.gt.f32.partialorder %v575, %v514
        %vm578 = vcmp.gt.f32.partialorder %v576, %v515
        %v579 = vsel %vm577, %v575, %v514
        %v580 = vsel %vm578, %v576, %v515
        %v581 = vsel %vm577, 1, 0
        %v582 = vsel %vm578, 1, 0
        %vm583 = vcmp.lt.f32.partialorder %v575, %v514
        %vm584 = vcmp.lt.f32.partialorder %v576, %v515
        %v585 = vsel %vm583, %v575, %v514
        %v586 = vsel %vm584, %v576, %v515
        %v587 = vsel %vm583, 1, 0
        %v588 = vsel %vm584, 1, 0
        %s589 = scalar_lea.vmem %s194, 64 [#allocation3]
        %v590 = vld [vmem:[%s589] sm:$0xff]
        %v591 = vld [vmem:[%s589 + $0x8] sm:$0xff]
        %v592 = vmul.f32 %v590, %v361
        %v593 = vmul.f32 %v591, %v362
        %s594 = scalar_lea.vmem %s194, 320 [#allocation3]
        %v595 = vld [vmem:[%s594] sm:$0xff]
        %v596 = vld [vmem:[%s594 + $0x8] sm:$0xff]
        %v597 = vmul.f32 %v595, %v379
        %v598 = vmul.f32 %v596, %v380
        %v599 = vadd.f32 %v592, %v597
        %v600 = vadd.f32 %v593, %v598
        %s601 = scalar_lea.vmem %s194, 576 [#allocation3]
        %v602 = vld [vmem:[%s601] sm:$0xff]
        %v603 = vld [vmem:[%s601 + $0x8] sm:$0xff]
        %v604 = vmul.f32 %v602, %v399
        %v605 = vmul.f32 %v603, %v400
        %v606 = vadd.f32 %v599, %v604
        %v607 = vadd.f32 %v600, %v605
        %s608 = scalar_lea.vmem %s194, 832 [#allocation3]
        %v609 = vld [vmem:[%s608] sm:$0xff]
        %v610 = vld [vmem:[%s608 + $0x8] sm:$0xff]
        %v611 = vmul.f32 %v609, %v419
        %v612 = vmul.f32 %v610, %v420
        %v613 = vadd.f32 %v606, %v611
        %v614 = vadd.f32 %v607, %v612
        %s615 = scalar_lea.vmem %s194, 1088 [#allocation3]
        %v616 = vld [vmem:[%s615] sm:$0xff]
        %v617 = vld [vmem:[%s615 + $0x8] sm:$0xff]
        %v618 = vmul.f32 %v616, %v341
        %v619 = vmul.f32 %v617, %v343
        %v620 = vadd.f32 %v613, %v618
        %v621 = vadd.f32 %v614, %v619
        %s622 = scalar_lea.vmem %s194, 1344 [#allocation3]
        %v623 = vld [vmem:[%s622] sm:$0xff]
        %v624 = vld [vmem:[%s622 + $0x8] sm:$0xff]
        %v625 = vmul.f32 %v623, %v448
        %v626 = vmul.f32 %v624, %v449
        %v627 = vadd.f32 %v620, %v625
        %v628 = vadd.f32 %v621, %v626
        %s629 = scalar_lea.vmem %s194, 1600 [#allocation3]
        %v630 = vld [vmem:[%s629] sm:$0xff]
        %v631 = vld [vmem:[%s629 + $0x8] sm:$0xff]
        %v632 = vmul.f32 %v630, %v468
        %v633 = vmul.f32 %v631, %v469
        %v634 = vadd.f32 %v627, %v632
        %v635 = vadd.f32 %v628, %v633
        %s636 = scalar_lea.vmem %s194, 1856 [#allocation3]
        %v637 = vld [vmem:[%s636] sm:$0xff]
        %v638 = vld [vmem:[%s636 + $0x8] sm:$0xff]
        %v639 = vmul.f32 %v637, %v488
        %v640 = vmul.f32 %v638, %v489
        %v641 = vadd.f32 %v634, %v639
        %v642 = vadd.f32 %v635, %v640
        %s643 = scalar_lea.vmem %s194, 2112 [#allocation3]
        %v644 = vld [vmem:[%s643] sm:$0xff]
        %v645 = vld [vmem:[%s643 + $0x8] sm:$0xff]
        %v646 = vmul.f32 %v644, %v508
        %v647 = vmul.f32 %v645, %v509
        %v648 = vadd.f32 %v641, %v646
        %v649 = vadd.f32 %v642, %v647
        %vm650 = vcmp.gt.f32.partialorder %v648, %v579
        %vm651 = vcmp.gt.f32.partialorder %v649, %v580
        %v652 = vsel %vm650, %v648, %v579
        %v653 = vsel %vm651, %v649, %v580
        %v654 = vsel %vm650, 2, %v581
        %v655 = vsel %vm651, 2, %v582
        %vm656 = vcmp.lt.f32.partialorder %v648, %v585
        %vm657 = vcmp.lt.f32.partialorder %v649, %v586
        %v658 = vsel %vm656, %v648, %v585
        %v659 = vsel %vm657, %v649, %v586
        %v660 = vsel %vm656, 2, %v587
        %v661 = vsel %vm657, 2, %v588
        %s662 = scalar_lea.vmem %s194, 96 [#allocation3]
        %v663 = vld [vmem:[%s662] sm:$0xff]
        %v664 = vld [vmem:[%s662 + $0x8] sm:$0xff]
        %v665 = vmul.f32 %v663, %v361
        %v666 = vmul.f32 %v664, %v362
        %s667 = scalar_lea.vmem %s194, 352 [#allocation3]
        %v668 = vld [vmem:[%s667] sm:$0xff]
        %v669 = vld [vmem:[%s667 + $0x8] sm:$0xff]
        %v670 = vmul.f32 %v668, %v379
        %v671 = vmul.f32 %v669, %v380
        %v672 = vadd.f32 %v665, %v670
        %v673 = vadd.f32 %v666, %v671
        %s674 = scalar_lea.vmem %s194, 608 [#allocation3]
        %v675 = vld [vmem:[%s674] sm:$0xff]
        %v676 = vld [vmem:[%s674 + $0x8] sm:$0xff]
        %v677 = vmul.f32 %v675, %v399
        %v678 = vmul.f32 %v676, %v400
        %v679 = vadd.f32 %v672, %v677
        %v680 = vadd.f32 %v673, %v678
        %s681 = scalar_lea.vmem %s194, 864 [#allocation3]
        %v682 = vld [vmem:[%s681] sm:$0xff]
        %v683 = vld [vmem:[%s681 + $0x8] sm:$0xff]
        %v684 = vmul.f32 %v682, %v419
        %v685 = vmul.f32 %v683, %v420
        %v686 = vadd.f32 %v679, %v684
        %v687 = vadd.f32 %v680, %v685
        %s688 = scalar_lea.vmem %s194, 1120 [#allocation3]
        %v689 = vld [vmem:[%s688] sm:$0xff]
        %v690 = vld [vmem:[%s688 + $0x8] sm:$0xff]
        %v691 = vmul.f32 %v689, %v341
        %v692 = vmul.f32 %v690, %v343
        %v693 = vadd.f32 %v686, %v691
        %v694 = vadd.f32 %v687, %v692
        %s695 = scalar_lea.vmem %s194, 1376 [#allocation3]
        %v696 = vld [vmem:[%s695] sm:$0xff]
        %v697 = vld [vmem:[%s695 + $0x8] sm:$0xff]
        %v698 = vmul.f32 %v696, %v448
        %v699 = vmul.f32 %v697, %v449
        %v700 = vadd.f32 %v693, %v698
        %v701 = vadd.f32 %v694, %v699
        %s702 = scalar_lea.vmem %s194, 1632 [#allocation3]
        %v703 = vld [vmem:[%s702] sm:$0xff]
        %v704 = vld [vmem:[%s702 + $0x8] sm:$0xff]
        %v705 = vmul.f32 %v703, %v468
        %v706 = vmul.f32 %v704, %v469
        %v707 = vadd.f32 %v700, %v705
        %v708 = vadd.f32 %v701, %v706
        %s709 = scalar_lea.vmem %s194, 1888 [#allocation3]
        %v710 = vld [vmem:[%s709] sm:$0xff]
        %v711 = vld [vmem:[%s709 + $0x8] sm:$0xff]
        %v712 = vmul.f32 %v710, %v488
        %v713 = vmul.f32 %v711, %v489
        %v714 = vadd.f32 %v707, %v712
        %v715 = vadd.f32 %v708, %v713
        %s716 = scalar_lea.vmem %s194, 2144 [#allocation3]
        %v717 = vld [vmem:[%s716] sm:$0xff]
        %v718 = vld [vmem:[%s716 + $0x8] sm:$0xff]
        %v719 = vmul.f32 %v717, %v508
        %v720 = vmul.f32 %v718, %v509
        %v721 = vadd.f32 %v714, %v719
        %v722 = vadd.f32 %v715, %v720
        %vm723 = vcmp.gt.f32.partialorder %v721, %v652
        %vm724 = vcmp.gt.f32.partialorder %v722, %v653
        %v725 = vsel %vm723, %v721, %v652
        %v726 = vsel %vm724, %v722, %v653
        %v727 = vsel %vm723, 3, %v654
        %v728 = vsel %vm724, 3, %v655
        %vm729 = vcmp.lt.f32.partialorder %v721, %v658
        %vm730 = vcmp.lt.f32.partialorder %v722, %v659
        %v731 = vsel %vm729, %v721, %v658
        %v732 = vsel %vm730, %v722, %v659
        %v733 = vsel %vm729, 3, %v660
        %v734 = vsel %vm730, 3, %v661
        %s735 = scalar_lea.vmem %s194, 128 [#allocation3]
        %v736 = vld [vmem:[%s735] sm:$0xff]
        %v737 = vld [vmem:[%s735 + $0x8] sm:$0xff]
        %v738 = vmul.f32 %v736, %v361
        %v739 = vmul.f32 %v737, %v362
        %s740 = scalar_lea.vmem %s194, 384 [#allocation3]
        %v741 = vld [vmem:[%s740] sm:$0xff]
        %v742 = vld [vmem:[%s740 + $0x8] sm:$0xff]
        %v743 = vmul.f32 %v741, %v379
        %v744 = vmul.f32 %v742, %v380
        %v745 = vadd.f32 %v738, %v743
        %v746 = vadd.f32 %v739, %v744
        %s747 = scalar_lea.vmem %s194, 640 [#allocation3]
        %v748 = vld [vmem:[%s747] sm:$0xff]
        %v749 = vld [vmem:[%s747 + $0x8] sm:$0xff]
        %v750 = vmul.f32 %v748, %v399
        %v751 = vmul.f32 %v749, %v400
        %v752 = vadd.f32 %v745, %v750
        %v753 = vadd.f32 %v746, %v751
        %s754 = scalar_lea.vmem %s194, 896 [#allocation3]
        %v755 = vld [vmem:[%s754] sm:$0xff]
        %v756 = vld [vmem:[%s754 + $0x8] sm:$0xff]
        %v757 = vmul.f32 %v755, %v419
        %v758 = vmul.f32 %v756, %v420
        %v759 = vadd.f32 %v752, %v757
        %v760 = vadd.f32 %v753, %v758
        %s761 = scalar_lea.vmem %s194, 1152 [#allocation3]
        %v762 = vld [vmem:[%s761] sm:$0xff]
        %v763 = vld [vmem:[%s761 + $0x8] sm:$0xff]
        %v764 = vmul.f32 %v762, %v341
        %v765 = vmul.f32 %v763, %v343
        %v766 = vadd.f32 %v759, %v764
        %v767 = vadd.f32 %v760, %v765
        %s768 = scalar_lea.vmem %s194, 1408 [#allocation3]
        %v769 = vld [vmem:[%s768] sm:$0xff]
        %v770 = vld [vmem:[%s768 + $0x8] sm:$0xff]
        %v771 = vmul.f32 %v769, %v448
        %v772 = vmul.f32 %v770, %v449
        %v773 = vadd.f32 %v766, %v771
        %v774 = vadd.f32 %v767, %v772
        %s775 = scalar_lea.vmem %s194, 1664 [#allocation3]
        %v776 = vld [vmem:[%s775] sm:$0xff]
        %v777 = vld [vmem:[%s775 + $0x8] sm:$0xff]
        %v778 = vmul.f32 %v776, %v468
        %v779 = vmul.f32 %v777, %v469
        %v780 = vadd.f32 %v773, %v778
        %v781 = vadd.f32 %v774, %v779
        %s782 = scalar_lea.vmem %s194, 1920 [#allocation3]
        %v783 = vld [vmem:[%s782] sm:$0xff]
        %v784 = vld [vmem:[%s782 + $0x8] sm:$0xff]
        %v785 = vmul.f32 %v783, %v488
        %v786 = vmul.f32 %v784, %v489
        %v787 = vadd.f32 %v780, %v785
        %v788 = vadd.f32 %v781, %v786
        %s789 = scalar_lea.vmem %s194, 2176 [#allocation3]
        %v790 = vld [vmem:[%s789] sm:$0xff]
        %v791 = vld [vmem:[%s789 + $0x8] sm:$0xff]
        %v792 = vmul.f32 %v790, %v508
        %v793 = vmul.f32 %v791, %v509
        %v794 = vadd.f32 %v787, %v792
        %v795 = vadd.f32 %v788, %v793
        %vm796 = vcmp.gt.f32.partialorder %v794, %v725
        %vm797 = vcmp.gt.f32.partialorder %v795, %v726
        %v798 = vsel %vm796, %v794, %v725
        %v799 = vsel %vm797, %v795, %v726
        %v800 = vsel %vm796, 4, %v727
        %v801 = vsel %vm797, 4, %v728
        %vm802 = vcmp.lt.f32.partialorder %v794, %v731
        %vm803 = vcmp.lt.f32.partialorder %v795, %v732
        %v804 = vsel %vm802, %v794, %v731
        %v805 = vsel %vm803, %v795, %v732
        %v806 = vsel %vm802, 4, %v733
        %v807 = vsel %vm803, 4, %v734
        %s808 = scalar_lea.vmem %s194, 160 [#allocation3]
        %v809 = vld [vmem:[%s808] sm:$0xff]
        %v810 = vld [vmem:[%s808 + $0x8] sm:$0xff]
        %v811 = vmul.f32 %v809, %v361
        %v812 = vmul.f32 %v810, %v362
        %s813 = scalar_lea.vmem %s194, 416 [#allocation3]
        %v814 = vld [vmem:[%s813] sm:$0xff]
        %v815 = vld [vmem:[%s813 + $0x8] sm:$0xff]
        %v816 = vmul.f32 %v814, %v379
        %v817 = vmul.f32 %v815, %v380
        %v818 = vadd.f32 %v811, %v816
        %v819 = vadd.f32 %v812, %v817
        %s820 = scalar_lea.vmem %s194, 672 [#allocation3]
        %v821 = vld [vmem:[%s820] sm:$0xff]
        %v822 = vld [vmem:[%s820 + $0x8] sm:$0xff]
        %v823 = vmul.f32 %v821, %v399
        %v824 = vmul.f32 %v822, %v400
        %v825 = vadd.f32 %v818, %v823
        %v826 = vadd.f32 %v819, %v824
        %s827 = scalar_lea.vmem %s194, 928 [#allocation3]
        %v828 = vld [vmem:[%s827] sm:$0xff]
        %v829 = vld [vmem:[%s827 + $0x8] sm:$0xff]
        %v830 = vmul.f32 %v828, %v419
        %v831 = vmul.f32 %v829, %v420
        %v832 = vadd.f32 %v825, %v830
        %v833 = vadd.f32 %v826, %v831
        %s834 = scalar_lea.vmem %s194, 1184 [#allocation3]
        %v835 = vld [vmem:[%s834] sm:$0xff]
        %v836 = vld [vmem:[%s834 + $0x8] sm:$0xff]
        %v837 = vmul.f32 %v835, %v341
        %v838 = vmul.f32 %v836, %v343
        %v839 = vadd.f32 %v832, %v837
        %v840 = vadd.f32 %v833, %v838
        %s841 = scalar_lea.vmem %s194, 1440 [#allocation3]
        %v842 = vld [vmem:[%s841] sm:$0xff]
        %v843 = vld [vmem:[%s841 + $0x8] sm:$0xff]
        %v844 = vmul.f32 %v842, %v448
        %v845 = vmul.f32 %v843, %v449
        %v846 = vadd.f32 %v839, %v844
        %v847 = vadd.f32 %v840, %v845
        %s848 = scalar_lea.vmem %s194, 1696 [#allocation3]
        %v849 = vld [vmem:[%s848] sm:$0xff]
        %v850 = vld [vmem:[%s848 + $0x8] sm:$0xff]
        %v851 = vmul.f32 %v849, %v468
        %v852 = vmul.f32 %v850, %v469
        %v853 = vadd.f32 %v846, %v851
        %v854 = vadd.f32 %v847, %v852
        %s855 = scalar_lea.vmem %s194, 1952 [#allocation3]
        %v856 = vld [vmem:[%s855] sm:$0xff]
        %v857 = vld [vmem:[%s855 + $0x8] sm:$0xff]
        %v858 = vmul.f32 %v856, %v488
        %v859 = vmul.f32 %v857, %v489
        %v860 = vadd.f32 %v853, %v858
        %v861 = vadd.f32 %v854, %v859
        %s862 = scalar_lea.vmem %s194, 2208 [#allocation3]
        %v863 = vld [vmem:[%s862] sm:$0xff]
        %v864 = vld [vmem:[%s862 + $0x8] sm:$0xff]
        %v865 = vmul.f32 %v863, %v508
        %v866 = vmul.f32 %v864, %v509
        %v867 = vadd.f32 %v860, %v865
        %v868 = vadd.f32 %v861, %v866
        %vm869 = vcmp.gt.f32.partialorder %v867, %v798
        %vm870 = vcmp.gt.f32.partialorder %v868, %v799
        %v871 = vsel %vm869, %v867, %v798
        %v872 = vsel %vm870, %v868, %v799
        %v873 = vsel %vm869, 5, %v800
        %v874 = vsel %vm870, 5, %v801
        %vm875 = vcmp.lt.f32.partialorder %v867, %v804
        %vm876 = vcmp.lt.f32.partialorder %v868, %v805
        %v877 = vsel %vm875, %v867, %v804
        %v878 = vsel %vm876, %v868, %v805
        %v879 = vsel %vm875, 5, %v806
        %v880 = vsel %vm876, 5, %v807
        %s881 = scalar_lea.vmem %s194, 192 [#allocation3]
        %v882 = vld [vmem:[%s881] sm:$0xff]
        %v883 = vld [vmem:[%s881 + $0x8] sm:$0xff]
        %v884 = vmul.f32 %v882, %v361
        %v885 = vmul.f32 %v883, %v362
        %s886 = scalar_lea.vmem %s194, 448 [#allocation3]
        %v887 = vld [vmem:[%s886] sm:$0xff]
        %v888 = vld [vmem:[%s886 + $0x8] sm:$0xff]
        %v889 = vmul.f32 %v887, %v379
        %v890 = vmul.f32 %v888, %v380
        %v891 = vadd.f32 %v884, %v889
        %v892 = vadd.f32 %v885, %v890
        %s893 = scalar_lea.vmem %s194, 704 [#allocation3]
        %v894 = vld [vmem:[%s893] sm:$0xff]
        %v895 = vld [vmem:[%s893 + $0x8] sm:$0xff]
        %v896 = vmul.f32 %v894, %v399
        %v897 = vmul.f32 %v895, %v400
        %v898 = vadd.f32 %v891, %v896
        %v899 = vadd.f32 %v892, %v897
        %s900 = scalar_lea.vmem %s194, 960 [#allocation3]
        %v901 = vld [vmem:[%s900] sm:$0xff]
        %v902 = vld [vmem:[%s900 + $0x8] sm:$0xff]
        %v903 = vmul.f32 %v901, %v419
        %v904 = vmul.f32 %v902, %v420
        %v905 = vadd.f32 %v898, %v903
        %v906 = vadd.f32 %v899, %v904
        %s907 = scalar_lea.vmem %s194, 1216 [#allocation3]
        %v908 = vld [vmem:[%s907] sm:$0xff]
        %v909 = vld [vmem:[%s907 + $0x8] sm:$0xff]
        %v910 = vmul.f32 %v908, %v341
        %v911 = vmul.f32 %v909, %v343
        %v912 = vadd.f32 %v905, %v910
        %v913 = vadd.f32 %v906, %v911
        %s914 = scalar_lea.vmem %s194, 1472 [#allocation3]
        %v915 = vld [vmem:[%s914] sm:$0xff]
        %v916 = vld [vmem:[%s914 + $0x8] sm:$0xff]
        %v917 = vmul.f32 %v915, %v448
        %v918 = vmul.f32 %v916, %v449
        %v919 = vadd.f32 %v912, %v917
        %v920 = vadd.f32 %v913, %v918
        %s921 = scalar_lea.vmem %s194, 1728 [#allocation3]
        %v922 = vld [vmem:[%s921] sm:$0xff]
        %v923 = vld [vmem:[%s921 + $0x8] sm:$0xff]
        %v924 = vmul.f32 %v922, %v468
        %v925 = vmul.f32 %v923, %v469
        %v926 = vadd.f32 %v919, %v924
        %v927 = vadd.f32 %v920, %v925
        %s928 = scalar_lea.vmem %s194, 1984 [#allocation3]
        %v929 = vld [vmem:[%s928] sm:$0xff]
        %v930 = vld [vmem:[%s928 + $0x8] sm:$0xff]
        %v931 = vmul.f32 %v929, %v488
        %v932 = vmul.f32 %v930, %v489
        %v933 = vadd.f32 %v926, %v931
        %v934 = vadd.f32 %v927, %v932
        %s935 = scalar_lea.vmem %s194, 2240 [#allocation3]
        %v936 = vld [vmem:[%s935] sm:$0xff]
        %v937 = vld [vmem:[%s935 + $0x8] sm:$0xff]
        %v938 = vmul.f32 %v936, %v508
        %v939 = vmul.f32 %v937, %v509
        %v940 = vadd.f32 %v933, %v938
        %v941 = vadd.f32 %v934, %v939
        %vm942 = vcmp.gt.f32.partialorder %v940, %v871
        %vm943 = vcmp.gt.f32.partialorder %v941, %v872
        %v944 = vsel %vm942, %v940, %v871
        %v945 = vsel %vm943, %v941, %v872
        %v946 = vsel %vm942, 6, %v873
        %v947 = vsel %vm943, 6, %v874
        %vm948 = vcmp.lt.f32.partialorder %v940, %v877
        %vm949 = vcmp.lt.f32.partialorder %v941, %v878
        %v950 = vsel %vm948, %v940, %v877
        %v951 = vsel %vm949, %v941, %v878
        %v952 = vsel %vm948, 6, %v879
        %v953 = vsel %vm949, 6, %v880
        %s954 = scalar_lea.vmem %s194, 224 [#allocation3]
        %v955 = vld [vmem:[%s954] sm:$0xff]
        %v956 = vld [vmem:[%s954 + $0x8] sm:$0xff]
        %v957 = vmul.f32 %v955, %v361
        %v958 = vmul.f32 %v956, %v362
        %s959 = scalar_lea.vmem %s194, 480 [#allocation3]
        %v960 = vld [vmem:[%s959] sm:$0xff]
        %v961 = vld [vmem:[%s959 + $0x8] sm:$0xff]
        %v962 = vmul.f32 %v960, %v379
        %v963 = vmul.f32 %v961, %v380
        %v964 = vadd.f32 %v957, %v962
        %v965 = vadd.f32 %v958, %v963
        %s966 = scalar_lea.vmem %s194, 736 [#allocation3]
        %v967 = vld [vmem:[%s966] sm:$0xff]
        %v968 = vld [vmem:[%s966 + $0x8] sm:$0xff]
        %v969 = vmul.f32 %v967, %v399
        %v970 = vmul.f32 %v968, %v400
        %v971 = vadd.f32 %v964, %v969
        %v972 = vadd.f32 %v965, %v970
        %s973 = scalar_lea.vmem %s194, 992 [#allocation3]
        %v974 = vld [vmem:[%s973] sm:$0xff]
        %v975 = vld [vmem:[%s973 + $0x8] sm:$0xff]
        %v976 = vmul.f32 %v974, %v419
        %v977 = vmul.f32 %v975, %v420
        %v978 = vadd.f32 %v971, %v976
        %v979 = vadd.f32 %v972, %v977
        %s980 = scalar_lea.vmem %s194, 1248 [#allocation3]
        %v981 = vld [vmem:[%s980] sm:$0xff]
        %v982 = vld [vmem:[%s980 + $0x8] sm:$0xff]
        %v983 = vmul.f32 %v981, %v341
        %v984 = vmul.f32 %v982, %v343
        %v985 = vadd.f32 %v978, %v983
        %v986 = vadd.f32 %v979, %v984
        %s987 = scalar_lea.vmem %s194, 1504 [#allocation3]
        %v988 = vld [vmem:[%s987] sm:$0xff]
        %v989 = vld [vmem:[%s987 + $0x8] sm:$0xff]
        %v990 = vmul.f32 %v988, %v448
        %v991 = vmul.f32 %v989, %v449
        %v992 = vadd.f32 %v985, %v990
        %v993 = vadd.f32 %v986, %v991
        %s994 = scalar_lea.vmem %s194, 1760 [#allocation3]
        %v995 = vld [vmem:[%s994] sm:$0xff]
        %v996 = vld [vmem:[%s994 + $0x8] sm:$0xff]
        %v997 = vmul.f32 %v995, %v468
        %v998 = vmul.f32 %v996, %v469
        %v999 = vadd.f32 %v992, %v997
        %v1000 = vadd.f32 %v993, %v998
        %s1001 = scalar_lea.vmem %s194, 2016 [#allocation3]
        %v1002 = vld [vmem:[%s1001] sm:$0xff]
        %v1003 = vld [vmem:[%s1001 + $0x8] sm:$0xff]
        %v1004 = vmul.f32 %v1002, %v488
        %v1005 = vmul.f32 %v1003, %v489
        %v1006 = vadd.f32 %v999, %v1004
        %v1007 = vadd.f32 %v1000, %v1005
        %s1008 = scalar_lea.vmem %s194, 2272 [#allocation3]
        %v1009 = vld [vmem:[%s1008] sm:$0xff]
        %v1010 = vld [vmem:[%s1008 + $0x8] sm:$0xff]
        %v1011 = vmul.f32 %v1009, %v508
        %v1012 = vmul.f32 %v1010, %v509
        %v1013 = vadd.f32 %v1006, %v1011
        %v1014 = vadd.f32 %v1007, %v1012
        %vm1015 = vcmp.gt.f32.partialorder %v1013, %v944
        %vm1016 = vcmp.gt.f32.partialorder %v1014, %v945
        %v1017 = vsel %vm1015, %v1013, %v944
        %v1018 = vsel %vm1016, %v1014, %v945
        %v1019 = vsel %vm1015, 7, %v946
        %v1020 = vsel %vm1016, 7, %v947
        %vm1021 = vcmp.lt.f32.partialorder %v1013, %v950
        %vm1022 = vcmp.lt.f32.partialorder %v1014, %v951
        %v1023 = vsel %vm1021, 7, %v952
        %v1024 = vsel %vm1022, 7, %v953
        %v1025 = vmul.f32 %v1017, %v339
        %v1026 = vmul.f32 %v1018, %v339
        %vm1027 = vcmp.eq.s32.totalorder %v1019, 0
        %vm1028 = vcmp.eq.s32.totalorder %v1020, 0
        %v1029 = vsel %vm1027, %v1025, 0.0
        %v1030 = vsel %vm1028, %v1026, 0.0
        %1031 = vadd.xlane.f32.xlu0 %v1029
        %v1032 = vpop.xlane.xlu0 %1031
        %1033 = vadd.xlane.f32.xlu0 %v1030
        %v1034 = vpop.xlane.xlu0 %1033
        %vm1035 = vcmp.eq.s32.totalorder %v1023, 0
        %vm1036 = vcmp.eq.s32.totalorder %v1024, 0
        %v1037 = vsel %vm1035, %v339, 0.0
        %v1038 = vsel %vm1036, %v339, 0.0
        %1039 = vadd.xlane.f32.xlu0 %v1037
        %v1040 = vpop.xlane.xlu0 %1039
        %1041 = vadd.xlane.f32.xlu0 %v1038
        %v1042 = vpop.xlane.xlu0 %1041
        %vm1043 = vcmp.eq.s32.totalorder %v1019, 1
        %vm1044 = vcmp.eq.s32.totalorder %v1020, 1
        %v1045 = vsel %vm1043, %v1025, 0.0
        %v1046 = vsel %vm1044, %v1026, 0.0
        %1047 = vadd.xlane.f32.xlu0 %v1045
        %v1048 = vpop.xlane.xlu0 %1047
        %1049 = vadd.xlane.f32.xlu0 %v1046
        %v1050 = vpop.xlane.xlu0 %1049
        %vm1051 = vcmp.eq.s32.totalorder %v1023, 1
        %vm1052 = vcmp.eq.s32.totalorder %v1024, 1
        %v1053 = vsel %vm1051, %v339, 0.0
        %v1054 = vsel %vm1052, %v339, 0.0
        %1055 = vadd.xlane.f32.xlu0 %v1053
        %v1056 = vpop.xlane.xlu0 %1055
        %1057 = vadd.xlane.f32.xlu0 %v1054
        %v1058 = vpop.xlane.xlu0 %1057
        %vm1059 = vcmp.eq.s32.totalorder %v1019, 2
        %vm1060 = vcmp.eq.s32.totalorder %v1020, 2
        %v1061 = vsel %vm1059, %v1025, 0.0
        %v1062 = vsel %vm1060, %v1026, 0.0
        %1063 = vadd.xlane.f32.xlu0 %v1061
        %v1064 = vpop.xlane.xlu0 %1063
        %1065 = vadd.xlane.f32.xlu0 %v1062
        %v1066 = vpop.xlane.xlu0 %1065
        %vm1067 = vcmp.eq.s32.totalorder %v1023, 2
        %vm1068 = vcmp.eq.s32.totalorder %v1024, 2
        %v1069 = vsel %vm1067, %v339, 0.0
        %v1070 = vsel %vm1068, %v339, 0.0
        %1071 = vadd.xlane.f32.xlu0 %v1069
        %v1072 = vpop.xlane.xlu0 %1071
        %1073 = vadd.xlane.f32.xlu0 %v1070
        %v1074 = vpop.xlane.xlu0 %1073
        %vm1075 = vcmp.eq.s32.totalorder %v1019, 3
        %vm1076 = vcmp.eq.s32.totalorder %v1020, 3
        %v1077 = vsel %vm1075, %v1025, 0.0
        %v1078 = vsel %vm1076, %v1026, 0.0
        %1079 = vadd.xlane.f32.xlu0 %v1077
        %v1080 = vpop.xlane.xlu0 %1079
        %1081 = vadd.xlane.f32.xlu0 %v1078
        %v1082 = vpop.xlane.xlu0 %1081
        %vm1083 = vcmp.eq.s32.totalorder %v1023, 3
        %vm1084 = vcmp.eq.s32.totalorder %v1024, 3
        %v1085 = vsel %vm1083, %v339, 0.0
        %v1086 = vsel %vm1084, %v339, 0.0
        %1087 = vadd.xlane.f32.xlu0 %v1085
        %v1088 = vpop.xlane.xlu0 %1087
        %1089 = vadd.xlane.f32.xlu0 %v1086
        %v1090 = vpop.xlane.xlu0 %1089
        %vm1091 = vcmp.eq.s32.totalorder %v1019, 4
        %vm1092 = vcmp.eq.s32.totalorder %v1020, 4
        %v1093 = vsel %vm1091, %v1025, 0.0
        %v1094 = vsel %vm1092, %v1026, 0.0
        %1095 = vadd.xlane.f32.xlu0 %v1093
        %v1096 = vpop.xlane.xlu0 %1095
        %1097 = vadd.xlane.f32.xlu0 %v1094
        %v1098 = vpop.xlane.xlu0 %1097
        %vm1099 = vcmp.eq.s32.totalorder %v1023, 4
        %vm1100 = vcmp.eq.s32.totalorder %v1024, 4
        %v1101 = vsel %vm1099, %v339, 0.0
        %v1102 = vsel %vm1100, %v339, 0.0
        %1103 = vadd.xlane.f32.xlu0 %v1101
        %v1104 = vpop.xlane.xlu0 %1103
        %1105 = vadd.xlane.f32.xlu0 %v1102
        %v1106 = vpop.xlane.xlu0 %1105
        %vm1107 = vcmp.eq.s32.totalorder %v1019, 5
        %vm1108 = vcmp.eq.s32.totalorder %v1020, 5
        %v1109 = vsel %vm1107, %v1025, 0.0
        %v1110 = vsel %vm1108, %v1026, 0.0
        %1111 = vadd.xlane.f32.xlu0 %v1109
        %v1112 = vpop.xlane.xlu0 %1111
        %1113 = vadd.xlane.f32.xlu0 %v1110
        %v1114 = vpop.xlane.xlu0 %1113
        %vm1115 = vcmp.eq.s32.totalorder %v1023, 5
        %vm1116 = vcmp.eq.s32.totalorder %v1024, 5
        %v1117 = vsel %vm1115, %v339, 0.0
        %v1118 = vsel %vm1116, %v339, 0.0
        %1119 = vadd.xlane.f32.xlu0 %v1117
        %v1120 = vpop.xlane.xlu0 %1119
        %1121 = vadd.xlane.f32.xlu0 %v1118
        %v1122 = vpop.xlane.xlu0 %1121
        %vm1123 = vcmp.eq.s32.totalorder %v1019, 6
        %vm1124 = vcmp.eq.s32.totalorder %v1020, 6
        %v1125 = vsel %vm1123, %v1025, 0.0
        %v1126 = vsel %vm1124, %v1026, 0.0
        %1127 = vadd.xlane.f32.xlu0 %v1125
        %v1128 = vpop.xlane.xlu0 %1127
        %1129 = vadd.xlane.f32.xlu0 %v1126
        %v1130 = vpop.xlane.xlu0 %1129
        %vm1131 = vcmp.eq.s32.totalorder %v1023, 6
        %vm1132 = vcmp.eq.s32.totalorder %v1024, 6
        %v1133 = vsel %vm1131, %v339, 0.0
        %v1134 = vsel %vm1132, %v339, 0.0
        %1135 = vadd.xlane.f32.xlu0 %v1133
        %v1136 = vpop.xlane.xlu0 %1135
        %1137 = vadd.xlane.f32.xlu0 %v1134
        %v1138 = vpop.xlane.xlu0 %1137
        %vm1139 = vcmp.eq.s32.totalorder %v1019, 7
        %vm1140 = vcmp.eq.s32.totalorder %v1020, 7
        %v1141 = vsel %vm1139, %v1025, 0.0
        %v1142 = vsel %vm1140, %v1026, 0.0
        %1143 = vadd.xlane.f32.xlu0 %v1141
        %v1144 = vpop.xlane.xlu0 %1143
        %1145 = vadd.xlane.f32.xlu0 %v1142
        %v1146 = vpop.xlane.xlu0 %1145
        %vm1147 = vcmp.eq.s32.totalorder %v1023, 7
        %vm1148 = vcmp.eq.s32.totalorder %v1024, 7
        %v1149 = vsel %vm1147, %v339, 0.0
        %v1150 = vsel %vm1148, %v339, 0.0
        %1151 = vadd.xlane.f32.xlu0 %v1149
        %v1152 = vpop.xlane.xlu0 %1151
        %1153 = vadd.xlane.f32.xlu0 %v1150
        %v1154 = vpop.xlane.xlu0 %1153
        %v1155 = vsel %vm418, %v1032, %v1048
        %v1156 = vsel %vm418, %v1034, %v1050
        %v1157 = vsel %vm398, %v1155, %v1064
        %v1158 = vsel %vm398, %v1156, %v1066
        %v1159 = vsel %vm378, %v1157, %v1080
        %v1160 = vsel %vm378, %v1158, %v1082
        %v1161 = vsel %vm360, %v1159, %v1096
        %v1162 = vsel %vm360, %v1160, %v1098
        %vm1163 = vcmask 39936
        %v1164 = vsel %vm1163, %v1161, %v1112
        %v1165 = vsel %vm1163, %v1162, %v1114
        %vm1166 = vcmask 48128
        %v1167 = vsel %vm1166, %v1164, %v1128
        %v1168 = vsel %vm1166, %v1165, %v1130
        %vm1169 = vcmask 56320
        %v1170 = vsel %vm1169, %v1167, %v1144
        %v1171 = vsel %vm1169, %v1168, %v1146
        %v1172 = vsel %vm418, %v1040, %v1056
        %v1173 = vsel %vm418, %v1042, %v1058
        %v1174 = vsel %vm398, %v1172, %v1072
        %v1175 = vsel %vm398, %v1173, %v1074
        %v1176 = vsel %vm378, %v1174, %v1088
        %v1177 = vsel %vm378, %v1175, %v1090
        %v1178 = vsel %vm360, %v1176, %v1104
        %v1179 = vsel %vm360, %v1177, %v1106
        %v1180 = vsel %vm1163, %v1178, %v1120
        %v1181 = vsel %vm1163, %v1179, %v1122
        %v1182 = vsel %vm1166, %v1180, %v1136
        %v1183 = vsel %vm1166, %v1181, %v1138
        %v1184 = vsel %vm1169, %v1182, %v1152
        %v1185 = vsel %vm1169, %v1183, %v1154
        %v1186 = vadd.f32 %v1170, 0.0
        %v1187 = vadd.f32 %v1171, 0.0
        %vm1188 = vcmask 64512
        %1189 = vst.msk [vmem:[%s247] sm:$0xff] %vm1188, %v1186
        %1190 = vst.msk [vmem:[%s247 + $0x8] sm:$0xff] %vm1188, %v1187
        %v1191 = vadd.f32 %v1184, 0.0
        %v1192 = vadd.f32 %v1185, 0.0
        %1195 = vrot.lane.b32.xlu0 %v1191, 8
        %v1196 = vpop.permute.xlu0 %1195
        %1197 = vrot.lane.b32.xlu0 %v1192, 8
        %v1198 = vpop.permute.xlu0 %1197
        %vm1201 = vcmask 130112
        %1202 = vst.msk [vmem:[%s247] sm:$0xff] %vm1201, %v1196
        %1203 = vst.msk [vmem:[%s247 + $0x8] sm:$0xff] %vm1201, %v1198
        %v1204 = vld [vmem:[#allocation2 + $0x30] sm:$0xff]
        %v1205 = vld [vmem:[#allocation2 + $0x38] sm:$0xff]
        %v1206 = vld [vmem:[#allocation2 + $0x48] sm:$0xff]
        %v1207 = vld [vmem:[#allocation2 + $0x50] sm:$0xff]
        %v1208 = vld [vmem:[#allocation2 + $0x38] sm:$0xff]
        %v1209 = vld [vmem:[#allocation2 + $0x40] sm:$0xff]
        %v1210 = vld [vmem:[#allocation2 + $0x50] sm:$0xff]
        %v1211 = vld [vmem:[#allocation2 + $0x58] sm:$0xff]
        %v1212 = vld [vmem:[%s194 + $0x10] sm:$0xff]
        %v1213 = vld [vmem:[%s194 + $0x18] sm:$0xff]
        %1218 = vrot.lane.b32.xlu0 %v1204, 4
        %v1219 = vpop.permute.xlu0 %1218
        %1220 = vrot.lane.b32.xlu0 %v1205, 4
        %v1221 = vpop.permute.xlu0 %1220
        %1222 = vrot.lane.b32.xlu0 %v1206, 4
        %v1223 = vpop.permute.xlu0 %1222
        %1224 = vrot.lane.b32.xlu0 %v1207, 4
        %v1225 = vpop.permute.xlu0 %1224
        %v1226 = vsel %vm360, %v1219, %v1221
        %v1227 = vsel %vm360, %v1223, %v1225
        %v1230 = vmul.f32 %v1212, %v1226
        %v1231 = vmul.f32 %v1213, %v1227
        %v1232 = vld [vmem:[%s367 + $0x10] sm:$0xff]
        %v1233 = vld [vmem:[%s367 + $0x18] sm:$0xff]
        %1234 = vrot.lane.b32.xlu0 %v1204, 3
        %v1235 = vpop.permute.xlu0 %1234
        %1236 = vrot.lane.b32.xlu0 %v1205, 3
        %v1237 = vpop.permute.xlu0 %1236
        %1238 = vrot.lane.b32.xlu0 %v1206, 3
        %v1239 = vpop.permute.xlu0 %1238
        %1240 = vrot.lane.b32.xlu0 %v1207, 3
        %v1241 = vpop.permute.xlu0 %1240
        %v1242 = vsel %vm378, %v1235, %v1237
        %v1243 = vsel %vm378, %v1239, %v1241
        %v1246 = vmul.f32 %v1232, %v1242
        %v1247 = vmul.f32 %v1233, %v1243
        %v1248 = vadd.f32 %v1230, %v1246
        %v1249 = vadd.f32 %v1231, %v1247
        %v1250 = vld [vmem:[%s387 + $0x10] sm:$0xff]
        %v1251 = vld [vmem:[%s387 + $0x18] sm:$0xff]
        %1252 = vrot.lane.b32.xlu0 %v1204, 2
        %v1253 = vpop.permute.xlu0 %1252
        %1254 = vrot.lane.b32.xlu0 %v1205, 2
        %v1255 = vpop.permute.xlu0 %1254
        %1256 = vrot.lane.b32.xlu0 %v1206, 2
        %v1257 = vpop.permute.xlu0 %1256
        %1258 = vrot.lane.b32.xlu0 %v1207, 2
        %v1259 = vpop.permute.xlu0 %1258
        %v1260 = vsel %vm398, %v1253, %v1255
        %v1261 = vsel %vm398, %v1257, %v1259
        %v1264 = vmul.f32 %v1250, %v1260
        %v1265 = vmul.f32 %v1251, %v1261
        %v1266 = vadd.f32 %v1248, %v1264
        %v1267 = vadd.f32 %v1249, %v1265
        %v1268 = vld [vmem:[%s407 + $0x10] sm:$0xff]
        %v1269 = vld [vmem:[%s407 + $0x18] sm:$0xff]
        %1270 = vrot.lane.b32.xlu0 %v1204, 1
        %v1271 = vpop.permute.xlu0 %1270
        %1272 = vrot.lane.b32.xlu0 %v1205, 1
        %v1273 = vpop.permute.xlu0 %1272
        %1274 = vrot.lane.b32.xlu0 %v1206, 1
        %v1275 = vpop.permute.xlu0 %1274
        %1276 = vrot.lane.b32.xlu0 %v1207, 1
        %v1277 = vpop.permute.xlu0 %1276
        %v1278 = vsel %vm418, %v1271, %v1273
        %v1279 = vsel %vm418, %v1275, %v1277
        %v1282 = vmul.f32 %v1268, %v1278
        %v1283 = vmul.f32 %v1269, %v1279
        %v1284 = vadd.f32 %v1266, %v1282
        %v1285 = vadd.f32 %v1267, %v1283
        %v1286 = vld [vmem:[%s427 + $0x10] sm:$0xff]
        %v1287 = vld [vmem:[%s427 + $0x18] sm:$0xff]
        %v1288 = vmul.f32 %v1286, %v1205
        %v1289 = vmul.f32 %v1287, %v1207
        %v1290 = vadd.f32 %v1284, %v1288
        %v1291 = vadd.f32 %v1285, %v1289
        %v1292 = vld [vmem:[%s434 + $0x10] sm:$0xff]
        %v1293 = vld [vmem:[%s434 + $0x18] sm:$0xff]
        %1298 = vrot.lane.b32.xlu0 %v1208, 127
        %v1299 = vpop.permute.xlu0 %1298
        %1300 = vrot.lane.b32.xlu0 %v1209, 127
        %v1301 = vpop.permute.xlu0 %1300
        %1302 = vrot.lane.b32.xlu0 %v1210, 127
        %v1303 = vpop.permute.xlu0 %1302
        %1304 = vrot.lane.b32.xlu0 %v1211, 127
        %v1305 = vpop.permute.xlu0 %1304
        %v1306 = vsel %vm447, %v1299, %v1301
        %v1307 = vsel %vm447, %v1303, %v1305
        %v1310 = vmul.f32 %v1292, %v1306
        %v1311 = vmul.f32 %v1293, %v1307
        %v1312 = vadd.f32 %v1290, %v1310
        %v1313 = vadd.f32 %v1291, %v1311
        %v1314 = vld [vmem:[%s456 + $0x10] sm:$0xff]
        %v1315 = vld [vmem:[%s456 + $0x18] sm:$0xff]
        %1316 = vrot.lane.b32.xlu0 %v1208, 126
        %v1317 = vpop.permute.xlu0 %1316
        %1318 = vrot.lane.b32.xlu0 %v1209, 126
        %v1319 = vpop.permute.xlu0 %1318
        %1320 = vrot.lane.b32.xlu0 %v1210, 126
        %v1321 = vpop.permute.xlu0 %1320
        %1322 = vrot.lane.b32.xlu0 %v1211, 126
        %v1323 = vpop.permute.xlu0 %1322
        %v1324 = vsel %vm467, %v1317, %v1319
        %v1325 = vsel %vm467, %v1321, %v1323
        %v1328 = vmul.f32 %v1314, %v1324
        %v1329 = vmul.f32 %v1315, %v1325
        %v1330 = vadd.f32 %v1312, %v1328
        %v1331 = vadd.f32 %v1313, %v1329
        %v1332 = vld [vmem:[%s476 + $0x10] sm:$0xff]
        %v1333 = vld [vmem:[%s476 + $0x18] sm:$0xff]
        %1334 = vrot.lane.b32.xlu0 %v1208, 125
        %v1335 = vpop.permute.xlu0 %1334
        %1336 = vrot.lane.b32.xlu0 %v1209, 125
        %v1337 = vpop.permute.xlu0 %1336
        %1338 = vrot.lane.b32.xlu0 %v1210, 125
        %v1339 = vpop.permute.xlu0 %1338
        %1340 = vrot.lane.b32.xlu0 %v1211, 125
        %v1341 = vpop.permute.xlu0 %1340
        %v1342 = vsel %vm487, %v1335, %v1337
        %v1343 = vsel %vm487, %v1339, %v1341
        %v1346 = vmul.f32 %v1332, %v1342
        %v1347 = vmul.f32 %v1333, %v1343
        %v1348 = vadd.f32 %v1330, %v1346
        %v1349 = vadd.f32 %v1331, %v1347
        %v1350 = vld [vmem:[%s496 + $0x10] sm:$0xff]
        %v1351 = vld [vmem:[%s496 + $0x18] sm:$0xff]
        %1352 = vrot.lane.b32.xlu0 %v1208, 124
        %v1353 = vpop.permute.xlu0 %1352
        %1354 = vrot.lane.b32.xlu0 %v1209, 124
        %v1355 = vpop.permute.xlu0 %1354
        %1356 = vrot.lane.b32.xlu0 %v1210, 124
        %v1357 = vpop.permute.xlu0 %1356
        %1358 = vrot.lane.b32.xlu0 %v1211, 124
        %v1359 = vpop.permute.xlu0 %1358
        %v1360 = vsel %vm507, %v1353, %v1355
        %v1361 = vsel %vm507, %v1357, %v1359
        %v1364 = vmul.f32 %v1350, %v1360
        %v1365 = vmul.f32 %v1351, %v1361
        %v1366 = vadd.f32 %v1348, %v1364
        %v1367 = vadd.f32 %v1349, %v1365
        %v1368 = vld [vmem:[%s516 + $0x10] sm:$0xff]
        %v1369 = vld [vmem:[%s516 + $0x18] sm:$0xff]
        %v1370 = vmul.f32 %v1368, %v1226
        %v1371 = vmul.f32 %v1369, %v1227
        %v1372 = vld [vmem:[%s521 + $0x10] sm:$0xff]
        %v1373 = vld [vmem:[%s521 + $0x18] sm:$0xff]
        %v1374 = vmul.f32 %v1372, %v1242
        %v1375 = vmul.f32 %v1373, %v1243
        %v1376 = vadd.f32 %v1370, %v1374
        %v1377 = vadd.f32 %v1371, %v1375
        %v1378 = vld [vmem:[%s528 + $0x10] sm:$0xff]
        %v1379 = vld [vmem:[%s528 + $0x18] sm:$0xff]
        %v1380 = vmul.f32 %v1378, %v1260
        %v1381 = vmul.f32 %v1379, %v1261
        %v1382 = vadd.f32 %v1376, %v1380
        %v1383 = vadd.f32 %v1377, %v1381
        %v1384 = vld [vmem:[%s535 + $0x10] sm:$0xff]
        %v1385 = vld [vmem:[%s535 + $0x18] sm:$0xff]
        %v1386 = vmul.f32 %v1384, %v1278
        %v1387 = vmul.f32 %v1385, %v1279
        %v1388 = vadd.f32 %v1382, %v1386
        %v1389 = vadd.f32 %v1383, %v1387
        %v1390 = vld [vmem:[%s542 + $0x10] sm:$0xff]
        %v1391 = vld [vmem:[%s542 + $0x18] sm:$0xff]
        %v1392 = vmul.f32 %v1390, %v1205
        %v1393 = vmul.f32 %v1391, %v1207
        %v1394 = vadd.f32 %v1388, %v1392
        %v1395 = vadd.f32 %v1389, %v1393
        %v1396 = vld [vmem:[%s549 + $0x10] sm:$0xff]
        %v1397 = vld [vmem:[%s549 + $0x18] sm:$0xff]
        %v1398 = vmul.f32 %v1396, %v1306
        %v1399 = vmul.f32 %v1397, %v1307
        %v1400 = vadd.f32 %v1394, %v1398
        %v1401 = vadd.f32 %v1395, %v1399
        %v1402 = vld [vmem:[%s556 + $0x10] sm:$0xff]
        %v1403 = vld [vmem:[%s556 + $0x18] sm:$0xff]
        %v1404 = vmul.f32 %v1402, %v1324
        %v1405 = vmul.f32 %v1403, %v1325
        %v1406 = vadd.f32 %v1400, %v1404
        %v1407 = vadd.f32 %v1401, %v1405
        %v1408 = vld [vmem:[%s563 + $0x10] sm:$0xff]
        %v1409 = vld [vmem:[%s563 + $0x18] sm:$0xff]
        %v1410 = vmul.f32 %v1408, %v1342
        %v1411 = vmul.f32 %v1409, %v1343
        %v1412 = vadd.f32 %v1406, %v1410
        %v1413 = vadd.f32 %v1407, %v1411
        %v1414 = vld [vmem:[%s570 + $0x10] sm:$0xff]
        %v1415 = vld [vmem:[%s570 + $0x18] sm:$0xff]
        %v1416 = vmul.f32 %v1414, %v1360
        %v1417 = vmul.f32 %v1415, %v1361
        %v1418 = vadd.f32 %v1412, %v1416
        %v1419 = vadd.f32 %v1413, %v1417
        %vm1420 = vcmp.gt.f32.partialorder %v1418, %v1366
        %vm1421 = vcmp.gt.f32.partialorder %v1419, %v1367
        %v1422 = vsel %vm1420, %v1418, %v1366
        %v1423 = vsel %vm1421, %v1419, %v1367
        %v1424 = vsel %vm1420, 1, 0
        %v1425 = vsel %vm1421, 1, 0
        %vm1426 = vcmp.lt.f32.partialorder %v1418, %v1366
        %vm1427 = vcmp.lt.f32.partialorder %v1419, %v1367
        %v1428 = vsel %vm1426, %v1418, %v1366
        %v1429 = vsel %vm1427, %v1419, %v1367
        %v1430 = vsel %vm1426, 1, 0
        %v1431 = vsel %vm1427, 1, 0
        %v1432 = vld [vmem:[%s589 + $0x10] sm:$0xff]
        %v1433 = vld [vmem:[%s589 + $0x18] sm:$0xff]
        %v1434 = vmul.f32 %v1432, %v1226
        %v1435 = vmul.f32 %v1433, %v1227
        %v1436 = vld [vmem:[%s594 + $0x10] sm:$0xff]
        %v1437 = vld [vmem:[%s594 + $0x18] sm:$0xff]
        %v1438 = vmul.f32 %v1436, %v1242
        %v1439 = vmul.f32 %v1437, %v1243
        %v1440 = vadd.f32 %v1434, %v1438
        %v1441 = vadd.f32 %v1435, %v1439
        %v1442 = vld [vmem:[%s601 + $0x10] sm:$0xff]
        %v1443 = vld [vmem:[%s601 + $0x18] sm:$0xff]
        %v1444 = vmul.f32 %v1442, %v1260
        %v1445 = vmul.f32 %v1443, %v1261
        %v1446 = vadd.f32 %v1440, %v1444
        %v1447 = vadd.f32 %v1441, %v1445
        %v1448 = vld [vmem:[%s608 + $0x10] sm:$0xff]
        %v1449 = vld [vmem:[%s608 + $0x18] sm:$0xff]
        %v1450 = vmul.f32 %v1448, %v1278
        %v1451 = vmul.f32 %v1449, %v1279
        %v1452 = vadd.f32 %v1446, %v1450
        %v1453 = vadd.f32 %v1447, %v1451
        %v1454 = vld [vmem:[%s615 + $0x10] sm:$0xff]
        %v1455 = vld [vmem:[%s615 + $0x18] sm:$0xff]
        %v1456 = vmul.f32 %v1454, %v1205
        %v1457 = vmul.f32 %v1455, %v1207
        %v1458 = vadd.f32 %v1452, %v1456
        %v1459 = vadd.f32 %v1453, %v1457
        %v1460 = vld [vmem:[%s622 + $0x10] sm:$0xff]
        %v1461 = vld [vmem:[%s622 + $0x18] sm:$0xff]
        %v1462 = vmul.f32 %v1460, %v1306
        %v1463 = vmul.f32 %v1461, %v1307
        %v1464 = vadd.f32 %v1458, %v1462
        %v1465 = vadd.f32 %v1459, %v1463
        %v1466 = vld [vmem:[%s629 + $0x10] sm:$0xff]
        %v1467 = vld [vmem:[%s629 + $0x18] sm:$0xff]
        %v1468 = vmul.f32 %v1466, %v1324
        %v1469 = vmul.f32 %v1467, %v1325
        %v1470 = vadd.f32 %v1464, %v1468
        %v1471 = vadd.f32 %v1465, %v1469
        %v1472 = vld [vmem:[%s636 + $0x10] sm:$0xff]
        %v1473 = vld [vmem:[%s636 + $0x18] sm:$0xff]
        %v1474 = vmul.f32 %v1472, %v1342
        %v1475 = vmul.f32 %v1473, %v1343
        %v1476 = vadd.f32 %v1470, %v1474
        %v1477 = vadd.f32 %v1471, %v1475
        %v1478 = vld [vmem:[%s643 + $0x10] sm:$0xff]
        %v1479 = vld [vmem:[%s643 + $0x18] sm:$0xff]
        %v1480 = vmul.f32 %v1478, %v1360
        %v1481 = vmul.f32 %v1479, %v1361
        %v1482 = vadd.f32 %v1476, %v1480
        %v1483 = vadd.f32 %v1477, %v1481
        %vm1484 = vcmp.gt.f32.partialorder %v1482, %v1422
        %vm1485 = vcmp.gt.f32.partialorder %v1483, %v1423
        %v1486 = vsel %vm1484, %v1482, %v1422
        %v1487 = vsel %vm1485, %v1483, %v1423
        %v1488 = vsel %vm1484, 2, %v1424
        %v1489 = vsel %vm1485, 2, %v1425
        %vm1490 = vcmp.lt.f32.partialorder %v1482, %v1428
        %vm1491 = vcmp.lt.f32.partialorder %v1483, %v1429
        %v1492 = vsel %vm1490, %v1482, %v1428
        %v1493 = vsel %vm1491, %v1483, %v1429
        %v1494 = vsel %vm1490, 2, %v1430
        %v1495 = vsel %vm1491, 2, %v1431
        %v1496 = vld [vmem:[%s662 + $0x10] sm:$0xff]
        %v1497 = vld [vmem:[%s662 + $0x18] sm:$0xff]
        %v1498 = vmul.f32 %v1496, %v1226
        %v1499 = vmul.f32 %v1497, %v1227
        %v1500 = vld [vmem:[%s667 + $0x10] sm:$0xff]
        %v1501 = vld [vmem:[%s667 + $0x18] sm:$0xff]
        %v1502 = vmul.f32 %v1500, %v1242
        %v1503 = vmul.f32 %v1501, %v1243
        %v1504 = vadd.f32 %v1498, %v1502
        %v1505 = vadd.f32 %v1499, %v1503
        %v1506 = vld [vmem:[%s674 + $0x10] sm:$0xff]
        %v1507 = vld [vmem:[%s674 + $0x18] sm:$0xff]
        %v1508 = vmul.f32 %v1506, %v1260
        %v1509 = vmul.f32 %v1507, %v1261
        %v1510 = vadd.f32 %v1504, %v1508
        %v1511 = vadd.f32 %v1505, %v1509
        %v1512 = vld [vmem:[%s681 + $0x10] sm:$0xff]
        %v1513 = vld [vmem:[%s681 + $0x18] sm:$0xff]
        %v1514 = vmul.f32 %v1512, %v1278
        %v1515 = vmul.f32 %v1513, %v1279
        %v1516 = vadd.f32 %v1510, %v1514
        %v1517 = vadd.f32 %v1511, %v1515
        %v1518 = vld [vmem:[%s688 + $0x10] sm:$0xff]
        %v1519 = vld [vmem:[%s688 + $0x18] sm:$0xff]
        %v1520 = vmul.f32 %v1518, %v1205
        %v1521 = vmul.f32 %v1519, %v1207
        %v1522 = vadd.f32 %v1516, %v1520
        %v1523 = vadd.f32 %v1517, %v1521
        %v1524 = vld [vmem:[%s695 + $0x10] sm:$0xff]
        %v1525 = vld [vmem:[%s695 + $0x18] sm:$0xff]
        %v1526 = vmul.f32 %v1524, %v1306
        %v1527 = vmul.f32 %v1525, %v1307
        %v1528 = vadd.f32 %v1522, %v1526
        %v1529 = vadd.f32 %v1523, %v1527
        %v1530 = vld [vmem:[%s702 + $0x10] sm:$0xff]
        %v1531 = vld [vmem:[%s702 + $0x18] sm:$0xff]
        %v1532 = vmul.f32 %v1530, %v1324
        %v1533 = vmul.f32 %v1531, %v1325
        %v1534 = vadd.f32 %v1528, %v1532
        %v1535 = vadd.f32 %v1529, %v1533
        %v1536 = vld [vmem:[%s709 + $0x10] sm:$0xff]
        %v1537 = vld [vmem:[%s709 + $0x18] sm:$0xff]
        %v1538 = vmul.f32 %v1536, %v1342
        %v1539 = vmul.f32 %v1537, %v1343
        %v1540 = vadd.f32 %v1534, %v1538
        %v1541 = vadd.f32 %v1535, %v1539
        %v1542 = vld [vmem:[%s716 + $0x10] sm:$0xff]
        %v1543 = vld [vmem:[%s716 + $0x18] sm:$0xff]
        %v1544 = vmul.f32 %v1542, %v1360
        %v1545 = vmul.f32 %v1543, %v1361
        %v1546 = vadd.f32 %v1540, %v1544
        %v1547 = vadd.f32 %v1541, %v1545
        %vm1548 = vcmp.gt.f32.partialorder %v1546, %v1486
        %vm1549 = vcmp.gt.f32.partialorder %v1547, %v1487
        %v1550 = vsel %vm1548, %v1546, %v1486
        %v1551 = vsel %vm1549, %v1547, %v1487
        %v1552 = vsel %vm1548, 3, %v1488
        %v1553 = vsel %vm1549, 3, %v1489
        %vm1554 = vcmp.lt.f32.partialorder %v1546, %v1492
        %vm1555 = vcmp.lt.f32.partialorder %v1547, %v1493
        %v1556 = vsel %vm1554, %v1546, %v1492
        %v1557 = vsel %vm1555, %v1547, %v1493
        %v1558 = vsel %vm1554, 3, %v1494
        %v1559 = vsel %vm1555, 3, %v1495
        %v1560 = vld [vmem:[%s735 + $0x10] sm:$0xff]
        %v1561 = vld [vmem:[%s735 + $0x18] sm:$0xff]
        %v1562 = vmul.f32 %v1560, %v1226
        %v1563 = vmul.f32 %v1561, %v1227
        %v1564 = vld [vmem:[%s740 + $0x10] sm:$0xff]
        %v1565 = vld [vmem:[%s740 + $0x18] sm:$0xff]
        %v1566 = vmul.f32 %v1564, %v1242
        %v1567 = vmul.f32 %v1565, %v1243
        %v1568 = vadd.f32 %v1562, %v1566
        %v1569 = vadd.f32 %v1563, %v1567
        %v1570 = vld [vmem:[%s747 + $0x10] sm:$0xff]
        %v1571 = vld [vmem:[%s747 + $0x18] sm:$0xff]
        %v1572 = vmul.f32 %v1570, %v1260
        %v1573 = vmul.f32 %v1571, %v1261
        %v1574 = vadd.f32 %v1568, %v1572
        %v1575 = vadd.f32 %v1569, %v1573
        %v1576 = vld [vmem:[%s754 + $0x10] sm:$0xff]
        %v1577 = vld [vmem:[%s754 + $0x18] sm:$0xff]
        %v1578 = vmul.f32 %v1576, %v1278
        %v1579 = vmul.f32 %v1577, %v1279
        %v1580 = vadd.f32 %v1574, %v1578
        %v1581 = vadd.f32 %v1575, %v1579
        %v1582 = vld [vmem:[%s761 + $0x10] sm:$0xff]
        %v1583 = vld [vmem:[%s761 + $0x18] sm:$0xff]
        %v1584 = vmul.f32 %v1582, %v1205
        %v1585 = vmul.f32 %v1583, %v1207
        %v1586 = vadd.f32 %v1580, %v1584
        %v1587 = vadd.f32 %v1581, %v1585
        %v1588 = vld [vmem:[%s768 + $0x10] sm:$0xff]
        %v1589 = vld [vmem:[%s768 + $0x18] sm:$0xff]
        %v1590 = vmul.f32 %v1588, %v1306
        %v1591 = vmul.f32 %v1589, %v1307
        %v1592 = vadd.f32 %v1586, %v1590
        %v1593 = vadd.f32 %v1587, %v1591
        %v1594 = vld [vmem:[%s775 + $0x10] sm:$0xff]
        %v1595 = vld [vmem:[%s775 + $0x18] sm:$0xff]
        %v1596 = vmul.f32 %v1594, %v1324
        %v1597 = vmul.f32 %v1595, %v1325
        %v1598 = vadd.f32 %v1592, %v1596
        %v1599 = vadd.f32 %v1593, %v1597
        %v1600 = vld [vmem:[%s782 + $0x10] sm:$0xff]
        %v1601 = vld [vmem:[%s782 + $0x18] sm:$0xff]
        %v1602 = vmul.f32 %v1600, %v1342
        %v1603 = vmul.f32 %v1601, %v1343
        %v1604 = vadd.f32 %v1598, %v1602
        %v1605 = vadd.f32 %v1599, %v1603
        %v1606 = vld [vmem:[%s789 + $0x10] sm:$0xff]
        %v1607 = vld [vmem:[%s789 + $0x18] sm:$0xff]
        %v1608 = vmul.f32 %v1606, %v1360
        %v1609 = vmul.f32 %v1607, %v1361
        %v1610 = vadd.f32 %v1604, %v1608
        %v1611 = vadd.f32 %v1605, %v1609
        %vm1612 = vcmp.gt.f32.partialorder %v1610, %v1550
        %vm1613 = vcmp.gt.f32.partialorder %v1611, %v1551
        %v1614 = vsel %vm1612, %v1610, %v1550
        %v1615 = vsel %vm1613, %v1611, %v1551
        %v1616 = vsel %vm1612, 4, %v1552
        %v1617 = vsel %vm1613, 4, %v1553
        %vm1618 = vcmp.lt.f32.partialorder %v1610, %v1556
        %vm1619 = vcmp.lt.f32.partialorder %v1611, %v1557
        %v1620 = vsel %vm1618, %v1610, %v1556
        %v1621 = vsel %vm1619, %v1611, %v1557
        %v1622 = vsel %vm1618, 4, %v1558
        %v1623 = vsel %vm1619, 4, %v1559
        %v1624 = vld [vmem:[%s808 + $0x10] sm:$0xff]
        %v1625 = vld [vmem:[%s808 + $0x18] sm:$0xff]
        %v1626 = vmul.f32 %v1624, %v1226
        %v1627 = vmul.f32 %v1625, %v1227
        %v1628 = vld [vmem:[%s813 + $0x10] sm:$0xff]
        %v1629 = vld [vmem:[%s813 + $0x18] sm:$0xff]
        %v1630 = vmul.f32 %v1628, %v1242
        %v1631 = vmul.f32 %v1629, %v1243
        %v1632 = vadd.f32 %v1626, %v1630
        %v1633 = vadd.f32 %v1627, %v1631
        %v1634 = vld [vmem:[%s820 + $0x10] sm:$0xff]
        %v1635 = vld [vmem:[%s820 + $0x18] sm:$0xff]
        %v1636 = vmul.f32 %v1634, %v1260
        %v1637 = vmul.f32 %v1635, %v1261
        %v1638 = vadd.f32 %v1632, %v1636
        %v1639 = vadd.f32 %v1633, %v1637
        %v1640 = vld [vmem:[%s827 + $0x10] sm:$0xff]
        %v1641 = vld [vmem:[%s827 + $0x18] sm:$0xff]
        %v1642 = vmul.f32 %v1640, %v1278
        %v1643 = vmul.f32 %v1641, %v1279
        %v1644 = vadd.f32 %v1638, %v1642
        %v1645 = vadd.f32 %v1639, %v1643
        %v1646 = vld [vmem:[%s834 + $0x10] sm:$0xff]
        %v1647 = vld [vmem:[%s834 + $0x18] sm:$0xff]
        %v1648 = vmul.f32 %v1646, %v1205
        %v1649 = vmul.f32 %v1647, %v1207
        %v1650 = vadd.f32 %v1644, %v1648
        %v1651 = vadd.f32 %v1645, %v1649
        %v1652 = vld [vmem:[%s841 + $0x10] sm:$0xff]
        %v1653 = vld [vmem:[%s841 + $0x18] sm:$0xff]
        %v1654 = vmul.f32 %v1652, %v1306
        %v1655 = vmul.f32 %v1653, %v1307
        %v1656 = vadd.f32 %v1650, %v1654
        %v1657 = vadd.f32 %v1651, %v1655
        %v1658 = vld [vmem:[%s848 + $0x10] sm:$0xff]
        %v1659 = vld [vmem:[%s848 + $0x18] sm:$0xff]
        %v1660 = vmul.f32 %v1658, %v1324
        %v1661 = vmul.f32 %v1659, %v1325
        %v1662 = vadd.f32 %v1656, %v1660
        %v1663 = vadd.f32 %v1657, %v1661
        %v1664 = vld [vmem:[%s855 + $0x10] sm:$0xff]
        %v1665 = vld [vmem:[%s855 + $0x18] sm:$0xff]
        %v1666 = vmul.f32 %v1664, %v1342
        %v1667 = vmul.f32 %v1665, %v1343
        %v1668 = vadd.f32 %v1662, %v1666
        %v1669 = vadd.f32 %v1663, %v1667
        %v1670 = vld [vmem:[%s862 + $0x10] sm:$0xff]
        %v1671 = vld [vmem:[%s862 + $0x18] sm:$0xff]
        %v1672 = vmul.f32 %v1670, %v1360
        %v1673 = vmul.f32 %v1671, %v1361
        %v1674 = vadd.f32 %v1668, %v1672
        %v1675 = vadd.f32 %v1669, %v1673
        %vm1676 = vcmp.gt.f32.partialorder %v1674, %v1614
        %vm1677 = vcmp.gt.f32.partialorder %v1675, %v1615
        %v1678 = vsel %vm1676, %v1674, %v1614
        %v1679 = vsel %vm1677, %v1675, %v1615
        %v1680 = vsel %vm1676, 5, %v1616
        %v1681 = vsel %vm1677, 5, %v1617
        %vm1682 = vcmp.lt.f32.partialorder %v1674, %v1620
        %vm1683 = vcmp.lt.f32.partialorder %v1675, %v1621
        %v1684 = vsel %vm1682, %v1674, %v1620
        %v1685 = vsel %vm1683, %v1675, %v1621
        %v1686 = vsel %vm1682, 5, %v1622
        %v1687 = vsel %vm1683, 5, %v1623
        %v1688 = vld [vmem:[%s881 + $0x10] sm:$0xff]
        %v1689 = vld [vmem:[%s881 + $0x18] sm:$0xff]
        %v1690 = vmul.f32 %v1688, %v1226
        %v1691 = vmul.f32 %v1689, %v1227
        %v1692 = vld [vmem:[%s886 + $0x10] sm:$0xff]
        %v1693 = vld [vmem:[%s886 + $0x18] sm:$0xff]
        %v1694 = vmul.f32 %v1692, %v1242
        %v1695 = vmul.f32 %v1693, %v1243
        %v1696 = vadd.f32 %v1690, %v1694
        %v1697 = vadd.f32 %v1691, %v1695
        %v1698 = vld [vmem:[%s893 + $0x10] sm:$0xff]
        %v1699 = vld [vmem:[%s893 + $0x18] sm:$0xff]
        %v1700 = vmul.f32 %v1698, %v1260
        %v1701 = vmul.f32 %v1699, %v1261
        %v1702 = vadd.f32 %v1696, %v1700
        %v1703 = vadd.f32 %v1697, %v1701
        %v1704 = vld [vmem:[%s900 + $0x10] sm:$0xff]
        %v1705 = vld [vmem:[%s900 + $0x18] sm:$0xff]
        %v1706 = vmul.f32 %v1704, %v1278
        %v1707 = vmul.f32 %v1705, %v1279
        %v1708 = vadd.f32 %v1702, %v1706
        %v1709 = vadd.f32 %v1703, %v1707
        %v1710 = vld [vmem:[%s907 + $0x10] sm:$0xff]
        %v1711 = vld [vmem:[%s907 + $0x18] sm:$0xff]
        %v1712 = vmul.f32 %v1710, %v1205
        %v1713 = vmul.f32 %v1711, %v1207
        %v1714 = vadd.f32 %v1708, %v1712
        %v1715 = vadd.f32 %v1709, %v1713
        %v1716 = vld [vmem:[%s914 + $0x10] sm:$0xff]
        %v1717 = vld [vmem:[%s914 + $0x18] sm:$0xff]
        %v1718 = vmul.f32 %v1716, %v1306
        %v1719 = vmul.f32 %v1717, %v1307
        %v1720 = vadd.f32 %v1714, %v1718
        %v1721 = vadd.f32 %v1715, %v1719
        %v1722 = vld [vmem:[%s921 + $0x10] sm:$0xff]
        %v1723 = vld [vmem:[%s921 + $0x18] sm:$0xff]
        %v1724 = vmul.f32 %v1722, %v1324
        %v1725 = vmul.f32 %v1723, %v1325
        %v1726 = vadd.f32 %v1720, %v1724
        %v1727 = vadd.f32 %v1721, %v1725
        %v1728 = vld [vmem:[%s928 + $0x10] sm:$0xff]
        %v1729 = vld [vmem:[%s928 + $0x18] sm:$0xff]
        %v1730 = vmul.f32 %v1728, %v1342
        %v1731 = vmul.f32 %v1729, %v1343
        %v1732 = vadd.f32 %v1726, %v1730
        %v1733 = vadd.f32 %v1727, %v1731
        %v1734 = vld [vmem:[%s935 + $0x10] sm:$0xff]
        %v1735 = vld [vmem:[%s935 + $0x18] sm:$0xff]
        %v1736 = vmul.f32 %v1734, %v1360
        %v1737 = vmul.f32 %v1735, %v1361
        %v1738 = vadd.f32 %v1732, %v1736
        %v1739 = vadd.f32 %v1733, %v1737
        %vm1740 = vcmp.gt.f32.partialorder %v1738, %v1678
        %vm1741 = vcmp.gt.f32.partialorder %v1739, %v1679
        %v1742 = vsel %vm1740, %v1738, %v1678
        %v1743 = vsel %vm1741, %v1739, %v1679
        %v1744 = vsel %vm1740, 6, %v1680
        %v1745 = vsel %vm1741, 6, %v1681
        %vm1746 = vcmp.lt.f32.partialorder %v1738, %v1684
        %vm1747 = vcmp.lt.f32.partialorder %v1739, %v1685
        %v1748 = vsel %vm1746, %v1738, %v1684
        %v1749 = vsel %vm1747, %v1739, %v1685
        %v1750 = vsel %vm1746, 6, %v1686
        %v1751 = vsel %vm1747, 6, %v1687
        %v1752 = vld [vmem:[%s954 + $0x10] sm:$0xff]
        %v1753 = vld [vmem:[%s954 + $0x18] sm:$0xff]
        %v1754 = vmul.f32 %v1752, %v1226
        %v1755 = vmul.f32 %v1753, %v1227
        %v1756 = vld [vmem:[%s959 + $0x10] sm:$0xff]
        %v1757 = vld [vmem:[%s959 + $0x18] sm:$0xff]
        %v1758 = vmul.f32 %v1756, %v1242
        %v1759 = vmul.f32 %v1757, %v1243
        %v1760 = vadd.f32 %v1754, %v1758
        %v1761 = vadd.f32 %v1755, %v1759
        %v1762 = vld [vmem:[%s966 + $0x10] sm:$0xff]
        %v1763 = vld [vmem:[%s966 + $0x18] sm:$0xff]
        %v1764 = vmul.f32 %v1762, %v1260
        %v1765 = vmul.f32 %v1763, %v1261
        %v1766 = vadd.f32 %v1760, %v1764
        %v1767 = vadd.f32 %v1761, %v1765
        %v1768 = vld [vmem:[%s973 + $0x10] sm:$0xff]
        %v1769 = vld [vmem:[%s973 + $0x18] sm:$0xff]
        %v1770 = vmul.f32 %v1768, %v1278
        %v1771 = vmul.f32 %v1769, %v1279
        %v1772 = vadd.f32 %v1766, %v1770
        %v1773 = vadd.f32 %v1767, %v1771
        %v1774 = vld [vmem:[%s980 + $0x10] sm:$0xff]
        %v1775 = vld [vmem:[%s980 + $0x18] sm:$0xff]
        %v1776 = vmul.f32 %v1774, %v1205
        %v1777 = vmul.f32 %v1775, %v1207
        %v1778 = vadd.f32 %v1772, %v1776
        %v1779 = vadd.f32 %v1773, %v1777
        %v1780 = vld [vmem:[%s987 + $0x10] sm:$0xff]
        %v1781 = vld [vmem:[%s987 + $0x18] sm:$0xff]
        %v1782 = vmul.f32 %v1780, %v1306
        %v1783 = vmul.f32 %v1781, %v1307
        %v1784 = vadd.f32 %v1778, %v1782
        %v1785 = vadd.f32 %v1779, %v1783
        %v1786 = vld [vmem:[%s994 + $0x10] sm:$0xff]
        %v1787 = vld [vmem:[%s994 + $0x18] sm:$0xff]
        %v1788 = vmul.f32 %v1786, %v1324
        %v1789 = vmul.f32 %v1787, %v1325
        %v1790 = vadd.f32 %v1784, %v1788
        %v1791 = vadd.f32 %v1785, %v1789
        %v1792 = vld [vmem:[%s1001 + $0x10] sm:$0xff]
        %v1793 = vld [vmem:[%s1001 + $0x18] sm:$0xff]
        %v1794 = vmul.f32 %v1792, %v1342
        %v1795 = vmul.f32 %v1793, %v1343
        %v1796 = vadd.f32 %v1790, %v1794
        %v1797 = vadd.f32 %v1791, %v1795
        %v1798 = vld [vmem:[%s1008 + $0x10] sm:$0xff]
        %v1799 = vld [vmem:[%s1008 + $0x18] sm:$0xff]
        %v1800 = vmul.f32 %v1798, %v1360
        %v1801 = vmul.f32 %v1799, %v1361
        %v1802 = vadd.f32 %v1796, %v1800
        %v1803 = vadd.f32 %v1797, %v1801
        %vm1804 = vcmp.gt.f32.partialorder %v1802, %v1742
        %vm1805 = vcmp.gt.f32.partialorder %v1803, %v1743
        %v1806 = vsel %vm1804, %v1802, %v1742
        %v1807 = vsel %vm1805, %v1803, %v1743
        %v1808 = vsel %vm1804, 7, %v1744
        %v1809 = vsel %vm1805, 7, %v1745
        %vm1810 = vcmp.lt.f32.partialorder %v1802, %v1748
        %vm1811 = vcmp.lt.f32.partialorder %v1803, %v1749
        %v1812 = vsel %vm1810, 7, %v1750
        %v1813 = vsel %vm1811, 7, %v1751
        %v1814 = vmul.f32 %v1806, %v339
        %v1815 = vmul.f32 %v1807, %v339
        %vm1816 = vcmp.eq.s32.totalorder %v1808, 0
        %vm1817 = vcmp.eq.s32.totalorder %v1809, 0
        %v1818 = vsel %vm1816, %v1814, 0.0
        %v1819 = vsel %vm1817, %v1815, 0.0
        %1820 = vadd.xlane.f32.xlu0 %v1818
        %v1821 = vpop.xlane.xlu0 %1820
        %1822 = vadd.xlane.f32.xlu0 %v1819
        %v1823 = vpop.xlane.xlu0 %1822
        %vm1824 = vcmp.eq.s32.totalorder %v1812, 0
        %vm1825 = vcmp.eq.s32.totalorder %v1813, 0
        %v1826 = vsel %vm1824, %v339, 0.0
        %v1827 = vsel %vm1825, %v339, 0.0
        %1828 = vadd.xlane.f32.xlu0 %v1826
        %v1829 = vpop.xlane.xlu0 %1828
        %1830 = vadd.xlane.f32.xlu0 %v1827
        %v1831 = vpop.xlane.xlu0 %1830
        %vm1832 = vcmp.eq.s32.totalorder %v1808, 1
        %vm1833 = vcmp.eq.s32.totalorder %v1809, 1
        %v1834 = vsel %vm1832, %v1814, 0.0
        %v1835 = vsel %vm1833, %v1815, 0.0
        %1836 = vadd.xlane.f32.xlu0 %v1834
        %v1837 = vpop.xlane.xlu0 %1836
        %1838 = vadd.xlane.f32.xlu0 %v1835
        %v1839 = vpop.xlane.xlu0 %1838
        %vm1840 = vcmp.eq.s32.totalorder %v1812, 1
        %vm1841 = vcmp.eq.s32.totalorder %v1813, 1
        %v1842 = vsel %vm1840, %v339, 0.0
        %v1843 = vsel %vm1841, %v339, 0.0
        %1844 = vadd.xlane.f32.xlu0 %v1842
        %v1845 = vpop.xlane.xlu0 %1844
        %1846 = vadd.xlane.f32.xlu0 %v1843
        %v1847 = vpop.xlane.xlu0 %1846
        %vm1848 = vcmp.eq.s32.totalorder %v1808, 2
        %vm1849 = vcmp.eq.s32.totalorder %v1809, 2
        %v1850 = vsel %vm1848, %v1814, 0.0
        %v1851 = vsel %vm1849, %v1815, 0.0
        %1852 = vadd.xlane.f32.xlu0 %v1850
        %v1853 = vpop.xlane.xlu0 %1852
        %1854 = vadd.xlane.f32.xlu0 %v1851
        %v1855 = vpop.xlane.xlu0 %1854
        %vm1856 = vcmp.eq.s32.totalorder %v1812, 2
        %vm1857 = vcmp.eq.s32.totalorder %v1813, 2
        %v1858 = vsel %vm1856, %v339, 0.0
        %v1859 = vsel %vm1857, %v339, 0.0
        %1860 = vadd.xlane.f32.xlu0 %v1858
        %v1861 = vpop.xlane.xlu0 %1860
        %1862 = vadd.xlane.f32.xlu0 %v1859
        %v1863 = vpop.xlane.xlu0 %1862
        %vm1864 = vcmp.eq.s32.totalorder %v1808, 3
        %vm1865 = vcmp.eq.s32.totalorder %v1809, 3
        %v1866 = vsel %vm1864, %v1814, 0.0
        %v1867 = vsel %vm1865, %v1815, 0.0
        %1868 = vadd.xlane.f32.xlu0 %v1866
        %v1869 = vpop.xlane.xlu0 %1868
        %1870 = vadd.xlane.f32.xlu0 %v1867
        %v1871 = vpop.xlane.xlu0 %1870
        %vm1872 = vcmp.eq.s32.totalorder %v1812, 3
        %vm1873 = vcmp.eq.s32.totalorder %v1813, 3
        %v1874 = vsel %vm1872, %v339, 0.0
        %v1875 = vsel %vm1873, %v339, 0.0
        %1876 = vadd.xlane.f32.xlu0 %v1874
        %v1877 = vpop.xlane.xlu0 %1876
        %1878 = vadd.xlane.f32.xlu0 %v1875
        %v1879 = vpop.xlane.xlu0 %1878
        %vm1880 = vcmp.eq.s32.totalorder %v1808, 4
        %vm1881 = vcmp.eq.s32.totalorder %v1809, 4
        %v1882 = vsel %vm1880, %v1814, 0.0
        %v1883 = vsel %vm1881, %v1815, 0.0
        %1884 = vadd.xlane.f32.xlu0 %v1882
        %v1885 = vpop.xlane.xlu0 %1884
        %1886 = vadd.xlane.f32.xlu0 %v1883
        %v1887 = vpop.xlane.xlu0 %1886
        %vm1888 = vcmp.eq.s32.totalorder %v1812, 4
        %vm1889 = vcmp.eq.s32.totalorder %v1813, 4
        %v1890 = vsel %vm1888, %v339, 0.0
        %v1891 = vsel %vm1889, %v339, 0.0
        %1892 = vadd.xlane.f32.xlu0 %v1890
        %v1893 = vpop.xlane.xlu0 %1892
        %1894 = vadd.xlane.f32.xlu0 %v1891
        %v1895 = vpop.xlane.xlu0 %1894
        %vm1896 = vcmp.eq.s32.totalorder %v1808, 5
        %vm1897 = vcmp.eq.s32.totalorder %v1809, 5
        %v1898 = vsel %vm1896, %v1814, 0.0
        %v1899 = vsel %vm1897, %v1815, 0.0
        %1900 = vadd.xlane.f32.xlu0 %v1898
        %v1901 = vpop.xlane.xlu0 %1900
        %1902 = vadd.xlane.f32.xlu0 %v1899
        %v1903 = vpop.xlane.xlu0 %1902
        %vm1904 = vcmp.eq.s32.totalorder %v1812, 5
        %vm1905 = vcmp.eq.s32.totalorder %v1813, 5
        %v1906 = vsel %vm1904, %v339, 0.0
        %v1907 = vsel %vm1905, %v339, 0.0
        %1908 = vadd.xlane.f32.xlu0 %v1906
        %v1909 = vpop.xlane.xlu0 %1908
        %1910 = vadd.xlane.f32.xlu0 %v1907
        %v1911 = vpop.xlane.xlu0 %1910
        %vm1912 = vcmp.eq.s32.totalorder %v1808, 6
        %vm1913 = vcmp.eq.s32.totalorder %v1809, 6
        %v1914 = vsel %vm1912, %v1814, 0.0
        %v1915 = vsel %vm1913, %v1815, 0.0
        %1916 = vadd.xlane.f32.xlu0 %v1914
        %v1917 = vpop.xlane.xlu0 %1916
        %1918 = vadd.xlane.f32.xlu0 %v1915
        %v1919 = vpop.xlane.xlu0 %1918
        %vm1920 = vcmp.eq.s32.totalorder %v1812, 6
        %vm1921 = vcmp.eq.s32.totalorder %v1813, 6
        %v1922 = vsel %vm1920, %v339, 0.0
        %v1923 = vsel %vm1921, %v339, 0.0
        %1924 = vadd.xlane.f32.xlu0 %v1922
        %v1925 = vpop.xlane.xlu0 %1924
        %1926 = vadd.xlane.f32.xlu0 %v1923
        %v1927 = vpop.xlane.xlu0 %1926
        %vm1928 = vcmp.eq.s32.totalorder %v1808, 7
        %vm1929 = vcmp.eq.s32.totalorder %v1809, 7
        %v1930 = vsel %vm1928, %v1814, 0.0
        %v1931 = vsel %vm1929, %v1815, 0.0
        %1932 = vadd.xlane.f32.xlu0 %v1930
        %v1933 = vpop.xlane.xlu0 %1932
        %1934 = vadd.xlane.f32.xlu0 %v1931
        %v1935 = vpop.xlane.xlu0 %1934
        %vm1936 = vcmp.eq.s32.totalorder %v1812, 7
        %vm1937 = vcmp.eq.s32.totalorder %v1813, 7
        %v1938 = vsel %vm1936, %v339, 0.0
        %v1939 = vsel %vm1937, %v339, 0.0
        %1940 = vadd.xlane.f32.xlu0 %v1938
        %v1941 = vpop.xlane.xlu0 %1940
        %1942 = vadd.xlane.f32.xlu0 %v1939
        %v1943 = vpop.xlane.xlu0 %1942
        %v1944 = vsel %vm418, %v1821, %v1837
        %v1945 = vsel %vm418, %v1823, %v1839
        %v1946 = vsel %vm398, %v1944, %v1853
        %v1947 = vsel %vm398, %v1945, %v1855
        %v1948 = vsel %vm378, %v1946, %v1869
        %v1949 = vsel %vm378, %v1947, %v1871
        %v1950 = vsel %vm360, %v1948, %v1885
        %v1951 = vsel %vm360, %v1949, %v1887
        %v1952 = vsel %vm1163, %v1950, %v1901
        %v1953 = vsel %vm1163, %v1951, %v1903
        %v1954 = vsel %vm1166, %v1952, %v1917
        %v1955 = vsel %vm1166, %v1953, %v1919
        %v1956 = vsel %vm1169, %v1954, %v1933
        %v1957 = vsel %vm1169, %v1955, %v1935
        %v1958 = vsel %vm418, %v1829, %v1845
        %v1959 = vsel %vm418, %v1831, %v1847
        %v1960 = vsel %vm398, %v1958, %v1861
        %v1961 = vsel %vm398, %v1959, %v1863
        %v1962 = vsel %vm378, %v1960, %v1877
        %v1963 = vsel %vm378, %v1961, %v1879
        %v1964 = vsel %vm360, %v1962, %v1893
        %v1965 = vsel %vm360, %v1963, %v1895
        %v1966 = vsel %vm1163, %v1964, %v1909
        %v1967 = vsel %vm1163, %v1965, %v1911
        %v1968 = vsel %vm1166, %v1966, %v1925
        %v1969 = vsel %vm1166, %v1967, %v1927
        %v1970 = vsel %vm1169, %v1968, %v1941
        %v1971 = vsel %vm1169, %v1969, %v1943
        %v1972 = vadd.f32 %v1956, 0.0
        %v1973 = vadd.f32 %v1957, 0.0
        %1974 = vst.msk [vmem:[%s247 + $0x10] sm:$0xff] %vm1188, %v1972
        %1975 = vst.msk [vmem:[%s247 + $0x18] sm:$0xff] %vm1188, %v1973
        %v1976 = vadd.f32 %v1970, 0.0
        %v1977 = vadd.f32 %v1971, 0.0
        %1980 = vrot.lane.b32.xlu0 %v1976, 8
        %v1981 = vpop.permute.xlu0 %1980
        %1982 = vrot.lane.b32.xlu0 %v1977, 8
        %v1983 = vpop.permute.xlu0 %1982
        %1986 = vst.msk [vmem:[%s247 + $0x10] sm:$0xff] %vm1201, %v1981
        %1987 = vst.msk [vmem:[%s247 + $0x18] sm:$0xff] %vm1201, %v1983
        %s1988 = smul.u32 4, %s20
        %p1989 = scmp.lt.s32.totalorder %s21, 1
        %s1990 = scalar_select %p1989, %s21, 1
        %p1991 = scmp.lt.s32.totalorder %s1988, 7
        %s1992 = scalar_select %p1991, %s1988, 7
        %s1993 = smul.addr %s1990, 8
        %s1994 = sadd.s32 %s1992, %s1993
        %s1995 = smul.addr %s1994, 8
        %s1996 = scalar_lea.vmem %s2, %s1995
        // Predicated region
        $region41: #{_lambda_.2} parent=27 // pred_check
          %p1997 = pneg %p102
        $region42: #{_lambda_.2} parent=27 // pred_check_branch
          %1999 = sbr.rel (%p1997) target = $region44
        $region43: #{_lambda_.2} parent=27 // pred_region
          %s2000 = smul.u32 4, %s20
        $region44: #{_lambda_.2} parent=27 // pred_fallthru
          _
      $region28: #{_lambda_.2} parent=5 // pred_fallthru
        _
      %p2001 = scmp.le.s32.totalorder 2, %s11
      // Predicated region
      $region45: #{_lambda_.2} parent=5 // pred_check
        %p2002 = pneg %p2001
      $region46: #{_lambda_.2} parent=5 // pred_check_branch
        %2004 = sbr.rel (%p2002) target = $region48
      $region47: #{_lambda_.2} parent=5 // pred_region
        %s2005 = ssub.s32 %s11, 2
        // Predicated region
        $region49: #{_lambda_.2} parent=47 // pred_check
          %p2006 = pneg %p108
        $region50: #{_lambda_.2} parent=47 // pred_check_branch
          %2008 = sbr.rel (%p2006) target = $region52
        $region51: #{_lambda_.2} parent=47 // pred_region
          %s2009 = smul.u32 4, %s22
          %p2010 = scmp.lt.s32.totalorder %s23, 1
          %s2011 = scalar_select %p2010, %s23, 1
          %p2012 = scmp.lt.s32.totalorder %s2009, 7
          %s2013 = scalar_select %p2012, %s2009, 7
          %s2014 = smul.addr %s2011, 8
          %s2015 = sadd.s32 %s2013, %s2014
          %s2016 = smul.addr %s2015, 8
          %s2017 = scalar_lea.vmem %s2, %s2016
        $region52: #{_lambda_.2} parent=47 // pred_fallthru
          _
      $region48: #{_lambda_.2} parent=5 // pred_fallthru
        _
    $region6: #{_lambda_.2} parent=1 // loop_footer
      %s15 = sadd.s32 1, %s11
    $region7: #{_lambda_.2} parent=1 // loop_footer_branch
      %10 = sbr.rel target = $region3
    $region8: #{_lambda_.2} parent=1 // loop_exit
      _
    %2018 = vsyncpa [#allocation4], 1
    %s2019 = scalar_lea.sflag [#allocation4], 1
    %2020 = vsyncpa %s2019, 1

// kernel: _lambda_.3
$region0: #{_lambda_.3}
  #allocation0 [shape = 'u32[]', space=smem, size = 0x4, offset = 0x4, fixed_abs, tag = 'smem constant byte address 0x4 - core index']
  #allocation1 [shape = 'u32[144,128]{1,0:T(1,128)}', space=vmem, size = 0x12000, scoped, tag = 'internal scratch']
  #allocation2 [shape = 'f32[32,384]{1,0:T(8,128)}', space=vmem, size = 0xc000, scoped, tag = 'scratch operand']
  %s0 = inlined_call_operand.vmem [shape: f32[2,64,32], index: 0, kind: input, shape index: {}]
  %s1 = inlined_call_operand.vmem [shape: f32[9,8,64,128], index: 1, kind: input, shape index: {}]
  %s2 = inlined_call_operand.vmem [shape: f32[2,64,16], index: 2, kind: output, shape index: {}]
  %s3 = sld [smem:[#allocation0]]
  $region87: #{_lambda_.3} parent=0
    _
  %s5 = ssub.s32 1, %s3
  %s6 = scalar_select 0, %s5, %s3
  $region1: #{_lambda_.3} parent=0
    #allocation3 [shape = 'u8[2359296]{0}', space=vmem, size = 0x240000, scoped, tag = 'input window, operand 1']
    loop: start=0, step=1, limit=6
    $region2: #{_lambda_.3} parent=1 // loop_pre_header
      _
    $region3: #{_lambda_.3} parent=1 // loop_header
      %s8 = sphi 0, %s12
      %p9 = scmp.ge.s32.totalorder %s8, 6
      %s15 = sphi 0, %s27
      %s16 = sphi 0, %s23
      %s17 = sphi 0, %s15
      %s18 = sphi 0, %s16
      %s19 = sphi 0, %s17
      %s20 = sphi 0, %s18
      %s32 = sphi 0, %s34
      %s35 = sphi 0, %s32
      %s36 = sphi 0, %s35
      %s52 = sphi 0, %s36
      %s58 = sphi 0, %s60
      %s61 = sphi 0, %s58
      %s62 = sphi 0, %s61
      %s78 = sphi 0, %s62
      %s86 = sphi 0, %s88
      %s89 = sphi 0, %s86
      %s90 = sphi 0, %s89
      %s106 = sphi 0, %s90
    $region4: #{_lambda_.3} parent=1 // loop_header_branch
      %11 = sbr.rel (%p9) target = $region8
    $region5: #{_lambda_.3} parent=1 // loop_body
      %s13 = ssub.s32 %s8, 1
      %s14 = ssub.s32 %s8, 2
      %s21 = sadd.s32 1, %s16
      %p22 = scmp.ge.s32.totalorder %s21, 2
      %s23 = scalar_select %p22, 0, %s21
      %s24 = sadd.s32 1, %s15
      %s25 = scalar_select %p22, %s24, %s15
      %p26 = scmp.ge.s32.totalorder %s25, 2
      %s27 = scalar_select %p26, 0, %s25
      %s28 = ssub.s32 %s16, %s23
      %s29 = ssub.s32 %s15, %s27
      %s30 = sor.u32 %s28, %s29
      %p31 = scmp.eq.s32.totalorder %s30, 0
      %s33 = sadd.s32 %s32, 1
      %s34 = scalar_select %p31, %s32, %s33
      %p37 = pneg %p31
      %p38 = scmp.eq.s32.totalorder %s8, 3
      %p39 = por %p37, %p38
      %p40 = scmp.ne.s32.totalorder %s32, %s35
      %p41 = scmp.eq.s32.totalorder %s8, 0
      %p42 = por %p40, %p41
      %p43 = scmp.ne.s32.totalorder %s32, %s35
      %p44 = scmp.eq.s32.totalorder %s13, 3
      %p45 = por %p43, %p44
      %p46 = scmp.ne.s32.totalorder %s35, %s36
      %p47 = scmp.eq.s32.totalorder %s13, 0
      %p48 = por %p46, %p47
      %p49 = scmp.ne.s32.totalorder %s35, %s36
      %p50 = scmp.eq.s32.totalorder %s14, 3
      %p51 = por %p49, %p50
      %p53 = scmp.ne.s32.totalorder %s36, %s52
      %p54 = scmp.eq.s32.totalorder %s14, 0
      %p55 = por %p53, %p54
      %s56 = ssub.s32 %s15, %s27
      %p57 = scmp.eq.s32.totalorder %s56, 0
      %s59 = sadd.s32 %s58, 1
      %s60 = scalar_select %p57, %s58, %s59
      %p63 = pneg %p57
      %p64 = scmp.eq.s32.totalorder %s8, 3
      %p65 = por %p63, %p64
      %p66 = scmp.ne.s32.totalorder %s58, %s61
      %p67 = scmp.eq.s32.totalorder %s8, 0
      %p68 = por %p66, %p67
      %p69 = scmp.ne.s32.totalorder %s58, %s61
      %p70 = scmp.eq.s32.totalorder %s13, 3
      %p71 = por %p69, %p70
      %p72 = scmp.ne.s32.totalorder %s61, %s62
      %p73 = scmp.eq.s32.totalorder %s13, 0
      %p74 = por %p72, %p73
      %p75 = scmp.ne.s32.totalorder %s61, %s62
      %p76 = scmp.eq.s32.totalorder %s14, 3
      %p77 = por %p75, %p76
      %p79 = scmp.ne.s32.totalorder %s62, %s78
      %p80 = scmp.eq.s32.totalorder %s14, 0
      %p81 = por %p79, %p80
      %s82 = ssub.s32 %s16, %s23
      %s83 = ssub.s32 %s15, %s27
      %s84 = sor.u32 %s82, %s83
      %p85 = scmp.eq.s32.totalorder %s84, 0
      %s87 = sadd.s32 %s86, 1
      %s88 = scalar_select %p85, %s86, %s87
      %p91 = pneg %p85
      %p92 = scmp.eq.s32.totalorder %s8, 3
      %p93 = por %p91, %p92
      %p94 = scmp.ne.s32.totalorder %s86, %s89
      %p95 = scmp.eq.s32.totalorder %s8, 0
      %p96 = por %p94, %p95
      %p97 = scmp.ne.s32.totalorder %s86, %s89
      %p98 = scmp.eq.s32.totalorder %s13, 3
      %p99 = por %p97, %p98
      %p100 = scmp.ne.s32.totalorder %s89, %s90
      %p101 = scmp.eq.s32.totalorder %s13, 0
      %p102 = por %p100, %p101
      %p103 = scmp.ne.s32.totalorder %s89, %s90
      %p104 = scmp.eq.s32.totalorder %s14, 3
      %p105 = por %p103, %p104
      %p107 = scmp.ne.s32.totalorder %s90, %s106
      %p108 = scmp.eq.s32.totalorder %s14, 0
      %p109 = por %p107, %p108
      %p110 = scmp.le.s32.totalorder 1, %s8
      %p111 = scmp.lt.s32.totalorder %s8, 5
      %p112 = pnand %p110, %p111
      %p113 = pneg %p112
      // Predicated region
      $region9: #{_lambda_.3} parent=5 // pred_check
        _
      $region10: #{_lambda_.3} parent=5 // pred_check_branch
        %115 = sbr.rel (%p112) target = $region12
      $region11: #{_lambda_.3} parent=5 // pred_region
        %s116 = ssub.s32 %s8, 1
      $region12: #{_lambda_.3} parent=5 // pred_fallthru
        _
      %p117 = scmp.lt.s32.totalorder %s8, 4
      // Predicated region
      $region13: #{_lambda_.3} parent=5 // pred_check
        %p118 = pneg %p117
      $region14: #{_lambda_.3} parent=5 // pred_check_branch
        %120 = sbr.rel (%p118) target = $region16
      $region15: #{_lambda_.3} parent=5 // pred_region
        // Predicated region
        $region17: #{_lambda_.3} parent=15 // pred_check
          %p121 = pneg %p42
        $region18: #{_lambda_.3} parent=15 // pred_check_branch
          %123 = sbr.rel (%p121) target = $region20
        $region19: #{_lambda_.3} parent=15 // pred_region
          %s124 = smul.u32 4, %s15
          %p125 = scmp.lt.s32.totalorder %s16, 1
          %s126 = scalar_select %p125, %s16, 1
          %p127 = scmp.lt.s32.totalorder %s124, 7
          %s128 = scalar_select %p127, %s124, 7
          %s129 = smul.addr %s126, 8
          %s130 = sadd.s32 %s128, %s129
          %s131 = smul.addr %s130, 8
          %s132 = scalar_lea.vmem %s0, %s131
          %s133 = smul.u32 4, %s15
        $region20: #{_lambda_.3} parent=15 // pred_fallthru
          _
        // Predicated region
        $region21: #{_lambda_.3} parent=15 // pred_check
          %p134 = pneg %p68
        $region22: #{_lambda_.3} parent=15 // pred_check_branch
          %136 = sbr.rel (%p134) target = $region24
        $region23: #{_lambda_.3} parent=15 // pred_region
          %s137 = sand.u32 %s58, 1
          %s138 = sand.u32 %s58, 1
          %s139 = smul.addr %s138, 2304
          %s140 = scalar_lea.vmem [#allocation3], %s139
          %s141 = smul.u32 4, %s15
          %s142 = smul.addr %s141, 8
          %s143 = scalar_lea.vmem %s1, %s142
          // Predicated region
          $region25: #{_lambda_.3} parent=23 // pred_check
            _
          $region26: #{_lambda_.3} parent=23 // pred_check_branch
            %145 = sbr.rel (0) target = $region28
          $region27: #{_lambda_.3} parent=23 // pred_region
            // Predicated region
            $region29: #{_lambda_.3} parent=27 // pred_check
              _
            $region30: #{_lambda_.3} parent=27 // pred_check_branch
              %147 = sbr.rel (0) target = $region32
            $region31: #{_lambda_.3} parent=27 // pred_region
              // Predicated region
              $region44: #{_lambda_.3} parent=31 // pred_check
                _
              $region45: #{_lambda_.3} parent=31 // pred_check_branch
                %737 = sbr.rel (0) target = $region47
              $region46: #{_lambda_.3} parent=31 // pred_region
                loop: start=0, step=1, limit=1
                $region48: #{_lambda_.3} parent=46 // loop_pre_header
                  _
                $region49: #{_lambda_.3} parent=46 // loop_header
                  %s739 = sphi 0, %s743
                  %p740 = scmp.ge.s32.totalorder %s739, 1
                  %s744 = sphi %s143, %s143
                  %s745 = sphi %s140, %s140
                $region50: #{_lambda_.3} parent=46 // loop_header_branch
                  %742 = sbr.rel (%p740) target = $region54
                $region51: #{_lambda_.3} parent=46 // loop_body
                  %v746 = vld [vmem:[%s744] sm:$0xff]
                  %747 = vst [vmem:[%s745] sm:$0xff] %v746
                  %v748 = vld [vmem:[%s744 + $0x8] sm:$0xff]
                  %749 = vst [vmem:[%s745 + $0x8] sm:$0xff] %v748
                  %v750 = vld [vmem:[%s744 + $0x10] sm:$0xff]
                  %751 = vst [vmem:[%s745 + $0x10] sm:$0xff] %v750
                  %v752 = vld [vmem:[%s744 + $0x18] sm:$0xff]
                  %753 = vst [vmem:[%s745 + $0x18] sm:$0xff] %v752
                  %v754 = vld [vmem:[%s744 + $0x40] sm:$0xff]
                  %755 = vst [vmem:[%s745 + $0x20] sm:$0xff] %v754
                  %v756 = vld [vmem:[%s744 + $0x48] sm:$0xff]
                  %757 = vst [vmem:[%s745 + $0x28] sm:$0xff] %v756
                  %v758 = vld [vmem:[%s744 + $0x50] sm:$0xff]
                  %759 = vst [vmem:[%s745 + $0x30] sm:$0xff] %v758
                  %v760 = vld [vmem:[%s744 + $0x58] sm:$0xff]
                  %761 = vst [vmem:[%s745 + $0x38] sm:$0xff] %v760
                  %v762 = vld [vmem:[%s744 + $0x80] sm:$0xff]
                  %763 = vst [vmem:[%s745 + $0x40] sm:$0xff] %v762
                  %v764 = vld [vmem:[%s744 + $0x88] sm:$0xff]
                  %765 = vst [vmem:[%s745 + $0x48] sm:$0xff] %v764
                  %v766 = vld [vmem:[%s744 + $0x90] sm:$0xff]
                  %767 = vst [vmem:[%s745 + $0x50] sm:$0xff] %v766
                  %v768 = vld [vmem:[%s744 + $0x98] sm:$0xff]
                  %769 = vst [vmem:[%s745 + $0x58] sm:$0xff] %v768
                  %v770 = vld [vmem:[%s744 + $0xc0] sm:$0xff]
                  %771 = vst [vmem:[%s745 + $0x60] sm:$0xff] %v770
                  %v772 = vld [vmem:[%s744 + $0xc8] sm:$0xff]
                  %773 = vst [vmem:[%s745 + $0x68] sm:$0xff] %v772
                  %v774 = vld [vmem:[%s744 + $0xd0] sm:$0xff]
                  %775 = vst [vmem:[%s745 + $0x70] sm:$0xff] %v774
                  %v776 = vld [vmem:[%s744 + $0xd8] sm:$0xff]
                  %777 = vst [vmem:[%s745 + $0x78] sm:$0xff] %v776
                  %v778 = vld [vmem:[%s744 + $0x100] sm:$0xff]
                  %779 = vst [vmem:[%s745 + $0x80] sm:$0xff] %v778
                  %v780 = vld [vmem:[%s744 + $0x108] sm:$0xff]
                  %781 = vst [vmem:[%s745 + $0x88] sm:$0xff] %v780
                  %v782 = vld [vmem:[%s744 + $0x110] sm:$0xff]
                  %783 = vst [vmem:[%s745 + $0x90] sm:$0xff] %v782
                  %v784 = vld [vmem:[%s744 + $0x118] sm:$0xff]
                  %785 = vst [vmem:[%s745 + $0x98] sm:$0xff] %v784
                  %v786 = vld [vmem:[%s744 + $0x140] sm:$0xff]
                  %787 = vst [vmem:[%s745 + $0xa0] sm:$0xff] %v786
                  %v788 = vld [vmem:[%s744 + $0x148] sm:$0xff]
                  %789 = vst [vmem:[%s745 + $0xa8] sm:$0xff] %v788
                  %v790 = vld [vmem:[%s744 + $0x150] sm:$0xff]
                  %791 = vst [vmem:[%s745 + $0xb0] sm:$0xff] %v790
                  %v792 = vld [vmem:[%s744 + $0x158] sm:$0xff]
                  %793 = vst [vmem:[%s745 + $0xb8] sm:$0xff] %v792
                  %v794 = vld [vmem:[%s744 + $0x180] sm:$0xff]
                  %795 = vst [vmem:[%s745 + $0xc0] sm:$0xff] %v794
                  %v796 = vld [vmem:[%s744 + $0x188] sm:$0xff]
                  %797 = vst [vmem:[%s745 + $0xc8] sm:$0xff] %v796
                  %v798 = vld [vmem:[%s744 + $0x190] sm:$0xff]
                  %799 = vst [vmem:[%s745 + $0xd0] sm:$0xff] %v798
                  %v800 = vld [vmem:[%s744 + $0x198] sm:$0xff]
                  %801 = vst [vmem:[%s745 + $0xd8] sm:$0xff] %v800
                  %v802 = vld [vmem:[%s744 + $0x1c0] sm:$0xff]
                  %803 = vst [vmem:[%s745 + $0xe0] sm:$0xff] %v802
                  %v804 = vld [vmem:[%s744 + $0x1c8] sm:$0xff]
                  %805 = vst [vmem:[%s745 + $0xe8] sm:$0xff] %v804
                  %v806 = vld [vmem:[%s744 + $0x1d0] sm:$0xff]
                  %807 = vst [vmem:[%s745 + $0xf0] sm:$0xff] %v806
                  %v808 = vld [vmem:[%s744 + $0x1d8] sm:$0xff]
                  %809 = vst [vmem:[%s745 + $0xf8] sm:$0xff] %v808
                  %v810 = vld [vmem:[%s744 + $0x200] sm:$0xff]
                  %811 = vst [vmem:[%s745 + $0x100] sm:$0xff] %v810
                  %v812 = vld [vmem:[%s744 + $0x208] sm:$0xff]
                  %813 = vst [vmem:[%s745 + $0x108] sm:$0xff] %v812
                  %v814 = vld [vmem:[%s744 + $0x210] sm:$0xff]
                  %815 = vst [vmem:[%s745 + $0x110] sm:$0xff] %v814
                  %v816 = vld [vmem:[%s744 + $0x218] sm:$0xff]
                  %817 = vst [vmem:[%s745 + $0x118] sm:$0xff] %v816
                  %v818 = vld [vmem:[%s744 + $0x240] sm:$0xff]
                  %819 = vst [vmem:[%s745 + $0x120] sm:$0xff] %v818
                  %v820 = vld [vmem:[%s744 + $0x248] sm:$0xff]
                  %821 = vst [vmem:[%s745 + $0x128] sm:$0xff] %v820
                  %v822 = vld [vmem:[%s744 + $0x250] sm:$0xff]
                  %823 = vst [vmem:[%s745 + $0x130] sm:$0xff] %v822
                  %v824 = vld [vmem:[%s744 + $0x258] sm:$0xff]
                  %825 = vst [vmem:[%s745 + $0x138] sm:$0xff] %v824
                  %v826 = vld [vmem:[%s744 + $0x280] sm:$0xff]
                  %827 = vst [vmem:[%s745 + $0x140] sm:$0xff] %v826
                  %v828 = vld [vmem:[%s744 + $0x288] sm:$0xff]
                  %829 = vst [vmem:[%s745 + $0x148] sm:$0xff] %v828
                  %v830 = vld [vmem:[%s744 + $0x290] sm:$0xff]
                  %831 = vst [vmem:[%s745 + $0x150] sm:$0xff] %v830
                  %v832 = vld [vmem:[%s744 + $0x298] sm:$0xff]
                  %833 = vst [vmem:[%s745 + $0x158] sm:$0xff] %v832
                  %v834 = vld [vmem:[%s744 + $0x2c0] sm:$0xff]
                  %835 = vst [vmem:[%s745 + $0x160] sm:$0xff] %v834
                  %v836 = vld [vmem:[%s744 + $0x2c8] sm:$0xff]
                  %837 = vst [vmem:[%s745 + $0x168] sm:$0xff] %v836
                  %v838 = vld [vmem:[%s744 + $0x2d0] sm:$0xff]
                  %839 = vst [vmem:[%s745 + $0x170] sm:$0xff] %v838
                  %v840 = vld [vmem:[%s744 + $0x2d8] sm:$0xff]
                  %841 = vst [vmem:[%s745 + $0x178] sm:$0xff] %v840
                  %v842 = vld [vmem:[%s744 + $0x300] sm:$0xff]
                  %843 = vst [vmem:[%s745 + $0x180] sm:$0xff] %v842
                  %v844 = vld [vmem:[%s744 + $0x308] sm:$0xff]
                  %845 = vst [vmem:[%s745 + $0x188] sm:$0xff] %v844
                  %v846 = vld [vmem:[%s744 + $0x310] sm:$0xff]
                  %847 = vst [vmem:[%s745 + $0x190] sm:$0xff] %v846
                  %v848 = vld [vmem:[%s744 + $0x318] sm:$0xff]
                  %849 = vst [vmem:[%s745 + $0x198] sm:$0xff] %v848
                  %v850 = vld [vmem:[%s744 + $0x340] sm:$0xff]
                  %851 = vst [vmem:[%s745 + $0x1a0] sm:$0xff] %v850
                  %v852 = vld [vmem:[%s744 + $0x348] sm:$0xff]
                  %853 = vst [vmem:[%s745 + $0x1a8] sm:$0xff] %v852
                  %v854 = vld [vmem:[%s744 + $0x350] sm:$0xff]
                  %855 = vst [vmem:[%s745 + $0x1b0] sm:$0xff] %v854
                  %v856 = vld [vmem:[%s744 + $0x358] sm:$0xff]
                  %857 = vst [vmem:[%s745 + $0x1b8] sm:$0xff] %v856
                  %v858 = vld [vmem:[%s744 + $0x380] sm:$0xff]
                  %859 = vst [vmem:[%s745 + $0x1c0] sm:$0xff] %v858
                  %v860 = vld [vmem:[%s744 + $0x388] sm:$0xff]
                  %861 = vst [vmem:[%s745 + $0x1c8] sm:$0xff] %v860
                  %v862 = vld [vmem:[%s744 + $0x390] sm:$0xff]
                  %863 = vst [vmem:[%s745 + $0x1d0] sm:$0xff] %v862
                  %v864 = vld [vmem:[%s744 + $0x398] sm:$0xff]
                  %865 = vst [vmem:[%s745 + $0x1d8] sm:$0xff] %v864
                  %v866 = vld [vmem:[%s744 + $0x3c0] sm:$0xff]
                  %867 = vst [vmem:[%s745 + $0x1e0] sm:$0xff] %v866
                  %v868 = vld [vmem:[%s744 + $0x3c8] sm:$0xff]
                  %869 = vst [vmem:[%s745 + $0x1e8] sm:$0xff] %v868
                  %v870 = vld [vmem:[%s744 + $0x3d0] sm:$0xff]
                  %871 = vst [vmem:[%s745 + $0x1f0] sm:$0xff] %v870
                  %v872 = vld [vmem:[%s744 + $0x3d8] sm:$0xff]
                  %873 = vst [vmem:[%s745 + $0x1f8] sm:$0xff] %v872
                  %v874 = vld [vmem:[%s744 + $0x400] sm:$0xff]
                  %875 = vst [vmem:[%s745 + $0x200] sm:$0xff] %v874
                  %v876 = vld [vmem:[%s744 + $0x408] sm:$0xff]
                  %877 = vst [vmem:[%s745 + $0x208] sm:$0xff] %v876
                  %v878 = vld [vmem:[%s744 + $0x410] sm:$0xff]
                  %879 = vst [vmem:[%s745 + $0x210] sm:$0xff] %v878
                  %v880 = vld [vmem:[%s744 + $0x418] sm:$0xff]
                  %881 = vst [vmem:[%s745 + $0x218] sm:$0xff] %v880
                  %v882 = vld [vmem:[%s744 + $0x440] sm:$0xff]
                  %883 = vst [vmem:[%s745 + $0x220] sm:$0xff] %v882
                  %v884 = vld [vmem:[%s744 + $0x448] sm:$0xff]
                  %885 = vst [vmem:[%s745 + $0x228] sm:$0xff] %v884
                  %v886 = vld [vmem:[%s744 + $0x450] sm:$0xff]
                  %887 = vst [vmem:[%s745 + $0x230] sm:$0xff] %v886
                  %v888 = vld [vmem:[%s744 + $0x458] sm:$0xff]
                  %889 = vst [vmem:[%s745 + $0x238] sm:$0xff] %v888
                  %v890 = vld [vmem:[%s744 + $0x480] sm:$0xff]
                  %891 = vst [vmem:[%s745 + $0x240] sm:$0xff] %v890
                  %v892 = vld [vmem:[%s744 + $0x488] sm:$0xff]
                  %893 = vst [vmem:[%s745 + $0x248] sm:$0xff] %v892
                  %v894 = vld [vmem:[%s744 + $0x490] sm:$0xff]
                  %895 = vst [vmem:[%s745 + $0x250] sm:$0xff] %v894
                  %v896 = vld [vmem:[%s744 + $0x498] sm:$0xff]
                  %897 = vst [vmem:[%s745 + $0x258] sm:$0xff] %v896
                  %v898 = vld [vmem:[%s744 + $0x4c0] sm:$0xff]
                  %899 = vst [vmem:[%s745 + $0x260] sm:$0xff] %v898
                  %v900 = vld [vmem:[%s744 + $0x4c8] sm:$0xff]
                  %901 = vst [vmem:[%s745 + $0x268] sm:$0xff] %v900
                  %v902 = vld [vmem:[%s744 + $0x4d0] sm:$0xff]
                  %903 = vst [vmem:[%s745 + $0x270] sm:$0xff] %v902
                  %v904 = vld [vmem:[%s744 + $0x4d8] sm:$0xff]
                  %905 = vst [vmem:[%s745 + $0x278] sm:$0xff] %v904
                  %v906 = vld [vmem:[%s744 + $0x500] sm:$0xff]
                  %907 = vst [vmem:[%s745 + $0x280] sm:$0xff] %v906
                  %v908 = vld [vmem:[%s744 + $0x508] sm:$0xff]
                  %909 = vst [vmem:[%s745 + $0x288] sm:$0xff] %v908
                  %v910 = vld [vmem:[%s744 + $0x510] sm:$0xff]
                  %911 = vst [vmem:[%s745 + $0x290] sm:$0xff] %v910
                  %v912 = vld [vmem:[%s744 + $0x518] sm:$0xff]
                  %913 = vst [vmem:[%s745 + $0x298] sm:$0xff] %v912
                  %v914 = vld [vmem:[%s744 + $0x540] sm:$0xff]
                  %915 = vst [vmem:[%s745 + $0x2a0] sm:$0xff] %v914
                  %v916 = vld [vmem:[%s744 + $0x548] sm:$0xff]
                  %917 = vst [vmem:[%s745 + $0x2a8] sm:$0xff] %v916
                  %v918 = vld [vmem:[%s744 + $0x550] sm:$0xff]
                  %919 = vst [vmem:[%s745 + $0x2b0] sm:$0xff] %v918
                  %v920 = vld [vmem:[%s744 + $0x558] sm:$0xff]
                  %921 = vst [vmem:[%s745 + $0x2b8] sm:$0xff] %v920
                  %v922 = vld [vmem:[%s744 + $0x580] sm:$0xff]
                  %923 = vst [vmem:[%s745 + $0x2c0] sm:$0xff] %v922
                  %v924 = vld [vmem:[%s744 + $0x588] sm:$0xff]
                  %925 = vst [vmem:[%s745 + $0x2c8] sm:$0xff] %v924
                  %v926 = vld [vmem:[%s744 + $0x590] sm:$0xff]
                  %927 = vst [vmem:[%s745 + $0x2d0] sm:$0xff] %v926
                  %v928 = vld [vmem:[%s744 + $0x598] sm:$0xff]
                  %929 = vst [vmem:[%s745 + $0x2d8] sm:$0xff] %v928
                  %v930 = vld [vmem:[%s744 + $0x5c0] sm:$0xff]
                  %931 = vst [vmem:[%s745 + $0x2e0] sm:$0xff] %v930
                  %v932 = vld [vmem:[%s744 + $0x5c8] sm:$0xff]
                  %933 = vst [vmem:[%s745 + $0x2e8] sm:$0xff] %v932
                  %v934 = vld [vmem:[%s744 + $0x5d0] sm:$0xff]
                  %935 = vst [vmem:[%s745 + $0x2f0] sm:$0xff] %v934
                  %v936 = vld [vmem:[%s744 + $0x5d8] sm:$0xff]
                  %937 = vst [vmem:[%s745 + $0x2f8] sm:$0xff] %v936
                  %v938 = vld [vmem:[%s744 + $0x600] sm:$0xff]
                  %939 = vst [vmem:[%s745 + $0x300] sm:$0xff] %v938
                  %v940 = vld [vmem:[%s744 + $0x608] sm:$0xff]
                  %941 = vst [vmem:[%s745 + $0x308] sm:$0xff] %v940
                  %v942 = vld [vmem:[%s744 + $0x610] sm:$0xff]
                  %943 = vst [vmem:[%s745 + $0x310] sm:$0xff] %v942
                  %v944 = vld [vmem:[%s744 + $0x618] sm:$0xff]
                  %945 = vst [vmem:[%s745 + $0x318] sm:$0xff] %v944
                  %v946 = vld [vmem:[%s744 + $0x640] sm:$0xff]
                  %947 = vst [vmem:[%s745 + $0x320] sm:$0xff] %v946
                  %v948 = vld [vmem:[%s744 + $0x648] sm:$0xff]
                  %949 = vst [vmem:[%s745 + $0x328] sm:$0xff] %v948
                  %v950 = vld [vmem:[%s744 + $0x650] sm:$0xff]
                  %951 = vst [vmem:[%s745 + $0x330] sm:$0xff] %v950
                  %v952 = vld [vmem:[%s744 + $0x658] sm:$0xff]
                  %953 = vst [vmem:[%s745 + $0x338] sm:$0xff] %v952
                  %v954 = vld [vmem:[%s744 + $0x680] sm:$0xff]
                  %955 = vst [vmem:[%s745 + $0x340] sm:$0xff] %v954
                  %v956 = vld [vmem:[%s744 + $0x688] sm:$0xff]
                  %957 = vst [vmem:[%s745 + $0x348] sm:$0xff] %v956
                  %v958 = vld [vmem:[%s744 + $0x690] sm:$0xff]
                  %959 = vst [vmem:[%s745 + $0x350] sm:$0xff] %v958
                  %v960 = vld [vmem:[%s744 + $0x698] sm:$0xff]
                  %961 = vst [vmem:[%s745 + $0x358] sm:$0xff] %v960
                  %v962 = vld [vmem:[%s744 + $0x6c0] sm:$0xff]
                  %963 = vst [vmem:[%s745 + $0x360] sm:$0xff] %v962
                  %v964 = vld [vmem:[%s744 + $0x6c8] sm:$0xff]
                  %965 = vst [vmem:[%s745 + $0x368] sm:$0xff] %v964
                  %v966 = vld [vmem:[%s744 + $0x6d0] sm:$0xff]
                  %967 = vst [vmem:[%s745 + $0x370] sm:$0xff] %v966
                  %v968 = vld [vmem:[%s744 + $0x6d8] sm:$0xff]
                  %969 = vst [vmem:[%s745 + $0x378] sm:$0xff] %v968
                  %v970 = vld [vmem:[%s744 + $0x700] sm:$0xff]
                  %971 = vst [vmem:[%s745 + $0x380] sm:$0xff] %v970
                  %v972 = vld [vmem:[%s744 + $0x708] sm:$0xff]
                  %973 = vst [vmem:[%s745 + $0x388] sm:$0xff] %v972
                  %v974 = vld [vmem:[%s744 + $0x710] sm:$0xff]
                  %975 = vst [vmem:[%s745 + $0x390] sm:$0xff] %v974
                  %v976 = vld [vmem:[%s744 + $0x718] sm:$0xff]
                  %977 = vst [vmem:[%s745 + $0x398] sm:$0xff] %v976
                  %v978 = vld [vmem:[%s744 + $0x740] sm:$0xff]
                  %979 = vst [vmem:[%s745 + $0x3a0] sm:$0xff] %v978
                  %v980 = vld [vmem:[%s744 + $0x748] sm:$0xff]
                  %981 = vst [vmem:[%s745 + $0x3a8] sm:$0xff] %v980
                  %v982 = vld [vmem:[%s744 + $0x750] sm:$0xff]
                  %983 = vst [vmem:[%s745 + $0x3b0] sm:$0xff] %v982
                  %v984 = vld [vmem:[%s744 + $0x758] sm:$0xff]
                  %985 = vst [vmem:[%s745 + $0x3b8] sm:$0xff] %v984
                  %v986 = vld [vmem:[%s744 + $0x780] sm:$0xff]
                  %987 = vst [vmem:[%s745 + $0x3c0] sm:$0xff] %v986
                  %v988 = vld [vmem:[%s744 + $0x788] sm:$0xff]
                  %989 = vst [vmem:[%s745 + $0x3c8] sm:$0xff] %v988
                  %v990 = vld [vmem:[%s744 + $0x790] sm:$0xff]
                  %991 = vst [vmem:[%s745 + $0x3d0] sm:$0xff] %v990
                  %v992 = vld [vmem:[%s744 + $0x798] sm:$0xff]
                  %993 = vst [vmem:[%s745 + $0x3d8] sm:$0xff] %v992
                  %v994 = vld [vmem:[%s744 + $0x7c0] sm:$0xff]
                  %995 = vst [vmem:[%s745 + $0x3e0] sm:$0xff] %v994
                  %v996 = vld [vmem:[%s744 + $0x7c8] sm:$0xff]
                  %997 = vst [vmem:[%s745 + $0x3e8] sm:$0xff] %v996
                  %v998 = vld [vmem:[%s744 + $0x7d0] sm:$0xff]
                  %999 = vst [vmem:[%s745 + $0x3f0] sm:$0xff] %v998
                  %v1000 = vld [vmem:[%s744 + $0x7d8] sm:$0xff]
                  %1001 = vst [vmem:[%s745 + $0x3f8] sm:$0xff] %v1000
                  %v1002 = vld [vmem:[%s744 + $0x800] sm:$0xff]
                  %1003 = vst [vmem:[%s745 + $0x400] sm:$0xff] %v1002
                  %v1004 = vld [vmem:[%s744 + $0x808] sm:$0xff]
                  %1005 = vst [vmem:[%s745 + $0x408] sm:$0xff] %v1004
                  %v1006 = vld [vmem:[%s744 + $0x810] sm:$0xff]
                  %1007 = vst [vmem:[%s745 + $0x410] sm:$0xff] %v1006
                  %v1008 = vld [vmem:[%s744 + $0x818] sm:$0xff]
                  %1009 = vst [vmem:[%s745 + $0x418] sm:$0xff] %v1008
                  %v1010 = vld [vmem:[%s744 + $0x840] sm:$0xff]
                  %1011 = vst [vmem:[%s745 + $0x420] sm:$0xff] %v1010
                  %v1012 = vld [vmem:[%s744 + $0x848] sm:$0xff]
                  %1013 = vst [vmem:[%s745 + $0x428] sm:$0xff] %v1012
                  %v1014 = vld [vmem:[%s744 + $0x850] sm:$0xff]
                  %1015 = vst [vmem:[%s745 + $0x430] sm:$0xff] %v1014
                  %v1016 = vld [vmem:[%s744 + $0x858] sm:$0xff]
                  %1017 = vst [vmem:[%s745 + $0x438] sm:$0xff] %v1016
                  %v1018 = vld [vmem:[%s744 + $0x880] sm:$0xff]
                  %1019 = vst [vmem:[%s745 + $0x440] sm:$0xff] %v1018
                  %v1020 = vld [vmem:[%s744 + $0x888] sm:$0xff]
                  %1021 = vst [vmem:[%s745 + $0x448] sm:$0xff] %v1020
                  %v1022 = vld [vmem:[%s744 + $0x890] sm:$0xff]
                  %1023 = vst [vmem:[%s745 + $0x450] sm:$0xff] %v1022
                  %v1024 = vld [vmem:[%s744 + $0x898] sm:$0xff]
                  %1025 = vst [vmem:[%s745 + $0x458] sm:$0xff] %v1024
                  %v1026 = vld [vmem:[%s744 + $0x8c0] sm:$0xff]
                  %1027 = vst [vmem:[%s745 + $0x460] sm:$0xff] %v1026
                  %v1028 = vld [vmem:[%s744 + $0x8c8] sm:$0xff]
                  %1029 = vst [vmem:[%s745 + $0x468] sm:$0xff] %v1028
                  %v1030 = vld [vmem:[%s744 + $0x8d0] sm:$0xff]
                  %1031 = vst [vmem:[%s745 + $0x470] sm:$0xff] %v1030
                  %v1032 = vld [vmem:[%s744 + $0x8d8] sm:$0xff]
                  %1033 = vst [vmem:[%s745 + $0x478] sm:$0xff] %v1032
                  %v1034 = vld [vmem:[%s744 + $0x900] sm:$0xff]
                  %1035 = vst [vmem:[%s745 + $0x480] sm:$0xff] %v1034
                  %v1036 = vld [vmem:[%s744 + $0x908] sm:$0xff]
                  %1037 = vst [vmem:[%s745 + $0x488] sm:$0xff] %v1036
                  %v1038 = vld [vmem:[%s744 + $0x910] sm:$0xff]
                  %1039 = vst [vmem:[%s745 + $0x490] sm:$0xff] %v1038
                  %v1040 = vld [vmem:[%s744 + $0x918] sm:$0xff]
                  %1041 = vst [vmem:[%s745 + $0x498] sm:$0xff] %v1040
                  %v1042 = vld [vmem:[%s744 + $0x940] sm:$0xff]
                  %1043 = vst [vmem:[%s745 + $0x4a0] sm:$0xff] %v1042
                  %v1044 = vld [vmem:[%s744 + $0x948] sm:$0xff]
                  %1045 = vst [vmem:[%s745 + $0x4a8] sm:$0xff] %v1044
                  %v1046 = vld [vmem:[%s744 + $0x950] sm:$0xff]
                  %1047 = vst [vmem:[%s745 + $0x4b0] sm:$0xff] %v1046
                  %v1048 = vld [vmem:[%s744 + $0x958] sm:$0xff]
                  %1049 = vst [vmem:[%s745 + $0x4b8] sm:$0xff] %v1048
                  %v1050 = vld [vmem:[%s744 + $0x980] sm:$0xff]
                  %1051 = vst [vmem:[%s745 + $0x4c0] sm:$0xff] %v1050
                  %v1052 = vld [vmem:[%s744 + $0x988] sm:$0xff]
                  %1053 = vst [vmem:[%s745 + $0x4c8] sm:$0xff] %v1052
                  %v1054 = vld [vmem:[%s744 + $0x990] sm:$0xff]
                  %1055 = vst [vmem:[%s745 + $0x4d0] sm:$0xff] %v1054
                  %v1056 = vld [vmem:[%s744 + $0x998] sm:$0xff]
                  %1057 = vst [vmem:[%s745 + $0x4d8] sm:$0xff] %v1056
                  %v1058 = vld [vmem:[%s744 + $0x9c0] sm:$0xff]
                  %1059 = vst [vmem:[%s745 + $0x4e0] sm:$0xff] %v1058
                  %v1060 = vld [vmem:[%s744 + $0x9c8] sm:$0xff]
                  %1061 = vst [vmem:[%s745 + $0x4e8] sm:$0xff] %v1060
                  %v1062 = vld [vmem:[%s744 + $0x9d0] sm:$0xff]
                  %1063 = vst [vmem:[%s745 + $0x4f0] sm:$0xff] %v1062
                  %v1064 = vld [vmem:[%s744 + $0x9d8] sm:$0xff]
                  %1065 = vst [vmem:[%s745 + $0x4f8] sm:$0xff] %v1064
                  %v1066 = vld [vmem:[%s744 + $0xa00] sm:$0xff]
                  %1067 = vst [vmem:[%s745 + $0x500] sm:$0xff] %v1066
                  %v1068 = vld [vmem:[%s744 + $0xa08] sm:$0xff]
                  %1069 = vst [vmem:[%s745 + $0x508] sm:$0xff] %v1068
                  %v1070 = vld [vmem:[%s744 + $0xa10] sm:$0xff]
                  %1071 = vst [vmem:[%s745 + $0x510] sm:$0xff] %v1070
                  %v1072 = vld [vmem:[%s744 + $0xa18] sm:$0xff]
                  %1073 = vst [vmem:[%s745 + $0x518] sm:$0xff] %v1072
                  %v1074 = vld [vmem:[%s744 + $0xa40] sm:$0xff]
                  %1075 = vst [vmem:[%s745 + $0x520] sm:$0xff] %v1074
                  %v1076 = vld [vmem:[%s744 + $0xa48] sm:$0xff]
                  %1077 = vst [vmem:[%s745 + $0x528] sm:$0xff] %v1076
                  %v1078 = vld [vmem:[%s744 + $0xa50] sm:$0xff]
                  %1079 = vst [vmem:[%s745 + $0x530] sm:$0xff] %v1078
                  %v1080 = vld [vmem:[%s744 + $0xa58] sm:$0xff]
                  %1081 = vst [vmem:[%s745 + $0x538] sm:$0xff] %v1080
                  %v1082 = vld [vmem:[%s744 + $0xa80] sm:$0xff]
                  %1083 = vst [vmem:[%s745 + $0x540] sm:$0xff] %v1082
                  %v1084 = vld [vmem:[%s744 + $0xa88] sm:$0xff]
                  %1085 = vst [vmem:[%s745 + $0x548] sm:$0xff] %v1084
                  %v1086 = vld [vmem:[%s744 + $0xa90] sm:$0xff]
                  %1087 = vst [vmem:[%s745 + $0x550] sm:$0xff] %v1086
                  %v1088 = vld [vmem:[%s744 + $0xa98] sm:$0xff]
                  %1089 = vst [vmem:[%s745 + $0x558] sm:$0xff] %v1088
                  %v1090 = vld [vmem:[%s744 + $0xac0] sm:$0xff]
                  %1091 = vst [vmem:[%s745 + $0x560] sm:$0xff] %v1090
                  %v1092 = vld [vmem:[%s744 + $0xac8] sm:$0xff]
                  %1093 = vst [vmem:[%s745 + $0x568] sm:$0xff] %v1092
                  %v1094 = vld [vmem:[%s744 + $0xad0] sm:$0xff]
                  %1095 = vst [vmem:[%s745 + $0x570] sm:$0xff] %v1094
                  %v1096 = vld [vmem:[%s744 + $0xad8] sm:$0xff]
                  %1097 = vst [vmem:[%s745 + $0x578] sm:$0xff] %v1096
                  %v1098 = vld [vmem:[%s744 + $0xb00] sm:$0xff]
                  %1099 = vst [vmem:[%s745 + $0x580] sm:$0xff] %v1098
                  %v1100 = vld [vmem:[%s744 + $0xb08] sm:$0xff]
                  %1101 = vst [vmem:[%s745 + $0x588] sm:$0xff] %v1100
                  %v1102 = vld [vmem:[%s744 + $0xb10] sm:$0xff]
                  %1103 = vst [vmem:[%s745 + $0x590] sm:$0xff] %v1102
                  %v1104 = vld [vmem:[%s744 + $0xb18] sm:$0xff]
                  %1105 = vst [vmem:[%s745 + $0x598] sm:$0xff] %v1104
                  %v1106 = vld [vmem:[%s744 + $0xb40] sm:$0xff]
                  %1107 = vst [vmem:[%s745 + $0x5a0] sm:$0xff] %v1106
                  %v1108 = vld [vmem:[%s744 + $0xb48] sm:$0xff]
                  %1109 = vst [vmem:[%s745 + $0x5a8] sm:$0xff] %v1108
                  %v1110 = vld [vmem:[%s744 + $0xb50] sm:$0xff]
                  %1111 = vst [vmem:[%s745 + $0x5b0] sm:$0xff] %v1110
                  %v1112 = vld [vmem:[%s744 + $0xb58] sm:$0xff]
                  %1113 = vst [vmem:[%s745 + $0x5b8] sm:$0xff] %v1112
                  %v1114 = vld [vmem:[%s744 + $0xb80] sm:$0xff]
                  %1115 = vst [vmem:[%s745 + $0x5c0] sm:$0xff] %v1114
                  %v1116 = vld [vmem:[%s744 + $0xb88] sm:$0xff]
                  %1117 = vst [vmem:[%s745 + $0x5c8] sm:$0xff] %v1116
                  %v1118 = vld [vmem:[%s744 + $0xb90] sm:$0xff]
                  %1119 = vst [vmem:[%s745 + $0x5d0] sm:$0xff] %v1118
                  %v1120 = vld [vmem:[%s744 + $0xb98] sm:$0xff]
                  %1121 = vst [vmem:[%s745 + $0x5d8] sm:$0xff] %v1120
                  %v1122 = vld [vmem:[%s744 + $0xbc0] sm:$0xff]
                  %1123 = vst [vmem:[%s745 + $0x5e0] sm:$0xff] %v1122
                  %v1124 = vld [vmem:[%s744 + $0xbc8] sm:$0xff]
                  %1125 = vst [vmem:[%s745 + $0x5e8] sm:$0xff] %v1124
                  %v1126 = vld [vmem:[%s744 + $0xbd0] sm:$0xff]
                  %1127 = vst [vmem:[%s745 + $0x5f0] sm:$0xff] %v1126
                  %v1128 = vld [vmem:[%s744 + $0xbd8] sm:$0xff]
                  %1129 = vst [vmem:[%s745 + $0x5f8] sm:$0xff] %v1128
                  %v1130 = vld [vmem:[%s744 + $0xc00] sm:$0xff]
                  %1131 = vst [vmem:[%s745 + $0x600] sm:$0xff] %v1130
                  %v1132 = vld [vmem:[%s744 + $0xc08] sm:$0xff]
                  %1133 = vst [vmem:[%s745 + $0x608] sm:$0xff] %v1132
                  %v1134 = vld [vmem:[%s744 + $0xc10] sm:$0xff]
                  %1135 = vst [vmem:[%s745 + $0x610] sm:$0xff] %v1134
                  %v1136 = vld [vmem:[%s744 + $0xc18] sm:$0xff]
                  %1137 = vst [vmem:[%s745 + $0x618] sm:$0xff] %v1136
                  %v1138 = vld [vmem:[%s744 + $0xc40] sm:$0xff]
                  %1139 = vst [vmem:[%s745 + $0x620] sm:$0xff] %v1138
                  %v1140 = vld [vmem:[%s744 + $0xc48] sm:$0xff]
                  %1141 = vst [vmem:[%s745 + $0x628] sm:$0xff] %v1140
                  %v1142 = vld [vmem:[%s744 + $0xc50] sm:$0xff]
                  %1143 = vst [vmem:[%s745 + $0x630] sm:$0xff] %v1142
                  %v1144 = vld [vmem:[%s744 + $0xc58] sm:$0xff]
                  %1145 = vst [vmem:[%s745 + $0x638] sm:$0xff] %v1144
                  %v1146 = vld [vmem:[%s744 + $0xc80] sm:$0xff]
                  %1147 = vst [vmem:[%s745 + $0x640] sm:$0xff] %v1146
                  %v1148 = vld [vmem:[%s744 + $0xc88] sm:$0xff]
                  %1149 = vst [vmem:[%s745 + $0x648] sm:$0xff] %v1148
                  %v1150 = vld [vmem:[%s744 + $0xc90] sm:$0xff]
                  %1151 = vst [vmem:[%s745 + $0x650] sm:$0xff] %v1150
                  %v1152 = vld [vmem:[%s744 + $0xc98] sm:$0xff]
                  %1153 = vst [vmem:[%s745 + $0x658] sm:$0xff] %v1152
                  %v1154 = vld [vmem:[%s744 + $0xcc0] sm:$0xff]
                  %1155 = vst [vmem:[%s745 + $0x660] sm:$0xff] %v1154
                  %v1156 = vld [vmem:[%s744 + $0xcc8] sm:$0xff]
                  %1157 = vst [vmem:[%s745 + $0x668] sm:$0xff] %v1156
                  %v1158 = vld [vmem:[%s744 + $0xcd0] sm:$0xff]
                  %1159 = vst [vmem:[%s745 + $0x670] sm:$0xff] %v1158
                  %v1160 = vld [vmem:[%s744 + $0xcd8] sm:$0xff]
                  %1161 = vst [vmem:[%s745 + $0x678] sm:$0xff] %v1160
                  %v1162 = vld [vmem:[%s744 + $0xd00] sm:$0xff]
                  %1163 = vst [vmem:[%s745 + $0x680] sm:$0xff] %v1162
                  %v1164 = vld [vmem:[%s744 + $0xd08] sm:$0xff]
                  %1165 = vst [vmem:[%s745 + $0x688] sm:$0xff] %v1164
                  %v1166 = vld [vmem:[%s744 + $0xd10] sm:$0xff]
                  %1167 = vst [vmem:[%s745 + $0x690] sm:$0xff] %v1166
                  %v1168 = vld [vmem:[%s744 + $0xd18] sm:$0xff]
                  %1169 = vst [vmem:[%s745 + $0x698] sm:$0xff] %v1168
                  %v1170 = vld [vmem:[%s744 + $0xd40] sm:$0xff]
                  %1171 = vst [vmem:[%s745 + $0x6a0] sm:$0xff] %v1170
                  %v1172 = vld [vmem:[%s744 + $0xd48] sm:$0xff]
                  %1173 = vst [vmem:[%s745 + $0x6a8] sm:$0xff] %v1172
                  %v1174 = vld [vmem:[%s744 + $0xd50] sm:$0xff]
                  %1175 = vst [vmem:[%s745 + $0x6b0] sm:$0xff] %v1174
                  %v1176 = vld [vmem:[%s744 + $0xd58] sm:$0xff]
                  %1177 = vst [vmem:[%s745 + $0x6b8] sm:$0xff] %v1176
                  %v1178 = vld [vmem:[%s744 + $0xd80] sm:$0xff]
                  %1179 = vst [vmem:[%s745 + $0x6c0] sm:$0xff] %v1178
                  %v1180 = vld [vmem:[%s744 + $0xd88] sm:$0xff]
                  %1181 = vst [vmem:[%s745 + $0x6c8] sm:$0xff] %v1180
                  %v1182 = vld [vmem:[%s744 + $0xd90] sm:$0xff]
                  %1183 = vst [vmem:[%s745 + $0x6d0] sm:$0xff] %v1182
                  %v1184 = vld [vmem:[%s744 + $0xd98] sm:$0xff]
                  %1185 = vst [vmem:[%s745 + $0x6d8] sm:$0xff] %v1184
                  %v1186 = vld [vmem:[%s744 + $0xdc0] sm:$0xff]
                  %1187 = vst [vmem:[%s745 + $0x6e0] sm:$0xff] %v1186
                  %v1188 = vld [vmem:[%s744 + $0xdc8] sm:$0xff]
                  %1189 = vst [vmem:[%s745 + $0x6e8] sm:$0xff] %v1188
                  %v1190 = vld [vmem:[%s744 + $0xdd0] sm:$0xff]
                  %1191 = vst [vmem:[%s745 + $0x6f0] sm:$0xff] %v1190
                  %v1192 = vld [vmem:[%s744 + $0xdd8] sm:$0xff]
                  %1193 = vst [vmem:[%s745 + $0x6f8] sm:$0xff] %v1192
                  %v1194 = vld [vmem:[%s744 + $0xe00] sm:$0xff]
                  %1195 = vst [vmem:[%s745 + $0x700] sm:$0xff] %v1194
                  %v1196 = vld [vmem:[%s744 + $0xe08] sm:$0xff]
                  %1197 = vst [vmem:[%s745 + $0x708] sm:$0xff] %v1196
                  %v1198 = vld [vmem:[%s744 + $0xe10] sm:$0xff]
                  %1199 = vst [vmem:[%s745 + $0x710] sm:$0xff] %v1198
                  %v1200 = vld [vmem:[%s744 + $0xe18] sm:$0xff]
                  %1201 = vst [vmem:[%s745 + $0x718] sm:$0xff] %v1200
                  %v1202 = vld [vmem:[%s744 + $0xe40] sm:$0xff]
                  %1203 = vst [vmem:[%s745 + $0x720] sm:$0xff] %v1202
                  %v1204 = vld [vmem:[%s744 + $0xe48] sm:$0xff]
                  %1205 = vst [vmem:[%s745 + $0x728] sm:$0xff] %v1204
                  %v1206 = vld [vmem:[%s744 + $0xe50] sm:$0xff]
                  %1207 = vst [vmem:[%s745 + $0x730] sm:$0xff] %v1206
                  %v1208 = vld [vmem:[%s744 + $0xe58] sm:$0xff]
                  %1209 = vst [vmem:[%s745 + $0x738] sm:$0xff] %v1208
                  %v1210 = vld [vmem:[%s744 + $0xe80] sm:$0xff]
                  %1211 = vst [vmem:[%s745 + $0x740] sm:$0xff] %v1210
                  %v1212 = vld [vmem:[%s744 + $0xe88] sm:$0xff]
                  %1213 = vst [vmem:[%s745 + $0x748] sm:$0xff] %v1212
                  %v1214 = vld [vmem:[%s744 + $0xe90] sm:$0xff]
                  %1215 = vst [vmem:[%s745 + $0x750] sm:$0xff] %v1214
                  %v1216 = vld [vmem:[%s744 + $0xe98] sm:$0xff]
                  %1217 = vst [vmem:[%s745 + $0x758] sm:$0xff] %v1216
                  %v1218 = vld [vmem:[%s744 + $0xec0] sm:$0xff]
                  %1219 = vst [vmem:[%s745 + $0x760] sm:$0xff] %v1218
                  %v1220 = vld [vmem:[%s744 + $0xec8] sm:$0xff]
                  %1221 = vst [vmem:[%s745 + $0x768] sm:$0xff] %v1220
                  %v1222 = vld [vmem:[%s744 + $0xed0] sm:$0xff]
                  %1223 = vst [vmem:[%s745 + $0x770] sm:$0xff] %v1222
                  %v1224 = vld [vmem:[%s744 + $0xed8] sm:$0xff]
                  %1225 = vst [vmem:[%s745 + $0x778] sm:$0xff] %v1224
                  %v1226 = vld [vmem:[%s744 + $0xf00] sm:$0xff]
                  %1227 = vst [vmem:[%s745 + $0x780] sm:$0xff] %v1226
                  %v1228 = vld [vmem:[%s744 + $0xf08] sm:$0xff]
                  %1229 = vst [vmem:[%s745 + $0x788] sm:$0xff] %v1228
                  %v1230 = vld [vmem:[%s744 + $0xf10] sm:$0xff]
                  %1231 = vst [vmem:[%s745 + $0x790] sm:$0xff] %v1230
                  %v1232 = vld [vmem:[%s744 + $0xf18] sm:$0xff]
                  %1233 = vst [vmem:[%s745 + $0x798] sm:$0xff] %v1232
                  %v1234 = vld [vmem:[%s744 + $0xf40] sm:$0xff]
                  %1235 = vst [vmem:[%s745 + $0x7a0] sm:$0xff] %v1234
                  %v1236 = vld [vmem:[%s744 + $0xf48] sm:$0xff]
                  %1237 = vst [vmem:[%s745 + $0x7a8] sm:$0xff] %v1236
                  %v1238 = vld [vmem:[%s744 + $0xf50] sm:$0xff]
                  %1239 = vst [vmem:[%s745 + $0x7b0] sm:$0xff] %v1238
                  %v1240 = vld [vmem:[%s744 + $0xf58] sm:$0xff]
                  %1241 = vst [vmem:[%s745 + $0x7b8] sm:$0xff] %v1240
                  %v1242 = vld [vmem:[%s744 + $0xf80] sm:$0xff]
                  %1243 = vst [vmem:[%s745 + $0x7c0] sm:$0xff] %v1242
                  %v1244 = vld [vmem:[%s744 + $0xf88] sm:$0xff]
                  %1245 = vst [vmem:[%s745 + $0x7c8] sm:$0xff] %v1244
                  %v1246 = vld [vmem:[%s744 + $0xf90] sm:$0xff]
                  %1247 = vst [vmem:[%s745 + $0x7d0] sm:$0xff] %v1246
                  %v1248 = vld [vmem:[%s744 + $0xf98] sm:$0xff]
                  %1249 = vst [vmem:[%s745 + $0x7d8] sm:$0xff] %v1248
                  %v1250 = vld [vmem:[%s744 + $0xfc0] sm:$0xff]
                  %1251 = vst [vmem:[%s745 + $0x7e0] sm:$0xff] %v1250
                  %v1252 = vld [vmem:[%s744 + $0xfc8] sm:$0xff]
                  %1253 = vst [vmem:[%s745 + $0x7e8] sm:$0xff] %v1252
                  %v1254 = vld [vmem:[%s744 + $0xfd0] sm:$0xff]
                  %1255 = vst [vmem:[%s745 + $0x7f0] sm:$0xff] %v1254
                  %v1256 = vld [vmem:[%s744 + $0xfd8] sm:$0xff]
                  %1257 = vst [vmem:[%s745 + $0x7f8] sm:$0xff] %v1256
                  %v1258 = vld [vmem:[%s744 + $0x1000] sm:$0xff]
                  %1259 = vst [vmem:[%s745 + $0x800] sm:$0xff] %v1258
                  %v1260 = vld [vmem:[%s744 + $0x1008] sm:$0xff]
                  %1261 = vst [vmem:[%s745 + $0x808] sm:$0xff] %v1260
                  %v1262 = vld [vmem:[%s744 + $0x1010] sm:$0xff]
                  %1263 = vst [vmem:[%s745 + $0x810] sm:$0xff] %v1262
                  %v1264 = vld [vmem:[%s744 + $0x1018] sm:$0xff]
                  %1265 = vst [vmem:[%s745 + $0x818] sm:$0xff] %v1264
                  %v1266 = vld [vmem:[%s744 + $0x1040] sm:$0xff]
                  %1267 = vst [vmem:[%s745 + $0x820] sm:$0xff] %v1266
                  %v1268 = vld [vmem:[%s744 + $0x1048] sm:$0xff]
                  %1269 = vst [vmem:[%s745 + $0x828] sm:$0xff] %v1268
                  %v1270 = vld [vmem:[%s744 + $0x1050] sm:$0xff]
                  %1271 = vst [vmem:[%s745 + $0x830] sm:$0xff] %v1270
                  %v1272 = vld [vmem:[%s744 + $0x1058] sm:$0xff]
                  %1273 = vst [vmem:[%s745 + $0x838] sm:$0xff] %v1272
                  %v1274 = vld [vmem:[%s744 + $0x1080] sm:$0xff]
                  %1275 = vst [vmem:[%s745 + $0x840] sm:$0xff] %v1274
                  %v1276 = vld [vmem:[%s744 + $0x1088] sm:$0xff]
                  %1277 = vst [vmem:[%s745 + $0x848] sm:$0xff] %v1276
                  %v1278 = vld [vmem:[%s744 + $0x1090] sm:$0xff]
                  %1279 = vst [vmem:[%s745 + $0x850] sm:$0xff] %v1278
                  %v1280 = vld [vmem:[%s744 + $0x1098] sm:$0xff]
                  %1281 = vst [vmem:[%s745 + $0x858] sm:$0xff] %v1280
                  %v1282 = vld [vmem:[%s744 + $0x10c0] sm:$0xff]
                  %1283 = vst [vmem:[%s745 + $0x860] sm:$0xff] %v1282
                  %v1284 = vld [vmem:[%s744 + $0x10c8] sm:$0xff]
                  %1285 = vst [vmem:[%s745 + $0x868] sm:$0xff] %v1284
                  %v1286 = vld [vmem:[%s744 + $0x10d0] sm:$0xff]
                  %1287 = vst [vmem:[%s745 + $0x870] sm:$0xff] %v1286
                  %v1288 = vld [vmem:[%s744 + $0x10d8] sm:$0xff]
                  %1289 = vst [vmem:[%s745 + $0x878] sm:$0xff] %v1288
                  %v1290 = vld [vmem:[%s744 + $0x1100] sm:$0xff]
                  %1291 = vst [vmem:[%s745 + $0x880] sm:$0xff] %v1290
                  %v1292 = vld [vmem:[%s744 + $0x1108] sm:$0xff]
                  %1293 = vst [vmem:[%s745 + $0x888] sm:$0xff] %v1292
                  %v1294 = vld [vmem:[%s744 + $0x1110] sm:$0xff]
                  %1295 = vst [vmem:[%s745 + $0x890] sm:$0xff] %v1294
                  %v1296 = vld [vmem:[%s744 + $0x1118] sm:$0xff]
                  %1297 = vst [vmem:[%s745 + $0x898] sm:$0xff] %v1296
                  %v1298 = vld [vmem:[%s744 + $0x1140] sm:$0xff]
                  %1299 = vst [vmem:[%s745 + $0x8a0] sm:$0xff] %v1298
                  %v1300 = vld [vmem:[%s744 + $0x1148] sm:$0xff]
                  %1301 = vst [vmem:[%s745 + $0x8a8] sm:$0xff] %v1300
                  %v1302 = vld [vmem:[%s744 + $0x1150] sm:$0xff]
                  %1303 = vst [vmem:[%s745 + $0x8b0] sm:$0xff] %v1302
                  %v1304 = vld [vmem:[%s744 + $0x1158] sm:$0xff]
                  %1305 = vst [vmem:[%s745 + $0x8b8] sm:$0xff] %v1304
                  %v1306 = vld [vmem:[%s744 + $0x1180] sm:$0xff]
                  %1307 = vst [vmem:[%s745 + $0x8c0] sm:$0xff] %v1306
                  %v1308 = vld [vmem:[%s744 + $0x1188] sm:$0xff]
                  %1309 = vst [vmem:[%s745 + $0x8c8] sm:$0xff] %v1308
                  %v1310 = vld [vmem:[%s744 + $0x1190] sm:$0xff]
                  %1311 = vst [vmem:[%s745 + $0x8d0] sm:$0xff] %v1310
                  %v1312 = vld [vmem:[%s744 + $0x1198] sm:$0xff]
                  %1313 = vst [vmem:[%s745 + $0x8d8] sm:$0xff] %v1312
                  %v1314 = vld [vmem:[%s744 + $0x11c0] sm:$0xff]
                  %1315 = vst [vmem:[%s745 + $0x8e0] sm:$0xff] %v1314
                  %v1316 = vld [vmem:[%s744 + $0x11c8] sm:$0xff]
                  %1317 = vst [vmem:[%s745 + $0x8e8] sm:$0xff] %v1316
                  %v1318 = vld [vmem:[%s744 + $0x11d0] sm:$0xff]
                  %1319 = vst [vmem:[%s745 + $0x8f0] sm:$0xff] %v1318
                  %v1320 = vld [vmem:[%s744 + $0x11d8] sm:$0xff]
                  %1321 = vst [vmem:[%s745 + $0x8f8] sm:$0xff] %v1320
                $region52: #{_lambda_.3} parent=46 // loop_footer
                  %s743 = sadd.s32 1, %s739
                $region53: #{_lambda_.3} parent=46 // loop_footer_branch
                  %738 = sbr.rel target = $region49
                $region54: #{_lambda_.3} parent=46 // loop_exit
                  _
              $region47: #{_lambda_.3} parent=31 // pred_fallthru
                _
              // Predicated region
              $region55: #{_lambda_.3} parent=31 // pred_check
                _
              $region56: #{_lambda_.3} parent=31 // pred_check_branch
                %1323 = sbr.rel target = $region58
              $region57: #{_lambda_.3} parent=31 // pred_region
                _
              $region58: #{_lambda_.3} parent=31 // pred_fallthru
                _
            $region32: #{_lambda_.3} parent=27 // pred_fallthru
              _
            // Predicated region
            $region33: #{_lambda_.3} parent=27 // pred_check
              _
            $region34: #{_lambda_.3} parent=27 // pred_check_branch
              %149 = sbr.rel target = $region36
            $region35: #{_lambda_.3} parent=27 // pred_region
              %s151 = ssub.s32 256, 1
              loop: start=0, step=1, limit=1
              $region37: #{_lambda_.3} parent=35 // loop_pre_header
                _
              $region38: #{_lambda_.3} parent=35 // loop_header
                %s153 = sphi 0, %s157
                %p154 = scmp.ge.s32.totalorder %s153, 1
                %s158 = sphi %s143, %s143
                %s159 = sphi %s140, %s140
              $region39: #{_lambda_.3} parent=35 // loop_header_branch
                %156 = sbr.rel (%p154) target = $region43
              $region40: #{_lambda_.3} parent=35 // loop_body
                %v160 = vld [vmem:[%s158] sm:%s151]
                %161 = vst [vmem:[%s159] sm:%s151] %v160
                %v162 = vld [vmem:[%s158 + $0x8] sm:%s151]
                %163 = vst [vmem:[%s159 + $0x8] sm:%s151] %v162
                %v164 = vld [vmem:[%s158 + $0x10] sm:%s151]
                %165 = vst [vmem:[%s159 + $0x10] sm:%s151] %v164
                %v166 = vld [vmem:[%s158 + $0x18] sm:%s151]
                %167 = vst [vmem:[%s159 + $0x18] sm:%s151] %v166
                %v168 = vld [vmem:[%s158 + $0x40] sm:%s151]
                %169 = vst [vmem:[%s159 + $0x20] sm:%s151] %v168
                %v170 = vld [vmem:[%s158 + $0x48] sm:%s151]
                %171 = vst [vmem:[%s159 + $0x28] sm:%s151] %v170
                %v172 = vld [vmem:[%s158 + $0x50] sm:%s151]
                %173 = vst [vmem:[%s159 + $0x30] sm:%s151] %v172
                %v174 = vld [vmem:[%s158 + $0x58] sm:%s151]
                %175 = vst [vmem:[%s159 + $0x38] sm:%s151] %v174
                %v176 = vld [vmem:[%s158 + $0x80] sm:%s151]
                %177 = vst [vmem:[%s159 + $0x40] sm:%s151] %v176
                %v178 = vld [vmem:[%s158 + $0x88] sm:%s151]
                %179 = vst [vmem:[%s159 + $0x48] sm:%s151] %v178
                %v180 = vld [vmem:[%s158 + $0x90] sm:%s151]
                %181 = vst [vmem:[%s159 + $0x50] sm:%s151] %v180
                %v182 = vld [vmem:[%s158 + $0x98] sm:%s151]
                %183 = vst [vmem:[%s159 + $0x58] sm:%s151] %v182
                %v184 = vld [vmem:[%s158 + $0xc0] sm:%s151]
                %185 = vst [vmem:[%s159 + $0x60] sm:%s151] %v184
                %v186 = vld [vmem:[%s158 + $0xc8] sm:%s151]
                %187 = vst [vmem:[%s159 + $0x68] sm:%s151] %v186
                %v188 = vld [vmem:[%s158 + $0xd0] sm:%s151]
                %189 = vst [vmem:[%s159 + $0x70] sm:%s151] %v188
                %v190 = vld [vmem:[%s158 + $0xd8] sm:%s151]
                %191 = vst [vmem:[%s159 + $0x78] sm:%s151] %v190
                %v192 = vld [vmem:[%s158 + $0x100] sm:%s151]
                %193 = vst [vmem:[%s159 + $0x80] sm:%s151] %v192
                %v194 = vld [vmem:[%s158 + $0x108] sm:%s151]
                %195 = vst [vmem:[%s159 + $0x88] sm:%s151] %v194
                %v196 = vld [vmem:[%s158 + $0x110] sm:%s151]
                %197 = vst [vmem:[%s159 + $0x90] sm:%s151] %v196
                %v198 = vld [vmem:[%s158 + $0x118] sm:%s151]
                %199 = vst [vmem:[%s159 + $0x98] sm:%s151] %v198
                %v200 = vld [vmem:[%s158 + $0x140] sm:%s151]
                %201 = vst [vmem:[%s159 + $0xa0] sm:%s151] %v200
                %v202 = vld [vmem:[%s158 + $0x148] sm:%s151]
                %203 = vst [vmem:[%s159 + $0xa8] sm:%s151] %v202
                %v204 = vld [vmem:[%s158 + $0x150] sm:%s151]
                %205 = vst [vmem:[%s159 + $0xb0] sm:%s151] %v204
                %v206 = vld [vmem:[%s158 + $0x158] sm:%s151]
                %207 = vst [vmem:[%s159 + $0xb8] sm:%s151] %v206
                %v208 = vld [vmem:[%s158 + $0x180] sm:%s151]
                %209 = vst [vmem:[%s159 + $0xc0] sm:%s151] %v208
                %v210 = vld [vmem:[%s158 + $0x188] sm:%s151]
                %211 = vst [vmem:[%s159 + $0xc8] sm:%s151] %v210
                %v212 = vld [vmem:[%s158 + $0x190] sm:%s151]
                %213 = vst [vmem:[%s159 + $0xd0] sm:%s151] %v212
                %v214 = vld [vmem:[%s158 + $0x198] sm:%s151]
                %215 = vst [vmem:[%s159 + $0xd8] sm:%s151] %v214
                %v216 = vld [vmem:[%s158 + $0x1c0] sm:%s151]
                %217 = vst [vmem:[%s159 + $0xe0] sm:%s151] %v216
                %v218 = vld [vmem:[%s158 + $0x1c8] sm:%s151]
                %219 = vst [vmem:[%s159 + $0xe8] sm:%s151] %v218
                %v220 = vld [vmem:[%s158 + $0x1d0] sm:%s151]
                %221 = vst [vmem:[%s159 + $0xf0] sm:%s151] %v220
                %v222 = vld [vmem:[%s158 + $0x1d8] sm:%s151]
                %223 = vst [vmem:[%s159 + $0xf8] sm:%s151] %v222
                %v224 = vld [vmem:[%s158 + $0x200] sm:%s151]
                %225 = vst [vmem:[%s159 + $0x100] sm:%s151] %v224
                %v226 = vld [vmem:[%s158 + $0x208] sm:%s151]
                %227 = vst [vmem:[%s159 + $0x108] sm:%s151] %v226
                %v228 = vld [vmem:[%s158 + $0x210] sm:%s151]
                %229 = vst [vmem:[%s159 + $0x110] sm:%s151] %v228
                %v230 = vld [vmem:[%s158 + $0x218] sm:%s151]
                %231 = vst [vmem:[%s159 + $0x118] sm:%s151] %v230
                %v232 = vld [vmem:[%s158 + $0x240] sm:%s151]
                %233 = vst [vmem:[%s159 + $0x120] sm:%s151] %v232
                %v234 = vld [vmem:[%s158 + $0x248] sm:%s151]
                %235 = vst [vmem:[%s159 + $0x128] sm:%s151] %v234
                %v236 = vld [vmem:[%s158 + $0x250] sm:%s151]
                %237 = vst [vmem:[%s159 + $0x130] sm:%s151] %v236
                %v238 = vld [vmem:[%s158 + $0x258] sm:%s151]
                %239 = vst [vmem:[%s159 + $0x138] sm:%s151] %v238
                %v240 = vld [vmem:[%s158 + $0x280] sm:%s151]
                %241 = vst [vmem:[%s159 + $0x140] sm:%s151] %v240
                %v242 = vld [vmem:[%s158 + $0x288] sm:%s151]
                %243 = vst [vmem:[%s159 + $0x148] sm:%s151] %v242
                %v244 = vld [vmem:[%s158 + $0x290] sm:%s151]
                %245 = vst [vmem:[%s159 + $0x150] sm:%s151] %v244
                %v246 = vld [vmem:[%s158 + $0x298] sm:%s151]
                %247 = vst [vmem:[%s159 + $0x158] sm:%s151] %v246
                %v248 = vld [vmem:[%s158 + $0x2c0] sm:%s151]
                %249 = vst [vmem:[%s159 + $0x160] sm:%s151] %v248
                %v250 = vld [vmem:[%s158 + $0x2c8] sm:%s151]
                %251 = vst [vmem:[%s159 + $0x168] sm:%s151] %v250
                %v252 = vld [vmem:[%s158 + $0x2d0] sm:%s151]
                %253 = vst [vmem:[%s159 + $0x170] sm:%s151] %v252
                %v254 = vld [vmem:[%s158 + $0x2d8] sm:%s151]
                %255 = vst [vmem:[%s159 + $0x178] sm:%s151] %v254
                %v256 = vld [vmem:[%s158 + $0x300] sm:%s151]
                %257 = vst [vmem:[%s159 + $0x180] sm:%s151] %v256
                %v258 = vld [vmem:[%s158 + $0x308] sm:%s151]
                %259 = vst [vmem:[%s159 + $0x188] sm:%s151] %v258
                %v260 = vld [vmem:[%s158 + $0x310] sm:%s151]
                %261 = vst [vmem:[%s159 + $0x190] sm:%s151] %v260
                %v262 = vld [vmem:[%s158 + $0x318] sm:%s151]
                %263 = vst [vmem:[%s159 + $0x198] sm:%s151] %v262
                %v264 = vld [vmem:[%s158 + $0x340] sm:%s151]
                %265 = vst [vmem:[%s159 + $0x1a0] sm:%s151] %v264
                %v266 = vld [vmem:[%s158 + $0x348] sm:%s151]
                %267 = vst [vmem:[%s159 + $0x1a8] sm:%s151] %v266
                %v268 = vld [vmem:[%s158 + $0x350] sm:%s151]
                %269 = vst [vmem:[%s159 + $0x1b0] sm:%s151] %v268
                %v270 = vld [vmem:[%s158 + $0x358] sm:%s151]
                %271 = vst [vmem:[%s159 + $0x1b8] sm:%s151] %v270
                %v272 = vld [vmem:[%s158 + $0x380] sm:%s151]
                %273 = vst [vmem:[%s159 + $0x1c0] sm:%s151] %v272
                %v274 = vld [vmem:[%s158 + $0x388] sm:%s151]
                %275 = vst [vmem:[%s159 + $0x1c8] sm:%s151] %v274
                %v276 = vld [vmem:[%s158 + $0x390] sm:%s151]
                %277 = vst [vmem:[%s159 + $0x1d0] sm:%s151] %v276
                %v278 = vld [vmem:[%s158 + $0x398] sm:%s151]
                %279 = vst [vmem:[%s159 + $0x1d8] sm:%s151] %v278
                %v280 = vld [vmem:[%s158 + $0x3c0] sm:%s151]
                %281 = vst [vmem:[%s159 + $0x1e0] sm:%s151] %v280
                %v282 = vld [vmem:[%s158 + $0x3c8] sm:%s151]
                %283 = vst [vmem:[%s159 + $0x1e8] sm:%s151] %v282
                %v284 = vld [vmem:[%s158 + $0x3d0] sm:%s151]
                %285 = vst [vmem:[%s159 + $0x1f0] sm:%s151] %v284
                %v286 = vld [vmem:[%s158 + $0x3d8] sm:%s151]
                %287 = vst [vmem:[%s159 + $0x1f8] sm:%s151] %v286
                %v288 = vld [vmem:[%s158 + $0x400] sm:%s151]
                %289 = vst [vmem:[%s159 + $0x200] sm:%s151] %v288
                %v290 = vld [vmem:[%s158 + $0x408] sm:%s151]
                %291 = vst [vmem:[%s159 + $0x208] sm:%s151] %v290
                %v292 = vld [vmem:[%s158 + $0x410] sm:%s151]
                %293 = vst [vmem:[%s159 + $0x210] sm:%s151] %v292
                %v294 = vld [vmem:[%s158 + $0x418] sm:%s151]
                %295 = vst [vmem:[%s159 + $0x218] sm:%s151] %v294
                %v296 = vld [vmem:[%s158 + $0x440] sm:%s151]
                %297 = vst [vmem:[%s159 + $0x220] sm:%s151] %v296
                %v298 = vld [vmem:[%s158 + $0x448] sm:%s151]
                %299 = vst [vmem:[%s159 + $0x228] sm:%s151] %v298
                %v300 = vld [vmem:[%s158 + $0x450] sm:%s151]
                %301 = vst [vmem:[%s159 + $0x230] sm:%s151] %v300
                %v302 = vld [vmem:[%s158 + $0x458] sm:%s151]
                %303 = vst [vmem:[%s159 + $0x238] sm:%s151] %v302
                %v304 = vld [vmem:[%s158 + $0x480] sm:%s151]
                %305 = vst [vmem:[%s159 + $0x240] sm:%s151] %v304
                %v306 = vld [vmem:[%s158 + $0x488] sm:%s151]
                %307 = vst [vmem:[%s159 + $0x248] sm:%s151] %v306
                %v308 = vld [vmem:[%s158 + $0x490] sm:%s151]
                %309 = vst [vmem:[%s159 + $0x250] sm:%s151] %v308
                %v310 = vld [vmem:[%s158 + $0x498] sm:%s151]
                %311 = vst [vmem:[%s159 + $0x258] sm:%s151] %v310
                %v312 = vld [vmem:[%s158 + $0x4c0] sm:%s151]
                %313 = vst [vmem:[%s159 + $0x260] sm:%s151] %v312
                %v314 = vld [vmem:[%s158 + $0x4c8] sm:%s151]
                %315 = vst [vmem:[%s159 + $0x268] sm:%s151] %v314
                %v316 = vld [vmem:[%s158 + $0x4d0] sm:%s151]
                %317 = vst [vmem:[%s159 + $0x270] sm:%s151] %v316
                %v318 = vld [vmem:[%s158 + $0x4d8] sm:%s151]
                %319 = vst [vmem:[%s159 + $0x278] sm:%s151] %v318
                %v320 = vld [vmem:[%s158 + $0x500] sm:%s151]
                %321 = vst [vmem:[%s159 + $0x280] sm:%s151] %v320
                %v322 = vld [vmem:[%s158 + $0x508] sm:%s151]
                %323 = vst [vmem:[%s159 + $0x288] sm:%s151] %v322
                %v324 = vld [vmem:[%s158 + $0x510] sm:%s151]
                %325 = vst [vmem:[%s159 + $0x290] sm:%s151] %v324
                %v326 = vld [vmem:[%s158 + $0x518] sm:%s151]
                %327 = vst [vmem:[%s159 + $0x298] sm:%s151] %v326
                %v328 = vld [vmem:[%s158 + $0x540] sm:%s151]
                %329 = vst [vmem:[%s159 + $0x2a0] sm:%s151] %v328
                %v330 = vld [vmem:[%s158 + $0x548] sm:%s151]
                %331 = vst [vmem:[%s159 + $0x2a8] sm:%s151] %v330
                %v332 = vld [vmem:[%s158 + $0x550] sm:%s151]
                %333 = vst [vmem:[%s159 + $0x2b0] sm:%s151] %v332
                %v334 = vld [vmem:[%s158 + $0x558] sm:%s151]
                %335 = vst [vmem:[%s159 + $0x2b8] sm:%s151] %v334
                %v336 = vld [vmem:[%s158 + $0x580] sm:%s151]
                %337 = vst [vmem:[%s159 + $0x2c0] sm:%s151] %v336
                %v338 = vld [vmem:[%s158 + $0x588] sm:%s151]
                %339 = vst [vmem:[%s159 + $0x2c8] sm:%s151] %v338
                %v340 = vld [vmem:[%s158 + $0x590] sm:%s151]
                %341 = vst [vmem:[%s159 + $0x2d0] sm:%s151] %v340
                %v342 = vld [vmem:[%s158 + $0x598] sm:%s151]
                %343 = vst [vmem:[%s159 + $0x2d8] sm:%s151] %v342
                %v344 = vld [vmem:[%s158 + $0x5c0] sm:%s151]
                %345 = vst [vmem:[%s159 + $0x2e0] sm:%s151] %v344
                %v346 = vld [vmem:[%s158 + $0x5c8] sm:%s151]
                %347 = vst [vmem:[%s159 + $0x2e8] sm:%s151] %v346
                %v348 = vld [vmem:[%s158 + $0x5d0] sm:%s151]
                %349 = vst [vmem:[%s159 + $0x2f0] sm:%s151] %v348
                %v350 = vld [vmem:[%s158 + $0x5d8] sm:%s151]
                %351 = vst [vmem:[%s159 + $0x2f8] sm:%s151] %v350
                %v352 = vld [vmem:[%s158 + $0x600] sm:%s151]
                %353 = vst [vmem:[%s159 + $0x300] sm:%s151] %v352
                %v354 = vld [vmem:[%s158 + $0x608] sm:%s151]
                %355 = vst [vmem:[%s159 + $0x308] sm:%s151] %v354
                %v356 = vld [vmem:[%s158 + $0x610] sm:%s151]
                %357 = vst [vmem:[%s159 + $0x310] sm:%s151] %v356
                %v358 = vld [vmem:[%s158 + $0x618] sm:%s151]
                %359 = vst [vmem:[%s159 + $0x318] sm:%s151] %v358
                %v360 = vld [vmem:[%s158 + $0x640] sm:%s151]
                %361 = vst [vmem:[%s159 + $0x320] sm:%s151] %v360
                %v362 = vld [vmem:[%s158 + $0x648] sm:%s151]
                %363 = vst [vmem:[%s159 + $0x328] sm:%s151] %v362
                %v364 = vld [vmem:[%s158 + $0x650] sm:%s151]
                %365 = vst [vmem:[%s159 + $0x330] sm:%s151] %v364
                %v366 = vld [vmem:[%s158 + $0x658] sm:%s151]
                %367 = vst [vmem:[%s159 + $0x338] sm:%s151] %v366
                %v368 = vld [vmem:[%s158 + $0x680] sm:%s151]
                %369 = vst [vmem:[%s159 + $0x340] sm:%s151] %v368
                %v370 = vld [vmem:[%s158 + $0x688] sm:%s151]
                %371 = vst [vmem:[%s159 + $0x348] sm:%s151] %v370
                %v372 = vld [vmem:[%s158 + $0x690] sm:%s151]
                %373 = vst [vmem:[%s159 + $0x350] sm:%s151] %v372
                %v374 = vld [vmem:[%s158 + $0x698] sm:%s151]
                %375 = vst [vmem:[%s159 + $0x358] sm:%s151] %v374
                %v376 = vld [vmem:[%s158 + $0x6c0] sm:%s151]
                %377 = vst [vmem:[%s159 + $0x360] sm:%s151] %v376
                %v378 = vld [vmem:[%s158 + $0x6c8] sm:%s151]
                %379 = vst [vmem:[%s159 + $0x368] sm:%s151] %v378
                %v380 = vld [vmem:[%s158 + $0x6d0] sm:%s151]
                %381 = vst [vmem:[%s159 + $0x370] sm:%s151] %v380
                %v382 = vld [vmem:[%s158 + $0x6d8] sm:%s151]
                %383 = vst [vmem:[%s159 + $0x378] sm:%s151] %v382
                %v384 = vld [vmem:[%s158 + $0x700] sm:%s151]
                %385 = vst [vmem:[%s159 + $0x380] sm:%s151] %v384
                %v386 = vld [vmem:[%s158 + $0x708] sm:%s151]
                %387 = vst [vmem:[%s159 + $0x388] sm:%s151] %v386
                %v388 = vld [vmem:[%s158 + $0x710] sm:%s151]
                %389 = vst [vmem:[%s159 + $0x390] sm:%s151] %v388
                %v390 = vld [vmem:[%s158 + $0x718] sm:%s151]
                %391 = vst [vmem:[%s159 + $0x398] sm:%s151] %v390
                %v392 = vld [vmem:[%s158 + $0x740] sm:%s151]
                %393 = vst [vmem:[%s159 + $0x3a0] sm:%s151] %v392
                %v394 = vld [vmem:[%s158 + $0x748] sm:%s151]
                %395 = vst [vmem:[%s159 + $0x3a8] sm:%s151] %v394
                %v396 = vld [vmem:[%s158 + $0x750] sm:%s151]
                %397 = vst [vmem:[%s159 + $0x3b0] sm:%s151] %v396
                %v398 = vld [vmem:[%s158 + $0x758] sm:%s151]
                %399 = vst [vmem:[%s159 + $0x3b8] sm:%s151] %v398
                %v400 = vld [vmem:[%s158 + $0x780] sm:%s151]
                %401 = vst [vmem:[%s159 + $0x3c0] sm:%s151] %v400
                %v402 = vld [vmem:[%s158 + $0x788] sm:%s151]
                %403 = vst [vmem:[%s159 + $0x3c8] sm:%s151] %v402
                %v404 = vld [vmem:[%s158 + $0x790] sm:%s151]
                %405 = vst [vmem:[%s159 + $0x3d0] sm:%s151] %v404
                %v406 = vld [vmem:[%s158 + $0x798] sm:%s151]
                %407 = vst [vmem:[%s159 + $0x3d8] sm:%s151] %v406
                %v408 = vld [vmem:[%s158 + $0x7c0] sm:%s151]
                %409 = vst [vmem:[%s159 + $0x3e0] sm:%s151] %v408
                %v410 = vld [vmem:[%s158 + $0x7c8] sm:%s151]
                %411 = vst [vmem:[%s159 + $0x3e8] sm:%s151] %v410
                %v412 = vld [vmem:[%s158 + $0x7d0] sm:%s151]
                %413 = vst [vmem:[%s159 + $0x3f0] sm:%s151] %v412
                %v414 = vld [vmem:[%s158 + $0x7d8] sm:%s151]
                %415 = vst [vmem:[%s159 + $0x3f8] sm:%s151] %v414
                %v416 = vld [vmem:[%s158 + $0x800] sm:%s151]
                %417 = vst [vmem:[%s159 + $0x400] sm:%s151] %v416
                %v418 = vld [vmem:[%s158 + $0x808] sm:%s151]
                %419 = vst [vmem:[%s159 + $0x408] sm:%s151] %v418
                %v420 = vld [vmem:[%s158 + $0x810] sm:%s151]
                %421 = vst [vmem:[%s159 + $0x410] sm:%s151] %v420
                %v422 = vld [vmem:[%s158 + $0x818] sm:%s151]
                %423 = vst [vmem:[%s159 + $0x418] sm:%s151] %v422
                %v424 = vld [vmem:[%s158 + $0x840] sm:%s151]
                %425 = vst [vmem:[%s159 + $0x420] sm:%s151] %v424
                %v426 = vld [vmem:[%s158 + $0x848] sm:%s151]
                %427 = vst [vmem:[%s159 + $0x428] sm:%s151] %v426
                %v428 = vld [vmem:[%s158 + $0x850] sm:%s151]
                %429 = vst [vmem:[%s159 + $0x430] sm:%s151] %v428
                %v430 = vld [vmem:[%s158 + $0x858] sm:%s151]
                %431 = vst [vmem:[%s159 + $0x438] sm:%s151] %v430
                %v432 = vld [vmem:[%s158 + $0x880] sm:%s151]
                %433 = vst [vmem:[%s159 + $0x440] sm:%s151] %v432
                %v434 = vld [vmem:[%s158 + $0x888] sm:%s151]
                %435 = vst [vmem:[%s159 + $0x448] sm:%s151] %v434
                %v436 = vld [vmem:[%s158 + $0x890] sm:%s151]
                %437 = vst [vmem:[%s159 + $0x450] sm:%s151] %v436
                %v438 = vld [vmem:[%s158 + $0x898] sm:%s151]
                %439 = vst [vmem:[%s159 + $0x458] sm:%s151] %v438
                %v440 = vld [vmem:[%s158 + $0x8c0] sm:%s151]
                %441 = vst [vmem:[%s159 + $0x460] sm:%s151] %v440
                %v442 = vld [vmem:[%s158 + $0x8c8] sm:%s151]
                %443 = vst [vmem:[%s159 + $0x468] sm:%s151] %v442
                %v444 = vld [vmem:[%s158 + $0x8d0] sm:%s151]
                %445 = vst [vmem:[%s159 + $0x470] sm:%s151] %v444
                %v446 = vld [vmem:[%s158 + $0x8d8] sm:%s151]
                %447 = vst [vmem:[%s159 + $0x478] sm:%s151] %v446
                %v448 = vld [vmem:[%s158 + $0x900] sm:%s151]
                %449 = vst [vmem:[%s159 + $0x480] sm:%s151] %v448
                %v450 = vld [vmem:[%s158 + $0x908] sm:%s151]
                %451 = vst [vmem:[%s159 + $0x488] sm:%s151] %v450
                %v452 = vld [vmem:[%s158 + $0x910] sm:%s151]
                %453 = vst [vmem:[%s159 + $0x490] sm:%s151] %v452
                %v454 = vld [vmem:[%s158 + $0x918] sm:%s151]
                %455 = vst [vmem:[%s159 + $0x498] sm:%s151] %v454
                %v456 = vld [vmem:[%s158 + $0x940] sm:%s151]
                %457 = vst [vmem:[%s159 + $0x4a0] sm:%s151] %v456
                %v458 = vld [vmem:[%s158 + $0x948] sm:%s151]
                %459 = vst [vmem:[%s159 + $0x4a8] sm:%s151] %v458
                %v460 = vld [vmem:[%s158 + $0x950] sm:%s151]
                %461 = vst [vmem:[%s159 + $0x4b0] sm:%s151] %v460
                %v462 = vld [vmem:[%s158 + $0x958] sm:%s151]
                %463 = vst [vmem:[%s159 + $0x4b8] sm:%s151] %v462
                %v464 = vld [vmem:[%s158 + $0x980] sm:%s151]
                %465 = vst [vmem:[%s159 + $0x4c0] sm:%s151] %v464
                %v466 = vld [vmem:[%s158 + $0x988] sm:%s151]
                %467 = vst [vmem:[%s159 + $0x4c8] sm:%s151] %v466
                %v468 = vld [vmem:[%s158 + $0x990] sm:%s151]
                %469 = vst [vmem:[%s159 + $0x4d0] sm:%s151] %v468
                %v470 = vld [vmem:[%s158 + $0x998] sm:%s151]
                %471 = vst [vmem:[%s159 + $0x4d8] sm:%s151] %v470
                %v472 = vld [vmem:[%s158 + $0x9c0] sm:%s151]
                %473 = vst [vmem:[%s159 + $0x4e0] sm:%s151] %v472
                %v474 = vld [vmem:[%s158 + $0x9c8] sm:%s151]
                %475 = vst [vmem:[%s159 + $0x4e8] sm:%s151] %v474
                %v476 = vld [vmem:[%s158 + $0x9d0] sm:%s151]
                %477 = vst [vmem:[%s159 + $0x4f0] sm:%s151] %v476
                %v478 = vld [vmem:[%s158 + $0x9d8] sm:%s151]
                %479 = vst [vmem:[%s159 + $0x4f8] sm:%s151] %v478
                %v480 = vld [vmem:[%s158 + $0xa00] sm:%s151]
                %481 = vst [vmem:[%s159 + $0x500] sm:%s151] %v480
                %v482 = vld [vmem:[%s158 + $0xa08] sm:%s151]
                %483 = vst [vmem:[%s159 + $0x508] sm:%s151] %v482
                %v484 = vld [vmem:[%s158 + $0xa10] sm:%s151]
                %485 = vst [vmem:[%s159 + $0x510] sm:%s151] %v484
                %v486 = vld [vmem:[%s158 + $0xa18] sm:%s151]
                %487 = vst [vmem:[%s159 + $0x518] sm:%s151] %v486
                %v488 = vld [vmem:[%s158 + $0xa40] sm:%s151]
                %489 = vst [vmem:[%s159 + $0x520] sm:%s151] %v488
                %v490 = vld [vmem:[%s158 + $0xa48] sm:%s151]
                %491 = vst [vmem:[%s159 + $0x528] sm:%s151] %v490
                %v492 = vld [vmem:[%s158 + $0xa50] sm:%s151]
                %493 = vst [vmem:[%s159 + $0x530] sm:%s151] %v492
                %v494 = vld [vmem:[%s158 + $0xa58] sm:%s151]
                %495 = vst [vmem:[%s159 + $0x538] sm:%s151] %v494
                %v496 = vld [vmem:[%s158 + $0xa80] sm:%s151]
                %497 = vst [vmem:[%s159 + $0x540] sm:%s151] %v496
                %v498 = vld [vmem:[%s158 + $0xa88] sm:%s151]
                %499 = vst [vmem:[%s159 + $0x548] sm:%s151] %v498
                %v500 = vld [vmem:[%s158 + $0xa90] sm:%s151]
                %501 = vst [vmem:[%s159 + $0x550] sm:%s151] %v500
                %v502 = vld [vmem:[%s158 + $0xa98] sm:%s151]
                %503 = vst [vmem:[%s159 + $0x558] sm:%s151] %v502
                %v504 = vld [vmem:[%s158 + $0xac0] sm:%s151]
                %505 = vst [vmem:[%s159 + $0x560] sm:%s151] %v504
                %v506 = vld [vmem:[%s158 + $0xac8] sm:%s151]
                %507 = vst [vmem:[%s159 + $0x568] sm:%s151] %v506
                %v508 = vld [vmem:[%s158 + $0xad0] sm:%s151]
                %509 = vst [vmem:[%s159 + $0x570] sm:%s151] %v508
                %v510 = vld [vmem:[%s158 + $0xad8] sm:%s151]
                %511 = vst [vmem:[%s159 + $0x578] sm:%s151] %v510
                %v512 = vld [vmem:[%s158 + $0xb00] sm:%s151]
                %513 = vst [vmem:[%s159 + $0x580] sm:%s151] %v512
                %v514 = vld [vmem:[%s158 + $0xb08] sm:%s151]
                %515 = vst [vmem:[%s159 + $0x588] sm:%s151] %v514
                %v516 = vld [vmem:[%s158 + $0xb10] sm:%s151]
                %517 = vst [vmem:[%s159 + $0x590] sm:%s151] %v516
                %v518 = vld [vmem:[%s158 + $0xb18] sm:%s151]
                %519 = vst [vmem:[%s159 + $0x598] sm:%s151] %v518
                %v520 = vld [vmem:[%s158 + $0xb40] sm:%s151]
                %521 = vst [vmem:[%s159 + $0x5a0] sm:%s151] %v520
                %v522 = vld [vmem:[%s158 + $0xb48] sm:%s151]
                %523 = vst [vmem:[%s159 + $0x5a8] sm:%s151] %v522
                %v524 = vld [vmem:[%s158 + $0xb50] sm:%s151]
                %525 = vst [vmem:[%s159 + $0x5b0] sm:%s151] %v524
                %v526 = vld [vmem:[%s158 + $0xb58] sm:%s151]
                %527 = vst [vmem:[%s159 + $0x5b8] sm:%s151] %v526
                %v528 = vld [vmem:[%s158 + $0xb80] sm:%s151]
                %529 = vst [vmem:[%s159 + $0x5c0] sm:%s151] %v528
                %v530 = vld [vmem:[%s158 + $0xb88] sm:%s151]
                %531 = vst [vmem:[%s159 + $0x5c8] sm:%s151] %v530
                %v532 = vld [vmem:[%s158 + $0xb90] sm:%s151]
                %533 = vst [vmem:[%s159 + $0x5d0] sm:%s151] %v532
                %v534 = vld [vmem:[%s158 + $0xb98] sm:%s151]
                %535 = vst [vmem:[%s159 + $0x5d8] sm:%s151] %v534
                %v536 = vld [vmem:[%s158 + $0xbc0] sm:%s151]
                %537 = vst [vmem:[%s159 + $0x5e0] sm:%s151] %v536
                %v538 = vld [vmem:[%s158 + $0xbc8] sm:%s151]
                %539 = vst [vmem:[%s159 + $0x5e8] sm:%s151] %v538
                %v540 = vld [vmem:[%s158 + $0xbd0] sm:%s151]
                %541 = vst [vmem:[%s159 + $0x5f0] sm:%s151] %v540
                %v542 = vld [vmem:[%s158 + $0xbd8] sm:%s151]
                %543 = vst [vmem:[%s159 + $0x5f8] sm:%s151] %v542
                %v544 = vld [vmem:[%s158 + $0xc00] sm:%s151]
                %545 = vst [vmem:[%s159 + $0x600] sm:%s151] %v544
                %v546 = vld [vmem:[%s158 + $0xc08] sm:%s151]
                %547 = vst [vmem:[%s159 + $0x608] sm:%s151] %v546
                %v548 = vld [vmem:[%s158 + $0xc10] sm:%s151]
                %549 = vst [vmem:[%s159 + $0x610] sm:%s151] %v548
                %v550 = vld [vmem:[%s158 + $0xc18] sm:%s151]
                %551 = vst [vmem:[%s159 + $0x618] sm:%s151] %v550
                %v552 = vld [vmem:[%s158 + $0xc40] sm:%s151]
                %553 = vst [vmem:[%s159 + $0x620] sm:%s151] %v552
                %v554 = vld [vmem:[%s158 + $0xc48] sm:%s151]
                %555 = vst [vmem:[%s159 + $0x628] sm:%s151] %v554
                %v556 = vld [vmem:[%s158 + $0xc50] sm:%s151]
                %557 = vst [vmem:[%s159 + $0x630] sm:%s151] %v556
                %v558 = vld [vmem:[%s158 + $0xc58] sm:%s151]
                %559 = vst [vmem:[%s159 + $0x638] sm:%s151] %v558
                %v560 = vld [vmem:[%s158 + $0xc80] sm:%s151]
                %561 = vst [vmem:[%s159 + $0x640] sm:%s151] %v560
                %v562 = vld [vmem:[%s158 + $0xc88] sm:%s151]
                %563 = vst [vmem:[%s159 + $0x648] sm:%s151] %v562
                %v564 = vld [vmem:[%s158 + $0xc90] sm:%s151]
                %565 = vst [vmem:[%s159 + $0x650] sm:%s151] %v564
                %v566 = vld [vmem:[%s158 + $0xc98] sm:%s151]
                %567 = vst [vmem:[%s159 + $0x658] sm:%s151] %v566
                %v568 = vld [vmem:[%s158 + $0xcc0] sm:%s151]
                %569 = vst [vmem:[%s159 + $0x660] sm:%s151] %v568
                %v570 = vld [vmem:[%s158 + $0xcc8] sm:%s151]
                %571 = vst [vmem:[%s159 + $0x668] sm:%s151] %v570
                %v572 = vld [vmem:[%s158 + $0xcd0] sm:%s151]
                %573 = vst [vmem:[%s159 + $0x670] sm:%s151] %v572
                %v574 = vld [vmem:[%s158 + $0xcd8] sm:%s151]
                %575 = vst [vmem:[%s159 + $0x678] sm:%s151] %v574
                %v576 = vld [vmem:[%s158 + $0xd00] sm:%s151]
                %577 = vst [vmem:[%s159 + $0x680] sm:%s151] %v576
                %v578 = vld [vmem:[%s158 + $0xd08] sm:%s151]
                %579 = vst [vmem:[%s159 + $0x688] sm:%s151] %v578
                %v580 = vld [vmem:[%s158 + $0xd10] sm:%s151]
                %581 = vst [vmem:[%s159 + $0x690] sm:%s151] %v580
                %v582 = vld [vmem:[%s158 + $0xd18] sm:%s151]
                %583 = vst [vmem:[%s159 + $0x698] sm:%s151] %v582
                %v584 = vld [vmem:[%s158 + $0xd40] sm:%s151]
                %585 = vst [vmem:[%s159 + $0x6a0] sm:%s151] %v584
                %v586 = vld [vmem:[%s158 + $0xd48] sm:%s151]
                %587 = vst [vmem:[%s159 + $0x6a8] sm:%s151] %v586
                %v588 = vld [vmem:[%s158 + $0xd50] sm:%s151]
                %589 = vst [vmem:[%s159 + $0x6b0] sm:%s151] %v588
                %v590 = vld [vmem:[%s158 + $0xd58] sm:%s151]
                %591 = vst [vmem:[%s159 + $0x6b8] sm:%s151] %v590
                %v592 = vld [vmem:[%s158 + $0xd80] sm:%s151]
                %593 = vst [vmem:[%s159 + $0x6c0] sm:%s151] %v592
                %v594 = vld [vmem:[%s158 + $0xd88] sm:%s151]
                %595 = vst [vmem:[%s159 + $0x6c8] sm:%s151] %v594
                %v596 = vld [vmem:[%s158 + $0xd90] sm:%s151]
                %597 = vst [vmem:[%s159 + $0x6d0] sm:%s151] %v596
                %v598 = vld [vmem:[%s158 + $0xd98] sm:%s151]
                %599 = vst [vmem:[%s159 + $0x6d8] sm:%s151] %v598
                %v600 = vld [vmem:[%s158 + $0xdc0] sm:%s151]
                %601 = vst [vmem:[%s159 + $0x6e0] sm:%s151] %v600
                %v602 = vld [vmem:[%s158 + $0xdc8] sm:%s151]
                %603 = vst [vmem:[%s159 + $0x6e8] sm:%s151] %v602
                %v604 = vld [vmem:[%s158 + $0xdd0] sm:%s151]
                %605 = vst [vmem:[%s159 + $0x6f0] sm:%s151] %v604
                %v606 = vld [vmem:[%s158 + $0xdd8] sm:%s151]
                %607 = vst [vmem:[%s159 + $0x6f8] sm:%s151] %v606
                %v608 = vld [vmem:[%s158 + $0xe00] sm:%s151]
                %609 = vst [vmem:[%s159 + $0x700] sm:%s151] %v608
                %v610 = vld [vmem:[%s158 + $0xe08] sm:%s151]
                %611 = vst [vmem:[%s159 + $0x708] sm:%s151] %v610
                %v612 = vld [vmem:[%s158 + $0xe10] sm:%s151]
                %613 = vst [vmem:[%s159 + $0x710] sm:%s151] %v612
                %v614 = vld [vmem:[%s158 + $0xe18] sm:%s151]
                %615 = vst [vmem:[%s159 + $0x718] sm:%s151] %v614
                %v616 = vld [vmem:[%s158 + $0xe40] sm:%s151]
                %617 = vst [vmem:[%s159 + $0x720] sm:%s151] %v616
                %v618 = vld [vmem:[%s158 + $0xe48] sm:%s151]
                %619 = vst [vmem:[%s159 + $0x728] sm:%s151] %v618
                %v620 = vld [vmem:[%s158 + $0xe50] sm:%s151]
                %621 = vst [vmem:[%s159 + $0x730] sm:%s151] %v620
                %v622 = vld [vmem:[%s158 + $0xe58] sm:%s151]
                %623 = vst [vmem:[%s159 + $0x738] sm:%s151] %v622
                %v624 = vld [vmem:[%s158 + $0xe80] sm:%s151]
                %625 = vst [vmem:[%s159 + $0x740] sm:%s151] %v624
                %v626 = vld [vmem:[%s158 + $0xe88] sm:%s151]
                %627 = vst [vmem:[%s159 + $0x748] sm:%s151] %v626
                %v628 = vld [vmem:[%s158 + $0xe90] sm:%s151]
                %629 = vst [vmem:[%s159 + $0x750] sm:%s151] %v628
                %v630 = vld [vmem:[%s158 + $0xe98] sm:%s151]
                %631 = vst [vmem:[%s159 + $0x758] sm:%s151] %v630
                %v632 = vld [vmem:[%s158 + $0xec0] sm:%s151]
                %633 = vst [vmem:[%s159 + $0x760] sm:%s151] %v632
                %v634 = vld [vmem:[%s158 + $0xec8] sm:%s151]
                %635 = vst [vmem:[%s159 + $0x768] sm:%s151] %v634
                %v636 = vld [vmem:[%s158 + $0xed0] sm:%s151]
                %637 = vst [vmem:[%s159 + $0x770] sm:%s151] %v636
                %v638 = vld [vmem:[%s158 + $0xed8] sm:%s151]
                %639 = vst [vmem:[%s159 + $0x778] sm:%s151] %v638
                %v640 = vld [vmem:[%s158 + $0xf00] sm:%s151]
                %641 = vst [vmem:[%s159 + $0x780] sm:%s151] %v640
                %v642 = vld [vmem:[%s158 + $0xf08] sm:%s151]
                %643 = vst [vmem:[%s159 + $0x788] sm:%s151] %v642
                %v644 = vld [vmem:[%s158 + $0xf10] sm:%s151]
                %645 = vst [vmem:[%s159 + $0x790] sm:%s151] %v644
                %v646 = vld [vmem:[%s158 + $0xf18] sm:%s151]
                %647 = vst [vmem:[%s159 + $0x798] sm:%s151] %v646
                %v648 = vld [vmem:[%s158 + $0xf40] sm:%s151]
                %649 = vst [vmem:[%s159 + $0x7a0] sm:%s151] %v648
                %v650 = vld [vmem:[%s158 + $0xf48] sm:%s151]
                %651 = vst [vmem:[%s159 + $0x7a8] sm:%s151] %v650
                %v652 = vld [vmem:[%s158 + $0xf50] sm:%s151]
                %653 = vst [vmem:[%s159 + $0x7b0] sm:%s151] %v652
                %v654 = vld [vmem:[%s158 + $0xf58] sm:%s151]
                %655 = vst [vmem:[%s159 + $0x7b8] sm:%s151] %v654
                %v656 = vld [vmem:[%s158 + $0xf80] sm:%s151]
                %657 = vst [vmem:[%s159 + $0x7c0] sm:%s151] %v656
                %v658 = vld [vmem:[%s158 + $0xf88] sm:%s151]
                %659 = vst [vmem:[%s159 + $0x7c8] sm:%s151] %v658
                %v660 = vld [vmem:[%s158 + $0xf90] sm:%s151]
                %661 = vst [vmem:[%s159 + $0x7d0] sm:%s151] %v660
                %v662 = vld [vmem:[%s158 + $0xf98] sm:%s151]
                %663 = vst [vmem:[%s159 + $0x7d8] sm:%s151] %v662
                %v664 = vld [vmem:[%s158 + $0xfc0] sm:%s151]
                %665 = vst [vmem:[%s159 + $0x7e0] sm:%s151] %v664
                %v666 = vld [vmem:[%s158 + $0xfc8] sm:%s151]
                %667 = vst [vmem:[%s159 + $0x7e8] sm:%s151] %v666
                %v668 = vld [vmem:[%s158 + $0xfd0] sm:%s151]
                %669 = vst [vmem:[%s159 + $0x7f0] sm:%s151] %v668
                %v670 = vld [vmem:[%s158 + $0xfd8] sm:%s151]
                %671 = vst [vmem:[%s159 + $0x7f8] sm:%s151] %v670
                %v672 = vld [vmem:[%s158 + $0x1000] sm:%s151]
                %673 = vst [vmem:[%s159 + $0x800] sm:%s151] %v672
                %v674 = vld [vmem:[%s158 + $0x1008] sm:%s151]
                %675 = vst [vmem:[%s159 + $0x808] sm:%s151] %v674
                %v676 = vld [vmem:[%s158 + $0x1010] sm:%s151]
                %677 = vst [vmem:[%s159 + $0x810] sm:%s151] %v676
                %v678 = vld [vmem:[%s158 + $0x1018] sm:%s151]
                %679 = vst [vmem:[%s159 + $0x818] sm:%s151] %v678
                %v680 = vld [vmem:[%s158 + $0x1040] sm:%s151]
                %681 = vst [vmem:[%s159 + $0x820] sm:%s151] %v680
                %v682 = vld [vmem:[%s158 + $0x1048] sm:%s151]
                %683 = vst [vmem:[%s159 + $0x828] sm:%s151] %v682
                %v684 = vld [vmem:[%s158 + $0x1050] sm:%s151]
                %685 = vst [vmem:[%s159 + $0x830] sm:%s151] %v684
                %v686 = vld [vmem:[%s158 + $0x1058] sm:%s151]
                %687 = vst [vmem:[%s159 + $0x838] sm:%s151] %v686
                %v688 = vld [vmem:[%s158 + $0x1080] sm:%s151]
                %689 = vst [vmem:[%s159 + $0x840] sm:%s151] %v688
                %v690 = vld [vmem:[%s158 + $0x1088] sm:%s151]
                %691 = vst [vmem:[%s159 + $0x848] sm:%s151] %v690
                %v692 = vld [vmem:[%s158 + $0x1090] sm:%s151]
                %693 = vst [vmem:[%s159 + $0x850] sm:%s151] %v692
                %v694 = vld [vmem:[%s158 + $0x1098] sm:%s151]
                %695 = vst [vmem:[%s159 + $0x858] sm:%s151] %v694
                %v696 = vld [vmem:[%s158 + $0x10c0] sm:%s151]
                %697 = vst [vmem:[%s159 + $0x860] sm:%s151] %v696
                %v698 = vld [vmem:[%s158 + $0x10c8] sm:%s151]
                %699 = vst [vmem:[%s159 + $0x868] sm:%s151] %v698
                %v700 = vld [vmem:[%s158 + $0x10d0] sm:%s151]
                %701 = vst [vmem:[%s159 + $0x870] sm:%s151] %v700
                %v702 = vld [vmem:[%s158 + $0x10d8] sm:%s151]
                %703 = vst [vmem:[%s159 + $0x878] sm:%s151] %v702
                %v704 = vld [vmem:[%s158 + $0x1100] sm:%s151]
                %705 = vst [vmem:[%s159 + $0x880] sm:%s151] %v704
                %v706 = vld [vmem:[%s158 + $0x1108] sm:%s151]
                %707 = vst [vmem:[%s159 + $0x888] sm:%s151] %v706
                %v708 = vld [vmem:[%s158 + $0x1110] sm:%s151]
                %709 = vst [vmem:[%s159 + $0x890] sm:%s151] %v708
                %v710 = vld [vmem:[%s158 + $0x1118] sm:%s151]
                %711 = vst [vmem:[%s159 + $0x898] sm:%s151] %v710
                %v712 = vld [vmem:[%s158 + $0x1140] sm:%s151]
                %713 = vst [vmem:[%s159 + $0x8a0] sm:%s151] %v712
                %v714 = vld [vmem:[%s158 + $0x1148] sm:%s151]
                %715 = vst [vmem:[%s159 + $0x8a8] sm:%s151] %v714
                %v716 = vld [vmem:[%s158 + $0x1150] sm:%s151]
                %717 = vst [vmem:[%s159 + $0x8b0] sm:%s151] %v716
                %v718 = vld [vmem:[%s158 + $0x1158] sm:%s151]
                %719 = vst [vmem:[%s159 + $0x8b8] sm:%s151] %v718
                %v720 = vld [vmem:[%s158 + $0x1180] sm:%s151]
                %721 = vst [vmem:[%s159 + $0x8c0] sm:%s151] %v720
                %v722 = vld [vmem:[%s158 + $0x1188] sm:%s151]
                %723 = vst [vmem:[%s159 + $0x8c8] sm:%s151] %v722
                %v724 = vld [vmem:[%s158 + $0x1190] sm:%s151]
                %725 = vst [vmem:[%s159 + $0x8d0] sm:%s151] %v724
                %v726 = vld [vmem:[%s158 + $0x1198] sm:%s151]
                %727 = vst [vmem:[%s159 + $0x8d8] sm:%s151] %v726
                %v728 = vld [vmem:[%s158 + $0x11c0] sm:%s151]
                %729 = vst [vmem:[%s159 + $0x8e0] sm:%s151] %v728
                %v730 = vld [vmem:[%s158 + $0x11c8] sm:%s151]
                %731 = vst [vmem:[%s159 + $0x8e8] sm:%s151] %v730
                %v732 = vld [vmem:[%s158 + $0x11d0] sm:%s151]
                %733 = vst [vmem:[%s159 + $0x8f0] sm:%s151] %v732
                %v734 = vld [vmem:[%s158 + $0x11d8] sm:%s151]
                %735 = vst [vmem:[%s159 + $0x8f8] sm:%s151] %v734
              $region41: #{_lambda_.3} parent=35 // loop_footer
                %s157 = sadd.s32 1, %s153
              $region42: #{_lambda_.3} parent=35 // loop_footer_branch
                %152 = sbr.rel target = $region38
              $region43: #{_lambda_.3} parent=35 // loop_exit
                _
            $region36: #{_lambda_.3} parent=27 // pred_fallthru
              _
          $region28: #{_lambda_.3} parent=23 // pred_fallthru
            _
          %1324 = vnop
        $region24: #{_lambda_.3} parent=15 // pred_fallthru
          _
      $region16: #{_lambda_.3} parent=5 // pred_fallthru
        _
      %p1325 = scmp.le.s32.totalorder 1, %s8
      %p1326 = scmp.lt.s32.totalorder %s8, 5
      %p1327 = pnand %p1325, %p1326
      %p1328 = pneg %p1327
      // Predicated region
      $region59: #{_lambda_.3} parent=5 // pred_check
        _
      $region60: #{_lambda_.3} parent=5 // pred_check_branch
        %1330 = sbr.rel (%p1327) target = $region62
      $region61: #{_lambda_.3} parent=5 // pred_region
        %s1331 = ssub.s32 %s8, 1
        %s1332 = sand.u32 %s61, 1
        %s1333 = sand.u32 %s61, 1
        %s1334 = smul.addr %s1333, 2304
        %s1335 = scalar_lea.vmem [#allocation3], %s1334
        // Predicated region
        $region63: #{_lambda_.3} parent=61 // pred_check
          %p1336 = pneg %p74
        $region64: #{_lambda_.3} parent=61 // pred_check_branch
          %1338 = sbr.rel (%p1336) target = $region66
        $region65: #{_lambda_.3} parent=61 // pred_region
          _
        $region66: #{_lambda_.3} parent=61 // pred_fallthru
          _
        %s1339 = smul.u32 4, %s17
        %p1340 = scmp.lt.s32.totalorder %s18, 1
        %s1341 = scalar_select %p1340, %s18, 1
        %p1342 = scmp.lt.s32.totalorder %s1339, 7
        %s1343 = scalar_select %p1342, %s1339, 7
        %s1344 = smul.addr %s1341, 8
        %s1345 = sadd.s32 %s1343, %s1344
        %s1346 = smul.addr %s1345, 8
        %s1347 = scalar_lea.vmem %s0, %s1346
        %p1348 = pneg %p48
        %p1349 = pneg %p45
        %s1350 = sand.u32 %s61, 1
        %s1351 = sand.u32 %s61, 1
        %s1352 = smul.addr %s1351, 2304
        %s1353 = scalar_lea.vmem [#allocation3], %s1352
        %p1354 = pneg %p74
        %p1355 = pneg %p71
        %p1356 = pneg %p102
        %p1357 = pneg %p99
        %s1358 = smul.u32 4, %s17
        %p1359 = scmp.lt.s32.totalorder %s18, 1
        %s1360 = scalar_select %p1359, %s18, 1
        %p1361 = scmp.lt.s32.totalorder %s1358, 7
        %s1362 = scalar_select %p1361, %s1358, 7
        %s1363 = smul.addr %s1360, 8
        %s1364 = sadd.s32 %s1362, %s1363
        %s1365 = smul.addr %s1364, 8
        %s1366 = scalar_lea.vmem %s2, %s1365
        %s1367 = smul.u32 4, %s17
        %p1368 = scmp.lt.s32.totalorder %s18, 1
        %s1369 = scalar_select %p1368, %s18, 1
        %p1370 = scmp.lt.s32.totalorder %s1367, 7
        %s1371 = scalar_select %p1370, %s1367, 7
        %s1372 = smul.addr %s1369, 8
        %s1373 = sadd.s32 %s1371, %s1372
        %s1374 = smul.addr %s1373, 8
        %s1375 = scalar_lea.vmem %s0, %s1374
        %s1376 = smul.u32 4, %s17
        %s1377 = smul.u32 4, %s17
        %s1378 = smul.u32 4, %s17
        %p1379 = scmp.lt.s32.totalorder %s18, 1
        %s1380 = scalar_select %p1379, %s18, 1
        %p1381 = scmp.lt.s32.totalorder %s1378, 7
        %s1382 = scalar_select %p1381, %s1378, 7
        %s1383 = smul.addr %s1380, 8
        %s1384 = sadd.s32 %s1382, %s1383
        %s1385 = smul.addr %s1384, 8
        %s1386 = scalar_lea.vmem %s2, %s1385
        %s1387 = smul.u32 4, %s17
        %1388 = vst [vmem:[#allocation2] sm:$0xff] 0.0
        %1389 = vst [vmem:[#allocation2 + $0x18] sm:$0xff] 0.0
        %1390 = vst [vmem:[#allocation2 + $0x30] sm:$0xff] 0.0
        %1391 = vst [vmem:[#allocation2 + $0x48] sm:$0xff] 0.0
        %p1392 = scmp.eq.s32.totalorder %s17, 1
        %p1393 = scmp.ne.s32.totalorder %s17, 1
        // Predicated region
        $region67: #{_lambda_.3} parent=61 // pred_check
          %p1394 = pneg %p1393
        $region68: #{_lambda_.3} parent=61 // pred_check_branch
          %1396 = sbr.rel (%p1394) target = $region70
        $region69: #{_lambda_.3} parent=61 // pred_region
          %v1397 = vld [vmem:[%s1375] sm:$0xff]
          %v1398 = vld [vmem:[%s1375 + $0x8] sm:$0xff]
          %v1399 = vld [vmem:[%s1375 + $0x10] sm:$0xff]
          %v1400 = vld [vmem:[%s1375 + $0x18] sm:$0xff]
          %vm1401 = vcmask 261120
          %1402 = vst.msk [vmem:[#allocation2 + $0x8] sm:$0xff] %vm1401, %v1397
          %1403 = vst.msk [vmem:[#allocation2 + $0x20] sm:$0xff] %vm1401, %v1398
          %1404 = vst.msk [vmem:[#allocation2 + $0x38] sm:$0xff] %vm1401, %v1399
          %1405 = vst.msk [vmem:[#allocation2 + $0x50] sm:$0xff] %vm1401, %v1400
          %vm1406 = vcmask 1047808
          %1407 = vst.msk [vmem:[#allocation2 + $0x8] sm:$0xff] %vm1406, 0.0
          %1408 = vst [vmem:[#allocation2 + $0x10] sm:$0xff] 0.0
          %1409 = vst.msk [vmem:[#allocation2 + $0x20] sm:$0xff] %vm1406, 0.0
          %1410 = vst [vmem:[#allocation2 + $0x28] sm:$0xff] 0.0
          %1411 = vst.msk [vmem:[#allocation2 + $0x38] sm:$0xff] %vm1406, 0.0
          %1412 = vst [vmem:[#allocation2 + $0x40] sm:$0xff] 0.0
          %1413 = vst.msk [vmem:[#allocation2 + $0x50] sm:$0xff] %vm1406, 0.0
          %1414 = vst [vmem:[#allocation2 + $0x58] sm:$0xff] 0.0
        $region70: #{_lambda_.3} parent=61 // pred_fallthru
          _
        // Predicated region
        $region71: #{_lambda_.3} parent=61 // pred_check
          %p1415 = pneg %p1392
        $region72: #{_lambda_.3} parent=61 // pred_check_branch
          %1417 = sbr.rel (%p1415) target = $region74
        $region73: #{_lambda_.3} parent=61 // pred_region
          %v1418 = vld [vmem:[%s1375] sm:$0xff]
          %v1419 = vld [vmem:[%s1375 + $0x8] sm:$0xff]
          %v1420 = vld [vmem:[%s1375 + $0x10] sm:$0xff]
          %v1421 = vld [vmem:[%s1375 + $0x18] sm:$0xff]
          %1426 = vrot.lane.b32.xlu0 %v1418, 1
          %v1427 = vpop.permute.xlu0 %1426
          %1428 = vrot.lane.b32.xlu0 %v1419, 1
          %v1429 = vpop.permute.xlu0 %1428
          %1430 = vrot.lane.b32.xlu0 %v1420, 1
          %v1431 = vpop.permute.xlu0 %1430
          %1432 = vrot.lane.b32.xlu0 %v1421, 1
          %v1433 = vpop.permute.xlu0 %1432
          %v1438 = vsub.f32 %v1418, %v1427
          %v1439 = vsub.f32 %v1419, %v1429
          %v1440 = vsub.f32 %v1420, %v1431
          %v1441 = vsub.f32 %v1421, %v1433
          %1446 = vrot.lane.b32.xlu0 %v1438, 127
          %v1447 = vpop.permute.xlu0 %1446
          %1448 = vrot.lane.b32.xlu0 %v1439, 127
          %v1449 = vpop.permute.xlu0 %1448
          %1450 = vrot.lane.b32.xlu0 %v1440, 127
          %v1451 = vpop.permute.xlu0 %1450
          %1452 = vrot.lane.b32.xlu0 %v1441, 127
          %v1453 = vpop.permute.xlu0 %1452
          %vm1458 = vcmask 252928
          %1459 = vst.msk [vmem:[#allocation2 + $0x8] sm:$0xff] %vm1458, %v1447
          %1460 = vst.msk [vmem:[#allocation2 + $0x20] sm:$0xff] %vm1458, %v1449
          %1461 = vst.msk [vmem:[#allocation2 + $0x38] sm:$0xff] %vm1458, %v1451
          %1462 = vst.msk [vmem:[#allocation2 + $0x50] sm:$0xff] %vm1458, %v1453
          %vm1463 = vcmask 1047800
          %1464 = vst.msk [vmem:[#allocation2 + $0x8] sm:$0xff] %vm1463, 0.0
          %1465 = vst [vmem:[#allocation2 + $0x10] sm:$0xff] 0.0
          %1466 = vst.msk [vmem:[#allocation2 + $0x20] sm:$0xff] %vm1463, 0.0
          %1467 = vst [vmem:[#allocation2 + $0x28] sm:$0xff] 0.0
          %1468 = vst.msk [vmem:[#allocation2 + $0x38] sm:$0xff] %vm1463, 0.0
          %1469 = vst [vmem:[#allocation2 + $0x40] sm:$0xff] 0.0
          %1470 = vst.msk [vmem:[#allocation2 + $0x50] sm:$0xff] %vm1463, 0.0
          %1471 = vst [vmem:[#allocation2 + $0x58] sm:$0xff] 0.0
        $region74: #{_lambda_.3} parent=61 // pred_fallthru
          _
        %s1472 = scalar_select %p1392, 31, 32
        %v1473 = vlaneseq
        %v1474 = vand.u32 %v1473, 127
        %v1475 = vstv %s1472
        %vm1476 = vcmp.lt.s32.totalorder %v1474, %v1475
        %v1477 = vsel %vm1476, 1, 0
        %v1478 = vcvt.s32.f32 %v1477
        %v1479 = vld [vmem:[#allocation2] sm:$0xff]
        %v1480 = vld [vmem:[#allocation2 + $0x8] sm:$0xff]
        %v1481 = vld [vmem:[#allocation2 + $0x18] sm:$0xff]
        %v1482 = vld [vmem:[#allocation2 + $0x20] sm:$0xff]
        %v1483 = vld [vmem:[#allocation2 + $0x10] sm:$0xff]
        %v1484 = vld [vmem:[#allocation2 + $0x28] sm:$0xff]
        %v1485 = vld [vmem:[%s1335] sm:$0xff]
        %v1486 = vld [vmem:[%s1335 + $0x8] sm:$0xff]
        %1491 = vrot.lane.b32.xlu0 %v1479, 8
        %v1492 = vpop.permute.xlu0 %1491
        %1493 = vrot.lane.b32.xlu0 %v1480, 8
        %v1494 = vpop.permute.xlu0 %1493
        %1495 = vrot.lane.b32.xlu0 %v1481, 8
        %v1496 = vpop.permute.xlu0 %1495
        %1497 = vrot.lane.b32.xlu0 %v1482, 8
        %v1498 = vpop.permute.xlu0 %1497
        %vm1499 = vcmask 64512
        %v1500 = vsel %vm1499, %v1492, %v1494
        %v1501 = vsel %vm1499, %v1496, %v1498
        %v1504 = vmul.f32 %v1485, %v1500
        %v1505 = vmul.f32 %v1486, %v1501
        %s1506 = scalar_lea.vmem %s1335, 256 [#allocation3]
        %v1507 = vld [vmem:[%s1506] sm:$0xff]
        %v1508 = vld [vmem:[%s1506 + $0x8] sm:$0xff]
        %1509 = vrot.lane.b32.xlu0 %v1479, 6
        %v1510 = vpop.permute.xlu0 %1509
        %1511 = vrot.lane.b32.xlu0 %v1480, 6
        %v1512 = vpop.permute.xlu0 %1511
        %1513 = vrot.lane.b32.xlu0 %v1481, 6
        %v1514 = vpop.permute.xlu0 %1513
        %1515 = vrot.lane.b32.xlu0 %v1482, 6
        %v1516 = vpop.permute.xlu0 %1515
        %vm1517 = vcmask 48128
        %v1518 = vsel %vm1517, %v1510, %v1512
        %v1519 = vsel %vm1517, %v1514, %v1516
        %v1522 = vmul.f32 %v1507, %v1518
        %v1523 = vmul.f32 %v1508, %v1519
        %v1524 = vadd.f32 %v1504, %v1522
        %v1525 = vadd.f32 %v1505, %v1523
        %s1526 = scalar_lea.vmem %s1335, 512 [#allocation3]
        %v1527 = vld [vmem:[%s1526] sm:$0xff]
        %v1528 = vld [vmem:[%s1526 + $0x8] sm:$0xff]
        %1529 = vrot.lane.b32.xlu0 %v1479, 4
        %v1530 = vpop.permute.xlu0 %1529
        %1531 = vrot.lane.b32.xlu0 %v1480, 4
        %v1532 = vpop.permute.xlu0 %1531
        %1533 = vrot.lane.b32.xlu0 %v1481, 4
        %v1534 = vpop.permute.xlu0 %1533
        %1535 = vrot.lane.b32.xlu0 %v1482, 4
        %v1536 = vpop.permute.xlu0 %1535
        %vm1537 = vcmask 31744
        %v1538 = vsel %vm1537, %v1530, %v1532
        %v1539 = vsel %vm1537, %v1534, %v1536
        %v1542 = vmul.f32 %v1527, %v1538
        %v1543 = vmul.f32 %v1528, %v1539
        %v1544 = vadd.f32 %v1524, %v1542
        %v1545 = vadd.f32 %v1525, %v1543
        %s1546 = scalar_lea.vmem %s1335, 768 [#allocation3]
        %v1547 = vld [vmem:[%s1546] sm:$0xff]
        %v1548 = vld [vmem:[%s1546 + $0x8] sm:$0xff]
        %1549 = vrot.lane.b32.xlu0 %v1479, 2
        %v1550 = vpop.permute.xlu0 %1549
        %1551 = vrot.lane.b32.xlu0 %v1480, 2
        %v1552 = vpop.permute.xlu0 %1551
        %1553 = vrot.lane.b32.xlu0 %v1481, 2
        %v1554 = vpop.permute.xlu0 %1553
        %1555 = vrot.lane.b32.xlu0 %v1482, 2
        %v1556 = vpop.permute.xlu0 %1555
        %vm1557 = vcmask 15360
        %v1558 = vsel %vm1557, %v1550, %v1552
        %v1559 = vsel %vm1557, %v1554, %v1556
        %v1562 = vmul.f32 %v1547, %v1558
        %v1563 = vmul.f32 %v1548, %v1559
        %v1564 = vadd.f32 %v1544, %v1562
        %v1565 = vadd.f32 %v1545, %v1563
        %s1566 = scalar_lea.vmem %s1335, 1024 [#allocation3]
        %v1567 = vld [vmem:[%s1566] sm:$0xff]
        %v1568 = vld [vmem:[%s1566 + $0x8] sm:$0xff]
        %v1569 = vmul.f32 %v1567, %v1480
        %v1570 = vmul.f32 %v1568, %v1482
        %v1571 = vadd.f32 %v1564, %v1569
        %v1572 = vadd.f32 %v1565, %v1570
        %s1573 = scalar_lea.vmem %s1335, 1280 [#allocation3]
        %v1574 = vld [vmem:[%s1573] sm:$0xff]
        %v1575 = vld [vmem:[%s1573 + $0x8] sm:$0xff]
        %1578 = vrot.lane.b32.xlu0 %v1480, 126
        %v1579 = vpop.permute.xlu0 %1578
        %1580 = vrot.lane.b32.xlu0 %v1483, 126
        %v1581 = vpop.permute.xlu0 %1580
        %1582 = vrot.lane.b32.xlu0 %v1482, 126
        %v1583 = vpop.permute.xlu0 %1582
        %1584 = vrot.lane.b32.xlu0 %v1484, 126
        %v1585 = vpop.permute.xlu0 %1584
        %vm1586 = vcmask 1031168
        %v1587 = vsel %vm1586, %v1579, %v1581
        %v1588 = vsel %vm1586, %v1583, %v1585
        %v1591 = vmul.f32 %v1574, %v1587
        %v1592 = vmul.f32 %v1575, %v1588
        %v1593 = vadd.f32 %v1571, %v1591
        %v1594 = vadd.f32 %v1572, %v1592
        %s1595 = scalar_lea.vmem %s1335, 1536 [#allocation3]
        %v1596 = vld [vmem:[%s1595] sm:$0xff]
        %v1597 = vld [vmem:[%s1595 + $0x8] sm:$0xff]
        %1598 = vrot.lane.b32.xlu0 %v1480, 124
        %v1599 = vpop.permute.xlu0 %1598
        %1600 = vrot.lane.b32.xlu0 %v1483, 124
        %v1601 = vpop.permute.xlu0 %1600
        %1602 = vrot.lane.b32.xlu0 %v1482, 124
        %v1603 = vpop.permute.xlu0 %1602
        %1604 = vrot.lane.b32.xlu0 %v1484, 124
        %v1605 = vpop.permute.xlu0 %1604
        %vm1606 = vcmask 1014784
        %v1607 = vsel %vm1606, %v1599, %v1601
        %v1608 = vsel %vm1606, %v1603, %v1605
        %v1611 = vmul.f32 %v1596, %v1607
        %v1612 = vmul.f32 %v1597, %v1608
        %v1613 = vadd.f32 %v1593, %v1611
        %v1614 = vadd.f32 %v1594, %v1612
        %s1615 = scalar_lea.vmem %s1335, 1792 [#allocation3]
        %v1616 = vld [vmem:[%s1615] sm:$0xff]
        %v1617 = vld [vmem:[%s1615 + $0x8] sm:$0xff]
        %1618 = vrot.lane.b32.xlu0 %v1480, 122
        %v1619 = vpop.permute.xlu0 %1618
        %1620 = vrot.lane.b32.xlu0 %v1483, 122
        %v1621 = vpop.permute.xlu0 %1620
        %1622 = vrot.lane.b32.xlu0 %v1482, 122
        %v1623 = vpop.permute.xlu0 %1622
        %1624 = vrot.lane.b32.xlu0 %v1484, 122
        %v1625 = vpop.permute.xlu0 %1624
        %vm1626 = vcmask 998400
        %v1627 = vsel %vm1626, %v1619, %v1621
        %v1628 = vsel %vm1626, %v1623, %v1625
        %v1631 = vmul.f32 %v1616, %v1627
        %v1632 = vmul.f32 %v1617, %v1628
        %v1633 = vadd.f32 %v1613, %v1631
        %v1634 = vadd.f32 %v1614, %v1632
        %s1635 = scalar_lea.vmem %s1335, 2048 [#allocation3]
        %v1636 = vld [vmem:[%s1635] sm:$0xff]
        %v1637 = vld [vmem:[%s1635 + $0x8] sm:$0xff]
        %1638 = vrot.lane.b32.xlu0 %v1480, 120
        %v1639 = vpop.permute.xlu0 %1638
        %1640 = vrot.lane.b32.xlu0 %v1483, 120
        %v1641 = vpop.permute.xlu0 %1640
        %1642 = vrot.lane.b32.xlu0 %v1482, 120
        %v1643 = vpop.permute.xlu0 %1642
        %1644 = vrot.lane.b32.xlu0 %v1484, 120
        %v1645 = vpop.permute.xlu0 %1644
        %vm1646 = vcmask 982016
        %v1647 = vsel %vm1646, %v1639, %v1641
        %v1648 = vsel %vm1646, %v1643, %v1645
        %v1651 = vmul.f32 %v1636, %v1647
        %v1652 = vmul.f32 %v1637, %v1648
        %v1653 = vadd.f32 %v1633, %v1651
        %v1654 = vadd.f32 %v1634, %v1652
        %s1655 = scalar_lea.vmem %s1335, 32 [#allocation3]
        %v1656 = vld [vmem:[%s1655] sm:$0xff]
        %v1657 = vld [vmem:[%s1655 + $0x8] sm:$0xff]
        %v1658 = vmul.f32 %v1656, %v1500
        %v1659 = vmul.f32 %v1657, %v1501
        %s1660 = scalar_lea.vmem %s1335, 288 [#allocation3]
        %v1661 = vld [vmem:[%s1660] sm:$0xff]
        %v1662 = vld [vmem:[%s1660 + $0x8] sm:$0xff]
        %v1663 = vmul.f32 %v1661, %v1518
        %v1664 = vmul.f32 %v1662, %v1519
        %v1665 = vadd.f32 %v1658, %v1663
        %v1666 = vadd.f32 %v1659, %v1664
        %s1667 = scalar_lea.vmem %s1335, 544 [#allocation3]
        %v1668 = vld [vmem:[%s1667] sm:$0xff]
        %v1669 = vld [vmem:[%s1667 + $0x8] sm:$0xff]
        %v1670 = vmul.f32 %v1668, %v1538
        %v1671 = vmul.f32 %v1669, %v1539
        %v1672 = vadd.f32 %v1665, %v1670
        %v1673 = vadd.f32 %v1666, %v1671
        %s1674 = scalar_lea.vmem %s1335, 800 [#allocation3]
        %v1675 = vld [vmem:[%s1674] sm:$0xff]
        %v1676 = vld [vmem:[%s1674 + $0x8] sm:$0xff]
        %v1677 = vmul.f32 %v1675, %v1558
        %v1678 = vmul.f32 %v1676, %v1559
        %v1679 = vadd.f32 %v1672, %v1677
        %v1680 = vadd.f32 %v1673, %v1678
        %s1681 = scalar_lea.vmem %s1335, 1056 [#allocation3]
        %v1682 = vld [vmem:[%s1681] sm:$0xff]
        %v1683 = vld [vmem:[%s1681 + $0x8] sm:$0xff]
        %v1684 = vmul.f32 %v1682, %v1480
        %v1685 = vmul.f32 %v1683, %v1482
        %v1686 = vadd.f32 %v1679, %v1684
        %v1687 = vadd.f32 %v1680, %v1685
        %s1688 = scalar_lea.vmem %s1335, 1312 [#allocation3]
        %v1689 = vld [vmem:[%s1688] sm:$0xff]
        %v1690 = vld [vmem:[%s1688 + $0x8] sm:$0xff]
        %v1691 = vmul.f32 %v1689, %v1587
        %v1692 = vmul.f32 %v1690, %v1588
        %v1693 = vadd.f32 %v1686, %v1691
        %v1694 = vadd.f32 %v1687, %v1692
        %s1695 = scalar_lea.vmem %s1335, 1568 [#allocation3]
        %v1696 = vld [vmem:[%s1695] sm:$0xff]
        %v1697 = vld [vmem:[%s1695 + $0x8] sm:$0xff]
        %v1698 = vmul.f32 %v1696, %v1607
        %v1699 = vmul.f32 %v1697, %v1608
        %v1700 = vadd.f32 %v1693, %v1698
        %v1701 = vadd.f32 %v1694, %v1699
        %s1702 = scalar_lea.vmem %s1335, 1824 [#allocation3]
        %v1703 = vld [vmem:[%s1702] sm:$0xff]
        %v1704 = vld [vmem:[%s1702 + $0x8] sm:$0xff]
        %v1705 = vmul.f32 %v1703, %v1627
        %v1706 = vmul.f32 %v1704, %v1628
        %v1707 = vadd.f32 %v1700, %v1705
        %v1708 = vadd.f32 %v1701, %v1706
        %s1709 = scalar_lea.vmem %s1335, 2080 [#allocation3]
        %v1710 = vld [vmem:[%s1709] sm:$0xff]
        %v1711 = vld [vmem:[%s1709 + $0x8] sm:$0xff]
        %v1712 = vmul.f32 %v1710, %v1647
        %v1713 = vmul.f32 %v1711, %v1648
        %v1714 = vadd.f32 %v1707, %v1712
        %v1715 = vadd.f32 %v1708, %v1713
        %vm1716 = vcmp.gt.f32.partialorder %v1714, %v1653
        %vm1717 = vcmp.gt.f32.partialorder %v1715, %v1654
        %v1718 = vsel %vm1716, %v1714, %v1653
        %v1719 = vsel %vm1717, %v1715, %v1654
        %v1720 = vsel %vm1716, 1, 0
        %v1721 = vsel %vm1717, 1, 0
        %vm1722 = vcmp.lt.f32.partialorder %v1714, %v1653
        %vm1723 = vcmp.lt.f32.partialorder %v1715, %v1654
        %v1724 = vsel %vm1722, %v1714, %v1653
        %v1725 = vsel %vm1723, %v1715, %v1654
        %v1726 = vsel %vm1722, 1, 0
        %v1727 = vsel %vm1723, 1, 0
        %s1728 = scalar_lea.vmem %s1335, 64 [#allocation3]
        %v1729 = vld [vmem:[%s1728] sm:$0xff]
        %v1730 = vld [vmem:[%s1728 + $0x8] sm:$0xff]
        %v1731 = vmul.f32 %v1729, %v1500
        %v1732 = vmul.f32 %v1730, %v1501
        %s1733 = scalar_lea.vmem %s1335, 320 [#allocation3]
        %v1734 = vld [vmem:[%s1733] sm:$0xff]
        %v1735 = vld [vmem:[%s1733 + $0x8] sm:$0xff]
        %v1736 = vmul.f32 %v1734, %v1518
        %v1737 = vmul.f32 %v1735, %v1519
        %v1738 = vadd.f32 %v1731, %v1736
        %v1739 = vadd.f32 %v1732, %v1737
        %s1740 = scalar_lea.vmem %s1335, 576 [#allocation3]
        %v1741 = vld [vmem:[%s1740] sm:$0xff]
        %v1742 = vld [vmem:[%s1740 + $0x8] sm:$0xff]
        %v1743 = vmul.f32 %v1741, %v1538
        %v1744 = vmul.f32 %v1742, %v1539
        %v1745 = vadd.f32 %v1738, %v1743
        %v1746 = vadd.f32 %v1739, %v1744
        %s1747 = scalar_lea.vmem %s1335, 832 [#allocation3]
        %v1748 = vld [vmem:[%s1747] sm:$0xff]
        %v1749 = vld [vmem:[%s1747 + $0x8] sm:$0xff]
        %v1750 = vmul.f32 %v1748, %v1558
        %v1751 = vmul.f32 %v1749, %v1559
        %v1752 = vadd.f32 %v1745, %v1750
        %v1753 = vadd.f32 %v1746, %v1751
        %s1754 = scalar_lea.vmem %s1335, 1088 [#allocation3]
        %v1755 = vld [vmem:[%s1754] sm:$0xff]
        %v1756 = vld [vmem:[%s1754 + $0x8] sm:$0xff]
        %v1757 = vmul.f32 %v1755, %v1480
        %v1758 = vmul.f32 %v1756, %v1482
        %v1759 = vadd.f32 %v1752, %v1757
        %v1760 = vadd.f32 %v1753, %v1758
        %s1761 = scalar_lea.vmem %s1335, 1344 [#allocation3]
        %v1762 = vld [vmem:[%s1761] sm:$0xff]
        %v1763 = vld [vmem:[%s1761 + $0x8] sm:$0xff]
        %v1764 = vmul.f32 %v1762, %v1587
        %v1765 = vmul.f32 %v1763, %v1588
        %v1766 = vadd.f32 %v1759, %v1764
        %v1767 = vadd.f32 %v1760, %v1765
        %s1768 = scalar_lea.vmem %s1335, 1600 [#allocation3]
        %v1769 = vld [vmem:[%s1768] sm:$0xff]
        %v1770 = vld [vmem:[%s1768 + $0x8] sm:$0xff]
        %v1771 = vmul.f32 %v1769, %v1607
        %v1772 = vmul.f32 %v1770, %v1608
        %v1773 = vadd.f32 %v1766, %v1771
        %v1774 = vadd.f32 %v1767, %v1772
        %s1775 = scalar_lea.vmem %s1335, 1856 [#allocation3]
        %v1776 = vld [vmem:[%s1775] sm:$0xff]
        %v1777 = vld [vmem:[%s1775 + $0x8] sm:$0xff]
        %v1778 = vmul.f32 %v1776, %v1627
        %v1779 = vmul.f32 %v1777, %v1628
        %v1780 = vadd.f32 %v1773, %v1778
        %v1781 = vadd.f32 %v1774, %v1779
        %s1782 = scalar_lea.vmem %s1335, 2112 [#allocation3]
        %v1783 = vld [vmem:[%s1782] sm:$0xff]
        %v1784 = vld [vmem:[%s1782 + $0x8] sm:$0xff]
        %v1785 = vmul.f32 %v1783, %v1647
        %v1786 = vmul.f32 %v1784, %v1648
        %v1787 = vadd.f32 %v1780, %v1785
        %v1788 = vadd.f32 %v1781, %v1786
        %vm1789 = vcmp.gt.f32.partialorder %v1787, %v1718
        %vm1790 = vcmp.gt.f32.partialorder %v1788, %v1719
        %v1791 = vsel %vm1789, %v1787, %v1718
        %v1792 = vsel %vm1790, %v1788, %v1719
        %v1793 = vsel %vm1789, 2, %v1720
        %v1794 = vsel %vm1790, 2, %v1721
        %vm1795 = vcmp.lt.f32.partialorder %v1787, %v1724
        %vm1796 = vcmp.lt.f32.partialorder %v1788, %v1725
        %v1797 = vsel %vm1795, %v1787, %v1724
        %v1798 = vsel %vm1796, %v1788, %v1725
        %v1799 = vsel %vm1795, 2, %v1726
        %v1800 = vsel %vm1796, 2, %v1727
        %s1801 = scalar_lea.vmem %s1335, 96 [#allocation3]
        %v1802 = vld [vmem:[%s1801] sm:$0xff]
        %v1803 = vld [vmem:[%s1801 + $0x8] sm:$0xff]
        %v1804 = vmul.f32 %v1802, %v1500
        %v1805 = vmul.f32 %v1803, %v1501
        %s1806 = scalar_lea.vmem %s1335, 352 [#allocation3]
        %v1807 = vld [vmem:[%s1806] sm:$0xff]
        %v1808 = vld [vmem:[%s1806 + $0x8] sm:$0xff]
        %v1809 = vmul.f32 %v1807, %v1518
        %v1810 = vmul.f32 %v1808, %v1519
        %v1811 = vadd.f32 %v1804, %v1809
        %v1812 = vadd.f32 %v1805, %v1810
        %s1813 = scalar_lea.vmem %s1335, 608 [#allocation3]
        %v1814 = vld [vmem:[%s1813] sm:$0xff]
        %v1815 = vld [vmem:[%s1813 + $0x8] sm:$0xff]
        %v1816 = vmul.f32 %v1814, %v1538
        %v1817 = vmul.f32 %v1815, %v1539
        %v1818 = vadd.f32 %v1811, %v1816
        %v1819 = vadd.f32 %v1812, %v1817
        %s1820 = scalar_lea.vmem %s1335, 864 [#allocation3]
        %v1821 = vld [vmem:[%s1820] sm:$0xff]
        %v1822 = vld [vmem:[%s1820 + $0x8] sm:$0xff]
        %v1823 = vmul.f32 %v1821, %v1558
        %v1824 = vmul.f32 %v1822, %v1559
        %v1825 = vadd.f32 %v1818, %v1823
        %v1826 = vadd.f32 %v1819, %v1824
        %s1827 = scalar_lea.vmem %s1335, 1120 [#allocation3]
        %v1828 = vld [vmem:[%s1827] sm:$0xff]
        %v1829 = vld [vmem:[%s1827 + $0x8] sm:$0xff]
        %v1830 = vmul.f32 %v1828, %v1480
        %v1831 = vmul.f32 %v1829, %v1482
        %v1832 = vadd.f32 %v1825, %v1830
        %v1833 = vadd.f32 %v1826, %v1831
        %s1834 = scalar_lea.vmem %s1335, 1376 [#allocation3]
        %v1835 = vld [vmem:[%s1834] sm:$0xff]
        %v1836 = vld [vmem:[%s1834 + $0x8] sm:$0xff]
        %v1837 = vmul.f32 %v1835, %v1587
        %v1838 = vmul.f32 %v1836, %v1588
        %v1839 = vadd.f32 %v1832, %v1837
        %v1840 = vadd.f32 %v1833, %v1838
        %s1841 = scalar_lea.vmem %s1335, 1632 [#allocation3]
        %v1842 = vld [vmem:[%s1841] sm:$0xff]
        %v1843 = vld [vmem:[%s1841 + $0x8] sm:$0xff]
        %v1844 = vmul.f32 %v1842, %v1607
        %v1845 = vmul.f32 %v1843, %v1608
        %v1846 = vadd.f32 %v1839, %v1844
        %v1847 = vadd.f32 %v1840, %v1845
        %s1848 = scalar_lea.vmem %s1335, 1888 [#allocation3]
        %v1849 = vld [vmem:[%s1848] sm:$0xff]
        %v1850 = vld [vmem:[%s1848 + $0x8] sm:$0xff]
        %v1851 = vmul.f32 %v1849, %v1627
        %v1852 = vmul.f32 %v1850, %v1628
        %v1853 = vadd.f32 %v1846, %v1851
        %v1854 = vadd.f32 %v1847, %v1852
        %s1855 = scalar_lea.vmem %s1335, 2144 [#allocation3]
        %v1856 = vld [vmem:[%s1855] sm:$0xff]
        %v1857 = vld [vmem:[%s1855 + $0x8] sm:$0xff]
        %v1858 = vmul.f32 %v1856, %v1647
        %v1859 = vmul.f32 %v1857, %v1648
        %v1860 = vadd.f32 %v1853, %v1858
        %v1861 = vadd.f32 %v1854, %v1859
        %vm1862 = vcmp.gt.f32.partialorder %v1860, %v1791
        %vm1863 = vcmp.gt.f32.partialorder %v1861, %v1792
        %v1864 = vsel %vm1862, %v1860, %v1791
        %v1865 = vsel %vm1863, %v1861, %v1792
        %v1866 = vsel %vm1862, 3, %v1793
        %v1867 = vsel %vm1863, 3, %v1794
        %vm1868 = vcmp.lt.f32.partialorder %v1860, %v1797
        %vm1869 = vcmp.lt.f32.partialorder %v1861, %v1798
        %v1870 = vsel %vm1868, %v1860, %v1797
        %v1871 = vsel %vm1869, %v1861, %v1798
        %v1872 = vsel %vm1868, 3, %v1799
        %v1873 = vsel %vm1869, 3, %v1800
        %s1874 = scalar_lea.vmem %s1335, 128 [#allocation3]
        %v1875 = vld [vmem:[%s1874] sm:$0xff]
        %v1876 = vld [vmem:[%s1874 + $0x8] sm:$0xff]
        %v1877 = vmul.f32 %v1875, %v1500
        %v1878 = vmul.f32 %v1876, %v1501
        %s1879 = scalar_lea.vmem %s1335, 384 [#allocation3]
        %v1880 = vld [vmem:[%s1879] sm:$0xff]
        %v1881 = vld [vmem:[%s1879 + $0x8] sm:$0xff]
        %v1882 = vmul.f32 %v1880, %v1518
        %v1883 = vmul.f32 %v1881, %v1519
        %v1884 = vadd.f32 %v1877, %v1882
        %v1885 = vadd.f32 %v1878, %v1883
        %s1886 = scalar_lea.vmem %s1335, 640 [#allocation3]
        %v1887 = vld [vmem:[%s1886] sm:$0xff]
        %v1888 = vld [vmem:[%s1886 + $0x8] sm:$0xff]
        %v1889 = vmul.f32 %v1887, %v1538
        %v1890 = vmul.f32 %v1888, %v1539
        %v1891 = vadd.f32 %v1884, %v1889
        %v1892 = vadd.f32 %v1885, %v1890
        %s1893 = scalar_lea.vmem %s1335, 896 [#allocation3]
        %v1894 = vld [vmem:[%s1893] sm:$0xff]
        %v1895 = vld [vmem:[%s1893 + $0x8] sm:$0xff]
        %v1896 = vmul.f32 %v1894, %v1558
        %v1897 = vmul.f32 %v1895, %v1559
        %v1898 = vadd.f32 %v1891, %v1896
        %v1899 = vadd.f32 %v1892, %v1897
        %s1900 = scalar_lea.vmem %s1335, 1152 [#allocation3]
        %v1901 = vld [vmem:[%s1900] sm:$0xff]
        %v1902 = vld [vmem:[%s1900 + $0x8] sm:$0xff]
        %v1903 = vmul.f32 %v1901, %v1480
        %v1904 = vmul.f32 %v1902, %v1482
        %v1905 = vadd.f32 %v1898, %v1903
        %v1906 = vadd.f32 %v1899, %v1904
        %s1907 = scalar_lea.vmem %s1335, 1408 [#allocation3]
        %v1908 = vld [vmem:[%s1907] sm:$0xff]
        %v1909 = vld [vmem:[%s1907 + $0x8] sm:$0xff]
        %v1910 = vmul.f32 %v1908, %v1587
        %v1911 = vmul.f32 %v1909, %v1588
        %v1912 = vadd.f32 %v1905, %v1910
        %v1913 = vadd.f32 %v1906, %v1911
        %s1914 = scalar_lea.vmem %s1335, 1664 [#allocation3]
        %v1915 = vld [vmem:[%s1914] sm:$0xff]
        %v1916 = vld [vmem:[%s1914 + $0x8] sm:$0xff]
        %v1917 = vmul.f32 %v1915, %v1607
        %v1918 = vmul.f32 %v1916, %v1608
        %v1919 = vadd.f32 %v1912, %v1917
        %v1920 = vadd.f32 %v1913, %v1918
        %s1921 = scalar_lea.vmem %s1335, 1920 [#allocation3]
        %v1922 = vld [vmem:[%s1921] sm:$0xff]
        %v1923 = vld [vmem:[%s1921 + $0x8] sm:$0xff]
        %v1924 = vmul.f32 %v1922, %v1627
        %v1925 = vmul.f32 %v1923, %v1628
        %v1926 = vadd.f32 %v1919, %v1924
        %v1927 = vadd.f32 %v1920, %v1925
        %s1928 = scalar_lea.vmem %s1335, 2176 [#allocation3]
        %v1929 = vld [vmem:[%s1928] sm:$0xff]
        %v1930 = vld [vmem:[%s1928 + $0x8] sm:$0xff]
        %v1931 = vmul.f32 %v1929, %v1647
        %v1932 = vmul.f32 %v1930, %v1648
        %v1933 = vadd.f32 %v1926, %v1931
        %v1934 = vadd.f32 %v1927, %v1932
        %vm1935 = vcmp.gt.f32.partialorder %v1933, %v1864
        %vm1936 = vcmp.gt.f32.partialorder %v1934, %v1865
        %v1937 = vsel %vm1935, %v1933, %v1864
        %v1938 = vsel %vm1936, %v1934, %v1865
        %v1939 = vsel %vm1935, 4, %v1866
        %v1940 = vsel %vm1936, 4, %v1867
        %vm1941 = vcmp.lt.f32.partialorder %v1933, %v1870
        %vm1942 = vcmp.lt.f32.partialorder %v1934, %v1871
        %v1943 = vsel %vm1941, %v1933, %v1870
        %v1944 = vsel %vm1942, %v1934, %v1871
        %v1945 = vsel %vm1941, 4, %v1872
        %v1946 = vsel %vm1942, 4, %v1873
        %s1947 = scalar_lea.vmem %s1335, 160 [#allocation3]
        %v1948 = vld [vmem:[%s1947] sm:$0xff]
        %v1949 = vld [vmem:[%s1947 + $0x8] sm:$0xff]
        %v1950 = vmul.f32 %v1948, %v1500
        %v1951 = vmul.f32 %v1949, %v1501
        %s1952 = scalar_lea.vmem %s1335, 416 [#allocation3]
        %v1953 = vld [vmem:[%s1952] sm:$0xff]
        %v1954 = vld [vmem:[%s1952 + $0x8] sm:$0xff]
        %v1955 = vmul.f32 %v1953, %v1518
        %v1956 = vmul.f32 %v1954, %v1519
        %v1957 = vadd.f32 %v1950, %v1955
        %v1958 = vadd.f32 %v1951, %v1956
        %s1959 = scalar_lea.vmem %s1335, 672 [#allocation3]
        %v1960 = vld [vmem:[%s1959] sm:$0xff]
        %v1961 = vld [vmem:[%s1959 + $0x8] sm:$0xff]
        %v1962 = vmul.f32 %v1960, %v1538
        %v1963 = vmul.f32 %v1961, %v1539
        %v1964 = vadd.f32 %v1957, %v1962
        %v1965 = vadd.f32 %v1958, %v1963
        %s1966 = scalar_lea.vmem %s1335, 928 [#allocation3]
        %v1967 = vld [vmem:[%s1966] sm:$0xff]
        %v1968 = vld [vmem:[%s1966 + $0x8] sm:$0xff]
        %v1969 = vmul.f32 %v1967, %v1558
        %v1970 = vmul.f32 %v1968, %v1559
        %v1971 = vadd.f32 %v1964, %v1969
        %v1972 = vadd.f32 %v1965, %v1970
        %s1973 = scalar_lea.vmem %s1335, 1184 [#allocation3]
        %v1974 = vld [vmem:[%s1973] sm:$0xff]
        %v1975 = vld [vmem:[%s1973 + $0x8] sm:$0xff]
        %v1976 = vmul.f32 %v1974, %v1480
        %v1977 = vmul.f32 %v1975, %v1482
        %v1978 = vadd.f32 %v1971, %v1976
        %v1979 = vadd.f32 %v1972, %v1977
        %s1980 = scalar_lea.vmem %s1335, 1440 [#allocation3]
        %v1981 = vld [vmem:[%s1980] sm:$0xff]
        %v1982 = vld [vmem:[%s1980 + $0x8] sm:$0xff]
        %v1983 = vmul.f32 %v1981, %v1587
        %v1984 = vmul.f32 %v1982, %v1588
        %v1985 = vadd.f32 %v1978, %v1983
        %v1986 = vadd.f32 %v1979, %v1984
        %s1987 = scalar_lea.vmem %s1335, 1696 [#allocation3]
        %v1988 = vld [vmem:[%s1987] sm:$0xff]
        %v1989 = vld [vmem:[%s1987 + $0x8] sm:$0xff]
        %v1990 = vmul.f32 %v1988, %v1607
        %v1991 = vmul.f32 %v1989, %v1608
        %v1992 = vadd.f32 %v1985, %v1990
        %v1993 = vadd.f32 %v1986, %v1991
        %s1994 = scalar_lea.vmem %s1335, 1952 [#allocation3]
        %v1995 = vld [vmem:[%s1994] sm:$0xff]
        %v1996 = vld [vmem:[%s1994 + $0x8] sm:$0xff]
        %v1997 = vmul.f32 %v1995, %v1627
        %v1998 = vmul.f32 %v1996, %v1628
        %v1999 = vadd.f32 %v1992, %v1997
        %v2000 = vadd.f32 %v1993, %v1998
        %s2001 = scalar_lea.vmem %s1335, 2208 [#allocation3]
        %v2002 = vld [vmem:[%s2001] sm:$0xff]
        %v2003 = vld [vmem:[%s2001 + $0x8] sm:$0xff]
        %v2004 = vmul.f32 %v2002, %v1647
        %v2005 = vmul.f32 %v2003, %v1648
        %v2006 = vadd.f32 %v1999, %v2004
        %v2007 = vadd.f32 %v2000, %v2005
        %vm2008 = vcmp.gt.f32.partialorder %v2006, %v1937
        %vm2009 = vcmp.gt.f32.partialorder %v2007, %v1938
        %v2010 = vsel %vm2008, %v2006, %v1937
        %v2011 = vsel %vm2009, %v2007, %v1938
        %v2012 = vsel %vm2008, 5, %v1939
        %v2013 = vsel %vm2009, 5, %v1940
        %vm2014 = vcmp.lt.f32.partialorder %v2006, %v1943
        %vm2015 = vcmp.lt.f32.partialorder %v2007, %v1944
        %v2016 = vsel %vm2014, %v2006, %v1943
        %v2017 = vsel %vm2015, %v2007, %v1944
        %v2018 = vsel %vm2014, 5, %v1945
        %v2019 = vsel %vm2015, 5, %v1946
        %s2020 = scalar_lea.vmem %s1335, 192 [#allocation3]
        %v2021 = vld [vmem:[%s2020] sm:$0xff]
        %v2022 = vld [vmem:[%s2020 + $0x8] sm:$0xff]
        %v2023 = vmul.f32 %v2021, %v1500
        %v2024 = vmul.f32 %v2022, %v1501
        %s2025 = scalar_lea.vmem %s1335, 448 [#allocation3]
        %v2026 = vld [vmem:[%s2025] sm:$0xff]
        %v2027 = vld [vmem:[%s2025 + $0x8] sm:$0xff]
        %v2028 = vmul.f32 %v2026, %v1518
        %v2029 = vmul.f32 %v2027, %v1519
        %v2030 = vadd.f32 %v2023, %v2028
        %v2031 = vadd.f32 %v2024, %v2029
        %s2032 = scalar_lea.vmem %s1335, 704 [#allocation3]
        %v2033 = vld [vmem:[%s2032] sm:$0xff]
        %v2034 = vld [vmem:[%s2032 + $0x8] sm:$0xff]
        %v2035 = vmul.f32 %v2033, %v1538
        %v2036 = vmul.f32 %v2034, %v1539
        %v2037 = vadd.f32 %v2030, %v2035
        %v2038 = vadd.f32 %v2031, %v2036
        %s2039 = scalar_lea.vmem %s1335, 960 [#allocation3]
        %v2040 = vld [vmem:[%s2039] sm:$0xff]
        %v2041 = vld [vmem:[%s2039 + $0x8] sm:$0xff]
        %v2042 = vmul.f32 %v2040, %v1558
        %v2043 = vmul.f32 %v2041, %v1559
        %v2044 = vadd.f32 %v2037, %v2042
        %v2045 = vadd.f32 %v2038, %v2043
        %s2046 = scalar_lea.vmem %s1335, 1216 [#allocation3]
        %v2047 = vld [vmem:[%s2046] sm:$0xff]
        %v2048 = vld [vmem:[%s2046 + $0x8] sm:$0xff]
        %v2049 = vmul.f32 %v2047, %v1480
        %v2050 = vmul.f32 %v2048, %v1482
        %v2051 = vadd.f32 %v2044, %v2049
        %v2052 = vadd.f32 %v2045, %v2050
        %s2053 = scalar_lea.vmem %s1335, 1472 [#allocation3]
        %v2054 = vld [vmem:[%s2053] sm:$0xff]
        %v2055 = vld [vmem:[%s2053 + $0x8] sm:$0xff]
        %v2056 = vmul.f32 %v2054, %v1587
        %v2057 = vmul.f32 %v2055, %v1588
        %v2058 = vadd.f32 %v2051, %v2056
        %v2059 = vadd.f32 %v2052, %v2057
        %s2060 = scalar_lea.vmem %s1335, 1728 [#allocation3]
        %v2061 = vld [vmem:[%s2060] sm:$0xff]
        %v2062 = vld [vmem:[%s2060 + $0x8] sm:$0xff]
        %v2063 = vmul.f32 %v2061, %v1607
        %v2064 = vmul.f32 %v2062, %v1608
        %v2065 = vadd.f32 %v2058, %v2063
        %v2066 = vadd.f32 %v2059, %v2064
        %s2067 = scalar_lea.vmem %s1335, 1984 [#allocation3]
        %v2068 = vld [vmem:[%s2067] sm:$0xff]
        %v2069 = vld [vmem:[%s2067 + $0x8] sm:$0xff]
        %v2070 = vmul.f32 %v2068, %v1627
        %v2071 = vmul.f32 %v2069, %v1628
        %v2072 = vadd.f32 %v2065, %v2070
        %v2073 = vadd.f32 %v2066, %v2071
        %s2074 = scalar_lea.vmem %s1335, 2240 [#allocation3]
        %v2075 = vld [vmem:[%s2074] sm:$0xff]
        %v2076 = vld [vmem:[%s2074 + $0x8] sm:$0xff]
        %v2077 = vmul.f32 %v2075, %v1647
        %v2078 = vmul.f32 %v2076, %v1648
        %v2079 = vadd.f32 %v2072, %v2077
        %v2080 = vadd.f32 %v2073, %v2078
        %vm2081 = vcmp.gt.f32.partialorder %v2079, %v2010
        %vm2082 = vcmp.gt.f32.partialorder %v2080, %v2011
        %v2083 = vsel %vm2081, %v2079, %v2010
        %v2084 = vsel %vm2082, %v2080, %v2011
        %v2085 = vsel %vm2081, 6, %v2012
        %v2086 = vsel %vm2082, 6, %v2013
        %vm2087 = vcmp.lt.f32.partialorder %v2079, %v2016
        %vm2088 = vcmp.lt.f32.partialorder %v2080, %v2017
        %v2089 = vsel %vm2087, %v2079, %v2016
        %v2090 = vsel %vm2088, %v2080, %v2017
        %v2091 = vsel %vm2087, 6, %v2018
        %v2092 = vsel %vm2088, 6, %v2019
        %s2093 = scalar_lea.vmem %s1335, 224 [#allocation3]
        %v2094 = vld [vmem:[%s2093] sm:$0xff]
        %v2095 = vld [vmem:[%s2093 + $0x8] sm:$0xff]
        %v2096 = vmul.f32 %v2094, %v1500
        %v2097 = vmul.f32 %v2095, %v1501
        %s2098 = scalar_lea.vmem %s1335, 480 [#allocation3]
        %v2099 = vld [vmem:[%s2098] sm:$0xff]
        %v2100 = vld [vmem:[%s2098 + $0x8] sm:$0xff]
        %v2101 = vmul.f32 %v2099, %v1518
        %v2102 = vmul.f32 %v2100, %v1519
        %v2103 = vadd.f32 %v2096, %v2101
        %v2104 = vadd.f32 %v2097, %v2102
        %s2105 = scalar_lea.vmem %s1335, 736 [#allocation3]
        %v2106 = vld [vmem:[%s2105] sm:$0xff]
        %v2107 = vld [vmem:[%s2105 + $0x8] sm:$0xff]
        %v2108 = vmul.f32 %v2106, %v1538
        %v2109 = vmul.f32 %v2107, %v1539
        %v2110 = vadd.f32 %v2103, %v2108
        %v2111 = vadd.f32 %v2104, %v2109
        %s2112 = scalar_lea.vmem %s1335, 992 [#allocation3]
        %v2113 = vld [vmem:[%s2112] sm:$0xff]
        %v2114 = vld [vmem:[%s2112 + $0x8] sm:$0xff]
        %v2115 = vmul.f32 %v2113, %v1558
        %v2116 = vmul.f32 %v2114, %v1559
        %v2117 = vadd.f32 %v2110, %v2115
        %v2118 = vadd.f32 %v2111, %v2116
        %s2119 = scalar_lea.vmem %s1335, 1248 [#allocation3]
        %v2120 = vld [vmem:[%s2119] sm:$0xff]
        %v2121 = vld [vmem:[%s2119 + $0x8] sm:$0xff]
        %v2122 = vmul.f32 %v2120, %v1480
        %v2123 = vmul.f32 %v2121, %v1482
        %v2124 = vadd.f32 %v2117, %v2122
        %v2125 = vadd.f32 %v2118, %v2123
        %s2126 = scalar_lea.vmem %s1335, 1504 [#allocation3]
        %v2127 = vld [vmem:[%s2126] sm:$0xff]
        %v2128 = vld [vmem:[%s2126 + $0x8] sm:$0xff]
        %v2129 = vmul.f32 %v2127, %v1587
        %v2130 = vmul.f32 %v2128, %v1588
        %v2131 = vadd.f32 %v2124, %v2129
        %v2132 = vadd.f32 %v2125, %v2130
        %s2133 = scalar_lea.vmem %s1335, 1760 [#allocation3]
        %v2134 = vld [vmem:[%s2133] sm:$0xff]
        %v2135 = vld [vmem:[%s2133 + $0x8] sm:$0xff]
        %v2136 = vmul.f32 %v2134, %v1607
        %v2137 = vmul.f32 %v2135, %v1608
        %v2138 = vadd.f32 %v2131, %v2136
        %v2139 = vadd.f32 %v2132, %v2137
        %s2140 = scalar_lea.vmem %s1335, 2016 [#allocation3]
        %v2141 = vld [vmem:[%s2140] sm:$0xff]
        %v2142 = vld [vmem:[%s2140 + $0x8] sm:$0xff]
        %v2143 = vmul.f32 %v2141, %v1627
        %v2144 = vmul.f32 %v2142, %v1628
        %v2145 = vadd.f32 %v2138, %v2143
        %v2146 = vadd.f32 %v2139, %v2144
        %s2147 = scalar_lea.vmem %s1335, 2272 [#allocation3]
        %v2148 = vld [vmem:[%s2147] sm:$0xff]
        %v2149 = vld [vmem:[%s2147 + $0x8] sm:$0xff]
        %v2150 = vmul.f32 %v2148, %v1647
        %v2151 = vmul.f32 %v2149, %v1648
        %v2152 = vadd.f32 %v2145, %v2150
        %v2153 = vadd.f32 %v2146, %v2151
        %vm2154 = vcmp.gt.f32.partialorder %v2152, %v2083
        %vm2155 = vcmp.gt.f32.partialorder %v2153, %v2084
        %v2156 = vsel %vm2154, %v2152, %v2083
        %v2157 = vsel %vm2155, %v2153, %v2084
        %v2158 = vsel %vm2154, 7, %v2085
        %v2159 = vsel %vm2155, 7, %v2086
        %vm2160 = vcmp.lt.f32.partialorder %v2152, %v2089
        %vm2161 = vcmp.lt.f32.partialorder %v2153, %v2090
        %v2162 = vsel %vm2160, 7, %v2091
        %v2163 = vsel %vm2161, 7, %v2092
        %v2164 = vmul.f32 %v2156, %v1478
        %v2165 = vmul.f32 %v2157, %v1478
        %vm2166 = vcmp.eq.s32.totalorder %v2158, 0
        %vm2167 = vcmp.eq.s32.totalorder %v2159, 0
        %v2168 = vsel %vm2166, %v2164, 0.0
        %v2169 = vsel %vm2167, %v2165, 0.0
        %2170 = vadd.xlane.f32.xlu0 %v2168
        %v2171 = vpop.xlane.xlu0 %2170
        %2172 = vadd.xlane.f32.xlu0 %v2169
        %v2173 = vpop.xlane.xlu0 %2172
        %vm2174 = vcmp.eq.s32.totalorder %v2162, 0
        %vm2175 = vcmp.eq.s32.totalorder %v2163, 0
        %v2176 = vsel %vm2174, %v1478, 0.0
        %v2177 = vsel %vm2175, %v1478, 0.0
        %2178 = vadd.xlane.f32.xlu0 %v2176
        %v2179 = vpop.xlane.xlu0 %2178
        %2180 = vadd.xlane.f32.xlu0 %v2177
        %v2181 = vpop.xlane.xlu0 %2180
        %vm2182 = vcmp.eq.s32.totalorder %v2158, 1
        %vm2183 = vcmp.eq.s32.totalorder %v2159, 1
        %v2184 = vsel %vm2182, %v2164, 0.0
        %v2185 = vsel %vm2183, %v2165, 0.0
        %2186 = vadd.xlane.f32.xlu0 %v2184
        %v2187 = vpop.xlane.xlu0 %2186
        %2188 = vadd.xlane.f32.xlu0 %v2185
        %v2189 = vpop.xlane.xlu0 %2188
        %vm2190 = vcmp.eq.s32.totalorder %v2162, 1
        %vm2191 = vcmp.eq.s32.totalorder %v2163, 1
        %v2192 = vsel %vm2190, %v1478, 0.0
        %v2193 = vsel %vm2191, %v1478, 0.0
        %2194 = vadd.xlane.f32.xlu0 %v2192
        %v2195 = vpop.xlane.xlu0 %2194
        %2196 = vadd.xlane.f32.xlu0 %v2193
        %v2197 = vpop.xlane.xlu0 %2196
        %vm2198 = vcmp.eq.s32.totalorder %v2158, 2
        %vm2199 = vcmp.eq.s32.totalorder %v2159, 2
        %v2200 = vsel %vm2198, %v2164, 0.0
        %v2201 = vsel %vm2199, %v2165, 0.0
        %2202 = vadd.xlane.f32.xlu0 %v2200
        %v2203 = vpop.xlane.xlu0 %2202
        %2204 = vadd.xlane.f32.xlu0 %v2201
        %v2205 = vpop.xlane.xlu0 %2204
        %vm2206 = vcmp.eq.s32.totalorder %v2162, 2
        %vm2207 = vcmp.eq.s32.totalorder %v2163, 2
        %v2208 = vsel %vm2206, %v1478, 0.0
        %v2209 = vsel %vm2207, %v1478, 0.0
        %2210 = vadd.xlane.f32.xlu0 %v2208
        %v2211 = vpop.xlane.xlu0 %2210
        %2212 = vadd.xlane.f32.xlu0 %v2209
        %v2213 = vpop.xlane.xlu0 %2212
        %vm2214 = vcmp.eq.s32.totalorder %v2158, 3
        %vm2215 = vcmp.eq.s32.totalorder %v2159, 3
        %v2216 = vsel %vm2214, %v2164, 0.0
        %v2217 = vsel %vm2215, %v2165, 0.0
        %2218 = vadd.xlane.f32.xlu0 %v2216
        %v2219 = vpop.xlane.xlu0 %2218
        %2220 = vadd.xlane.f32.xlu0 %v2217
        %v2221 = vpop.xlane.xlu0 %2220
        %vm2222 = vcmp.eq.s32.totalorder %v2162, 3
        %vm2223 = vcmp.eq.s32.totalorder %v2163, 3
        %v2224 = vsel %vm2222, %v1478, 0.0
        %v2225 = vsel %vm2223, %v1478, 0.0
        %2226 = vadd.xlane.f32.xlu0 %v2224
        %v2227 = vpop.xlane.xlu0 %2226
        %2228 = vadd.xlane.f32.xlu0 %v2225
        %v2229 = vpop.xlane.xlu0 %2228
        %vm2230 = vcmp.eq.s32.totalorder %v2158, 4
        %vm2231 = vcmp.eq.s32.totalorder %v2159, 4
        %v2232 = vsel %vm2230, %v2164, 0.0
        %v2233 = vsel %vm2231, %v2165, 0.0
        %2234 = vadd.xlane.f32.xlu0 %v2232
        %v2235 = vpop.xlane.xlu0 %2234
        %2236 = vadd.xlane.f32.xlu0 %v2233
        %v2237 = vpop.xlane.xlu0 %2236
        %vm2238 = vcmp.eq.s32.totalorder %v2162, 4
        %vm2239 = vcmp.eq.s32.totalorder %v2163, 4
        %v2240 = vsel %vm2238, %v1478, 0.0
        %v2241 = vsel %vm2239, %v1478, 0.0
        %2242 = vadd.xlane.f32.xlu0 %v2240
        %v2243 = vpop.xlane.xlu0 %2242
        %2244 = vadd.xlane.f32.xlu0 %v2241
        %v2245 = vpop.xlane.xlu0 %2244
        %vm2246 = vcmp.eq.s32.totalorder %v2158, 5
        %vm2247 = vcmp.eq.s32.totalorder %v2159, 5
        %v2248 = vsel %vm2246, %v2164, 0.0
        %v2249 = vsel %vm2247, %v2165, 0.0
        %2250 = vadd.xlane.f32.xlu0 %v2248
        %v2251 = vpop.xlane.xlu0 %2250
        %2252 = vadd.xlane.f32.xlu0 %v2249
        %v2253 = vpop.xlane.xlu0 %2252
        %vm2254 = vcmp.eq.s32.totalorder %v2162, 5
        %vm2255 = vcmp.eq.s32.totalorder %v2163, 5
        %v2256 = vsel %vm2254, %v1478, 0.0
        %v2257 = vsel %vm2255, %v1478, 0.0
        %2258 = vadd.xlane.f32.xlu0 %v2256
        %v2259 = vpop.xlane.xlu0 %2258
        %2260 = vadd.xlane.f32.xlu0 %v2257
        %v2261 = vpop.xlane.xlu0 %2260
        %vm2262 = vcmp.eq.s32.totalorder %v2158, 6
        %vm2263 = vcmp.eq.s32.totalorder %v2159, 6
        %v2264 = vsel %vm2262, %v2164, 0.0
        %v2265 = vsel %vm2263, %v2165, 0.0
        %2266 = vadd.xlane.f32.xlu0 %v2264
        %v2267 = vpop.xlane.xlu0 %2266
        %2268 = vadd.xlane.f32.xlu0 %v2265
        %v2269 = vpop.xlane.xlu0 %2268
        %vm2270 = vcmp.eq.s32.totalorder %v2162, 6
        %vm2271 = vcmp.eq.s32.totalorder %v2163, 6
        %v2272 = vsel %vm2270, %v1478, 0.0
        %v2273 = vsel %vm2271, %v1478, 0.0
        %2274 = vadd.xlane.f32.xlu0 %v2272
        %v2275 = vpop.xlane.xlu0 %2274
        %2276 = vadd.xlane.f32.xlu0 %v2273
        %v2277 = vpop.xlane.xlu0 %2276
        %vm2278 = vcmp.eq.s32.totalorder %v2158, 7
        %vm2279 = vcmp.eq.s32.totalorder %v2159, 7
        %v2280 = vsel %vm2278, %v2164, 0.0
        %v2281 = vsel %vm2279, %v2165, 0.0
        %2282 = vadd.xlane.f32.xlu0 %v2280
        %v2283 = vpop.xlane.xlu0 %2282
        %2284 = vadd.xlane.f32.xlu0 %v2281
        %v2285 = vpop.xlane.xlu0 %2284
        %vm2286 = vcmp.eq.s32.totalorder %v2162, 7
        %vm2287 = vcmp.eq.s32.totalorder %v2163, 7
        %v2288 = vsel %vm2286, %v1478, 0.0
        %v2289 = vsel %vm2287, %v1478, 0.0
        %2290 = vadd.xlane.f32.xlu0 %v2288
        %v2291 = vpop.xlane.xlu0 %2290
        %2292 = vadd.xlane.f32.xlu0 %v2289
        %v2293 = vpop.xlane.xlu0 %2292
        %vm2294 = vcmask 7168
        %v2295 = vsel %vm2294, %v2171, %v2187
        %v2296 = vsel %vm2294, %v2173, %v2189
        %v2297 = vsel %vm1557, %v2295, %v2203
        %v2298 = vsel %vm1557, %v2296, %v2205
        %vm2299 = vcmask 23552
        %v2300 = vsel %vm2299, %v2297, %v2219
        %v2301 = vsel %vm2299, %v2298, %v2221
        %v2302 = vsel %vm1537, %v2300, %v2235
        %v2303 = vsel %vm1537, %v2301, %v2237
        %vm2304 = vcmask 39936
        %v2305 = vsel %vm2304, %v2302, %v2251
        %v2306 = vsel %vm2304, %v2303, %v2253
        %v2307 = vsel %vm1517, %v2305, %v2267
        %v2308 = vsel %vm1517, %v2306, %v2269
        %vm2309 = vcmask 56320
        %v2310 = vsel %vm2309, %v2307, %v2283
        %v2311 = vsel %vm2309, %v2308, %v2285
        %v2312 = vsel %vm2294, %v2179, %v2195
        %v2313 = vsel %vm2294, %v2181, %v2197
        %v2314 = vsel %vm1557, %v2312, %v2211
        %v2315 = vsel %vm1557, %v2313, %v2213
        %v2316 = vsel %vm2299, %v2314, %v2227
        %v2317 = vsel %vm2299, %v2315, %v2229
        %v2318 = vsel %vm1537, %v2316, %v2243
        %v2319 = vsel %vm1537, %v2317, %v2245
        %v2320 = vsel %vm2304, %v2318, %v2259
        %v2321 = vsel %vm2304, %v2319, %v2261
        %v2322 = vsel %vm1517, %v2320, %v2275
        %v2323 = vsel %vm1517, %v2321, %v2277
        %v2324 = vsel %vm2309, %v2322, %v2291
        %v2325 = vsel %vm2309, %v2323, %v2293
        %v2326 = vadd.f32 %v2310, 0.0
        %v2327 = vadd.f32 %v2311, 0.0
        %2328 = vst.msk [vmem:[%s1386] sm:$0xff] %vm1499, %v2326
        %2329 = vst.msk [vmem:[%s1386 + $0x8] sm:$0xff] %vm1499, %v2327
        %v2330 = vadd.f32 %v2324, 0.0
        %v2331 = vadd.f32 %v2325, 0.0
        %2334 = vrot.lane.b32.xlu0 %v2330, 8
        %v2335 = vpop.permute.xlu0 %2334
        %2336 = vrot.lane.b32.xlu0 %v2331, 8
        %v2337 = vpop.permute.xlu0 %2336
        %vm2340 = vcmask 130112
        %2341 = vst.msk [vmem:[%s1386] sm:$0xff] %vm2340, %v2335
        %2342 = vst.msk [vmem:[%s1386 + $0x8] sm:$0xff] %vm2340, %v2337
        %v2343 = vld [vmem:[#allocation2 + $0x30] sm:$0xff]
        %v2344 = vld [vmem:[#allocation2 + $0x38] sm:$0xff]
        %v2345 = vld [vmem:[#allocation2 + $0x48] sm:$0xff]
        %v2346 = vld [vmem:[#allocation2 + $0x50] sm:$0xff]
        %v2347 = vld [vmem:[#allocation2 + $0x38] sm:$0xff]
        %v2348 = vld [vmem:[#allocation2 + $0x40] sm:$0xff]
        %v2349 = vld [vmem:[#allocation2 + $0x50] sm:$0xff]
        %v2350 = vld [vmem:[#allocation2 + $0x58] sm:$0xff]
        %v2351 = vld [vmem:[%s1335 + $0x10] sm:$0xff]
        %v2352 = vld [vmem:[%s1335 + $0x18] sm:$0xff]
        %2357 = vrot.lane.b32.xlu0 %v2343, 8
        %v2358 = vpop.permute.xlu0 %2357
        %2359 = vrot.lane.b32.xlu0 %v2344, 8
        %v2360 = vpop.permute.xlu0 %2359
        %2361 = vrot.lane.b32.xlu0 %v2345, 8
        %v2362 = vpop.permute.xlu0 %2361
        %2363 = vrot.lane.b32.xlu0 %v2346, 8
        %v2364 = vpop.permute.xlu0 %2363
        %v2365 = vsel %vm1499, %v2358, %v2360
        %v2366 = vsel %vm1499, %v2362, %v2364
        %v2369 = vmul.f32 %v2351, %v2365
        %v2370 = vmul.f32 %v2352, %v2366
        %v2371 = vld [vmem:[%s1506 + $0x10] sm:$0xff]
        %v2372 = vld [vmem:[%s1506 + $0x18] sm:$0xff]
        %2373 = vrot.lane.b32.xlu0 %v2343, 6
        %v2374 = vpop.permute.xlu0 %2373
        %2375 = vrot.lane.b32.xlu0 %v2344, 6
        %v2376 = vpop.permute.xlu0 %2375
        %2377 = vrot.lane.b32.xlu0 %v2345, 6
        %v2378 = vpop.permute.xlu0 %2377
        %2379 = vrot.lane.b32.xlu0 %v2346, 6
        %v2380 = vpop.permute.xlu0 %2379
        %v2381 = vsel %vm1517, %v2374, %v2376
        %v2382 = vsel %vm1517, %v2378, %v2380
        %v2385 = vmul.f32 %v2371, %v2381
        %v2386 = vmul.f32 %v2372, %v2382
        %v2387 = vadd.f32 %v2369, %v2385
        %v2388 = vadd.f32 %v2370, %v2386
        %v2389 = vld [vmem:[%s1526 + $0x10] sm:$0xff]
        %v2390 = vld [vmem:[%s1526 + $0x18] sm:$0xff]
        %2391 = vrot.lane.b32.xlu0 %v2343, 4
        %v2392 = vpop.permute.xlu0 %2391
        %2393 = vrot.lane.b32.xlu0 %v2344, 4
        %v2394 = vpop.permute.xlu0 %2393
        %2395 = vrot.lane.b32.xlu0 %v2345, 4
        %v2396 = vpop.permute.xlu0 %2395
        %2397 = vrot.lane.b32.xlu0 %v2346, 4
        %v2398 = vpop.permute.xlu0 %2397
        %v2399 = vsel %vm1537, %v2392, %v2394
        %v2400 = vsel %vm1537, %v2396, %v2398
        %v2403 = vmul.f32 %v2389, %v2399
        %v2404 = vmul.f32 %v2390, %v2400
        %v2405 = vadd.f32 %v2387, %v2403
        %v2406 = vadd.f32 %v2388, %v2404
        %v2407 = vld [vmem:[%s1546 + $0x10] sm:$0xff]
        %v2408 = vld [vmem:[%s1546 + $0x18] sm:$0xff]
        %2409 = vrot.lane.b32.xlu0 %v2343, 2
        %v2410 = vpop.permute.xlu0 %2409
        %2411 = vrot.lane.b32.xlu0 %v2344, 2
        %v2412 = vpop.permute.xlu0 %2411
        %2413 = vrot.lane.b32.xlu0 %v2345, 2
        %v2414 = vpop.permute.xlu0 %2413
        %2415 = vrot.lane.b32.xlu0 %v2346, 2
        %v2416 = vpop.permute.xlu0 %2415
        %v2417 = vsel %vm1557, %v2410, %v2412
        %v2418 = vsel %vm1557, %v2414, %v2416
        %v2421 = vmul.f32 %v2407, %v2417
        %v2422 = vmul.f32 %v2408, %v2418
        %v2423 = vadd.f32 %v2405, %v2421
        %v2424 = vadd.f32 %v2406, %v2422
        %v2425 = vld [vmem:[%s1566 + $0x10] sm:$0xff]
        %v2426 = vld [vmem:[%s1566 + $0x18] sm:$0xff]
        %v2427 = vmul.f32 %v2425, %v2344
        %v2428 = vmul.f32 %v2426, %v2346
        %v2429 = vadd.f32 %v2423, %v2427
        %v2430 = vadd.f32 %v2424, %v2428
        %v2431 = vld [vmem:[%s1573 + $0x10] sm:$0xff]
        %v2432 = vld [vmem:[%s1573 + $0x18] sm:$0xff]
        %2437 = vrot.lane.b32.xlu0 %v2347, 126
        %v2438 = vpop.permute.xlu0 %2437
        %2439 = vrot.lane.b32.xlu0 %v2348, 126
        %v2440 = vpop.permute.xlu0 %2439
        %2441 = vrot.lane.b32.xlu0 %v2349, 126
        %v2442 = vpop.permute.xlu0 %2441
        %2443 = vrot.lane.b32.xlu0 %v2350, 126
        %v2444 = vpop.permute.xlu0 %2443
        %v2445 = vsel %vm1586, %v2438, %v2440
        %v2446 = vsel %vm1586, %v2442, %v2444
        %v2449 = vmul.f32 %v2431, %v2445
        %v2450 = vmul.f32 %v2432, %v2446
        %v2451 = vadd.f32 %v2429, %v2449
        %v2452 = vadd.f32 %v2430, %v2450
        %v2453 = vld [vmem:[%s1595 + $0x10] sm:$0xff]
        %v2454 = vld [vmem:[%s1595 + $0x18] sm:$0xff]
        %2455 = vrot.lane.b32.xlu0 %v2347, 124
        %v2456 = vpop.permute.xlu0 %2455
        %2457 = vrot.lane.b32.xlu0 %v2348, 124
        %v2458 = vpop.permute.xlu0 %2457
        %2459 = vrot.lane.b32.xlu0 %v2349, 124
        %v2460 = vpop.permute.xlu0 %2459
        %2461 = vrot.lane.b32.xlu0 %v2350, 124
        %v2462 = vpop.permute.xlu0 %2461
        %v2463 = vsel %vm1606, %v2456, %v2458
        %v2464 = vsel %vm1606, %v2460, %v2462
        %v2467 = vmul.f32 %v2453, %v2463
        %v2468 = vmul.f32 %v2454, %v2464
        %v2469 = vadd.f32 %v2451, %v2467
        %v2470 = vadd.f32 %v2452, %v2468
        %v2471 = vld [vmem:[%s1615 + $0x10] sm:$0xff]
        %v2472 = vld [vmem:[%s1615 + $0x18] sm:$0xff]
        %2473 = vrot.lane.b32.xlu0 %v2347, 122
        %v2474 = vpop.permute.xlu0 %2473
        %2475 = vrot.lane.b32.xlu0 %v2348, 122
        %v2476 = vpop.permute.xlu0 %2475
        %2477 = vrot.lane.b32.xlu0 %v2349, 122
        %v2478 = vpop.permute.xlu0 %2477
        %2479 = vrot.lane.b32.xlu0 %v2350, 122
        %v2480 = vpop.permute.xlu0 %2479
        %v2481 = vsel %vm1626, %v2474, %v2476
        %v2482 = vsel %vm1626, %v2478, %v2480
        %v2485 = vmul.f32 %v2471, %v2481
        %v2486 = vmul.f32 %v2472, %v2482
        %v2487 = vadd.f32 %v2469, %v2485
        %v2488 = vadd.f32 %v2470, %v2486
        %v2489 = vld [vmem:[%s1635 + $0x10] sm:$0xff]
        %v2490 = vld [vmem:[%s1635 + $0x18] sm:$0xff]
        %2491 = vrot.lane.b32.xlu0 %v2347, 120
        %v2492 = vpop.permute.xlu0 %2491
        %2493 = vrot.lane.b32.xlu0 %v2348, 120
        %v2494 = vpop.permute.xlu0 %2493
        %2495 = vrot.lane.b32.xlu0 %v2349, 120
        %v2496 = vpop.permute.xlu0 %2495
        %2497 = vrot.lane.b32.xlu0 %v2350, 120
        %v2498 = vpop.permute.xlu0 %2497
        %v2499 = vsel %vm1646, %v2492, %v2494
        %v2500 = vsel %vm1646, %v2496, %v2498
        %v2503 = vmul.f32 %v2489, %v2499
        %v2504 = vmul.f32 %v2490, %v2500
        %v2505 = vadd.f32 %v2487, %v2503
        %v2506 = vadd.f32 %v2488, %v2504
        %v2507 = vld [vmem:[%s1655 + $0x10] sm:$0xff]
        %v2508 = vld [vmem:[%s1655 + $0x18] sm:$0xff]
        %v2509 = vmul.f32 %v2507, %v2365
        %v2510 = vmul.f32 %v2508, %v2366
        %v2511 = vld [vmem:[%s1660 + $0x10] sm:$0xff]
        %v2512 = vld [vmem:[%s1660 + $0x18] sm:$0xff]
        %v2513 = vmul.f32 %v2511, %v2381
        %v2514 = vmul.f32 %v2512, %v2382
        %v2515 = vadd.f32 %v2509, %v2513
        %v2516 = vadd.f32 %v2510, %v2514
        %v2517 = vld [vmem:[%s1667 + $0x10] sm:$0xff]
        %v2518 = vld [vmem:[%s1667 + $0x18] sm:$0xff]
        %v2519 = vmul.f32 %v2517, %v2399
        %v2520 = vmul.f32 %v2518, %v2400
        %v2521 = vadd.f32 %v2515, %v2519
        %v2522 = vadd.f32 %v2516, %v2520
        %v2523 = vld [vmem:[%s1674 + $0x10] sm:$0xff]
        %v2524 = vld [vmem:[%s1674 + $0x18] sm:$0xff]
        %v2525 = vmul.f32 %v2523, %v2417
        %v2526 = vmul.f32 %v2524, %v2418
        %v2527 = vadd.f32 %v2521, %v2525
        %v2528 = vadd.f32 %v2522, %v2526
        %v2529 = vld [vmem:[%s1681 + $0x10] sm:$0xff]
        %v2530 = vld [vmem:[%s1681 + $0x18] sm:$0xff]
        %v2531 = vmul.f32 %v2529, %v2344
        %v2532 = vmul.f32 %v2530, %v2346
        %v2533 = vadd.f32 %v2527, %v2531
        %v2534 = vadd.f32 %v2528, %v2532
        %v2535 = vld [vmem:[%s1688 + $0x10] sm:$0xff]
        %v2536 = vld [vmem:[%s1688 + $0x18] sm:$0xff]
        %v2537 = vmul.f32 %v2535, %v2445
        %v2538 = vmul.f32 %v2536, %v2446
        %v2539 = vadd.f32 %v2533, %v2537
        %v2540 = vadd.f32 %v2534, %v2538
        %v2541 = vld [vmem:[%s1695 + $0x10] sm:$0xff]
        %v2542 = vld [vmem:[%s1695 + $0x18] sm:$0xff]
        %v2543 = vmul.f32 %v2541, %v2463
        %v2544 = vmul.f32 %v2542, %v2464
        %v2545 = vadd.f32 %v2539, %v2543
        %v2546 = vadd.f32 %v2540, %v2544
        %v2547 = vld [vmem:[%s1702 + $0x10] sm:$0xff]
        %v2548 = vld [vmem:[%s1702 + $0x18] sm:$0xff]
        %v2549 = vmul.f32 %v2547, %v2481
        %v2550 = vmul.f32 %v2548, %v2482
        %v2551 = vadd.f32 %v2545, %v2549
        %v2552 = vadd.f32 %v2546, %v2550
        %v2553 = vld [vmem:[%s1709 + $0x10] sm:$0xff]
        %v2554 = vld [vmem:[%s1709 + $0x18] sm:$0xff]
        %v2555 = vmul.f32 %v2553, %v2499
        %v2556 = vmul.f32 %v2554, %v2500
        %v2557 = vadd.f32 %v2551, %v2555
        %v2558 = vadd.f32 %v2552, %v2556
        %vm2559 = vcmp.gt.f32.partialorder %v2557, %v2505
        %vm2560 = vcmp.gt.f32.partialorder %v2558, %v2506
        %v2561 = vsel %vm2559, %v2557, %v2505
        %v2562 = vsel %vm2560, %v2558, %v2506
        %v2563 = vsel %vm2559, 1, 0
        %v2564 = vsel %vm2560, 1, 0
        %vm2565 = vcmp.lt.f32.partialorder %v2557, %v2505
        %vm2566 = vcmp.lt.f32.partialorder %v2558, %v2506
        %v2567 = vsel %vm2565, %v2557, %v2505
        %v2568 = vsel %vm2566, %v2558, %v2506
        %v2569 = vsel %vm2565, 1, 0
        %v2570 = vsel %vm2566, 1, 0
        %v2571 = vld [vmem:[%s1728 + $0x10] sm:$0xff]
        %v2572 = vld [vmem:[%s1728 + $0x18] sm:$0xff]
        %v2573 = vmul.f32 %v2571, %v2365
        %v2574 = vmul.f32 %v2572, %v2366
        %v2575 = vld [vmem:[%s1733 + $0x10] sm:$0xff]
        %v2576 = vld [vmem:[%s1733 + $0x18] sm:$0xff]
        %v2577 = vmul.f32 %v2575, %v2381
        %v2578 = vmul.f32 %v2576, %v2382
        %v2579 = vadd.f32 %v2573, %v2577
        %v2580 = vadd.f32 %v2574, %v2578
        %v2581 = vld [vmem:[%s1740 + $0x10] sm:$0xff]
        %v2582 = vld [vmem:[%s1740 + $0x18] sm:$0xff]
        %v2583 = vmul.f32 %v2581, %v2399
        %v2584 = vmul.f32 %v2582, %v2400
        %v2585 = vadd.f32 %v2579, %v2583
        %v2586 = vadd.f32 %v2580, %v2584
        %v2587 = vld [vmem:[%s1747 + $0x10] sm:$0xff]
        %v2588 = vld [vmem:[%s1747 + $0x18] sm:$0xff]
        %v2589 = vmul.f32 %v2587, %v2417
        %v2590 = vmul.f32 %v2588, %v2418
        %v2591 = vadd.f32 %v2585, %v2589
        %v2592 = vadd.f32 %v2586, %v2590
        %v2593 = vld [vmem:[%s1754 + $0x10] sm:$0xff]
        %v2594 = vld [vmem:[%s1754 + $0x18] sm:$0xff]
        %v2595 = vmul.f32 %v2593, %v2344
        %v2596 = vmul.f32 %v2594, %v2346
        %v2597 = vadd.f32 %v2591, %v2595
        %v2598 = vadd.f32 %v2592, %v2596
        %v2599 = vld [vmem:[%s1761 + $0x10] sm:$0xff]
        %v2600 = vld [vmem:[%s1761 + $0x18] sm:$0xff]
        %v2601 = vmul.f32 %v2599, %v2445
        %v2602 = vmul.f32 %v2600, %v2446
        %v2603 = vadd.f32 %v2597, %v2601
        %v2604 = vadd.f32 %v2598, %v2602
        %v2605 = vld [vmem:[%s1768 + $0x10] sm:$0xff]
        %v2606 = vld [vmem:[%s1768 + $0x18] sm:$0xff]
        %v2607 = vmul.f32 %v2605, %v2463
        %v2608 = vmul.f32 %v2606, %v2464
        %v2609 = vadd.f32 %v2603, %v2607
        %v2610 = vadd.f32 %v2604, %v2608
        %v2611 = vld [vmem:[%s1775 + $0x10] sm:$0xff]
        %v2612 = vld [vmem:[%s1775 + $0x18] sm:$0xff]
        %v2613 = vmul.f32 %v2611, %v2481
        %v2614 = vmul.f32 %v2612, %v2482
        %v2615 = vadd.f32 %v2609, %v2613
        %v2616 = vadd.f32 %v2610, %v2614
        %v2617 = vld [vmem:[%s1782 + $0x10] sm:$0xff]
        %v2618 = vld [vmem:[%s1782 + $0x18] sm:$0xff]
        %v2619 = vmul.f32 %v2617, %v2499
        %v2620 = vmul.f32 %v2618, %v2500
        %v2621 = vadd.f32 %v2615, %v2619
        %v2622 = vadd.f32 %v2616, %v2620
        %vm2623 = vcmp.gt.f32.partialorder %v2621, %v2561
        %vm2624 = vcmp.gt.f32.partialorder %v2622, %v2562
        %v2625 = vsel %vm2623, %v2621, %v2561
        %v2626 = vsel %vm2624, %v2622, %v2562
        %v2627 = vsel %vm2623, 2, %v2563
        %v2628 = vsel %vm2624, 2, %v2564
        %vm2629 = vcmp.lt.f32.partialorder %v2621, %v2567
        %vm2630 = vcmp.lt.f32.partialorder %v2622, %v2568
        %v2631 = vsel %vm2629, %v2621, %v2567
        %v2632 = vsel %vm2630, %v2622, %v2568
        %v2633 = vsel %vm2629, 2, %v2569
        %v2634 = vsel %vm2630, 2, %v2570
        %v2635 = vld [vmem:[%s1801 + $0x10] sm:$0xff]
        %v2636 = vld [vmem:[%s1801 + $0x18] sm:$0xff]
        %v2637 = vmul.f32 %v2635, %v2365
        %v2638 = vmul.f32 %v2636, %v2366
        %v2639 = vld [vmem:[%s1806 + $0x10] sm:$0xff]
        %v2640 = vld [vmem:[%s1806 + $0x18] sm:$0xff]
        %v2641 = vmul.f32 %v2639, %v2381
        %v2642 = vmul.f32 %v2640, %v2382
        %v2643 = vadd.f32 %v2637, %v2641
        %v2644 = vadd.f32 %v2638, %v2642
        %v2645 = vld [vmem:[%s1813 + $0x10] sm:$0xff]
        %v2646 = vld [vmem:[%s1813 + $0x18] sm:$0xff]
        %v2647 = vmul.f32 %v2645, %v2399
        %v2648 = vmul.f32 %v2646, %v2400
        %v2649 = vadd.f32 %v2643, %v2647
        %v2650 = vadd.f32 %v2644, %v2648
        %v2651 = vld [vmem:[%s1820 + $0x10] sm:$0xff]
        %v2652 = vld [vmem:[%s1820 + $0x18] sm:$0xff]
        %v2653 = vmul.f32 %v2651, %v2417
        %v2654 = vmul.f32 %v2652, %v2418
        %v2655 = vadd.f32 %v2649, %v2653
        %v2656 = vadd.f32 %v2650, %v2654
        %v2657 = vld [vmem:[%s1827 + $0x10] sm:$0xff]
        %v2658 = vld [vmem:[%s1827 + $0x18] sm:$0xff]
        %v2659 = vmul.f32 %v2657, %v2344
        %v2660 = vmul.f32 %v2658, %v2346
        %v2661 = vadd.f32 %v2655, %v2659
        %v2662 = vadd.f32 %v2656, %v2660
        %v2663 = vld [vmem:[%s1834 + $0x10] sm:$0xff]
        %v2664 = vld [vmem:[%s1834 + $0x18] sm:$0xff]
        %v2665 = vmul.f32 %v2663, %v2445
        %v2666 = vmul.f32 %v2664, %v2446
        %v2667 = vadd.f32 %v2661, %v2665
        %v2668 = vadd.f32 %v2662, %v2666
        %v2669 = vld [vmem:[%s1841 + $0x10] sm:$0xff]
        %v2670 = vld [vmem:[%s1841 + $0x18] sm:$0xff]
        %v2671 = vmul.f32 %v2669, %v2463
        %v2672 = vmul.f32 %v2670, %v2464
        %v2673 = vadd.f32 %v2667, %v2671
        %v2674 = vadd.f32 %v2668, %v2672
        %v2675 = vld [vmem:[%s1848 + $0x10] sm:$0xff]
        %v2676 = vld [vmem:[%s1848 + $0x18] sm:$0xff]
        %v2677 = vmul.f32 %v2675, %v2481
        %v2678 = vmul.f32 %v2676, %v2482
        %v2679 = vadd.f32 %v2673, %v2677
        %v2680 = vadd.f32 %v2674, %v2678
        %v2681 = vld [vmem:[%s1855 + $0x10] sm:$0xff]
        %v2682 = vld [vmem:[%s1855 + $0x18] sm:$0xff]
        %v2683 = vmul.f32 %v2681, %v2499
        %v2684 = vmul.f32 %v2682, %v2500
        %v2685 = vadd.f32 %v2679, %v2683
        %v2686 = vadd.f32 %v2680, %v2684
        %vm2687 = vcmp.gt.f32.partialorder %v2685, %v2625
        %vm2688 = vcmp.gt.f32.partialorder %v2686, %v2626
        %v2689 = vsel %vm2687, %v2685, %v2625
        %v2690 = vsel %vm2688, %v2686, %v2626
        %v2691 = vsel %vm2687, 3, %v2627
        %v2692 = vsel %vm2688, 3, %v2628
        %vm2693 = vcmp.lt.f32.partialorder %v2685, %v2631
        %vm2694 = vcmp.lt.f32.partialorder %v2686, %v2632
        %v2695 = vsel %vm2693, %v2685, %v2631
        %v2696 = vsel %vm2694, %v2686, %v2632
        %v2697 = vsel %vm2693, 3, %v2633
        %v2698 = vsel %vm2694, 3, %v2634
        %v2699 = vld [vmem:[%s1874 + $0x10] sm:$0xff]
        %v2700 = vld [vmem:[%s1874 + $0x18] sm:$0xff]
        %v2701 = vmul.f32 %v2699, %v2365
        %v2702 = vmul.f32 %v2700, %v2366
        %v2703 = vld [vmem:[%s1879 + $0x10] sm:$0xff]
        %v2704 = vld [vmem:[%s1879 + $0x18] sm:$0xff]
        %v2705 = vmul.f32 %v2703, %v2381
        %v2706 = vmul.f32 %v2704, %v2382
        %v2707 = vadd.f32 %v2701, %v2705
        %v2708 = vadd.f32 %v2702, %v2706
        %v2709 = vld [vmem:[%s1886 + $0x10] sm:$0xff]
        %v2710 = vld [vmem:[%s1886 + $0x18] sm:$0xff]
        %v2711 = vmul.f32 %v2709, %v2399
        %v2712 = vmul.f32 %v2710, %v2400
        %v2713 = vadd.f32 %v2707, %v2711
        %v2714 = vadd.f32 %v2708, %v2712
        %v2715 = vld [vmem:[%s1893 + $0x10] sm:$0xff]
        %v2716 = vld [vmem:[%s1893 + $0x18] sm:$0xff]
        %v2717 = vmul.f32 %v2715, %v2417
        %v2718 = vmul.f32 %v2716, %v2418
        %v2719 = vadd.f32 %v2713, %v2717
        %v2720 = vadd.f32 %v2714, %v2718
        %v2721 = vld [vmem:[%s1900 + $0x10] sm:$0xff]
        %v2722 = vld [vmem:[%s1900 + $0x18] sm:$0xff]
        %v2723 = vmul.f32 %v2721, %v2344
        %v2724 = vmul.f32 %v2722, %v2346
        %v2725 = vadd.f32 %v2719, %v2723
        %v2726 = vadd.f32 %v2720, %v2724
        %v2727 = vld [vmem:[%s1907 + $0x10] sm:$0xff]
        %v2728 = vld [vmem:[%s1907 + $0x18] sm:$0xff]
        %v2729 = vmul.f32 %v2727, %v2445
        %v2730 = vmul.f32 %v2728, %v2446
        %v2731 = vadd.f32 %v2725, %v2729
        %v2732 = vadd.f32 %v2726, %v2730
        %v2733 = vld [vmem:[%s1914 + $0x10] sm:$0xff]
        %v2734 = vld [vmem:[%s1914 + $0x18] sm:$0xff]
        %v2735 = vmul.f32 %v2733, %v2463
        %v2736 = vmul.f32 %v2734, %v2464
        %v2737 = vadd.f32 %v2731, %v2735
        %v2738 = vadd.f32 %v2732, %v2736
        %v2739 = vld [vmem:[%s1921 + $0x10] sm:$0xff]
        %v2740 = vld [vmem:[%s1921 + $0x18] sm:$0xff]
        %v2741 = vmul.f32 %v2739, %v2481
        %v2742 = vmul.f32 %v2740, %v2482
        %v2743 = vadd.f32 %v2737, %v2741
        %v2744 = vadd.f32 %v2738, %v2742
        %v2745 = vld [vmem:[%s1928 + $0x10] sm:$0xff]
        %v2746 = vld [vmem:[%s1928 + $0x18] sm:$0xff]
        %v2747 = vmul.f32 %v2745, %v2499
        %v2748 = vmul.f32 %v2746, %v2500
        %v2749 = vadd.f32 %v2743, %v2747
        %v2750 = vadd.f32 %v2744, %v2748
        %vm2751 = vcmp.gt.f32.partialorder %v2749, %v2689
        %vm2752 = vcmp.gt.f32.partialorder %v2750, %v2690
        %v2753 = vsel %vm2751, %v2749, %v2689
        %v2754 = vsel %vm2752, %v2750, %v2690
        %v2755 = vsel %vm2751, 4, %v2691
        %v2756 = vsel %vm2752, 4, %v2692
        %vm2757 = vcmp.lt.f32.partialorder %v2749, %v2695
        %vm2758 = vcmp.lt.f32.partialorder %v2750, %v2696
        %v2759 = vsel %vm2757, %v2749, %v2695
        %v2760 = vsel %vm2758, %v2750, %v2696
        %v2761 = vsel %vm2757, 4, %v2697
        %v2762 = vsel %vm2758, 4, %v2698
        %v2763 = vld [vmem:[%s1947 + $0x10] sm:$0xff]
        %v2764 = vld [vmem:[%s1947 + $0x18] sm:$0xff]
        %v2765 = vmul.f32 %v2763, %v2365
        %v2766 = vmul.f32 %v2764, %v2366
        %v2767 = vld [vmem:[%s1952 + $0x10] sm:$0xff]
        %v2768 = vld [vmem:[%s1952 + $0x18] sm:$0xff]
        %v2769 = vmul.f32 %v2767, %v2381
        %v2770 = vmul.f32 %v2768, %v2382
        %v2771 = vadd.f32 %v2765, %v2769
        %v2772 = vadd.f32 %v2766, %v2770
        %v2773 = vld [vmem:[%s1959 + $0x10] sm:$0xff]
        %v2774 = vld [vmem:[%s1959 + $0x18] sm:$0xff]
        %v2775 = vmul.f32 %v2773, %v2399
        %v2776 = vmul.f32 %v2774, %v2400
        %v2777 = vadd.f32 %v2771, %v2775
        %v2778 = vadd.f32 %v2772, %v2776
        %v2779 = vld [vmem:[%s1966 + $0x10] sm:$0xff]
        %v2780 = vld [vmem:[%s1966 + $0x18] sm:$0xff]
        %v2781 = vmul.f32 %v2779, %v2417
        %v2782 = vmul.f32 %v2780, %v2418
        %v2783 = vadd.f32 %v2777, %v2781
        %v2784 = vadd.f32 %v2778, %v2782
        %v2785 = vld [vmem:[%s1973 + $0x10] sm:$0xff]
        %v2786 = vld [vmem:[%s1973 + $0x18] sm:$0xff]
        %v2787 = vmul.f32 %v2785, %v2344
        %v2788 = vmul.f32 %v2786, %v2346
        %v2789 = vadd.f32 %v2783, %v2787
        %v2790 = vadd.f32 %v2784, %v2788
        %v2791 = vld [vmem:[%s1980 + $0x10] sm:$0xff]
        %v2792 = vld [vmem:[%s1980 + $0x18] sm:$0xff]
        %v2793 = vmul.f32 %v2791, %v2445
        %v2794 = vmul.f32 %v2792, %v2446
        %v2795 = vadd.f32 %v2789, %v2793
        %v2796 = vadd.f32 %v2790, %v2794
        %v2797 = vld [vmem:[%s1987 + $0x10] sm:$0xff]
        %v2798 = vld [vmem:[%s1987 + $0x18] sm:$0xff]
        %v2799 = vmul.f32 %v2797, %v2463
        %v2800 = vmul.f32 %v2798, %v2464
        %v2801 = vadd.f32 %v2795, %v2799
        %v2802 = vadd.f32 %v2796, %v2800
        %v2803 = vld [vmem:[%s1994 + $0x10] sm:$0xff]
        %v2804 = vld [vmem:[%s1994 + $0x18] sm:$0xff]
        %v2805 = vmul.f32 %v2803, %v2481
        %v2806 = vmul.f32 %v2804, %v2482
        %v2807 = vadd.f32 %v2801, %v2805
        %v2808 = vadd.f32 %v2802, %v2806
        %v2809 = vld [vmem:[%s2001 + $0x10] sm:$0xff]
        %v2810 = vld [vmem:[%s2001 + $0x18] sm:$0xff]
        %v2811 = vmul.f32 %v2809, %v2499
        %v2812 = vmul.f32 %v2810, %v2500
        %v2813 = vadd.f32 %v2807, %v2811
        %v2814 = vadd.f32 %v2808, %v2812
        %vm2815 = vcmp.gt.f32.partialorder %v2813, %v2753
        %vm2816 = vcmp.gt.f32.partialorder %v2814, %v2754
        %v2817 = vsel %vm2815, %v2813, %v2753
        %v2818 = vsel %vm2816, %v2814, %v2754
        %v2819 = vsel %vm2815, 5, %v2755
        %v2820 = vsel %vm2816, 5, %v2756
        %vm2821 = vcmp.lt.f32.partialorder %v2813, %v2759
        %vm2822 = vcmp.lt.f32.partialorder %v2814, %v2760
        %v2823 = vsel %vm2821, %v2813, %v2759
        %v2824 = vsel %vm2822, %v2814, %v2760
        %v2825 = vsel %vm2821, 5, %v2761
        %v2826 = vsel %vm2822, 5, %v2762
        %v2827 = vld [vmem:[%s2020 + $0x10] sm:$0xff]
        %v2828 = vld [vmem:[%s2020 + $0x18] sm:$0xff]
        %v2829 = vmul.f32 %v2827, %v2365
        %v2830 = vmul.f32 %v2828, %v2366
        %v2831 = vld [vmem:[%s2025 + $0x10] sm:$0xff]
        %v2832 = vld [vmem:[%s2025 + $0x18] sm:$0xff]
        %v2833 = vmul.f32 %v2831, %v2381
        %v2834 = vmul.f32 %v2832, %v2382
        %v2835 = vadd.f32 %v2829, %v2833
        %v2836 = vadd.f32 %v2830, %v2834
        %v2837 = vld [vmem:[%s2032 + $0x10] sm:$0xff]
        %v2838 = vld [vmem:[%s2032 + $0x18] sm:$0xff]
        %v2839 = vmul.f32 %v2837, %v2399
        %v2840 = vmul.f32 %v2838, %v2400
        %v2841 = vadd.f32 %v2835, %v2839
        %v2842 = vadd.f32 %v2836, %v2840
        %v2843 = vld [vmem:[%s2039 + $0x10] sm:$0xff]
        %v2844 = vld [vmem:[%s2039 + $0x18] sm:$0xff]
        %v2845 = vmul.f32 %v2843, %v2417
        %v2846 = vmul.f32 %v2844, %v2418
        %v2847 = vadd.f32 %v2841, %v2845
        %v2848 = vadd.f32 %v2842, %v2846
        %v2849 = vld [vmem:[%s2046 + $0x10] sm:$0xff]
        %v2850 = vld [vmem:[%s2046 + $0x18] sm:$0xff]
        %v2851 = vmul.f32 %v2849, %v2344
        %v2852 = vmul.f32 %v2850, %v2346
        %v2853 = vadd.f32 %v2847, %v2851
        %v2854 = vadd.f32 %v2848, %v2852
        %v2855 = vld [vmem:[%s2053 + $0x10] sm:$0xff]
        %v2856 = vld [vmem:[%s2053 + $0x18] sm:$0xff]
        %v2857 = vmul.f32 %v2855, %v2445
        %v2858 = vmul.f32 %v2856, %v2446
        %v2859 = vadd.f32 %v2853, %v2857
        %v2860 = vadd.f32 %v2854, %v2858
        %v2861 = vld [vmem:[%s2060 + $0x10] sm:$0xff]
        %v2862 = vld [vmem:[%s2060 + $0x18] sm:$0xff]
        %v2863 = vmul.f32 %v2861, %v2463
        %v2864 = vmul.f32 %v2862, %v2464
        %v2865 = vadd.f32 %v2859, %v2863
        %v2866 = vadd.f32 %v2860, %v2864
        %v2867 = vld [vmem:[%s2067 + $0x10] sm:$0xff]
        %v2868 = vld [vmem:[%s2067 + $0x18] sm:$0xff]
        %v2869 = vmul.f32 %v2867, %v2481
        %v2870 = vmul.f32 %v2868, %v2482
        %v2871 = vadd.f32 %v2865, %v2869
        %v2872 = vadd.f32 %v2866, %v2870
        %v2873 = vld [vmem:[%s2074 + $0x10] sm:$0xff]
        %v2874 = vld [vmem:[%s2074 + $0x18] sm:$0xff]
        %v2875 = vmul.f32 %v2873, %v2499
        %v2876 = vmul.f32 %v2874, %v2500
        %v2877 = vadd.f32 %v2871, %v2875
        %v2878 = vadd.f32 %v2872, %v2876
        %vm2879 = vcmp.gt.f32.partialorder %v2877, %v2817
        %vm2880 = vcmp.gt.f32.partialorder %v2878, %v2818
        %v2881 = vsel %vm2879, %v2877, %v2817
        %v2882 = vsel %vm2880, %v2878, %v2818
        %v2883 = vsel %vm2879, 6, %v2819
        %v2884 = vsel %vm2880, 6, %v2820
        %vm2885 = vcmp.lt.f32.partialorder %v2877, %v2823
        %vm2886 = vcmp.lt.f32.partialorder %v2878, %v2824
        %v2887 = vsel %vm2885, %v2877, %v2823
        %v2888 = vsel %vm2886, %v2878, %v2824
        %v2889 = vsel %vm2885, 6, %v2825
        %v2890 = vsel %vm2886, 6, %v2826
        %v2891 = vld [vmem:[%s2093 + $0x10] sm:$0xff]
        %v2892 = vld [vmem:[%s2093 + $0x18] sm:$0xff]
        %v2893 = vmul.f32 %v2891, %v2365
        %v2894 = vmul.f32 %v2892, %v2366
        %v2895 = vld [vmem:[%s2098 + $0x10] sm:$0xff]
        %v2896 = vld [vmem:[%s2098 + $0x18] sm:$0xff]
        %v2897 = vmul.f32 %v2895, %v2381
        %v2898 = vmul.f32 %v2896, %v2382
        %v2899 = vadd.f32 %v2893, %v2897
        %v2900 = vadd.f32 %v2894, %v2898
        %v2901 = vld [vmem:[%s2105 + $0x10] sm:$0xff]
        %v2902 = vld [vmem:[%s2105 + $0x18] sm:$0xff]
        %v2903 = vmul.f32 %v2901, %v2399
        %v2904 = vmul.f32 %v2902, %v2400
        %v2905 = vadd.f32 %v2899, %v2903
        %v2906 = vadd.f32 %v2900, %v2904
        %v2907 = vld [vmem:[%s2112 + $0x10] sm:$0xff]
        %v2908 = vld [vmem:[%s2112 + $0x18] sm:$0xff]
        %v2909 = vmul.f32 %v2907, %v2417
        %v2910 = vmul.f32 %v2908, %v2418
        %v2911 = vadd.f32 %v2905, %v2909
        %v2912 = vadd.f32 %v2906, %v2910
        %v2913 = vld [vmem:[%s2119 + $0x10] sm:$0xff]
        %v2914 = vld [vmem:[%s2119 + $0x18] sm:$0xff]
        %v2915 = vmul.f32 %v2913, %v2344
        %v2916 = vmul.f32 %v2914, %v2346
        %v2917 = vadd.f32 %v2911, %v2915
        %v2918 = vadd.f32 %v2912, %v2916
        %v2919 = vld [vmem:[%s2126 + $0x10] sm:$0xff]
        %v2920 = vld [vmem:[%s2126 + $0x18] sm:$0xff]
        %v2921 = vmul.f32 %v2919, %v2445
        %v2922 = vmul.f32 %v2920, %v2446
        %v2923 = vadd.f32 %v2917, %v2921
        %v2924 = vadd.f32 %v2918, %v2922
        %v2925 = vld [vmem:[%s2133 + $0x10] sm:$0xff]
        %v2926 = vld [vmem:[%s2133 + $0x18] sm:$0xff]
        %v2927 = vmul.f32 %v2925, %v2463
        %v2928 = vmul.f32 %v2926, %v2464
        %v2929 = vadd.f32 %v2923, %v2927
        %v2930 = vadd.f32 %v2924, %v2928
        %v2931 = vld [vmem:[%s2140 + $0x10] sm:$0xff]
        %v2932 = vld [vmem:[%s2140 + $0x18] sm:$0xff]
        %v2933 = vmul.f32 %v2931, %v2481
        %v2934 = vmul.f32 %v2932, %v2482
        %v2935 = vadd.f32 %v2929, %v2933
        %v2936 = vadd.f32 %v2930, %v2934
        %v2937 = vld [vmem:[%s2147 + $0x10] sm:$0xff]
        %v2938 = vld [vmem:[%s2147 + $0x18] sm:$0xff]
        %v2939 = vmul.f32 %v2937, %v2499
        %v2940 = vmul.f32 %v2938, %v2500
        %v2941 = vadd.f32 %v2935, %v2939
        %v2942 = vadd.f32 %v2936, %v2940
        %vm2943 = vcmp.gt.f32.partialorder %v2941, %v2881
        %vm2944 = vcmp.gt.f32.partialorder %v2942, %v2882
        %v2945 = vsel %vm2943, %v2941, %v2881
        %v2946 = vsel %vm2944, %v2942, %v2882
        %v2947 = vsel %vm2943, 7, %v2883
        %v2948 = vsel %vm2944, 7, %v2884
        %vm2949 = vcmp.lt.f32.partialorder %v2941, %v2887
        %vm2950 = vcmp.lt.f32.partialorder %v2942, %v2888
        %v2951 = vsel %vm2949, 7, %v2889
        %v2952 = vsel %vm2950, 7, %v2890
        %v2953 = vmul.f32 %v2945, %v1478
        %v2954 = vmul.f32 %v2946, %v1478
        %vm2955 = vcmp.eq.s32.totalorder %v2947, 0
        %vm2956 = vcmp.eq.s32.totalorder %v2948, 0
        %v2957 = vsel %vm2955, %v2953, 0.0
        %v2958 = vsel %vm2956, %v2954, 0.0
        %2959 = vadd.xlane.f32.xlu0 %v2957
        %v2960 = vpop.xlane.xlu0 %2959
        %2961 = vadd.xlane.f32.xlu0 %v2958
        %v2962 = vpop.xlane.xlu0 %2961
        %vm2963 = vcmp.eq.s32.totalorder %v2951, 0
        %vm2964 = vcmp.eq.s32.totalorder %v2952, 0
        %v2965 = vsel %vm2963, %v1478, 0.0
        %v2966 = vsel %vm2964, %v1478, 0.0
        %2967 = vadd.xlane.f32.xlu0 %v2965
        %v2968 = vpop.xlane.xlu0 %2967
        %2969 = vadd.xlane.f32.xlu0 %v2966
        %v2970 = vpop.xlane.xlu0 %2969
        %vm2971 = vcmp.eq.s32.totalorder %v2947, 1
        %vm2972 = vcmp.eq.s32.totalorder %v2948, 1
        %v2973 = vsel %vm2971, %v2953, 0.0
        %v2974 = vsel %vm2972, %v2954, 0.0
        %2975 = vadd.xlane.f32.xlu0 %v2973
        %v2976 = vpop.xlane.xlu0 %2975
        %2977 = vadd.xlane.f32.xlu0 %v2974
        %v2978 = vpop.xlane.xlu0 %2977
        %vm2979 = vcmp.eq.s32.totalorder %v2951, 1
        %vm2980 = vcmp.eq.s32.totalorder %v2952, 1
        %v2981 = vsel %vm2979, %v1478, 0.0
        %v2982 = vsel %vm2980, %v1478, 0.0
        %2983 = vadd.xlane.f32.xlu0 %v2981
        %v2984 = vpop.xlane.xlu0 %2983
        %2985 = vadd.xlane.f32.xlu0 %v2982
        %v2986 = vpop.xlane.xlu0 %2985
        %vm2987 = vcmp.eq.s32.totalorder %v2947, 2
        %vm2988 = vcmp.eq.s32.totalorder %v2948, 2
        %v2989 = vsel %vm2987, %v2953, 0.0
        %v2990 = vsel %vm2988, %v2954, 0.0
        %2991 = vadd.xlane.f32.xlu0 %v2989
        %v2992 = vpop.xlane.xlu0 %2991
        %2993 = vadd.xlane.f32.xlu0 %v2990
        %v2994 = vpop.xlane.xlu0 %2993
        %vm2995 = vcmp.eq.s32.totalorder %v2951, 2
        %vm2996 = vcmp.eq.s32.totalorder %v2952, 2
        %v2997 = vsel %vm2995, %v1478, 0.0
        %v2998 = vsel %vm2996, %v1478, 0.0
        %2999 = vadd.xlane.f32.xlu0 %v2997
        %v3000 = vpop.xlane.xlu0 %2999
        %3001 = vadd.xlane.f32.xlu0 %v2998
        %v3002 = vpop.xlane.xlu0 %3001
        %vm3003 = vcmp.eq.s32.totalorder %v2947, 3
        %vm3004 = vcmp.eq.s32.totalorder %v2948, 3
        %v3005 = vsel %vm3003, %v2953, 0.0
        %v3006 = vsel %vm3004, %v2954, 0.0
        %3007 = vadd.xlane.f32.xlu0 %v3005
        %v3008 = vpop.xlane.xlu0 %3007
        %3009 = vadd.xlane.f32.xlu0 %v3006
        %v3010 = vpop.xlane.xlu0 %3009
        %vm3011 = vcmp.eq.s32.totalorder %v2951, 3
        %vm3012 = vcmp.eq.s32.totalorder %v2952, 3
        %v3013 = vsel %vm3011, %v1478, 0.0
        %v3014 = vsel %vm3012, %v1478, 0.0
        %3015 = vadd.xlane.f32.xlu0 %v3013
        %v3016 = vpop.xlane.xlu0 %3015
        %3017 = vadd.xlane.f32.xlu0 %v3014
        %v3018 = vpop.xlane.xlu0 %3017
        %vm3019 = vcmp.eq.s32.totalorder %v2947, 4
        %vm3020 = vcmp.eq.s32.totalorder %v2948, 4
        %v3021 = vsel %vm3019, %v2953, 0.0
        %v3022 = vsel %vm3020, %v2954, 0.0
        %3023 = vadd.xlane.f32.xlu0 %v3021
        %v3024 = vpop.xlane.xlu0 %3023
        %3025 = vadd.xlane.f32.xlu0 %v3022
        %v3026 = vpop.xlane.xlu0 %3025
        %vm3027 = vcmp.eq.s32.totalorder %v2951, 4
        %vm3028 = vcmp.eq.s32.totalorder %v2952, 4
        %v3029 = vsel %vm3027, %v1478, 0.0
        %v3030 = vsel %vm3028, %v1478, 0.0
        %3031 = vadd.xlane.f32.xlu0 %v3029
        %v3032 = vpop.xlane.xlu0 %3031
        %3033 = vadd.xlane.f32.xlu0 %v3030
        %v3034 = vpop.xlane.xlu0 %3033
        %vm3035 = vcmp.eq.s32.totalorder %v2947, 5
        %vm3036 = vcmp.eq.s32.totalorder %v2948, 5
        %v3037 = vsel %vm3035, %v2953, 0.0
        %v3038 = vsel %vm3036, %v2954, 0.0
        %3039 = vadd.xlane.f32.xlu0 %v3037
        %v3040 = vpop.xlane.xlu0 %3039
        %3041 = vadd.xlane.f32.xlu0 %v3038
        %v3042 = vpop.xlane.xlu0 %3041
        %vm3043 = vcmp.eq.s32.totalorder %v2951, 5
        %vm3044 = vcmp.eq.s32.totalorder %v2952, 5
        %v3045 = vsel %vm3043, %v1478, 0.0
        %v3046 = vsel %vm3044, %v1478, 0.0
        %3047 = vadd.xlane.f32.xlu0 %v3045
        %v3048 = vpop.xlane.xlu0 %3047
        %3049 = vadd.xlane.f32.xlu0 %v3046
        %v3050 = vpop.xlane.xlu0 %3049
        %vm3051 = vcmp.eq.s32.totalorder %v2947, 6
        %vm3052 = vcmp.eq.s32.totalorder %v2948, 6
        %v3053 = vsel %vm3051, %v2953, 0.0
        %v3054 = vsel %vm3052, %v2954, 0.0
        %3055 = vadd.xlane.f32.xlu0 %v3053
        %v3056 = vpop.xlane.xlu0 %3055
        %3057 = vadd.xlane.f32.xlu0 %v3054
        %v3058 = vpop.xlane.xlu0 %3057
        %vm3059 = vcmp.eq.s32.totalorder %v2951, 6
        %vm3060 = vcmp.eq.s32.totalorder %v2952, 6
        %v3061 = vsel %vm3059, %v1478, 0.0
        %v3062 = vsel %vm3060, %v1478, 0.0
        %3063 = vadd.xlane.f32.xlu0 %v3061
        %v3064 = vpop.xlane.xlu0 %3063
        %3065 = vadd.xlane.f32.xlu0 %v3062
        %v3066 = vpop.xlane.xlu0 %3065
        %vm3067 = vcmp.eq.s32.totalorder %v2947, 7
        %vm3068 = vcmp.eq.s32.totalorder %v2948, 7
        %v3069 = vsel %vm3067, %v2953, 0.0
        %v3070 = vsel %vm3068, %v2954, 0.0
        %3071 = vadd.xlane.f32.xlu0 %v3069
        %v3072 = vpop.xlane.xlu0 %3071
        %3073 = vadd.xlane.f32.xlu0 %v3070
        %v3074 = vpop.xlane.xlu0 %3073
        %vm3075 = vcmp.eq.s32.totalorder %v2951, 7
        %vm3076 = vcmp.eq.s32.totalorder %v2952, 7
        %v3077 = vsel %vm3075, %v1478, 0.0
        %v3078 = vsel %vm3076, %v1478, 0.0
        %3079 = vadd.xlane.f32.xlu0 %v3077
        %v3080 = vpop.xlane.xlu0 %3079
        %3081 = vadd.xlane.f32.xlu0 %v3078
        %v3082 = vpop.xlane.xlu0 %3081
        %v3083 = vsel %vm2294, %v2960, %v2976
        %v3084 = vsel %vm2294, %v2962, %v2978
        %v3085 = vsel %vm1557, %v3083, %v2992
        %v3086 = vsel %vm1557, %v3084, %v2994
        %v3087 = vsel %vm2299, %v3085, %v3008
        %v3088 = vsel %vm2299, %v3086, %v3010
        %v3089 = vsel %vm1537, %v3087, %v3024
        %v3090 = vsel %vm1537, %v3088, %v3026
        %v3091 = vsel %vm2304, %v3089, %v3040
        %v3092 = vsel %vm2304, %v3090, %v3042
        %v3093 = vsel %vm1517, %v3091, %v3056
        %v3094 = vsel %vm1517, %v3092, %v3058
        %v3095 = vsel %vm2309, %v3093, %v3072
        %v3096 = vsel %vm2309, %v3094, %v3074
        %v3097 = vsel %vm2294, %v2968, %v2984
        %v3098 = vsel %vm2294, %v2970, %v2986
        %v3099 = vsel %vm1557, %v3097, %v3000
        %v3100 = vsel %vm1557, %v3098, %v3002
        %v3101 = vsel %vm2299, %v3099, %v3016
        %v3102 = vsel %vm2299, %v3100, %v3018
        %v3103 = vsel %vm1537, %v3101, %v3032
        %v3104 = vsel %vm1537, %v3102, %v3034
        %v3105 = vsel %vm2304, %v3103, %v3048
        %v3106 = vsel %vm2304, %v3104, %v3050
        %v3107 = vsel %vm1517, %v3105, %v3064
        %v3108 = vsel %vm1517, %v3106, %v3066
        %v3109 = vsel %vm2309, %v3107, %v3080
        %v3110 = vsel %vm2309, %v3108, %v3082
        %v3111 = vadd.f32 %v3095, 0.0
        %v3112 = vadd.f32 %v3096, 0.0
        %3113 = vst.msk [vmem:[%s1386 + $0x10] sm:$0xff] %vm1499, %v3111
        %3114 = vst.msk [vmem:[%s1386 + $0x18] sm:$0xff] %vm1499, %v3112
        %v3115 = vadd.f32 %v3109, 0.0
        %v3116 = vadd.f32 %v3110, 0.0
        %3119 = vrot.lane.b32.xlu0 %v3115, 8
        %v3120 = vpop.permute.xlu0 %3119
        %3121 = vrot.lane.b32.xlu0 %v3116, 8
        %v3122 = vpop.permute.xlu0 %3121
        %3125 = vst.msk [vmem:[%s1386 + $0x10] sm:$0xff] %vm2340, %v3120
        %3126 = vst.msk [vmem:[%s1386 + $0x18] sm:$0xff] %vm2340, %v3122
        %s3127 = smul.u32 4, %s17
        %p3128 = scmp.lt.s32.totalorder %s18, 1
        %s3129 = scalar_select %p3128, %s18, 1
        %p3130 = scmp.lt.s32.totalorder %s3127, 7
        %s3131 = scalar_select %p3130, %s3127, 7
        %s3132 = smul.addr %s3129, 8
        %s3133 = sadd.s32 %s3131, %s3132
        %s3134 = smul.addr %s3133, 8
        %s3135 = scalar_lea.vmem %s2, %s3134
        // Predicated region
        $region75: #{_lambda_.3} parent=61 // pred_check
          %p3136 = pneg %p99
        $region76: #{_lambda_.3} parent=61 // pred_check_branch
          %3138 = sbr.rel (%p3136) target = $region78
        $region77: #{_lambda_.3} parent=61 // pred_region
          %s3139 = smul.u32 4, %s17
        $region78: #{_lambda_.3} parent=61 // pred_fallthru
          _
      $region62: #{_lambda_.3} parent=5 // pred_fallthru
        _
      %p3140 = scmp.le.s32.totalorder 2, %s8
      // Predicated region
      $region79: #{_lambda_.3} parent=5 // pred_check
        %p3141 = pneg %p3140
      $region80: #{_lambda_.3} parent=5 // pred_check_branch
        %3143 = sbr.rel (%p3141) target = $region82
      $region81: #{_lambda_.3} parent=5 // pred_region
        %s3144 = ssub.s32 %s8, 2
        // Predicated region
        $region83: #{_lambda_.3} parent=81 // pred_check
          %p3145 = pneg %p105
        $region84: #{_lambda_.3} parent=81 // pred_check_branch
          %3147 = sbr.rel (%p3145) target = $region86
        $region85: #{_lambda_.3} parent=81 // pred_region
          %s3148 = smul.u32 4, %s19
          %p3149 = scmp.lt.s32.totalorder %s20, 1
          %s3150 = scalar_select %p3149, %s20, 1
          %p3151 = scmp.lt.s32.totalorder %s3148, 7
          %s3152 = scalar_select %p3151, %s3148, 7
          %s3153 = smul.addr %s3150, 8
          %s3154 = sadd.s32 %s3152, %s3153
          %s3155 = smul.addr %s3154, 8
          %s3156 = scalar_lea.vmem %s2, %s3155
        $region86: #{_lambda_.3} parent=81 // pred_fallthru
          _
      $region82: #{_lambda_.3} parent=5 // pred_fallthru
        _
    $region6: #{_lambda_.3} parent=1 // loop_footer
      %s12 = sadd.s32 1, %s8
    $region7: #{_lambda_.3} parent=1 // loop_footer_branch
      %7 = sbr.rel target = $region3
    $region8: #{_lambda_.3} parent=1 // loop_exit
      _

</llo_original>
